<compile_context>
chip_gen: v7x
topology: tpu7x:2x2x1
jax: 0.10.0
libtpu: 0.0.40
codegen_flags: <defaults>
</compile_context>

<pallas_src>
import jax
import jax.numpy as jnp
from jax.experimental import pallas as pl
from jax.experimental.pallas import tpu as pltpu

IMAGE_SIZE = 56
PATCH = 28
CHANNELS = 1
DIM = 224
DEPTH = 6
HEADS = 8
DIM_HEAD = 28
INNER = HEADS * DIM_HEAD               # 224
MLP_DIM = 2048
GRID_HW = IMAGE_SIZE // PATCH          # 2
NUM_PATCHES = GRID_HW * GRID_HW        # 4
SEQ = NUM_PATCHES + 1                  # 5 (cls + patches)
PATCH_DIM = CHANNELS * PATCH * PATCH   # 784
LN_EPS = 1e-5                          # PyTorch LayerNorm default
BT = 128                               # batch tile: BT*SEQ = 640 rows (5*128)
PATCH_ROW_TILE = 512                   # row tile for the patch-embed kernel
VMEM_LIMIT = 56 * 1024 * 1024          # fits v7x (64 MiB) and v5e/v6e (128 MiB)


def _round_up(x, m):
    return ((x + m - 1) // m) * m


def _layernorm(x, g, b):
    mu = jnp.mean(x, axis=-1, keepdims=True)
    xc = x - mu
    var = jnp.mean(xc * xc, axis=-1, keepdims=True)
    return xc * jax.lax.rsqrt(var + LN_EPS) * g + b


# ---------------------------------------------------------------------------
# Kernel 1: patch embedding  (Linear(784 -> 224)), tiled over rows.
# ---------------------------------------------------------------------------
def patch_embed_kernel(x_ref, w_ref, b_ref, o_ref):
    o_ref[...] = (
        jnp.dot(x_ref[...].astype(jnp.bfloat16), w_ref[...],
                preferred_element_type=jnp.float32)
        + b_ref[...]
    )


# ---------------------------------------------------------------------------
# Kernel 2: one transformer layer per grid step, grid = (batch_blocks, depth).
# The output block is resident across the depth axis (accumulator pattern),
# so it carries the residual stream between layers.  All layer weights are
# passed as full (DEPTH, ...) stacks with constant block indices, making them
# VMEM-resident for the whole kernel; the current layer is selected with a
# dynamic leading-axis index.
# ---------------------------------------------------------------------------
def transformer_layer_kernel(x_ref, wq_ref, wk_ref, wv_ref, wo_ref, bo_ref,
                             ln1g_ref, ln1b_ref, ln2g_ref, ln2b_ref,
                             wf1_ref, bf1_ref, wf2_ref, bf2_ref, o_ref):
    d = pl.program_id(1)

    @pl.when(d == 0)
    def _():
        o_ref[...] = x_ref[...]

    x = o_ref[...]                          # (rows, DIM) f32 residual stream
    rows = x.shape[0]
    bt = rows // SEQ

    # ---- Attention (PreNorm); q/k/v/out projections are dense lane-wide
    # bf16 MXU matmuls with f32 accumulation.  The per-head softmax scale is
    # folded into wq at parameter-setup time.
    h = _layernorm(x, ln1g_ref[d], ln1b_ref[d]).astype(jnp.bfloat16)
    q = jnp.dot(h, wq_ref[d], preferred_element_type=jnp.float32)  # (rows,224)
    k = jnp.dot(h, wk_ref[d], preferred_element_type=jnp.float32)
    v = jnp.dot(h, wv_ref[d], preferred_element_type=jnp.float32)

    head_outs = []
    for hd in range(HEADS):                 # static unroll; tiny per-head math
        sl = slice(hd * DIM_HEAD, (hd + 1) * DIM_HEAD)
        qh = q[:, sl].reshape(bt, SEQ, DIM_HEAD)
        kh = k[:, sl].reshape(bt, SEQ, DIM_HEAD)
        vh = v[:, sl].reshape(bt, SEQ, DIM_HEAD)
        s = jnp.einsum('bqd,bkd->bqk', qh, kh,
                       preferred_element_type=jnp.float32)
        s = s - jnp.max(s, axis=-1, keepdims=True)
        p = jnp.exp(s)
        p = p * pl.reciprocal(jnp.sum(p, axis=-1, keepdims=True), approx=True)
        head_outs.append(jnp.einsum('bqk,bkd->bqd', p, vh,
                                    preferred_element_type=jnp.float32))
    ov = jnp.concatenate(head_outs, axis=-1).reshape(rows, INNER)
    attn = jnp.dot(ov.astype(jnp.bfloat16), wo_ref[d],
                   preferred_element_type=jnp.float32) + bo_ref[d]
    x = x + attn                            # to_out bias + residual

    # ---- FeedForward (PreNorm) ----
    h2 = _layernorm(x, ln2g_ref[d], ln2b_ref[d]).astype(jnp.bfloat16)
    f = jnp.dot(h2, wf1_ref[d], preferred_element_type=jnp.float32) + bf1_ref[d]
    # TODO(synk): PyTorch nn.GELU defaults to the exact erf form; tanh approximation used for TPU lowering.
    f = jax.nn.gelu(f.astype(jnp.bfloat16), approximate=True)
    f = jnp.dot(f, wf2_ref[d], preferred_element_type=jnp.float32) + bf2_ref[d]
    x = x + f

    o_ref[...] = x


# ---------------------------------------------------------------------------
# Kernel 3: energy head  (LayerNorm(224) + Linear(224 -> 1)) as row reduction
# ---------------------------------------------------------------------------
def energy_head_kernel(x_ref, g_ref, b_ref, w_ref, bias_ref, o_ref):
    h = _layernorm(x_ref[...], g_ref[...], b_ref[...])
    o_ref[...] = jnp.sum(h * w_ref[...], axis=-1, keepdims=True) + bias_ref[...]


# ---------------------------------------------------------------------------
# Wrappers / parameter setup (glue)
# ---------------------------------------------------------------------------
def run_patch_embed(patches, w, b):
    R = patches.shape[0]
    tr = min(PATCH_ROW_TILE, _round_up(R, 8))
    Rp = _round_up(R, tr)
    if Rp != R:
        patches = jnp.pad(patches, ((0, Rp - R), (0, 0)))
    out = pl.pallas_call(
        patch_embed_kernel,
        grid=(Rp // tr,),
        in_specs=[
            pl.BlockSpec((tr, PATCH_DIM), lambda i: (i, 0)),
            pl.BlockSpec((PATCH_DIM, DIM), lambda i: (0, 0)),   # resident
            pl.BlockSpec((1, DIM), lambda i: (0, 0)),
        ],
        out_specs=pl.BlockSpec((tr, DIM), lambda i: (i, 0)),
        out_shape=jax.ShapeDtypeStruct((Rp, DIM), jnp.float32),
        compiler_params=pltpu.CompilerParams(
            dimension_semantics=("parallel",)),
    )(patches, w, b)
    return out[:R]


def run_transformer(tokens, p):
    B = tokens.shape[0]
    bt = min(B, BT)
    nb = -(-B // bt)
    Bp = nb * bt
    if Bp != B:
        tokens = jnp.pad(tokens, ((0, Bp - B), (0, 0), (0, 0)))
    tok2d = tokens.reshape(Bp * SEQ, DIM)
    rows = bt * SEQ

    xmap = lambda b, d: (b, 0)          # tokens: new block per batch block only
    wmap = lambda b, d: (0, 0, 0)       # weights: constant index -> DMA'd once,
                                        # VMEM-resident for the whole kernel
    in_specs = [
        pl.BlockSpec((rows, DIM), xmap),                 # tokens (flat slab)
        pl.BlockSpec((DEPTH, DIM, INNER), wmap),         # wq  (scale folded in)
        pl.BlockSpec((DEPTH, DIM, INNER), wmap),         # wk
        pl.BlockSpec((DEPTH, DIM, INNER), wmap),         # wv
        pl.BlockSpec((DEPTH, INNER, DIM), wmap),         # wo
        pl.BlockSpec((DEPTH, 1, DIM), wmap),             # bo
        pl.BlockSpec((DEPTH, 1, DIM), wmap),             # ln1 gamma
        pl.BlockSpec((DEPTH, 1, DIM), wmap),             # ln1 beta
        pl.BlockSpec((DEPTH, 1, DIM), wmap),             # ln2 gamma
        pl.BlockSpec((DEPTH, 1, DIM), wmap),             # ln2 beta
        pl.BlockSpec((DEPTH, DIM, MLP_DIM), wmap),       # ff W1
        pl.BlockSpec((DEPTH, 1, MLP_DIM), wmap),         # ff b1
        pl.BlockSpec((DEPTH, MLP_DIM, DIM), wmap),       # ff W2
        pl.BlockSpec((DEPTH, 1, DIM), wmap),             # ff b2
    ]
    out = pl.pallas_call(
        transformer_layer_kernel,
        grid=(nb, DEPTH),
        in_specs=in_specs,
        out_specs=pl.BlockSpec((rows, DIM), xmap),
        out_shape=jax.ShapeDtypeStruct((Bp * SEQ, DIM), jnp.float32),
        compiler_params=pltpu.CompilerParams(
            dimension_semantics=("parallel", "arbitrary"),
            vmem_limit_bytes=VMEM_LIMIT),
    )(tok2d, p["wq"], p["wk"], p["wv"], p["wo"], p["bo"],
      p["ln1g"], p["ln1b"], p["ln2g"], p["ln2b"],
      p["wf1"], p["bf1"], p["wf2"], p["bf2"])
    return out.reshape(Bp, SEQ, DIM)[:B]


@jax.jit
def jem_forward(x, p):
    B = x.shape[0]
    # ---- patchify: 'b c (h p1) (w p2) -> b (h w) (p1 p2 c)'  (glue) ----
    xp = x.reshape(B, CHANNELS, GRID_HW, PATCH, GRID_HW, PATCH)
    xp = xp.transpose(0, 2, 4, 3, 5, 1)               # b h w p1 p2 c
    patches = xp.reshape(B * NUM_PATCHES, PATCH_DIM)

    emb = run_patch_embed(patches, p["patch_w"], p["patch_b"])
    emb = emb.reshape(B, NUM_PATCHES, DIM)

    cls = jnp.broadcast_to(p["cls"], (B, 1, DIM))
    tokens = jnp.concatenate([cls, emb], axis=1) + p["pos"]   # emb dropout = id

    tokens = run_transformer(tokens, p)
    cls_feat = tokens[:, 0, :]                        # pool='cls', to_latent=Id

    energy = pl.pallas_call(
        energy_head_kernel,
        out_shape=jax.ShapeDtypeStruct((B, 1), jnp.float32),
    )(cls_feat, p["e_ln_g"], p["e_ln_b"], p["e_w"], p["e_b"])
    return jnp.squeeze(energy)                        # matches .squeeze() -> (B,)


def init_params(key):
    ks = jax.random.split(key, 12)

    def nrm(k, shape, s=0.02):
        return s * jax.random.normal(k, shape)

    bf16 = jnp.bfloat16
    p = {}
    p["patch_w"] = nrm(ks[0], (PATCH_DIM, DIM)).astype(bf16)
    p["patch_b"] = nrm(ks[1], (1, DIM)).astype(jnp.float32)
    p["cls"] = nrm(ks[2], (1, 1, DIM), 1.0).astype(jnp.float32)
    p["pos"] = nrm(ks[3], (1, SEQ, DIM), 1.0).astype(jnp.float32)
    # qkv / out-proj weights stored head-fused and lane-dense: columns
    # [h*28:(h+1)*28] of wq/wk/wv (rows of wo) correspond to head h, which is
    # mathematically identical to the single Linear(dim, 3*inner, bias=False)
    # / Linear(inner, dim) layers of the reference ViT.  The attention scale
    # dim_head**-0.5 is folded into wq (scale real torch W_q the same way
    # when porting weights).  bf16 storage, f32 MXU accumulation.
    p["wq"] = (nrm(ks[4], (DEPTH, DIM, INNER)) * (DIM_HEAD ** -0.5)).astype(bf16)
    p["wk"] = nrm(ks[5], (DEPTH, DIM, INNER)).astype(bf16)
    p["wv"] = nrm(ks[6], (DEPTH, DIM, INNER)).astype(bf16)
    p["wo"] = nrm(ks[7], (DEPTH, INNER, DIM)).astype(bf16)
    p["bo"] = nrm(ks[8], (DEPTH, 1, DIM)).astype(jnp.float32)
    p["ln1g"] = jnp.ones((DEPTH, 1, DIM), jnp.float32)
    p["ln1b"] = jnp.zeros((DEPTH, 1, DIM), jnp.float32)
    p["ln2g"] = jnp.ones((DEPTH, 1, DIM), jnp.float32)
    p["ln2b"] = jnp.zeros((DEPTH, 1, DIM), jnp.float32)
    p["wf1"] = nrm(ks[9], (DEPTH, DIM, MLP_DIM)).astype(bf16)
    p["bf1"] = jnp.zeros((DEPTH, 1, MLP_DIM), jnp.float32)
    p["wf2"] = nrm(ks[10], (DEPTH, MLP_DIM, DIM)).astype(bf16)
    p["bf2"] = jnp.zeros((DEPTH, 1, DIM), jnp.float32)
    p["e_ln_g"] = jnp.ones((1, DIM), jnp.float32)
    p["e_ln_b"] = jnp.zeros((1, DIM), jnp.float32)
    p["e_w"] = nrm(ks[11], (1, DIM)).astype(jnp.float32)
    p["e_b"] = jnp.zeros((1, 1), jnp.float32)
    return p


if __name__ == "__main__":
    key = jax.random.PRNGKey(0)
    k_in, k_par = jax.random.split(key)
    x = jax.random.normal(k_in, (2, CHANNELS, IMAGE_SIZE, IMAGE_SIZE), jnp.float32)
    params = init_params(k_par)
    out = jem_forward(x, params)
    jax.block_until_ready(out)
    assert out.shape == (2,) and out.dtype == jnp.float32
    assert bool(jnp.all(jnp.isfinite(out)))
    print("KERNEL_OK")
</pallas_src>

<mosaic_0001>
module attributes {stable_mosaic.version = 11 : i64} {
  func.func @patch_embed_kernel(%arg0: i32, %arg1: memref<8x784xf32, #tpu.memory_space<vmem>>, %arg2: memref<784x224xbf16, #tpu.memory_space<vmem>>, %arg3: memref<1x224xf32, #tpu.memory_space<vmem>>, %arg4: memref<8x224xf32, #tpu.memory_space<vmem>>) attributes {dimension_semantics = [#tpu.dimension_semantics<parallel>], iteration_bounds = array<i64: 1>, scalar_prefetch = 0 : i64, scratch_operands = 0 : i64, tpu.core_type = #tpu.core_type<tc>, window_params = [{transform_indices = @transform_0, window_bounds = array<i64: 8, 784>}, {pipeline_mode = #tpu.pipeline_mode<synchronous>, transform_indices = @transform_1, window_bounds = array<i64: 784, 224>}, {pipeline_mode = #tpu.pipeline_mode<synchronous>, transform_indices = @transform_2, window_bounds = array<i64: 1, 224>}, {transform_indices = @transform_3, window_bounds = array<i64: 8, 224>}]} {
    %c0 = arith.constant 0 : index
    %c0_0 = arith.constant 0 : index
    %0 = vector.load %arg1[%c0, %c0_0] : memref<8x784xf32, #tpu.memory_space<vmem>>, vector<8x784xf32>
    %1 = arith.truncf %0 : vector<8x784xf32> to vector<8x784xbf16>
    %c0_1 = arith.constant 0 : index
    %c0_2 = arith.constant 0 : index
    %2 = vector.load %arg2[%c0_1, %c0_2] : memref<784x224xbf16, #tpu.memory_space<vmem>>, vector<784x224xbf16>
    %cst = arith.constant dense<0.000000e+00> : vector<8x224xf32>
    %3 = tpu.matmul %1, %2, %cst {dimension_numbers = #tpu.dot_dimension_numbers<[1], [0], [0], [1], [0, 0, 1, 1], [], []>} : vector<8x784xbf16>, vector<784x224xbf16>, vector<8x224xf32> -> vector<8x224xf32>
    %c0_3 = arith.constant 0 : index
    %c0_4 = arith.constant 0 : index
    %4 = vector.load %arg3[%c0_3, %c0_4] : memref<1x224xf32, #tpu.memory_space<vmem>>, vector<1x224xf32>
    %5 = vector.broadcast %4 : vector<1x224xf32> to vector<8x224xf32>
    %6 = arith.addf %3, %5 : vector<8x224xf32>
    %c0_5 = arith.constant 0 : index
    %c0_6 = arith.constant 0 : index
    %7 = vector.load %arg4[%c0_5, %c0_6] : memref<8x224xf32, #tpu.memory_space<vmem>>, vector<8x224xf32>
    tpu.vector_store %arg4[%c0_5, %c0_6], %6 {strides = array<i32>} : memref<8x224xf32, #tpu.memory_space<vmem>>, vector<8x224xf32>,
    return
  }
  func.func @transform_0(%arg0: i32) -> (i32, i32) {
    %c0_i32 = arith.constant 0 : i32
    %c0_i32_0 = arith.constant 0 : i32
    return %arg0, %c0_i32 : i32, i32
  }
  func.func @transform_1(%arg0: i32) -> (i32, i32) {
    %c0_i32 = arith.constant 0 : i32
    %c0_i32_0 = arith.constant 0 : i32
    %c0_i32_1 = arith.constant 0 : i32
    return %c0_i32, %c0_i32_0 : i32, i32
  }
  func.func @transform_2(%arg0: i32) -> (i32, i32) {
    %c0_i32 = arith.constant 0 : i32
    %c0_i32_0 = arith.constant 0 : i32
    %c0_i32_1 = arith.constant 0 : i32
    return %c0_i32, %c0_i32_0 : i32, i32
  }
  func.func @transform_3(%arg0: i32) -> (i32, i32) {
    %c0_i32 = arith.constant 0 : i32
    %c0_i32_0 = arith.constant 0 : i32
    return %arg0, %c0_i32 : i32, i32
  }
}

module attributes {stable_mosaic.version = 11 : i64} {
  func.func @energy_head_kernel(%arg0: memref<2x224xf32, #tpu.memory_space<vmem>>, %arg1: memref<1x224xf32, #tpu.memory_space<vmem>>, %arg2: memref<1x224xf32, #tpu.memory_space<vmem>>, %arg3: memref<1x224xf32, #tpu.memory_space<vmem>>, %arg4: memref<1x1xf32, #tpu.memory_space<vmem>>, %arg5: memref<2x1xf32, #tpu.memory_space<vmem>>) attributes {dimension_semantics = [], scalar_prefetch = 0 : i64, scratch_operands = 0 : i64, tpu.core_type = #tpu.core_type<tc>} {
    %c0 = arith.constant 0 : index
    %c0_0 = arith.constant 0 : index
    %0 = vector.load %arg0[%c0, %c0_0] : memref<2x224xf32, #tpu.memory_space<vmem>>, vector<2x224xf32>
    %c0_1 = arith.constant 0 : index
    %c0_2 = arith.constant 0 : index
    %1 = vector.load %arg1[%c0_1, %c0_2] : memref<1x224xf32, #tpu.memory_space<vmem>>, vector<1x224xf32>
    %c0_3 = arith.constant 0 : index
    %c0_4 = arith.constant 0 : index
    %2 = vector.load %arg2[%c0_3, %c0_4] : memref<1x224xf32, #tpu.memory_space<vmem>>, vector<1x224xf32>
    %cst = arith.constant dense<0.000000e+00> : vector<2xf32>
    %3 = vector.multi_reduction <add>, %0, %cst [1] : vector<2x224xf32> to vector<2xf32>
    %4 = vector.shape_cast %3 : vector<2xf32> to vector<2x1xf32>
    %cst_5 = arith.constant 2.240000e+02 : f32
    %5 = vector.broadcast %cst_5 : f32 to vector<2x1xf32>
    %6 = arith.divf %4, %5 : vector<2x1xf32>
    %7 = vector.broadcast %6 : vector<2x1xf32> to vector<2x224xf32>
    %8 = arith.subf %0, %7 : vector<2x224xf32>
    %9 = arith.mulf %8, %8 : vector<2x224xf32>
    %cst_6 = arith.constant dense<0.000000e+00> : vector<2xf32>
    %10 = vector.multi_reduction <add>, %9, %cst_6 [1] : vector<2x224xf32> to vector<2xf32>
    %11 = vector.shape_cast %10 : vector<2xf32> to vector<2x1xf32>
    %cst_7 = arith.constant 2.240000e+02 : f32
    %12 = vector.broadcast %cst_7 : f32 to vector<2x1xf32>
    %13 = arith.divf %11, %12 : vector<2x1xf32>
    %cst_8 = arith.constant 9.99999974E-6 : f32
    %14 = vector.broadcast %cst_8 : f32 to vector<2x1xf32>
    %15 = arith.addf %13, %14 : vector<2x1xf32>
    %16 = math.rsqrt %15 : vector<2x1xf32>
    %17 = vector.broadcast %16 : vector<2x1xf32> to vector<2x224xf32>
    %18 = arith.mulf %8, %17 : vector<2x224xf32>
    %19 = vector.broadcast %1 : vector<1x224xf32> to vector<2x224xf32>
    %20 = arith.mulf %18, %19 : vector<2x224xf32>
    %21 = vector.broadcast %2 : vector<1x224xf32> to vector<2x224xf32>
    %22 = arith.addf %20, %21 : vector<2x224xf32>
    %c0_9 = arith.constant 0 : index
    %c0_10 = arith.constant 0 : index
    %23 = vector.load %arg3[%c0_9, %c0_10] : memref<1x224xf32, #tpu.memory_space<vmem>>, vector<1x224xf32>
    %24 = vector.broadcast %23 : vector<1x224xf32> to vector<2x224xf32>
    %25 = arith.mulf %22, %24 : vector<2x224xf32>
    %cst_11 = arith.constant dense<0.000000e+00> : vector<2xf32>
    %26 = vector.multi_reduction <add>, %25, %cst_11 [1] : vector<2x224xf32> to vector<2xf32>
    %27 = vector.shape_cast %26 : vector<2xf32> to vector<2x1xf32>
    %c0_12 = arith.constant 0 : index
    %c0_13 = arith.constant 0 : index
    %28 = vector.load %arg4[%c0_12, %c0_13] : memref<1x1xf32, #tpu.memory_space<vmem>>, vector<1x1xf32>
    %29 = vector.broadcast %28 : vector<1x1xf32> to vector<2x1xf32>
    %30 = arith.addf %27, %29 : vector<2x1xf32>
    %c0_14 = arith.constant 0 : index
    %c0_15 = arith.constant 0 : index
    %31 = vector.load %arg5[%c0_14, %c0_15] : memref<2x1xf32, #tpu.memory_space<vmem>>, vector<2x1xf32>
    tpu.vector_store %arg5[%c0_14, %c0_15], %30 {strides = array<i32>} : memref<2x1xf32, #tpu.memory_space<vmem>>, vector<2x1xf32>,
    return
  }
}

module attributes {stable_mosaic.version = 11 : i64} {
  func.func @transformer_layer_kernel(%arg0: i32, %arg1: i32, %arg2: memref<10x224xf32, #tpu.memory_space<vmem>>, %arg3: memref<6x224x224xbf16, #tpu.memory_space<vmem>>, %arg4: memref<6x224x224xbf16, #tpu.memory_space<vmem>>, %arg5: memref<6x224x224xbf16, #tpu.memory_space<vmem>>, %arg6: memref<6x224x224xbf16, #tpu.memory_space<vmem>>, %arg7: memref<6x1x224xf32, #tpu.memory_space<vmem>>, %arg8: memref<6x1x224xf32, #tpu.memory_space<vmem>>, %arg9: memref<6x1x224xf32, #tpu.memory_space<vmem>>, %arg10: memref<6x1x224xf32, #tpu.memory_space<vmem>>, %arg11: memref<6x1x224xf32, #tpu.memory_space<vmem>>, %arg12: memref<6x224x2048xbf16, #tpu.memory_space<vmem>>, %arg13: memref<6x1x2048xf32, #tpu.memory_space<vmem>>, %arg14: memref<6x2048x224xbf16, #tpu.memory_space<vmem>>, %arg15: memref<6x1x224xf32, #tpu.memory_space<vmem>>, %arg16: memref<10x224xf32, #tpu.memory_space<vmem>>) attributes {dimension_semantics = [#tpu.dimension_semantics<parallel>, #tpu.dimension_semantics<arbitrary>], iteration_bounds = array<i64: 1, 6>, scalar_prefetch = 0 : i64, scratch_operands = 0 : i64, tpu.core_type = #tpu.core_type<tc>, window_params = [{transform_indices = @transform_0, window_bounds = array<i64: 10, 224>}, {pipeline_mode = #tpu.pipeline_mode<synchronous>, transform_indices = @transform_1, window_bounds = array<i64: 6, 224, 224>}, {pipeline_mode = #tpu.pipeline_mode<synchronous>, transform_indices = @transform_2, window_bounds = array<i64: 6, 224, 224>}, {pipeline_mode = #tpu.pipeline_mode<synchronous>, transform_indices = @transform_3, window_bounds = array<i64: 6, 224, 224>}, {pipeline_mode = #tpu.pipeline_mode<synchronous>, transform_indices = @transform_4, window_bounds = array<i64: 6, 224, 224>}, {pipeline_mode = #tpu.pipeline_mode<synchronous>, transform_indices = @transform_5, window_bounds = array<i64: 6, 1, 224>}, {pipeline_mode = #tpu.pipeline_mode<synchronous>, transform_indices = @transform_6, window_bounds = array<i64: 6, 1, 224>}, {pipeline_mode = #tpu.pipeline_mode<synchronous>, transform_indices = @transform_7, window_bounds = array<i64: 6, 1, 224>}, {pipeline_mode = #tpu.pipeline_mode<synchronous>, transform_indices = @transform_8, window_bounds = array<i64: 6, 1, 224>}, {pipeline_mode = #tpu.pipeline_mode<synchronous>, transform_indices = @transform_9, window_bounds = array<i64: 6, 1, 224>}, {pipeline_mode = #tpu.pipeline_mode<synchronous>, transform_indices = @transform_10, window_bounds = array<i64: 6, 224, 2048>}, {pipeline_mode = #tpu.pipeline_mode<synchronous>, transform_indices = @transform_11, window_bounds = array<i64: 6, 1, 2048>}, {pipeline_mode = #tpu.pipeline_mode<synchronous>, transform_indices = @transform_12, window_bounds = array<i64: 6, 2048, 224>}, {pipeline_mode = #tpu.pipeline_mode<synchronous>, transform_indices = @transform_13, window_bounds = array<i64: 6, 1, 224>}, {transform_indices = @transform_14, window_bounds = array<i64: 10, 224>}]} {
    %c0_i32 = arith.constant 0 : i32
    %0 = arith.cmpi eq, %arg1, %c0_i32 : i32
    %1 = arith.extui %0 : i1 to i32
    %c0_i32_0 = arith.constant 0 : i32
    %2 = arith.cmpi ne, %1, %c0_i32_0 : i32
    scf.if %2 {
      %c0_81 = arith.constant 0 : index
      %c0_82 = arith.constant 0 : index
      %261 = vector.load %arg2[%c0_81, %c0_82] : memref<10x224xf32, #tpu.memory_space<vmem>>, vector<10x224xf32>
      %c0_83 = arith.constant 0 : index
      %c0_84 = arith.constant 0 : index
      %262 = vector.load %arg16[%c0_83, %c0_84] : memref<10x224xf32, #tpu.memory_space<vmem>>, vector<10x224xf32>
      tpu.vector_store %arg16[%c0_83, %c0_84], %261 {strides = array<i32>} : memref<10x224xf32, #tpu.memory_space<vmem>>, vector<10x224xf32>,
    } else {
    }
    %c0 = arith.constant 0 : index
    %c0_1 = arith.constant 0 : index
    %3 = vector.load %arg16[%c0, %c0_1] : memref<10x224xf32, #tpu.memory_space<vmem>>, vector<10x224xf32>
    %4 = arith.index_cast %arg1 : i32 to index
    %c0_2 = arith.constant 0 : index
    %c0_3 = arith.constant 0 : index
    %5 = vector.load %arg8[%4, %c0_2, %c0_3] : memref<6x1x224xf32, #tpu.memory_space<vmem>>, vector<1x1x224xf32>
    %6 = vector.shape_cast %5 : vector<1x1x224xf32> to vector<1x224xf32>
    %7 = arith.index_cast %arg1 : i32 to index
    %c0_4 = arith.constant 0 : index
    %c0_5 = arith.constant 0 : index
    %8 = vector.load %arg9[%7, %c0_4, %c0_5] : memref<6x1x224xf32, #tpu.memory_space<vmem>>, vector<1x1x224xf32>
    %9 = vector.shape_cast %8 : vector<1x1x224xf32> to vector<1x224xf32>
    %cst = arith.constant dense<0.000000e+00> : vector<10xf32>
    %10 = vector.multi_reduction <add>, %3, %cst [1] : vector<10x224xf32> to vector<10xf32>
    %11 = vector.shape_cast %10 : vector<10xf32> to vector<10x1xf32>
    %cst_6 = arith.constant 2.240000e+02 : f32
    %12 = vector.broadcast %cst_6 : f32 to vector<10x1xf32>
    %13 = arith.divf %11, %12 : vector<10x1xf32>
    %14 = vector.broadcast %13 : vector<10x1xf32> to vector<10x224xf32>
    %15 = arith.subf %3, %14 : vector<10x224xf32>
    %16 = arith.mulf %15, %15 : vector<10x224xf32>
    %cst_7 = arith.constant dense<0.000000e+00> : vector<10xf32>
    %17 = vector.multi_reduction <add>, %16, %cst_7 [1] : vector<10x224xf32> to vector<10xf32>
    %18 = vector.shape_cast %17 : vector<10xf32> to vector<10x1xf32>
    %cst_8 = arith.constant 2.240000e+02 : f32
    %19 = vector.broadcast %cst_8 : f32 to vector<10x1xf32>
    %20 = arith.divf %18, %19 : vector<10x1xf32>
    %cst_9 = arith.constant 9.99999974E-6 : f32
    %21 = vector.broadcast %cst_9 : f32 to vector<10x1xf32>
    %22 = arith.addf %20, %21 : vector<10x1xf32>
    %23 = math.rsqrt %22 : vector<10x1xf32>
    %24 = vector.broadcast %23 : vector<10x1xf32> to vector<10x224xf32>
    %25 = arith.mulf %15, %24 : vector<10x224xf32>
    %26 = vector.broadcast %6 : vector<1x224xf32> to vector<10x224xf32>
    %27 = arith.mulf %25, %26 : vector<10x224xf32>
    %28 = vector.broadcast %9 : vector<1x224xf32> to vector<10x224xf32>
    %29 = arith.addf %27, %28 : vector<10x224xf32>
    %30 = arith.truncf %29 : vector<10x224xf32> to vector<10x224xbf16>
    %31 = arith.index_cast %arg1 : i32 to index
    %c0_10 = arith.constant 0 : index
    %c0_11 = arith.constant 0 : index
    %32 = vector.load %arg3[%31, %c0_10, %c0_11] : memref<6x224x224xbf16, #tpu.memory_space<vmem>>, vector<1x224x224xbf16>
    %33 = vector.shape_cast %32 : vector<1x224x224xbf16> to vector<224x224xbf16>
    %cst_12 = arith.constant dense<0.000000e+00> : vector<10x224xf32>
    %34 = tpu.matmul %30, %33, %cst_12 {dimension_numbers = #tpu.dot_dimension_numbers<[1], [0], [0], [1], [0, 0, 1, 1], [], []>} : vector<10x224xbf16>, vector<224x224xbf16>, vector<10x224xf32> -> vector<10x224xf32>
    %35 = arith.index_cast %arg1 : i32 to index
    %c0_13 = arith.constant 0 : index
    %c0_14 = arith.constant 0 : index
    %36 = vector.load %arg4[%35, %c0_13, %c0_14] : memref<6x224x224xbf16, #tpu.memory_space<vmem>>, vector<1x224x224xbf16>
    %37 = vector.shape_cast %36 : vector<1x224x224xbf16> to vector<224x224xbf16>
    %cst_15 = arith.constant dense<0.000000e+00> : vector<10x224xf32>
    %38 = tpu.matmul %30, %37, %cst_15 {dimension_numbers = #tpu.dot_dimension_numbers<[1], [0], [0], [1], [0, 0, 1, 1], [], []>} : vector<10x224xbf16>, vector<224x224xbf16>, vector<10x224xf32> -> vector<10x224xf32>
    %39 = arith.index_cast %arg1 : i32 to index
    %c0_16 = arith.constant 0 : index
    %c0_17 = arith.constant 0 : index
    %40 = vector.load %arg5[%39, %c0_16, %c0_17] : memref<6x224x224xbf16, #tpu.memory_space<vmem>>, vector<1x224x224xbf16>
    %41 = vector.shape_cast %40 : vector<1x224x224xbf16> to vector<224x224xbf16>
    %cst_18 = arith.constant dense<0.000000e+00> : vector<10x224xf32>
    %42 = tpu.matmul %30, %41, %cst_18 {dimension_numbers = #tpu.dot_dimension_numbers<[1], [0], [0], [1], [0, 0, 1, 1], [], []>} : vector<10x224xbf16>, vector<224x224xbf16>, vector<10x224xf32> -> vector<10x224xf32>
    %43 = vector.extract_strided_slice %34 {offsets = [0, 0], sizes = [10, 28], strides = [1, 1]} : vector<10x224xf32> to vector<10x28xf32>
    %44 = vector.shape_cast %43 : vector<10x28xf32> to vector<2x5x28xf32>
    %45 = vector.extract_strided_slice %38 {offsets = [0, 0], sizes = [10, 28], strides = [1, 1]} : vector<10x224xf32> to vector<10x28xf32>
    %46 = vector.shape_cast %45 : vector<10x28xf32> to vector<2x5x28xf32>
    %47 = vector.extract_strided_slice %42 {offsets = [0, 0], sizes = [10, 28], strides = [1, 1]} : vector<10x224xf32> to vector<10x28xf32>
    %48 = vector.shape_cast %47 : vector<10x28xf32> to vector<2x5x28xf32>
    "tpu.trace_start"() <{level = 10 : i32, message = "bqd,bkd->bqk"}> : () -> ()
    %cst_19 = arith.constant dense<0.000000e+00> : vector<2x5x5xf32>
    %49 = tpu.matmul %44, %46, %cst_19 {dimension_numbers = #tpu.dot_dimension_numbers<[2], [2], [1], [1], [0, 0, 0, 1, 1, 1], [0], [0]>} : vector<2x5x28xf32>, vector<2x5x28xf32>, vector<2x5x5xf32> -> vector<2x5x5xf32>
    "tpu.trace_stop"() : () -> ()
    %cst_20 = arith.constant dense<0xFF800000> : vector<2x5xf32>
    %50 = vector.multi_reduction <maximumf>, %49, %cst_20 [2] : vector<2x5x5xf32> to vector<2x5xf32>
    %51 = vector.shape_cast %50 : vector<2x5xf32> to vector<2x5x1xf32>
    %52 = vector.broadcast %51 : vector<2x5x1xf32> to vector<2x5x5xf32>
    %53 = arith.subf %49, %52 : vector<2x5x5xf32>
    %54 = math.exp %53 : vector<2x5x5xf32>
    %cst_21 = arith.constant dense<0.000000e+00> : vector<2x5xf32>
    %55 = vector.multi_reduction <add>, %54, %cst_21 [2] : vector<2x5x5xf32> to vector<2x5xf32>
    %56 = vector.shape_cast %55 : vector<2x5xf32> to vector<2x5x1xf32>
    %57 = tpu.reciprocal %56 {approx = true} : vector<2x5x1xf32> -> vector<2x5x1xf32>
    %58 = vector.broadcast %57 : vector<2x5x1xf32> to vector<2x5x5xf32>
    %59 = arith.mulf %54, %58 : vector<2x5x5xf32>
    "tpu.trace_start"() <{level = 10 : i32, message = "bqk,bkd->bqd"}> : () -> ()
    %cst_22 = arith.constant dense<0.000000e+00> : vector<2x5x28xf32>
    %60 = tpu.matmul %59, %48, %cst_22 {dimension_numbers = #tpu.dot_dimension_numbers<[2], [1], [1], [2], [0, 0, 0, 1, 1, 2], [0], [0]>} : vector<2x5x5xf32>, vector<2x5x28xf32>, vector<2x5x28xf32> -> vector<2x5x28xf32>
    "tpu.trace_stop"() : () -> ()
    %61 = vector.extract_strided_slice %34 {offsets = [0, 28], sizes = [10, 28], strides = [1, 1]} : vector<10x224xf32> to vector<10x28xf32>
    %62 = vector.shape_cast %61 : vector<10x28xf32> to vector<2x5x28xf32>
    %63 = vector.extract_strided_slice %38 {offsets = [0, 28], sizes = [10, 28], strides = [1, 1]} : vector<10x224xf32> to vector<10x28xf32>
    %64 = vector.shape_cast %63 : vector<10x28xf32> to vector<2x5x28xf32>
    %65 = vector.extract_strided_slice %42 {offsets = [0, 28], sizes = [10, 28], strides = [1, 1]} : vector<10x224xf32> to vector<10x28xf32>
    %66 = vector.shape_cast %65 : vector<10x28xf32> to vector<2x5x28xf32>
    "tpu.trace_start"() <{level = 10 : i32, message = "bqd,bkd->bqk"}> : () -> ()
    %cst_23 = arith.constant dense<0.000000e+00> : vector<2x5x5xf32>
    %67 = tpu.matmul %62, %64, %cst_23 {dimension_numbers = #tpu.dot_dimension_numbers<[2], [2], [1], [1], [0, 0, 0, 1, 1, 1], [0], [0]>} : vector<2x5x28xf32>, vector<2x5x28xf32>, vector<2x5x5xf32> -> vector<2x5x5xf32>
    "tpu.trace_stop"() : () -> ()
    %cst_24 = arith.constant dense<0xFF800000> : vector<2x5xf32>
    %68 = vector.multi_reduction <maximumf>, %67, %cst_24 [2] : vector<2x5x5xf32> to vector<2x5xf32>
    %69 = vector.shape_cast %68 : vector<2x5xf32> to vector<2x5x1xf32>
    %70 = vector.broadcast %69 : vector<2x5x1xf32> to vector<2x5x5xf32>
    %71 = arith.subf %67, %70 : vector<2x5x5xf32>
    %72 = math.exp %71 : vector<2x5x5xf32>
    %cst_25 = arith.constant dense<0.000000e+00> : vector<2x5xf32>
    %73 = vector.multi_reduction <add>, %72, %cst_25 [2] : vector<2x5x5xf32> to vector<2x5xf32>
    %74 = vector.shape_cast %73 : vector<2x5xf32> to vector<2x5x1xf32>
    %75 = tpu.reciprocal %74 {approx = true} : vector<2x5x1xf32> -> vector<2x5x1xf32>
    %76 = vector.broadcast %75 : vector<2x5x1xf32> to vector<2x5x5xf32>
    %77 = arith.mulf %72, %76 : vector<2x5x5xf32>
    "tpu.trace_start"() <{level = 10 : i32, message = "bqk,bkd->bqd"}> : () -> ()
    %cst_26 = arith.constant dense<0.000000e+00> : vector<2x5x28xf32>
    %78 = tpu.matmul %77, %66, %cst_26 {dimension_numbers = #tpu.dot_dimension_numbers<[2], [1], [1], [2], [0, 0, 0, 1, 1, 2], [0], [0]>} : vector<2x5x5xf32>, vector<2x5x28xf32>, vector<2x5x28xf32> -> vector<2x5x28xf32>
    "tpu.trace_stop"() : () -> ()
    %79 = vector.extract_strided_slice %34 {offsets = [0, 56], sizes = [10, 28], strides = [1, 1]} : vector<10x224xf32> to vector<10x28xf32>
    %80 = vector.shape_cast %79 : vector<10x28xf32> to vector<2x5x28xf32>
    %81 = vector.extract_strided_slice %38 {offsets = [0, 56], sizes = [10, 28], strides = [1, 1]} : vector<10x224xf32> to vector<10x28xf32>
    %82 = vector.shape_cast %81 : vector<10x28xf32> to vector<2x5x28xf32>
    %83 = vector.extract_strided_slice %42 {offsets = [0, 56], sizes = [10, 28], strides = [1, 1]} : vector<10x224xf32> to vector<10x28xf32>
    %84 = vector.shape_cast %83 : vector<10x28xf32> to vector<2x5x28xf32>
    "tpu.trace_start"() <{level = 10 : i32, message = "bqd,bkd->bqk"}> : () -> ()
    %cst_27 = arith.constant dense<0.000000e+00> : vector<2x5x5xf32>
    %85 = tpu.matmul %80, %82, %cst_27 {dimension_numbers = #tpu.dot_dimension_numbers<[2], [2], [1], [1], [0, 0, 0, 1, 1, 1], [0], [0]>} : vector<2x5x28xf32>, vector<2x5x28xf32>, vector<2x5x5xf32> -> vector<2x5x5xf32>
    "tpu.trace_stop"() : () -> ()
    %cst_28 = arith.constant dense<0xFF800000> : vector<2x5xf32>
    %86 = vector.multi_reduction <maximumf>, %85, %cst_28 [2] : vector<2x5x5xf32> to vector<2x5xf32>
    %87 = vector.shape_cast %86 : vector<2x5xf32> to vector<2x5x1xf32>
    %88 = vector.broadcast %87 : vector<2x5x1xf32> to vector<2x5x5xf32>
    %89 = arith.subf %85, %88 : vector<2x5x5xf32>
    %90 = math.exp %89 : vector<2x5x5xf32>
    %cst_29 = arith.constant dense<0.000000e+00> : vector<2x5xf32>
    %91 = vector.multi_reduction <add>, %90, %cst_29 [2] : vector<2x5x5xf32> to vector<2x5xf32>
    %92 = vector.shape_cast %91 : vector<2x5xf32> to vector<2x5x1xf32>
    %93 = tpu.reciprocal %92 {approx = true} : vector<2x5x1xf32> -> vector<2x5x1xf32>
    %94 = vector.broadcast %93 : vector<2x5x1xf32> to vector<2x5x5xf32>
    %95 = arith.mulf %90, %94 : vector<2x5x5xf32>
    "tpu.trace_start"() <{level = 10 : i32, message = "bqk,bkd->bqd"}> : () -> ()
    %cst_30 = arith.constant dense<0.000000e+00> : vector<2x5x28xf32>
    %96 = tpu.matmul %95, %84, %cst_30 {dimension_numbers = #tpu.dot_dimension_numbers<[2], [1], [1], [2], [0, 0, 0, 1, 1, 2], [0], [0]>} : vector<2x5x5xf32>, vector<2x5x28xf32>, vector<2x5x28xf32> -> vector<2x5x28xf32>
    "tpu.trace_stop"() : () -> ()
    %97 = vector.extract_strided_slice %34 {offsets = [0, 84], sizes = [10, 28], strides = [1, 1]} : vector<10x224xf32> to vector<10x28xf32>
    %98 = vector.shape_cast %97 : vector<10x28xf32> to vector<2x5x28xf32>
    %99 = vector.extract_strided_slice %38 {offsets = [0, 84], sizes = [10, 28], strides = [1, 1]} : vector<10x224xf32> to vector<10x28xf32>
    %100 = vector.shape_cast %99 : vector<10x28xf32> to vector<2x5x28xf32>
    %101 = vector.extract_strided_slice %42 {offsets = [0, 84], sizes = [10, 28], strides = [1, 1]} : vector<10x224xf32> to vector<10x28xf32>
    %102 = vector.shape_cast %101 : vector<10x28xf32> to vector<2x5x28xf32>
    "tpu.trace_start"() <{level = 10 : i32, message = "bqd,bkd->bqk"}> : () -> ()
    %cst_31 = arith.constant dense<0.000000e+00> : vector<2x5x5xf32>
    %103 = tpu.matmul %98, %100, %cst_31 {dimension_numbers = #tpu.dot_dimension_numbers<[2], [2], [1], [1], [0, 0, 0, 1, 1, 1], [0], [0]>} : vector<2x5x28xf32>, vector<2x5x28xf32>, vector<2x5x5xf32> -> vector<2x5x5xf32>
    "tpu.trace_stop"() : () -> ()
    %cst_32 = arith.constant dense<0xFF800000> : vector<2x5xf32>
    %104 = vector.multi_reduction <maximumf>, %103, %cst_32 [2] : vector<2x5x5xf32> to vector<2x5xf32>
    %105 = vector.shape_cast %104 : vector<2x5xf32> to vector<2x5x1xf32>
    %106 = vector.broadcast %105 : vector<2x5x1xf32> to vector<2x5x5xf32>
    %107 = arith.subf %103, %106 : vector<2x5x5xf32>
    %108 = math.exp %107 : vector<2x5x5xf32>
    %cst_33 = arith.constant dense<0.000000e+00> : vector<2x5xf32>
    %109 = vector.multi_reduction <add>, %108, %cst_33 [2] : vector<2x5x5xf32> to vector<2x5xf32>
    %110 = vector.shape_cast %109 : vector<2x5xf32> to vector<2x5x1xf32>
    %111 = tpu.reciprocal %110 {approx = true} : vector<2x5x1xf32> -> vector<2x5x1xf32>
    %112 = vector.broadcast %111 : vector<2x5x1xf32> to vector<2x5x5xf32>
    %113 = arith.mulf %108, %112 : vector<2x5x5xf32>
    "tpu.trace_start"() <{level = 10 : i32, message = "bqk,bkd->bqd"}> : () -> ()
    %cst_34 = arith.constant dense<0.000000e+00> : vector<2x5x28xf32>
    %114 = tpu.matmul %113, %102, %cst_34 {dimension_numbers = #tpu.dot_dimension_numbers<[2], [1], [1], [2], [0, 0, 0, 1, 1, 2], [0], [0]>} : vector<2x5x5xf32>, vector<2x5x28xf32>, vector<2x5x28xf32> -> vector<2x5x28xf32>
    "tpu.trace_stop"() : () -> ()
    %115 = vector.extract_strided_slice %34 {offsets = [0, 112], sizes = [10, 28], strides = [1, 1]} : vector<10x224xf32> to vector<10x28xf32>
    %116 = vector.shape_cast %115 : vector<10x28xf32> to vector<2x5x28xf32>
    %117 = vector.extract_strided_slice %38 {offsets = [0, 112], sizes = [10, 28], strides = [1, 1]} : vector<10x224xf32> to vector<10x28xf32>
    %118 = vector.shape_cast %117 : vector<10x28xf32> to vector<2x5x28xf32>
    %119 = vector.extract_strided_slice %42 {offsets = [0, 112], sizes = [10, 28], strides = [1, 1]} : vector<10x224xf32> to vector<10x28xf32>
    %120 = vector.shape_cast %119 : vector<10x28xf32> to vector<2x5x28xf32>
    "tpu.trace_start"() <{level = 10 : i32, message = "bqd,bkd->bqk"}> : () -> ()
    %cst_35 = arith.constant dense<0.000000e+00> : vector<2x5x5xf32>
    %121 = tpu.matmul %116, %118, %cst_35 {dimension_numbers = #tpu.dot_dimension_numbers<[2], [2], [1], [1], [0, 0, 0, 1, 1, 1], [0], [0]>} : vector<2x5x28xf32>, vector<2x5x28xf32>, vector<2x5x5xf32> -> vector<2x5x5xf32>
    "tpu.trace_stop"() : () -> ()
    %cst_36 = arith.constant dense<0xFF800000> : vector<2x5xf32>
    %122 = vector.multi_reduction <maximumf>, %121, %cst_36 [2] : vector<2x5x5xf32> to vector<2x5xf32>
    %123 = vector.shape_cast %122 : vector<2x5xf32> to vector<2x5x1xf32>
    %124 = vector.broadcast %123 : vector<2x5x1xf32> to vector<2x5x5xf32>
    %125 = arith.subf %121, %124 : vector<2x5x5xf32>
    %126 = math.exp %125 : vector<2x5x5xf32>
    %cst_37 = arith.constant dense<0.000000e+00> : vector<2x5xf32>
    %127 = vector.multi_reduction <add>, %126, %cst_37 [2] : vector<2x5x5xf32> to vector<2x5xf32>
    %128 = vector.shape_cast %127 : vector<2x5xf32> to vector<2x5x1xf32>
    %129 = tpu.reciprocal %128 {approx = true} : vector<2x5x1xf32> -> vector<2x5x1xf32>
    %130 = vector.broadcast %129 : vector<2x5x1xf32> to vector<2x5x5xf32>
    %131 = arith.mulf %126, %130 : vector<2x5x5xf32>
    "tpu.trace_start"() <{level = 10 : i32, message = "bqk,bkd->bqd"}> : () -> ()
    %cst_38 = arith.constant dense<0.000000e+00> : vector<2x5x28xf32>
    %132 = tpu.matmul %131, %120, %cst_38 {dimension_numbers = #tpu.dot_dimension_numbers<[2], [1], [1], [2], [0, 0, 0, 1, 1, 2], [0], [0]>} : vector<2x5x5xf32>, vector<2x5x28xf32>, vector<2x5x28xf32> -> vector<2x5x28xf32>
    "tpu.trace_stop"() : () -> ()
    %133 = vector.extract_strided_slice %34 {offsets = [0, 140], sizes = [10, 28], strides = [1, 1]} : vector<10x224xf32> to vector<10x28xf32>
    %134 = vector.shape_cast %133 : vector<10x28xf32> to vector<2x5x28xf32>
    %135 = vector.extract_strided_slice %38 {offsets = [0, 140], sizes = [10, 28], strides = [1, 1]} : vector<10x224xf32> to vector<10x28xf32>
    %136 = vector.shape_cast %135 : vector<10x28xf32> to vector<2x5x28xf32>
    %137 = vector.extract_strided_slice %42 {offsets = [0, 140], sizes = [10, 28], strides = [1, 1]} : vector<10x224xf32> to vector<10x28xf32>
    %138 = vector.shape_cast %137 : vector<10x28xf32> to vector<2x5x28xf32>
    "tpu.trace_start"() <{level = 10 : i32, message = "bqd,bkd->bqk"}> : () -> ()
    %cst_39 = arith.constant dense<0.000000e+00> : vector<2x5x5xf32>
    %139 = tpu.matmul %134, %136, %cst_39 {dimension_numbers = #tpu.dot_dimension_numbers<[2], [2], [1], [1], [0, 0, 0, 1, 1, 1], [0], [0]>} : vector<2x5x28xf32>, vector<2x5x28xf32>, vector<2x5x5xf32> -> vector<2x5x5xf32>
    "tpu.trace_stop"() : () -> ()
    %cst_40 = arith.constant dense<0xFF800000> : vector<2x5xf32>
    %140 = vector.multi_reduction <maximumf>, %139, %cst_40 [2] : vector<2x5x5xf32> to vector<2x5xf32>
    %141 = vector.shape_cast %140 : vector<2x5xf32> to vector<2x5x1xf32>
    %142 = vector.broadcast %141 : vector<2x5x1xf32> to vector<2x5x5xf32>
    %143 = arith.subf %139, %142 : vector<2x5x5xf32>
    %144 = math.exp %143 : vector<2x5x5xf32>
    %cst_41 = arith.constant dense<0.000000e+00> : vector<2x5xf32>
    %145 = vector.multi_reduction <add>, %144, %cst_41 [2] : vector<2x5x5xf32> to vector<2x5xf32>
    %146 = vector.shape_cast %145 : vector<2x5xf32> to vector<2x5x1xf32>
    %147 = tpu.reciprocal %146 {approx = true} : vector<2x5x1xf32> -> vector<2x5x1xf32>
    %148 = vector.broadcast %147 : vector<2x5x1xf32> to vector<2x5x5xf32>
    %149 = arith.mulf %144, %148 : vector<2x5x5xf32>
    "tpu.trace_start"() <{level = 10 : i32, message = "bqk,bkd->bqd"}> : () -> ()
    %cst_42 = arith.constant dense<0.000000e+00> : vector<2x5x28xf32>
    %150 = tpu.matmul %149, %138, %cst_42 {dimension_numbers = #tpu.dot_dimension_numbers<[2], [1], [1], [2], [0, 0, 0, 1, 1, 2], [0], [0]>} : vector<2x5x5xf32>, vector<2x5x28xf32>, vector<2x5x28xf32> -> vector<2x5x28xf32>
    "tpu.trace_stop"() : () -> ()
    %151 = vector.extract_strided_slice %34 {offsets = [0, 168], sizes = [10, 28], strides = [1, 1]} : vector<10x224xf32> to vector<10x28xf32>
    %152 = vector.shape_cast %151 : vector<10x28xf32> to vector<2x5x28xf32>
    %153 = vector.extract_strided_slice %38 {offsets = [0, 168], sizes = [10, 28], strides = [1, 1]} : vector<10x224xf32> to vector<10x28xf32>
    %154 = vector.shape_cast %153 : vector<10x28xf32> to vector<2x5x28xf32>
    %155 = vector.extract_strided_slice %42 {offsets = [0, 168], sizes = [10, 28], strides = [1, 1]} : vector<10x224xf32> to vector<10x28xf32>
    %156 = vector.shape_cast %155 : vector<10x28xf32> to vector<2x5x28xf32>
    "tpu.trace_start"() <{level = 10 : i32, message = "bqd,bkd->bqk"}> : () -> ()
    %cst_43 = arith.constant dense<0.000000e+00> : vector<2x5x5xf32>
    %157 = tpu.matmul %152, %154, %cst_43 {dimension_numbers = #tpu.dot_dimension_numbers<[2], [2], [1], [1], [0, 0, 0, 1, 1, 1], [0], [0]>} : vector<2x5x28xf32>, vector<2x5x28xf32>, vector<2x5x5xf32> -> vector<2x5x5xf32>
    "tpu.trace_stop"() : () -> ()
    %cst_44 = arith.constant dense<0xFF800000> : vector<2x5xf32>
    %158 = vector.multi_reduction <maximumf>, %157, %cst_44 [2] : vector<2x5x5xf32> to vector<2x5xf32>
    %159 = vector.shape_cast %158 : vector<2x5xf32> to vector<2x5x1xf32>
    %160 = vector.broadcast %159 : vector<2x5x1xf32> to vector<2x5x5xf32>
    %161 = arith.subf %157, %160 : vector<2x5x5xf32>
    %162 = math.exp %161 : vector<2x5x5xf32>
    %cst_45 = arith.constant dense<0.000000e+00> : vector<2x5xf32>
    %163 = vector.multi_reduction <add>, %162, %cst_45 [2] : vector<2x5x5xf32> to vector<2x5xf32>
    %164 = vector.shape_cast %163 : vector<2x5xf32> to vector<2x5x1xf32>
    %165 = tpu.reciprocal %164 {approx = true} : vector<2x5x1xf32> -> vector<2x5x1xf32>
    %166 = vector.broadcast %165 : vector<2x5x1xf32> to vector<2x5x5xf32>
    %167 = arith.mulf %162, %166 : vector<2x5x5xf32>
    "tpu.trace_start"() <{level = 10 : i32, message = "bqk,bkd->bqd"}> : () -> ()
    %cst_46 = arith.constant dense<0.000000e+00> : vector<2x5x28xf32>
    %168 = tpu.matmul %167, %156, %cst_46 {dimension_numbers = #tpu.dot_dimension_numbers<[2], [1], [1], [2], [0, 0, 0, 1, 1, 2], [0], [0]>} : vector<2x5x5xf32>, vector<2x5x28xf32>, vector<2x5x28xf32> -> vector<2x5x28xf32>
    "tpu.trace_stop"() : () -> ()
    %169 = vector.extract_strided_slice %34 {offsets = [0, 196], sizes = [10, 28], strides = [1, 1]} : vector<10x224xf32> to vector<10x28xf32>
    %170 = vector.shape_cast %169 : vector<10x28xf32> to vector<2x5x28xf32>
    %171 = vector.extract_strided_slice %38 {offsets = [0, 196], sizes = [10, 28], strides = [1, 1]} : vector<10x224xf32> to vector<10x28xf32>
    %172 = vector.shape_cast %171 : vector<10x28xf32> to vector<2x5x28xf32>
    %173 = vector.extract_strided_slice %42 {offsets = [0, 196], sizes = [10, 28], strides = [1, 1]} : vector<10x224xf32> to vector<10x28xf32>
    %174 = vector.shape_cast %173 : vector<10x28xf32> to vector<2x5x28xf32>
    "tpu.trace_start"() <{level = 10 : i32, message = "bqd,bkd->bqk"}> : () -> ()
    %cst_47 = arith.constant dense<0.000000e+00> : vector<2x5x5xf32>
    %175 = tpu.matmul %170, %172, %cst_47 {dimension_numbers = #tpu.dot_dimension_numbers<[2], [2], [1], [1], [0, 0, 0, 1, 1, 1], [0], [0]>} : vector<2x5x28xf32>, vector<2x5x28xf32>, vector<2x5x5xf32> -> vector<2x5x5xf32>
    "tpu.trace_stop"() : () -> ()
    %cst_48 = arith.constant dense<0xFF800000> : vector<2x5xf32>
    %176 = vector.multi_reduction <maximumf>, %175, %cst_48 [2] : vector<2x5x5xf32> to vector<2x5xf32>
    %177 = vector.shape_cast %176 : vector<2x5xf32> to vector<2x5x1xf32>
    %178 = vector.broadcast %177 : vector<2x5x1xf32> to vector<2x5x5xf32>
    %179 = arith.subf %175, %178 : vector<2x5x5xf32>
    %180 = math.exp %179 : vector<2x5x5xf32>
    %cst_49 = arith.constant dense<0.000000e+00> : vector<2x5xf32>
    %181 = vector.multi_reduction <add>, %180, %cst_49 [2] : vector<2x5x5xf32> to vector<2x5xf32>
    %182 = vector.shape_cast %181 : vector<2x5xf32> to vector<2x5x1xf32>
    %183 = tpu.reciprocal %182 {approx = true} : vector<2x5x1xf32> -> vector<2x5x1xf32>
    %184 = vector.broadcast %183 : vector<2x5x1xf32> to vector<2x5x5xf32>
    %185 = arith.mulf %180, %184 : vector<2x5x5xf32>
    "tpu.trace_start"() <{level = 10 : i32, message = "bqk,bkd->bqd"}> : () -> ()
    %cst_50 = arith.constant dense<0.000000e+00> : vector<2x5x28xf32>
    %186 = tpu.matmul %185, %174, %cst_50 {dimension_numbers = #tpu.dot_dimension_numbers<[2], [1], [1], [2], [0, 0, 0, 1, 1, 2], [0], [0]>} : vector<2x5x5xf32>, vector<2x5x28xf32>, vector<2x5x28xf32> -> vector<2x5x28xf32>
    "tpu.trace_stop"() : () -> ()
    %187 = tpu.concatenate %60, %78, %96, %114, %132, %150, %168, %186 in 2 : vector<2x5x28xf32>, vector<2x5x28xf32>, vector<2x5x28xf32>, vector<2x5x28xf32>, vector<2x5x28xf32>, vector<2x5x28xf32>, vector<2x5x28xf32>, vector<2x5x28xf32> -> vector<2x5x224xf32>
    %188 = vector.shape_cast %187 : vector<2x5x224xf32> to vector<10x224xf32>
    %189 = arith.truncf %188 : vector<10x224xf32> to vector<10x224xbf16>
    %190 = arith.index_cast %arg1 : i32 to index
    %c0_51 = arith.constant 0 : index
    %c0_52 = arith.constant 0 : index
    %191 = vector.load %arg6[%190, %c0_51, %c0_52] : memref<6x224x224xbf16, #tpu.memory_space<vmem>>, vector<1x224x224xbf16>
    %192 = vector.shape_cast %191 : vector<1x224x224xbf16> to vector<224x224xbf16>
    %cst_53 = arith.constant dense<0.000000e+00> : vector<10x224xf32>
    %193 = tpu.matmul %189, %192, %cst_53 {dimension_numbers = #tpu.dot_dimension_numbers<[1], [0], [0], [1], [0, 0, 1, 1], [], []>} : vector<10x224xbf16>, vector<224x224xbf16>, vector<10x224xf32> -> vector<10x224xf32>
    %194 = arith.index_cast %arg1 : i32 to index
    %c0_54 = arith.constant 0 : index
    %c0_55 = arith.constant 0 : index
    %195 = vector.load %arg7[%194, %c0_54, %c0_55] : memref<6x1x224xf32, #tpu.memory_space<vmem>>, vector<1x1x224xf32>
    %196 = vector.shape_cast %195 : vector<1x1x224xf32> to vector<1x224xf32>
    %197 = vector.broadcast %196 : vector<1x224xf32> to vector<10x224xf32>
    %198 = arith.addf %193, %197 : vector<10x224xf32>
    %199 = arith.addf %3, %198 : vector<10x224xf32>
    %200 = arith.index_cast %arg1 : i32 to index
    %c0_56 = arith.constant 0 : index
    %c0_57 = arith.constant 0 : index
    %201 = vector.load %arg10[%200, %c0_56, %c0_57] : memref<6x1x224xf32, #tpu.memory_space<vmem>>, vector<1x1x224xf32>
    %202 = vector.shape_cast %201 : vector<1x1x224xf32> to vector<1x224xf32>
    %203 = arith.index_cast %arg1 : i32 to index
    %c0_58 = arith.constant 0 : index
    %c0_59 = arith.constant 0 : index
    %204 = vector.load %arg11[%203, %c0_58, %c0_59] : memref<6x1x224xf32, #tpu.memory_space<vmem>>, vector<1x1x224xf32>
    %205 = vector.shape_cast %204 : vector<1x1x224xf32> to vector<1x224xf32>
    %cst_60 = arith.constant dense<0.000000e+00> : vector<10xf32>
    %206 = vector.multi_reduction <add>, %199, %cst_60 [1] : vector<10x224xf32> to vector<10xf32>
    %207 = vector.shape_cast %206 : vector<10xf32> to vector<10x1xf32>
    %cst_61 = arith.constant 2.240000e+02 : f32
    %208 = vector.broadcast %cst_61 : f32 to vector<10x1xf32>
    %209 = arith.divf %207, %208 : vector<10x1xf32>
    %210 = vector.broadcast %209 : vector<10x1xf32> to vector<10x224xf32>
    %211 = arith.subf %199, %210 : vector<10x224xf32>
    %212 = arith.mulf %211, %211 : vector<10x224xf32>
    %cst_62 = arith.constant dense<0.000000e+00> : vector<10xf32>
    %213 = vector.multi_reduction <add>, %212, %cst_62 [1] : vector<10x224xf32> to vector<10xf32>
    %214 = vector.shape_cast %213 : vector<10xf32> to vector<10x1xf32>
    %cst_63 = arith.constant 2.240000e+02 : f32
    %215 = vector.broadcast %cst_63 : f32 to vector<10x1xf32>
    %216 = arith.divf %214, %215 : vector<10x1xf32>
    %cst_64 = arith.constant 9.99999974E-6 : f32
    %217 = vector.broadcast %cst_64 : f32 to vector<10x1xf32>
    %218 = arith.addf %216, %217 : vector<10x1xf32>
    %219 = math.rsqrt %218 : vector<10x1xf32>
    %220 = vector.broadcast %219 : vector<10x1xf32> to vector<10x224xf32>
    %221 = arith.mulf %211, %220 : vector<10x224xf32>
    %222 = vector.broadcast %202 : vector<1x224xf32> to vector<10x224xf32>
    %223 = arith.mulf %221, %222 : vector<10x224xf32>
    %224 = vector.broadcast %205 : vector<1x224xf32> to vector<10x224xf32>
    %225 = arith.addf %223, %224 : vector<10x224xf32>
    %226 = arith.truncf %225 : vector<10x224xf32> to vector<10x224xbf16>
    %227 = arith.index_cast %arg1 : i32 to index
    %c0_65 = arith.constant 0 : index
    %c0_66 = arith.constant 0 : index
    %228 = vector.load %arg12[%227, %c0_65, %c0_66] : memref<6x224x2048xbf16, #tpu.memory_space<vmem>>, vector<1x224x2048xbf16>
    %229 = vector.shape_cast %228 : vector<1x224x2048xbf16> to vector<224x2048xbf16>
    %cst_67 = arith.constant dense<0.000000e+00> : vector<10x2048xf32>
    %230 = tpu.matmul %226, %229, %cst_67 {dimension_numbers = #tpu.dot_dimension_numbers<[1], [0], [0], [1], [0, 0, 1, 1], [], []>} : vector<10x224xbf16>, vector<224x2048xbf16>, vector<10x2048xf32> -> vector<10x2048xf32>
    %231 = arith.index_cast %arg1 : i32 to index
    %c0_68 = arith.constant 0 : index
    %c0_69 = arith.constant 0 : index
    %232 = vector.load %arg13[%231, %c0_68, %c0_69] : memref<6x1x2048xf32, #tpu.memory_space<vmem>>, vector<1x1x2048xf32>
    %233 = vector.shape_cast %232 : vector<1x1x2048xf32> to vector<1x2048xf32>
    %234 = vector.broadcast %233 : vector<1x2048xf32> to vector<10x2048xf32>
    %235 = arith.addf %230, %234 : vector<10x2048xf32>
    %236 = arith.truncf %235 : vector<10x2048xf32> to vector<10x2048xbf16>
    %237 = arith.mulf %236, %236 : vector<10x2048xbf16>
    %238 = arith.mulf %236, %237 : vector<10x2048xbf16>
    %cst_70 = arith.constant 4.467770e-02 : bf16
    %239 = vector.broadcast %cst_70 : bf16 to vector<10x2048xbf16>
    %240 = arith.mulf %239, %238 : vector<10x2048xbf16>
    %241 = arith.addf %236, %240 : vector<10x2048xbf16>
    %cst_71 = arith.constant 7.968750e-01 : bf16
    %242 = vector.broadcast %cst_71 : bf16 to vector<10x2048xbf16>
    %243 = arith.mulf %242, %241 : vector<10x2048xbf16>
    %244 = math.tanh %243 : vector<10x2048xbf16>
    %cst_72 = arith.constant 1.000000e+00 : bf16
    %245 = vector.broadcast %cst_72 : bf16 to vector<10x2048xbf16>
    %246 = arith.addf %245, %244 : vector<10x2048xbf16>
    %cst_73 = arith.constant 5.000000e-01 : bf16
    %247 = vector.broadcast %cst_73 : bf16 to vector<10x2048xbf16>
    %248 = arith.mulf %247, %246 : vector<10x2048xbf16>
    %249 = arith.mulf %236, %248 : vector<10x2048xbf16>
    %250 = arith.index_cast %arg1 : i32 to index
    %c0_74 = arith.constant 0 : index
    %c0_75 = arith.constant 0 : index
    %251 = vector.load %arg14[%250, %c0_74, %c0_75] : memref<6x2048x224xbf16, #tpu.memory_space<vmem>>, vector<1x2048x224xbf16>
    %252 = vector.shape_cast %251 : vector<1x2048x224xbf16> to vector<2048x224xbf16>
    %cst_76 = arith.constant dense<0.000000e+00> : vector<10x224xf32>
    %253 = tpu.matmul %249, %252, %cst_76 {dimension_numbers = #tpu.dot_dimension_numbers<[1], [0], [0], [1], [0, 0, 1, 1], [], []>} : vector<10x2048xbf16>, vector<2048x224xbf16>, vector<10x224xf32> -> vector<10x224xf32>
    %254 = arith.index_cast %arg1 : i32 to index
    %c0_77 = arith.constant 0 : index
    %c0_78 = arith.constant 0 : index
    %255 = vector.load %arg15[%254, %c0_77, %c0_78] : memref<6x1x224xf32, #tpu.memory_space<vmem>>, vector<1x1x224xf32>
    %256 = vector.shape_cast %255 : vector<1x1x224xf32> to vector<1x224xf32>
    %257 = vector.broadcast %256 : vector<1x224xf32> to vector<10x224xf32>
    %258 = arith.addf %253, %257 : vector<10x224xf32>
    %259 = arith.addf %199, %258 : vector<10x224xf32>
    %c0_79 = arith.constant 0 : index
    %c0_80 = arith.constant 0 : index
    %260 = vector.load %arg16[%c0_79, %c0_80] : memref<10x224xf32, #tpu.memory_space<vmem>>, vector<10x224xf32>
    tpu.vector_store %arg16[%c0_79, %c0_80], %259 {strides = array<i32>} : memref<10x224xf32, #tpu.memory_space<vmem>>, vector<10x224xf32>,
    return
  }
  func.func @transform_0(%arg0: i32, %arg1: i32) -> (i32, i32) {
    %c0_i32 = arith.constant 0 : i32
    %c0_i32_0 = arith.constant 0 : i32
    return %arg0, %c0_i32 : i32, i32
  }
  func.func @transform_1(%arg0: i32, %arg1: i32) -> (i32, i32, i32) {
    %c0_i32 = arith.constant 0 : i32
    %c0_i32_0 = arith.constant 0 : i32
    %c0_i32_1 = arith.constant 0 : i32
    %c0_i32_2 = arith.constant 0 : i32
    return %c0_i32, %c0_i32_0, %c0_i32_1 : i32, i32, i32
  }
  func.func @transform_2(%arg0: i32, %arg1: i32) -> (i32, i32, i32) {
    %c0_i32 = arith.constant 0 : i32
    %c0_i32_0 = arith.constant 0 : i32
    %c0_i32_1 = arith.constant 0 : i32
    %c0_i32_2 = arith.constant 0 : i32
    return %c0_i32, %c0_i32_0, %c0_i32_1 : i32, i32, i32
  }
  func.func @transform_3(%arg0: i32, %arg1: i32) -> (i32, i32, i32) {
    %c0_i32 = arith.constant 0 : i32
    %c0_i32_0 = arith.constant 0 : i32
    %c0_i32_1 = arith.constant 0 : i32
    %c0_i32_2 = arith.constant 0 : i32
    return %c0_i32, %c0_i32_0, %c0_i32_1 : i32, i32, i32
  }
  func.func @transform_4(%arg0: i32, %arg1: i32) -> (i32, i32, i32) {
    %c0_i32 = arith.constant 0 : i32
    %c0_i32_0 = arith.constant 0 : i32
    %c0_i32_1 = arith.constant 0 : i32
    %c0_i32_2 = arith.constant 0 : i32
    return %c0_i32, %c0_i32_0, %c0_i32_1 : i32, i32, i32
  }
  func.func @transform_5(%arg0: i32, %arg1: i32) -> (i32, i32, i32) {
    %c0_i32 = arith.constant 0 : i32
    %c0_i32_0 = arith.constant 0 : i32
    %c0_i32_1 = arith.constant 0 : i32
    %c0_i32_2 = arith.constant 0 : i32
    return %c0_i32, %c0_i32_0, %c0_i32_1 : i32, i32, i32
  }
  func.func @transform_6(%arg0: i32, %arg1: i32) -> (i32, i32, i32) {
    %c0_i32 = arith.constant 0 : i32
    %c0_i32_0 = arith.constant 0 : i32
    %c0_i32_1 = arith.constant 0 : i32
    %c0_i32_2 = arith.constant 0 : i32
    return %c0_i32, %c0_i32_0, %c0_i32_1 : i32, i32, i32
  }
  func.func @transform_7(%arg0: i32, %arg1: i32) -> (i32, i32, i32) {
    %c0_i32 = arith.constant 0 : i32
    %c0_i32_0 = arith.constant 0 : i32
    %c0_i32_1 = arith.constant 0 : i32
    %c0_i32_2 = arith.constant 0 : i32
    return %c0_i32, %c0_i32_0, %c0_i32_1 : i32, i32, i32
  }
  func.func @transform_8(%arg0: i32, %arg1: i32) -> (i32, i32, i32) {
    %c0_i32 = arith.constant 0 : i32
    %c0_i32_0 = arith.constant 0 : i32
    %c0_i32_1 = arith.constant 0 : i32
    %c0_i32_2 = arith.constant 0 : i32
    return %c0_i32, %c0_i32_0, %c0_i32_1 : i32, i32, i32
  }
  func.func @transform_9(%arg0: i32, %arg1: i32) -> (i32, i32, i32) {
    %c0_i32 = arith.constant 0 : i32
    %c0_i32_0 = arith.constant 0 : i32
    %c0_i32_1 = arith.constant 0 : i32
    %c0_i32_2 = arith.constant 0 : i32
    return %c0_i32, %c0_i32_0, %c0_i32_1 : i32, i32, i32
  }
  func.func @transform_10(%arg0: i32, %arg1: i32) -> (i32, i32, i32) {
    %c0_i32 = arith.constant 0 : i32
    %c0_i32_0 = arith.constant 0 : i32
    %c0_i32_1 = arith.constant 0 : i32
    %c0_i32_2 = arith.constant 0 : i32
    return %c0_i32, %c0_i32_0, %c0_i32_1 : i32, i32, i32
  }
  func.func @transform_11(%arg0: i32, %arg1: i32) -> (i32, i32, i32) {
    %c0_i32 = arith.constant 0 : i32
    %c0_i32_0 = arith.constant 0 : i32
    %c0_i32_1 = arith.constant 0 : i32
    %c0_i32_2 = arith.constant 0 : i32
    return %c0_i32, %c0_i32_0, %c0_i32_1 : i32, i32, i32
  }
  func.func @transform_12(%arg0: i32, %arg1: i32) -> (i32, i32, i32) {
    %c0_i32 = arith.constant 0 : i32
    %c0_i32_0 = arith.constant 0 : i32
    %c0_i32_1 = arith.constant 0 : i32
    %c0_i32_2 = arith.constant 0 : i32
    return %c0_i32, %c0_i32_0, %c0_i32_1 : i32, i32, i32
  }
  func.func @transform_13(%arg0: i32, %arg1: i32) -> (i32, i32, i32) {
    %c0_i32 = arith.constant 0 : i32
    %c0_i32_0 = arith.constant 0 : i32
    %c0_i32_1 = arith.constant 0 : i32
    %c0_i32_2 = arith.constant 0 : i32
    return %c0_i32, %c0_i32_0, %c0_i32_1 : i32, i32, i32
  }
  func.func @transform_14(%arg0: i32, %arg1: i32) -> (i32, i32) {
    %c0_i32 = arith.constant 0 : i32
    %c0_i32_0 = arith.constant 0 : i32
    return %arg0, %c0_i32 : i32, i32
  }
}

</mosaic_0001>

<llo_original>
// kernel: jem_forward.5
$region0: #{jem_forward.5}
  #allocation0 [shape = 'u32[]', space=smem, size = 0x4, offset = 0x4, fixed_abs, tag = 'smem constant byte address 0x4 - core index']
  #allocation1 [shape = 'u32[144,128]{1,0:T(1,128)}', space=vmem, size = 0x12000, scoped, tag = 'internal scratch']
  #allocation2 [shape = 'f32[1,1]{1,0:T(1,128)S(1)}', space=vmem, size = 0x200, scoped, tag = 'scoped memory for jem_forward.5']
  %s0 = inlined_call_operand.vmem [shape: f32[2,224], index: 0, kind: input, shape index: {}]
  %s1 = inlined_call_operand.hbm [shape: f32[1,224], index: 1, kind: input, shape index: {}]
  %s2 = inlined_call_operand.hbm [shape: f32[1,224], index: 2, kind: input, shape index: {}]
  %s3 = inlined_call_operand.hbm [shape: f32[1,224], index: 3, kind: input, shape index: {}]
  %s4 = inlined_call_operand.<no memory space> [shape: f32[1,1], index: 4, kind: input, shape index: {}]
  %s5 = inlined_call_operand.vmem [shape: f32[2,1], index: 5, kind: output, shape index: {}]
  %s6 = sld [smem:[#allocation0]]
  $region42: #{jem_forward.5} parent=0
    _
  %s8 = ssub.s32 1, %s6
  %s9 = scalar_select 0, %s8, %s6
  %v10 = vstv %s4
  %11 = vst [vmem:[#allocation2] sm:$0x1] %v10
  $region1: #{jem_forward.5} parent=0
    #allocation3 [shape = 'u8[1024]{0}', space=vmem, size = 0x400, scoped, tag = 'input window, operand 1, single buffered']
    #allocation4 [shape = 's32[1]{0}', space=sflag, size = 0x4, scoped, tag = 'scoped memory for jem_forward.5']
    #allocation5 [shape = 'u8[1024]{0}', space=vmem, size = 0x400, scoped, tag = 'input window, operand 2, single buffered']
    #allocation6 [shape = 's32[1]{0}', space=sflag, size = 0x4, scoped, tag = 'scoped memory for jem_forward.5']
    #allocation7 [shape = 'u8[1024]{0}', space=vmem, size = 0x400, scoped, tag = 'input window, operand 3, single buffered']
    %12 = vsyncpa [#allocation4], 0
    %13 = vsyncpa [#allocation6], 0
    // Predicated region
    $region2: #{jem_forward.5} parent=1 // pred_check
      _
    $region3: #{jem_forward.5} parent=1 // pred_check_branch
      %15 = sbr.rel (0) target = $region5
    $region4: #{jem_forward.5} parent=1 // pred_region
      _
    $region5: #{jem_forward.5} parent=1 // pred_fallthru
      _
    // Predicated region
    $region6: #{jem_forward.5} parent=1 // pred_check
      _
    $region7: #{jem_forward.5} parent=1 // pred_check_branch
      %17 = sbr.rel (0) target = $region9
    $region8: #{jem_forward.5} parent=1 // pred_region
      %s19 = ssub.s32 32, 32
      %20 = vsyncadd [#allocation4], %s19
      %s22 = sshll.u32 [#allocation3], 4
      %s23 = int_to_ptr.vmem [resolvable:$true] %s22
      %25 = dma.hbm_to_vmem [thread:$0]  %s1, 32, %s23, [#allocation4]
    $region9: #{jem_forward.5} parent=1 // pred_fallthru
      _
    // Predicated region
    $region10: #{jem_forward.5} parent=1 // pred_check
      _
    $region11: #{jem_forward.5} parent=1 // pred_check_branch
      %27 = sbr.rel (0) target = $region13
    $region12: #{jem_forward.5} parent=1 // pred_region
      %s29 = ssub.s32 32, 32
      %30 = vsyncadd [#allocation6], %s29
      %s32 = sshll.u32 [#allocation5], 4
      %s33 = int_to_ptr.vmem [resolvable:$true] %s32
      %35 = dma.hbm_to_vmem [thread:$0]  %s2, 32, %s33, [#allocation6]
    $region13: #{jem_forward.5} parent=1 // pred_fallthru
      _
    // Predicated region
    $region14: #{jem_forward.5} parent=1 // pred_check
      _
    $region15: #{jem_forward.5} parent=1 // pred_check_branch
      %37 = sbr.rel (0) target = $region17
    $region16: #{jem_forward.5} parent=1 // pred_region
      %s39 = ssub.s32 32, 32
      %40 = vsyncadd [#allocation6], %s39
      %s42 = sshll.u32 [#allocation7], 4
      %s43 = int_to_ptr.vmem [resolvable:$true] %s42
      %45 = dma.hbm_to_vmem [thread:$0]  %s3, 32, %s43, [#allocation6]
    $region17: #{jem_forward.5} parent=1 // pred_fallthru
      _
    // Predicated region
    $region18: #{jem_forward.5} parent=1 // pred_check
      _
    $region19: #{jem_forward.5} parent=1 // pred_check_branch
      %47 = sbr.rel (0) target = $region21
    $region20: #{jem_forward.5} parent=1 // pred_region
      _
    $region21: #{jem_forward.5} parent=1 // pred_fallthru
      _
    // Predicated region
    $region22: #{jem_forward.5} parent=1 // pred_check
      _
    $region23: #{jem_forward.5} parent=1 // pred_check_branch
      %49 = sbr.rel (0) target = $region25
    $region24: #{jem_forward.5} parent=1 // pred_region
      %50 = dma.done [#allocation4], 32
    $region25: #{jem_forward.5} parent=1 // pred_fallthru
      _
    // Predicated region
    $region26: #{jem_forward.5} parent=1 // pred_check
      _
    $region27: #{jem_forward.5} parent=1 // pred_check_branch
      %52 = sbr.rel (0) target = $region29
    $region28: #{jem_forward.5} parent=1 // pred_region
      %53 = dma.done [#allocation6], 32
    $region29: #{jem_forward.5} parent=1 // pred_fallthru
      _
    // Predicated region
    $region30: #{jem_forward.5} parent=1 // pred_check
      _
    $region31: #{jem_forward.5} parent=1 // pred_check_branch
      %55 = sbr.rel (0) target = $region33
    $region32: #{jem_forward.5} parent=1 // pred_region
      %56 = dma.done [#allocation6], 32
    $region33: #{jem_forward.5} parent=1 // pred_fallthru
      _
    %v57 = vld [vmem:[%s0] sm:$0xf]
    %v58 = vld [vmem:[#allocation3] sm:$0x3]
    %v59 = vld [vmem:[#allocation5] sm:$0x3]
    %v62 = vunpack.c.l.s4 1983009808
    %v63 = vunpack.c.0.s8 %v62
    %v64 = vlaneseq
    %v65 = vshrl.u32 %v64, 7
    %v66 = vsub.s32 %v63, %v65
    %v67 = vrot.slane %v57, %v66
    %v68 = vcombine.high %v67, %v67
    %vm71 = vcmask 1041408
    %v72 = vsel %vm71, %v67, 0.0
    %vm73 = vcmask 779264
    %v74 = vsel %vm73, %v68, 0.0
    %v75 = vadd.f32 %v72, %v74
    %76 = vadd.xlane.f32.xlu0 %v75
    %v77 = vpop.xlane.xlu0 %76
    %v78 = vrcp.pop 224.0
    %v79 = vmul.f32 %v77, %v78
    %v82 = vunpack.c.l.s4 269488144
    %v83 = vunpack.c.0.s8 %v82
    %v84 = vlaneseq
    %v85 = vshrl.u32 %v84, 7
    %v86 = vsub.s32 %v83, %v85
    %v87 = vrot.slane %v79, %v86
    %v89 = vsub.f32 %v57, %v87
    %v90 = vmul.f32 %v89, %v89
    %v93 = vunpack.c.l.s4 1983009808
    %v94 = vunpack.c.0.s8 %v93
    %v95 = vlaneseq
    %v96 = vshrl.u32 %v95, 7
    %v97 = vsub.s32 %v94, %v96
    %v98 = vrot.slane %v90, %v97
    %v99 = vcombine.high %v98, %v98
    %v102 = vsel %vm71, %v98, 0.0
    %v103 = vsel %vm73, %v99, 0.0
    %v104 = vadd.f32 %v102, %v103
    %105 = vadd.xlane.f32.xlu0 %v104
    %v106 = vpop.xlane.xlu0 %105
    %v107 = vmul.f32 %v106, %v78
    %v108 = vadd.f32 %v107, 1e-05
    %v109 = vrsqrt.pop %v108
    %v112 = vunpack.c.l.s4 269488144
    %v113 = vunpack.c.0.s8 %v112
    %v114 = vlaneseq
    %v115 = vshrl.u32 %v114, 7
    %v116 = vsub.s32 %v113, %v115
    %v117 = vrot.slane %v109, %v116
    %v119 = vmul.f32 %v89, %v117
    %v121 = vlaneseq
    %v122 = vshrl.u32 %v121, 7
    %v123 = vsub.s32 0, %v122
    %v124 = vrot.slane %v58, %v123
    %v125 = vlaneseq
    %v126 = vshrl.u32 %v125, 7
    %v127 = vsub.s32 1, %v126
    %v128 = vrot.slane %v58, %v127
    %v129 = vcombine.low %v124, %v128
    %v131 = vunpack.c.l.s4 1983009808
    %v132 = vunpack.c.0.s8 %v131
    %v133 = vlaneseq
    %v134 = vshrl.u32 %v133, 7
    %v135 = vsub.s32 %v132, %v134
    %v136 = vrot.slane %v129, %v135
    %v138 = vmul.f32 %v119, %v136
    %v140 = vlaneseq
    %v141 = vshrl.u32 %v140, 7
    %v142 = vsub.s32 0, %v141
    %v143 = vrot.slane %v59, %v142
    %v144 = vlaneseq
    %v145 = vshrl.u32 %v144, 7
    %v146 = vsub.s32 1, %v145
    %v147 = vrot.slane %v59, %v146
    %v148 = vcombine.low %v143, %v147
    %v150 = vunpack.c.l.s4 1983009808
    %v151 = vunpack.c.0.s8 %v150
    %v152 = vlaneseq
    %v153 = vshrl.u32 %v152, 7
    %v154 = vsub.s32 %v151, %v153
    %v155 = vrot.slane %v148, %v154
    %v157 = vadd.f32 %v138, %v155
    %v158 = vld [vmem:[#allocation7] sm:$0x3]
    %v160 = vlaneseq
    %v161 = vshrl.u32 %v160, 7
    %v162 = vsub.s32 0, %v161
    %v163 = vrot.slane %v158, %v162
    %v164 = vlaneseq
    %v165 = vshrl.u32 %v164, 7
    %v166 = vsub.s32 1, %v165
    %v167 = vrot.slane %v158, %v166
    %v168 = vcombine.low %v163, %v167
    %v170 = vunpack.c.l.s4 1983009808
    %v171 = vunpack.c.0.s8 %v170
    %v172 = vlaneseq
    %v173 = vshrl.u32 %v172, 7
    %v174 = vsub.s32 %v171, %v173
    %v175 = vrot.slane %v168, %v174
    %v177 = vmul.f32 %v157, %v175
    %v180 = vunpack.c.l.s4 1983009808
    %v181 = vunpack.c.0.s8 %v180
    %v182 = vlaneseq
    %v183 = vshrl.u32 %v182, 7
    %v184 = vsub.s32 %v181, %v183
    %v185 = vrot.slane %v177, %v184
    %v186 = vcombine.high %v185, %v185
    %v189 = vsel %vm71, %v185, 0.0
    %v190 = vsel %vm73, %v186, 0.0
    %v191 = vadd.f32 %v189, %v190
    %192 = vadd.xlane.f32.xlu0 %v191
    %v193 = vpop.xlane.xlu0 %192
    %v194 = vld [vmem:[#allocation2] sm:$0x1]
    %v196 = vlaneseq
    %v197 = vshrl.u32 %v196, 7
    %v198 = vsub.s32 0, %v197
    %v199 = vrot.slane %v194, %v198
    %v201 = vadd.f32 %v193, %v199
    %vm202 = vcmask 1024
    %203 = vst.msk [vmem:[%s5] sm:$0x3] %vm202, %v201
    // Predicated region
    $region34: #{jem_forward.5} parent=1 // pred_check
      _
    $region35: #{jem_forward.5} parent=1 // pred_check_branch
      %205 = sbr.rel (0) target = $region37
    $region36: #{jem_forward.5} parent=1 // pred_region
      _
    $region37: #{jem_forward.5} parent=1 // pred_fallthru
      _
    // Predicated region
    $region38: #{jem_forward.5} parent=1 // pred_check
      _
    $region39: #{jem_forward.5} parent=1 // pred_check_branch
      %207 = sbr.rel (0) target = $region41
    $region40: #{jem_forward.5} parent=1 // pred_region
      _
    $region41: #{jem_forward.5} parent=1 // pred_fallthru
      _
    %208 = vsyncpa [#allocation4], 1
    %209 = vsyncpa [#allocation6], 1

// kernel: jem_forward.3
$region0: #{jem_forward.3}
  #allocation0 [shape = 'u32[]', space=smem, size = 0x4, offset = 0x4, fixed_abs, tag = 'smem constant byte address 0x4 - core index']
  #allocation1 [shape = 'u32[144,128]{1,0:T(1,128)}', space=vmem, size = 0x12000, scoped, tag = 'internal scratch']
  %s0 = inlined_call_operand.vmem [shape: f32[8,784], index: 0, kind: input, shape index: {}]
  %s1 = inlined_call_operand.hbm [shape: bf16[784,224], index: 1, kind: input, shape index: {}]
  %s2 = inlined_call_operand.hbm [shape: f32[1,224], index: 2, kind: input, shape index: {}]
  %s3 = inlined_call_operand.vmem [shape: f32[8,224], index: 3, kind: output, shape index: {}]
  %s4 = sld [smem:[#allocation0]]
  $region30: #{jem_forward.3} parent=0
    _
  %s6 = ssub.s32 1, %s4
  %s7 = scalar_select 0, %s6, %s4
  $region1: #{jem_forward.3} parent=0
    #allocation2 [shape = 'u8[401408]{0}', space=vmem, size = 0x62000, scoped, tag = 'input window, operand 1, single buffered']
    #allocation3 [shape = 's32[1]{0}', space=sflag, size = 0x4, scoped, tag = 'scoped memory for jem_forward.3']
    #allocation4 [shape = 'u8[1024]{0}', space=vmem, size = 0x400, scoped, tag = 'input window, operand 2, single buffered']
    #allocation5 [shape = 's32[1]{0}', space=sflag, size = 0x4, scoped, tag = 'scoped memory for jem_forward.3']
    %8 = vsyncpa [#allocation3], 0
    %9 = vsyncpa [#allocation5], 0
    // Predicated region
    $region2: #{jem_forward.3} parent=1 // pred_check
      _
    $region3: #{jem_forward.3} parent=1 // pred_check_branch
      %11 = sbr.rel (0) target = $region5
    $region4: #{jem_forward.3} parent=1 // pred_region
      _
    $region5: #{jem_forward.3} parent=1 // pred_fallthru
      _
    // Predicated region
    $region6: #{jem_forward.3} parent=1 // pred_check
      _
    $region7: #{jem_forward.3} parent=1 // pred_check_branch
      %13 = sbr.rel (0) target = $region9
    $region8: #{jem_forward.3} parent=1 // pred_region
      %s15 = ssub.s32 12544, 12544
      %16 = vsyncadd [#allocation3], %s15
      %s17 = sshll.u32 [#allocation2], 4
      %s18 = int_to_ptr.vmem [resolvable:$true] %s17
      %23 = dma.hbm_to_vmem [thread:$0]  %s1, 12544, %s18, [#allocation3], 128, 128, 8
    $region9: #{jem_forward.3} parent=1 // pred_fallthru
      _
    // Predicated region
    $region10: #{jem_forward.3} parent=1 // pred_check
      _
    $region11: #{jem_forward.3} parent=1 // pred_check_branch
      %25 = sbr.rel (0) target = $region13
    $region12: #{jem_forward.3} parent=1 // pred_region
      %s27 = ssub.s32 32, 32
      %28 = vsyncadd [#allocation5], %s27
      %s30 = sshll.u32 [#allocation4], 4
      %s31 = int_to_ptr.vmem [resolvable:$true] %s30
      %33 = dma.hbm_to_vmem [thread:$0]  %s2, 32, %s31, [#allocation5]
    $region13: #{jem_forward.3} parent=1 // pred_fallthru
      _
    // Predicated region
    $region14: #{jem_forward.3} parent=1 // pred_check
      _
    $region15: #{jem_forward.3} parent=1 // pred_check_branch
      %35 = sbr.rel (0) target = $region17
    $region16: #{jem_forward.3} parent=1 // pred_region
      %36 = dma.done [#allocation3], 12544
    $region17: #{jem_forward.3} parent=1 // pred_fallthru
      _
    // Predicated region
    $region18: #{jem_forward.3} parent=1 // pred_check
      _
    $region19: #{jem_forward.3} parent=1 // pred_check_branch
      %38 = sbr.rel (0) target = $region21
    $region20: #{jem_forward.3} parent=1 // pred_region
      %39 = dma.done [#allocation5], 32
    $region21: #{jem_forward.3} parent=1 // pred_fallthru
      _
    %v41 = vld [vmem:[%s0] sm:$0xff]
    %v42 = vld [vmem:[%s0 + $0x8] sm:$0xff]
    %v43 = vld [vmem:[%s0 + $0x10] sm:$0xff]
    %v44 = vld [vmem:[%s0 + $0x18] sm:$0xff]
    %v45 = vld [vmem:[%s0 + $0x20] sm:$0xff]
    %v46 = vld [vmem:[%s0 + $0x28] sm:$0xff]
    %v47 = vld [vmem:[%s0 + $0x30] sm:$0xff]
    %v48 = vpack.c.bf16 %v41, %v41
    %v49 = vpack.c.bf16 %v42, %v42
    %v50 = vpack.c.bf16 %v43, %v43
    %v51 = vpack.c.bf16 %v44, %v44
    %v52 = vpack.c.bf16 %v45, %v45
    %v53 = vpack.c.bf16 %v46, %v46
    %v54 = vpack.c.bf16 %v47, %v47
    %v55 = vld [vmem:[#allocation2] sm:$0xff]
    %v56 = vld [vmem:[#allocation2 + $0x8] sm:$0xff]
    %v57 = vld [vmem:[#allocation2 + $0x10] sm:$0xff]
    %v58 = vld [vmem:[#allocation2 + $0x18] sm:$0xff]
    %v59 = vld [vmem:[#allocation2 + $0x20] sm:$0xff]
    %v60 = vld [vmem:[#allocation2 + $0x28] sm:$0xff]
    %v61 = vld [vmem:[#allocation2 + $0x30] sm:$0xff]
    %v62 = vld [vmem:[#allocation2 + $0x38] sm:$0xff]
    %v63 = vld [vmem:[#allocation2 + $0x40] sm:$0xff]
    %v64 = vld [vmem:[#allocation2 + $0x48] sm:$0xff]
    %v65 = vld [vmem:[#allocation2 + $0x50] sm:$0xff]
    %v66 = vld [vmem:[#allocation2 + $0x58] sm:$0xff]
    %v67 = vld [vmem:[#allocation2 + $0x60] sm:$0xff]
    %v68 = vld [vmem:[#allocation2 + $0x68] sm:$0xff]
    %v69 = vld [vmem:[#allocation2 + $0x70] sm:$0xff]
    %v70 = vld [vmem:[#allocation2 + $0x78] sm:$0xff]
    %v71 = vld [vmem:[#allocation2 + $0x80] sm:$0xff]
    %v72 = vld [vmem:[#allocation2 + $0x88] sm:$0xff]
    %v73 = vld [vmem:[#allocation2 + $0x90] sm:$0xff]
    %v74 = vld [vmem:[#allocation2 + $0x98] sm:$0xff]
    %v75 = vld [vmem:[#allocation2 + $0xa0] sm:$0xff]
    %v76 = vld [vmem:[#allocation2 + $0xa8] sm:$0xff]
    %v77 = vld [vmem:[#allocation2 + $0xb0] sm:$0xff]
    %v78 = vld [vmem:[#allocation2 + $0xb8] sm:$0xff]
    %v79 = vld [vmem:[#allocation2 + $0xc0] sm:$0xff]
    %v80 = vld [vmem:[#allocation2 + $0xc8] sm:$0xff]
    %v81 = vld [vmem:[#allocation2 + $0xd0] sm:$0xff]
    %v82 = vld [vmem:[#allocation2 + $0xd8] sm:$0xff]
    %v83 = vld [vmem:[#allocation2 + $0xe0] sm:$0xff]
    %v84 = vld [vmem:[#allocation2 + $0xe8] sm:$0xff]
    %v85 = vld [vmem:[#allocation2 + $0xf0] sm:$0xff]
    %v86 = vld [vmem:[#allocation2 + $0xf8] sm:$0xff]
    %v87 = vld [vmem:[#allocation2 + $0x100] sm:$0xff]
    %v88 = vld [vmem:[#allocation2 + $0x108] sm:$0xff]
    %v89 = vld [vmem:[#allocation2 + $0x110] sm:$0xff]
    %v90 = vld [vmem:[#allocation2 + $0x118] sm:$0xff]
    %v91 = vld [vmem:[#allocation2 + $0x120] sm:$0xff]
    %v92 = vld [vmem:[#allocation2 + $0x128] sm:$0xff]
    %v93 = vld [vmem:[#allocation2 + $0x130] sm:$0xff]
    %v94 = vld [vmem:[#allocation2 + $0x138] sm:$0xff]
    %v95 = vld [vmem:[#allocation2 + $0x140] sm:$0xff]
    %v96 = vld [vmem:[#allocation2 + $0x148] sm:$0xff]
    %v97 = vld [vmem:[#allocation2 + $0x150] sm:$0xff]
    %v98 = vld [vmem:[#allocation2 + $0x158] sm:$0xff]
    %v99 = vld [vmem:[#allocation2 + $0x160] sm:$0xff]
    %v100 = vld [vmem:[#allocation2 + $0x168] sm:$0xff]
    %v101 = vld [vmem:[#allocation2 + $0x170] sm:$0xff]
    %v102 = vld [vmem:[#allocation2 + $0x178] sm:$0xff]
    %v103 = vld [vmem:[#allocation2 + $0x180] sm:$0xff]
    %v104 = vld [vmem:[#allocation2 + $0x188] sm:$0xff]
    %v105 = vld [vmem:[#allocation2 + $0x190] sm:$0xff]
    %v106 = vld [vmem:[#allocation2 + $0x198] sm:$0xff]
    %v107 = vld [vmem:[#allocation2 + $0x1a0] sm:$0xff]
    %v108 = vld [vmem:[#allocation2 + $0x1a8] sm:$0xff]
    %v109 = vld [vmem:[#allocation2 + $0x1b0] sm:$0xff]
    %v110 = vld [vmem:[#allocation2 + $0x1b8] sm:$0xff]
    %v111 = vld [vmem:[#allocation2 + $0x1c0] sm:$0xff]
    %v112 = vld [vmem:[#allocation2 + $0x1c8] sm:$0xff]
    %v113 = vld [vmem:[#allocation2 + $0x1d0] sm:$0xff]
    %v114 = vld [vmem:[#allocation2 + $0x1d8] sm:$0xff]
    %v115 = vld [vmem:[#allocation2 + $0x1e0] sm:$0xff]
    %v116 = vld [vmem:[#allocation2 + $0x1e8] sm:$0xff]
    %v117 = vld [vmem:[#allocation2 + $0x1f0] sm:$0xff]
    %v118 = vld [vmem:[#allocation2 + $0x1f8] sm:$0xff]
    %v119 = vld [vmem:[#allocation2 + $0x200] sm:$0xff]
    %v120 = vld [vmem:[#allocation2 + $0x208] sm:$0xff]
    %v121 = vld [vmem:[#allocation2 + $0x210] sm:$0xff]
    %v122 = vld [vmem:[#allocation2 + $0x218] sm:$0xff]
    %v123 = vld [vmem:[#allocation2 + $0x220] sm:$0xff]
    %v124 = vld [vmem:[#allocation2 + $0x228] sm:$0xff]
    %v125 = vld [vmem:[#allocation2 + $0x230] sm:$0xff]
    %v126 = vld [vmem:[#allocation2 + $0x238] sm:$0xff]
    %v127 = vld [vmem:[#allocation2 + $0x240] sm:$0xff]
    %v128 = vld [vmem:[#allocation2 + $0x248] sm:$0xff]
    %v129 = vld [vmem:[#allocation2 + $0x250] sm:$0xff]
    %v130 = vld [vmem:[#allocation2 + $0x258] sm:$0xff]
    %v131 = vld [vmem:[#allocation2 + $0x260] sm:$0xff]
    %v132 = vld [vmem:[#allocation2 + $0x268] sm:$0xff]
    %v133 = vld [vmem:[#allocation2 + $0x270] sm:$0xff]
    %v134 = vld [vmem:[#allocation2 + $0x278] sm:$0xff]
    %v135 = vld [vmem:[#allocation2 + $0x280] sm:$0xff]
    %v136 = vld [vmem:[#allocation2 + $0x288] sm:$0xff]
    %v137 = vld [vmem:[#allocation2 + $0x290] sm:$0xff]
    %v138 = vld [vmem:[#allocation2 + $0x298] sm:$0xff]
    %v139 = vld [vmem:[#allocation2 + $0x2a0] sm:$0xff]
    %v140 = vld [vmem:[#allocation2 + $0x2a8] sm:$0xff]
    %v141 = vld [vmem:[#allocation2 + $0x2b0] sm:$0xff]
    %v142 = vld [vmem:[#allocation2 + $0x2b8] sm:$0xff]
    %v143 = vld [vmem:[#allocation2 + $0x2c0] sm:$0xff]
    %v144 = vld [vmem:[#allocation2 + $0x2c8] sm:$0xff]
    %v145 = vld [vmem:[#allocation2 + $0x2d0] sm:$0xff]
    %v146 = vld [vmem:[#allocation2 + $0x2d8] sm:$0xff]
    %v147 = vld [vmem:[#allocation2 + $0x2e0] sm:$0xff]
    %v148 = vld [vmem:[#allocation2 + $0x2e8] sm:$0xff]
    %v149 = vld [vmem:[#allocation2 + $0x2f0] sm:$0xff]
    %v150 = vld [vmem:[#allocation2 + $0x2f8] sm:$0xff]
    %v151 = vld [vmem:[#allocation2 + $0x300] sm:$0xff]
    %v152 = vld [vmem:[#allocation2 + $0x308] sm:$0xff]
    %v153 = vld [vmem:[#allocation4] sm:$0x3]
    %v155 = vlaneseq
    %v156 = vshrl.u32 %v155, 7
    %v157 = vsub.s32 0, %v156
    %v158 = vrot.slane %v153, %v157
    %v159 = vlaneseq
    %v160 = vshrl.u32 %v159, 7
    %v161 = vsub.s32 1, %v160
    %v162 = vrot.slane %v153, %v161
    %v263 = vunpack.c.l.b16 %v55
    %v264 = vunpack.c.h.b16 %v55
    %v265 = vunpack.c.l.b16 %v56
    %v266 = vunpack.c.h.b16 %v56
    %v267 = vunpack.c.l.b16 %v57
    %v268 = vunpack.c.h.b16 %v57
    %v269 = vunpack.c.l.b16 %v58
    %v270 = vunpack.c.h.b16 %v58
    %v271 = vunpack.c.l.b16 %v59
    %v272 = vunpack.c.h.b16 %v59
    %v273 = vunpack.c.l.b16 %v60
    %v274 = vunpack.c.h.b16 %v60
    %v275 = vunpack.c.l.b16 %v61
    %v276 = vunpack.c.h.b16 %v61
    %v277 = vunpack.c.l.b16 %v62
    %v278 = vunpack.c.h.b16 %v62
    %v279 = vunpack.c.l.b16 %v63
    %v280 = vunpack.c.h.b16 %v63
    %v281 = vunpack.c.l.b16 %v64
    %v282 = vunpack.c.h.b16 %v64
    %v283 = vunpack.c.l.b16 %v65
    %v284 = vunpack.c.h.b16 %v65
    %v285 = vunpack.c.l.b16 %v66
    %v286 = vunpack.c.h.b16 %v66
    %v287 = vunpack.c.l.b16 %v67
    %v288 = vunpack.c.h.b16 %v67
    %v289 = vunpack.c.l.b16 %v68
    %v290 = vunpack.c.h.b16 %v68
    %v291 = vunpack.c.l.b16 %v69
    %v292 = vunpack.c.h.b16 %v69
    %v293 = vunpack.c.l.b16 %v70
    %v294 = vunpack.c.h.b16 %v70
    %v295 = vunpack.c.l.b16 %v71
    %v296 = vunpack.c.h.b16 %v71
    %v297 = vunpack.c.l.b16 %v72
    %v298 = vunpack.c.h.b16 %v72
    %v299 = vunpack.c.l.b16 %v73
    %v300 = vunpack.c.h.b16 %v73
    %v301 = vunpack.c.l.b16 %v74
    %v302 = vunpack.c.h.b16 %v74
    %v303 = vunpack.c.l.b16 %v75
    %v304 = vunpack.c.h.b16 %v75
    %v305 = vunpack.c.l.b16 %v76
    %v306 = vunpack.c.h.b16 %v76
    %v307 = vunpack.c.l.b16 %v77
    %v308 = vunpack.c.h.b16 %v77
    %v309 = vunpack.c.l.b16 %v78
    %v310 = vunpack.c.h.b16 %v78
    %v311 = vunpack.c.l.b16 %v79
    %v312 = vunpack.c.h.b16 %v79
    %v313 = vunpack.c.l.b16 %v80
    %v314 = vunpack.c.h.b16 %v80
    %v315 = vunpack.c.l.b16 %v81
    %v316 = vunpack.c.h.b16 %v81
    %v317 = vunpack.c.l.b16 %v82
    %v318 = vunpack.c.h.b16 %v82
    %v319 = vunpack.c.l.b16 %v83
    %v320 = vunpack.c.h.b16 %v83
    %v321 = vunpack.c.l.b16 %v84
    %v322 = vunpack.c.h.b16 %v84
    %v323 = vunpack.c.l.b16 %v85
    %v324 = vunpack.c.h.b16 %v85
    %v325 = vunpack.c.l.b16 %v86
    %v326 = vunpack.c.h.b16 %v86
    %v327 = vunpack.c.l.b16 %v87
    %v328 = vunpack.c.h.b16 %v87
    %v329 = vunpack.c.l.b16 %v88
    %v330 = vunpack.c.h.b16 %v88
    %v331 = vunpack.c.l.b16 %v89
    %v332 = vunpack.c.h.b16 %v89
    %v333 = vunpack.c.l.b16 %v90
    %v334 = vunpack.c.h.b16 %v90
    %v335 = vunpack.c.l.b16 %v91
    %v336 = vunpack.c.h.b16 %v91
    %v337 = vunpack.c.l.b16 %v92
    %v338 = vunpack.c.h.b16 %v92
    %v339 = vunpack.c.l.b16 %v93
    %v340 = vunpack.c.h.b16 %v93
    %v341 = vunpack.c.l.b16 %v94
    %v342 = vunpack.c.h.b16 %v94
    %v343 = vunpack.c.l.b16 %v95
    %v344 = vunpack.c.h.b16 %v95
    %v345 = vunpack.c.l.b16 %v96
    %v346 = vunpack.c.h.b16 %v96
    %v347 = vunpack.c.l.b16 %v97
    %v348 = vunpack.c.h.b16 %v97
    %v349 = vunpack.c.l.b16 %v98
    %v350 = vunpack.c.h.b16 %v98
    %v351 = vunpack.c.l.b16 %v99
    %v352 = vunpack.c.h.b16 %v99
    %v353 = vunpack.c.l.b16 %v100
    %v354 = vunpack.c.h.b16 %v100
    %v355 = vunpack.c.l.b16 %v101
    %v356 = vunpack.c.h.b16 %v101
    %v357 = vunpack.c.l.b16 %v102
    %v358 = vunpack.c.h.b16 %v102
    %v359 = vunpack.c.l.b16 %v103
    %v360 = vunpack.c.h.b16 %v103
    %v361 = vunpack.c.l.b16 %v104
    %v362 = vunpack.c.h.b16 %v104
    %v363 = vunpack.c.l.b16 %v105
    %v364 = vunpack.c.h.b16 %v105
    %v365 = vunpack.c.l.b16 %v106
    %v366 = vunpack.c.h.b16 %v106
    %v367 = vunpack.c.l.b16 %v107
    %v368 = vunpack.c.h.b16 %v107
    %v369 = vunpack.c.l.b16 %v108
    %v370 = vunpack.c.h.b16 %v108
    %v371 = vunpack.c.l.b16 %v109
    %v372 = vunpack.c.h.b16 %v109
    %v373 = vunpack.c.l.b16 %v110
    %v374 = vunpack.c.h.b16 %v110
    %v375 = vunpack.c.l.b16 %v111
    %v376 = vunpack.c.h.b16 %v111
    %v377 = vunpack.c.l.b16 %v112
    %v378 = vunpack.c.h.b16 %v112
    %v379 = vunpack.c.l.b16 %v113
    %v380 = vunpack.c.h.b16 %v113
    %v381 = vunpack.c.l.b16 %v114
    %v382 = vunpack.c.h.b16 %v114
    %v383 = vunpack.c.l.b16 %v115
    %v384 = vunpack.c.h.b16 %v115
    %v385 = vunpack.c.l.b16 %v116
    %v386 = vunpack.c.h.b16 %v116
    %v387 = vunpack.c.l.b16 %v117
    %v388 = vunpack.c.h.b16 %v117
    %v389 = vunpack.c.l.b16 %v118
    %v390 = vunpack.c.h.b16 %v118
    %v391 = vunpack.c.l.b16 %v119
    %v392 = vunpack.c.h.b16 %v119
    %v393 = vunpack.c.l.b16 %v120
    %v394 = vunpack.c.h.b16 %v120
    %v395 = vunpack.c.l.b16 %v121
    %v396 = vunpack.c.h.b16 %v121
    %v397 = vunpack.c.l.b16 %v122
    %v398 = vunpack.c.h.b16 %v122
    %v399 = vunpack.c.l.b16 %v123
    %v400 = vunpack.c.h.b16 %v123
    %v401 = vunpack.c.l.b16 %v124
    %v402 = vunpack.c.h.b16 %v124
    %v403 = vunpack.c.l.b16 %v125
    %v404 = vunpack.c.h.b16 %v125
    %v405 = vunpack.c.l.b16 %v126
    %v406 = vunpack.c.h.b16 %v126
    %v407 = vunpack.c.l.b16 %v127
    %v408 = vunpack.c.h.b16 %v127
    %v409 = vunpack.c.l.b16 %v128
    %v410 = vunpack.c.h.b16 %v128
    %v411 = vunpack.c.l.b16 %v129
    %v412 = vunpack.c.h.b16 %v129
    %v413 = vunpack.c.l.b16 %v130
    %v414 = vunpack.c.h.b16 %v130
    %v415 = vunpack.c.l.b16 %v131
    %v416 = vunpack.c.h.b16 %v131
    %v417 = vunpack.c.l.b16 %v132
    %v418 = vunpack.c.h.b16 %v132
    %v419 = vunpack.c.l.b16 %v133
    %v420 = vunpack.c.h.b16 %v133
    %v421 = vunpack.c.l.b16 %v134
    %v422 = vunpack.c.h.b16 %v134
    %v423 = vunpack.c.l.b16 %v135
    %v424 = vunpack.c.h.b16 %v135
    %v425 = vunpack.c.l.b16 %v136
    %v426 = vunpack.c.h.b16 %v136
    %v427 = vunpack.c.l.b16 %v137
    %v428 = vunpack.c.h.b16 %v137
    %v429 = vunpack.c.l.b16 %v138
    %v430 = vunpack.c.h.b16 %v138
    %v431 = vunpack.c.l.b16 %v139
    %v432 = vunpack.c.h.b16 %v139
    %v433 = vunpack.c.l.b16 %v140
    %v434 = vunpack.c.h.b16 %v140
    %v435 = vunpack.c.l.b16 %v141
    %v436 = vunpack.c.h.b16 %v141
    %v437 = vunpack.c.l.b16 %v142
    %v438 = vunpack.c.h.b16 %v142
    %v439 = vunpack.c.l.b16 %v143
    %v440 = vunpack.c.h.b16 %v143
    %v441 = vunpack.c.l.b16 %v144
    %v442 = vunpack.c.h.b16 %v144
    %v443 = vunpack.c.l.b16 %v145
    %v444 = vunpack.c.h.b16 %v145
    %v445 = vunpack.c.l.b16 %v146
    %v446 = vunpack.c.h.b16 %v146
    %v447 = vunpack.c.l.b16 %v147
    %v448 = vunpack.c.h.b16 %v147
    %v449 = vunpack.c.l.b16 %v148
    %v450 = vunpack.c.h.b16 %v148
    %v451 = vunpack.c.l.b16 %v149
    %v452 = vunpack.c.h.b16 %v149
    %v453 = vunpack.c.l.b16 %v150
    %v454 = vunpack.c.h.b16 %v150
    %v455 = vunpack.c.l.b16 %v151
    %v456 = vunpack.c.h.b16 %v151
    %v457 = vunpack.c.l.b16 %v152
    %v458 = vunpack.c.h.b16 %v152
    %v459 = vpack.c.b16 %v265, %v263
    %v460 = vpack.c.b16 %v266, %v264
    %v461 = vpack.c.b16 %v269, %v267
    %v462 = vpack.c.b16 %v270, %v268
    %v463 = vpack.c.b16 %v273, %v271
    %v464 = vpack.c.b16 %v274, %v272
    %v465 = vpack.c.b16 %v277, %v275
    %v466 = vpack.c.b16 %v278, %v276
    %v467 = vpack.c.b16 %v281, %v279
    %v468 = vpack.c.b16 %v282, %v280
    %v469 = vpack.c.b16 %v285, %v283
    %v470 = vpack.c.b16 %v286, %v284
    %v471 = vpack.c.b16 %v289, %v287
    %v472 = vpack.c.b16 %v290, %v288
    %v473 = vpack.c.b16 %v293, %v291
    %v474 = vpack.c.b16 %v294, %v292
    %v475 = vpack.c.b16 %v297, %v295
    %v476 = vpack.c.b16 %v298, %v296
    %v477 = vpack.c.b16 %v301, %v299
    %v478 = vpack.c.b16 %v302, %v300
    %v479 = vpack.c.b16 %v305, %v303
    %v480 = vpack.c.b16 %v306, %v304
    %v481 = vpack.c.b16 %v309, %v307
    %v482 = vpack.c.b16 %v310, %v308
    %v483 = vpack.c.b16 %v313, %v311
    %v484 = vpack.c.b16 %v314, %v312
    %v485 = vpack.c.b16 %v317, %v315
    %v486 = vpack.c.b16 %v318, %v316
    %v487 = vpack.c.b16 %v321, %v319
    %v488 = vpack.c.b16 %v322, %v320
    %v489 = vpack.c.b16 %v325, %v323
    %v490 = vpack.c.b16 %v326, %v324
    %v491 = vpack.c.b16 %v329, %v327
    %v492 = vpack.c.b16 %v330, %v328
    %v493 = vpack.c.b16 %v333, %v331
    %v494 = vpack.c.b16 %v334, %v332
    %v495 = vpack.c.b16 %v337, %v335
    %v496 = vpack.c.b16 %v338, %v336
    %v497 = vpack.c.b16 %v341, %v339
    %v498 = vpack.c.b16 %v342, %v340
    %v499 = vpack.c.b16 %v345, %v343
    %v500 = vpack.c.b16 %v346, %v344
    %v501 = vpack.c.b16 %v349, %v347
    %v502 = vpack.c.b16 %v350, %v348
    %v503 = vpack.c.b16 %v353, %v351
    %v504 = vpack.c.b16 %v354, %v352
    %v505 = vpack.c.b16 %v357, %v355
    %v506 = vpack.c.b16 %v358, %v356
    %v507 = vpack.c.b16 %v361, %v359
    %v508 = vpack.c.b16 %v362, %v360
    %v509 = vpack.c.b16 %v365, %v363
    %v510 = vpack.c.b16 %v366, %v364
    %v511 = vpack.c.b16 %v369, %v367
    %v512 = vpack.c.b16 %v370, %v368
    %v513 = vpack.c.b16 %v373, %v371
    %v514 = vpack.c.b16 %v374, %v372
    %v515 = vpack.c.b16 %v377, %v375
    %v516 = vpack.c.b16 %v378, %v376
    %v517 = vpack.c.b16 %v381, %v379
    %v518 = vpack.c.b16 %v382, %v380
    %v519 = vpack.c.b16 %v385, %v383
    %v520 = vpack.c.b16 %v386, %v384
    %v521 = vpack.c.b16 %v389, %v387
    %v522 = vpack.c.b16 %v390, %v388
    %v523 = vpack.c.b16 %v393, %v391
    %v524 = vpack.c.b16 %v394, %v392
    %v525 = vpack.c.b16 %v397, %v395
    %v526 = vpack.c.b16 %v398, %v396
    %v527 = vpack.c.b16 %v401, %v399
    %v528 = vpack.c.b16 %v402, %v400
    %v529 = vpack.c.b16 %v405, %v403
    %v530 = vpack.c.b16 %v406, %v404
    %v531 = vpack.c.b16 %v409, %v407
    %v532 = vpack.c.b16 %v410, %v408
    %v533 = vpack.c.b16 %v413, %v411
    %v534 = vpack.c.b16 %v414, %v412
    %v535 = vpack.c.b16 %v417, %v415
    %v536 = vpack.c.b16 %v418, %v416
    %v537 = vpack.c.b16 %v421, %v419
    %v538 = vpack.c.b16 %v422, %v420
    %v539 = vpack.c.b16 %v425, %v423
    %v540 = vpack.c.b16 %v426, %v424
    %v541 = vpack.c.b16 %v429, %v427
    %v542 = vpack.c.b16 %v430, %v428
    %v543 = vpack.c.b16 %v433, %v431
    %v544 = vpack.c.b16 %v434, %v432
    %v545 = vpack.c.b16 %v437, %v435
    %v546 = vpack.c.b16 %v438, %v436
    %v547 = vpack.c.b16 %v441, %v439
    %v548 = vpack.c.b16 %v442, %v440
    %v549 = vpack.c.b16 %v445, %v443
    %v550 = vpack.c.b16 %v446, %v444
    %v551 = vpack.c.b16 %v449, %v447
    %v552 = vpack.c.b16 %v450, %v448
    %v553 = vpack.c.b16 %v453, %v451
    %v554 = vpack.c.b16 %v454, %v452
    %v555 = vpack.c.b16 %v457, %v455
    %v556 = vpack.c.b16 %v458, %v456
    %vm655 = vcmask 130048
    %v657 = vsel %vm655, %v54, 0
    %659 = vmatprep.subr.bf16.mxu0 %v460
    %660 = vmatpush1.bf16.msra.mxu0 %v459
    %661 = vmatprep.subr.bf16.mxu0 %v462
    %662 = vmatpush1.bf16.msra.mxu0 %v461
    %663 = vmatprep.subr.bf16.mxu0 %v464
    %664 = vmatpush1.bf16.msra.mxu0 %v463
    %665 = vmatprep.subr.bf16.mxu0 %v466
    %666 = vmatpush1.bf16.msra.mxu0 %v465
    %667 = vmatprep.subr.bf16.mxu0 %v468
    %668 = vmatpush1.bf16.msra.mxu0 %v467
    %669 = vmatprep.subr.bf16.mxu0 %v470
    %670 = vmatpush1.bf16.msra.mxu0 %v469
    %671 = vmatprep.subr.bf16.mxu0 %v472
    %672 = vmatpush1.bf16.msra.mxu0 %v471
    %673 = vmatprep.subr.bf16.mxu0 %v474
    %674 = vmatpush1.bf16.msra.mxu0 %v473
    %675 = vmatprep.subr.bf16.mxu0 %v476
    %676 = vmatpush1.bf16.msra.mxu0 %v475
    %677 = vmatprep.subr.bf16.mxu0 %v478
    %678 = vmatpush1.bf16.msra.mxu0 %v477
    %679 = vmatprep.subr.bf16.mxu0 %v480
    %680 = vmatpush1.bf16.msra.mxu0 %v479
    %681 = vmatprep.subr.bf16.mxu0 %v482
    %682 = vmatpush1.bf16.msra.mxu0 %v481
    %683 = vmatprep.subr.bf16.mxu0 %v484
    %684 = vmatpush1.bf16.msra.mxu0 %v483
    %685 = vmatprep.subr.bf16.mxu0 %v486
    %686 = vmatpush1.bf16.msra.mxu0 %v485
    %687 = vmatprep.subr.bf16.mxu0 %v488
    %688 = vmatpush1.bf16.msra.mxu0 %v487
    %689 = vmatprep.subr.bf16.mxu0 %v490
    %690 = vmatpush1.bf16.msra.mxu0 %v489
    %691 = vmatprep.mubr.bf16.mxu0 %v49
    %692 = vmatmul.mubr.bf16.gmra.mrb[0].mxu0 %v48
    %v693 = vpop.f32.mrb[0].mxu0
    %v694 = vadd.f32 %v158, %v693
    %v695 = vpop.f32.mrb[0].mxu0
    %v696 = vadd.f32 %v162, %v695
    %v697 = vpop.f32.mrb[0].mxu0
    %v698 = vpop.f32.mrb[0].mxu0
    %699 = vdwg.mxu0
    %700 = vmatprep.subr.bf16.mxu0 %v492
    %701 = vmatpush1.bf16.msra.mxu0 %v491
    %702 = vmatprep.subr.bf16.mxu0 %v494
    %703 = vmatpush1.bf16.msra.mxu0 %v493
    %704 = vmatprep.subr.bf16.mxu0 %v496
    %705 = vmatpush1.bf16.msra.mxu0 %v495
    %706 = vmatprep.subr.bf16.mxu0 %v498
    %707 = vmatpush1.bf16.msra.mxu0 %v497
    %708 = vmatprep.subr.bf16.mxu0 %v500
    %709 = vmatpush1.bf16.msra.mxu0 %v499
    %710 = vmatprep.subr.bf16.mxu0 %v502
    %711 = vmatpush1.bf16.msra.mxu0 %v501
    %712 = vmatprep.subr.bf16.mxu0 %v504
    %713 = vmatpush1.bf16.msra.mxu0 %v503
    %714 = vmatprep.subr.bf16.mxu0 %v506
    %715 = vmatpush1.bf16.msra.mxu0 %v505
    %716 = vmatprep.subr.bf16.mxu0 %v508
    %717 = vmatpush1.bf16.msra.mxu0 %v507
    %718 = vmatprep.subr.bf16.mxu0 %v510
    %719 = vmatpush1.bf16.msra.mxu0 %v509
    %720 = vmatprep.subr.bf16.mxu0 %v512
    %721 = vmatpush1.bf16.msra.mxu0 %v511
    %722 = vmatprep.subr.bf16.mxu0 %v514
    %723 = vmatpush1.bf16.msra.mxu0 %v513
    %724 = vmatprep.subr.bf16.mxu0 %v516
    %725 = vmatpush1.bf16.msra.mxu0 %v515
    %726 = vmatprep.subr.bf16.mxu0 %v518
    %727 = vmatpush1.bf16.msra.mxu0 %v517
    %728 = vmatprep.subr.bf16.mxu0 %v520
    %729 = vmatpush1.bf16.msra.mxu0 %v519
    %730 = vmatprep.subr.bf16.mxu0 %v522
    %731 = vmatpush1.bf16.msra.mxu0 %v521
    %732 = vmatprep.mubr.bf16.mxu0 %v51
    %733 = vmatmul.mubr.bf16.gmra.mrb[0].mxu0 %v50
    %v734 = vpop.f32.mrb[0].mxu0
    %v735 = vadd.f32 %v694, %v734
    %v736 = vpop.f32.mrb[0].mxu0
    %v737 = vadd.f32 %v696, %v736
    %v738 = vpop.f32.mrb[0].mxu0
    %v739 = vpop.f32.mrb[0].mxu0
    %740 = vdwg.mxu0
    %741 = vmatprep.subr.bf16.mxu0 %v524
    %742 = vmatpush1.bf16.msra.mxu0 %v523
    %743 = vmatprep.subr.bf16.mxu0 %v526
    %744 = vmatpush1.bf16.msra.mxu0 %v525
    %745 = vmatprep.subr.bf16.mxu0 %v528
    %746 = vmatpush1.bf16.msra.mxu0 %v527
    %747 = vmatprep.subr.bf16.mxu0 %v530
    %748 = vmatpush1.bf16.msra.mxu0 %v529
    %749 = vmatprep.subr.bf16.mxu0 %v532
    %750 = vmatpush1.bf16.msra.mxu0 %v531
    %751 = vmatprep.subr.bf16.mxu0 %v534
    %752 = vmatpush1.bf16.msra.mxu0 %v533
    %753 = vmatprep.subr.bf16.mxu0 %v536
    %754 = vmatpush1.bf16.msra.mxu0 %v535
    %755 = vmatprep.subr.bf16.mxu0 %v538
    %756 = vmatpush1.bf16.msra.mxu0 %v537
    %757 = vmatprep.subr.bf16.mxu0 %v540
    %758 = vmatpush1.bf16.msra.mxu0 %v539
    %759 = vmatprep.subr.bf16.mxu0 %v542
    %760 = vmatpush1.bf16.msra.mxu0 %v541
    %761 = vmatprep.subr.bf16.mxu0 %v544
    %762 = vmatpush1.bf16.msra.mxu0 %v543
    %763 = vmatprep.subr.bf16.mxu0 %v546
    %764 = vmatpush1.bf16.msra.mxu0 %v545
    %765 = vmatprep.subr.bf16.mxu0 %v548
    %766 = vmatpush1.bf16.msra.mxu0 %v547
    %767 = vmatprep.subr.bf16.mxu0 %v550
    %768 = vmatpush1.bf16.msra.mxu0 %v549
    %769 = vmatprep.subr.bf16.mxu0 %v552
    %770 = vmatpush1.bf16.msra.mxu0 %v551
    %771 = vmatprep.subr.bf16.mxu0 %v554
    %772 = vmatpush1.bf16.msra.mxu0 %v553
    %773 = vmatprep.mubr.bf16.mxu0 %v53
    %774 = vmatmul.mubr.bf16.gmra.mrb[0].mxu0 %v52
    %v775 = vpop.f32.mrb[0].mxu0
    %v776 = vadd.f32 %v735, %v775
    %v777 = vpop.f32.mrb[0].mxu0
    %v778 = vadd.f32 %v737, %v777
    %v779 = vpop.f32.mrb[0].mxu0
    %v780 = vpop.f32.mrb[0].mxu0
    %781 = vdwg.mxu0
    %782 = vmatprep.subr.bf16.mxu0 %v556
    %783 = vmatpush1.bf16.msra.mxu0 %v555
    %784 = vmatprep.subr.bf16.mxu0 0
    %785 = vmatpush1.bf16.msra.mxu0 0
    %786 = vmatprep.subr.bf16.mxu0 0
    %787 = vmatpush1.bf16.msra.mxu0 0
    %788 = vmatprep.subr.bf16.mxu0 0
    %789 = vmatpush1.bf16.msra.mxu0 0
    %790 = vmatprep.subr.bf16.mxu0 0
    %791 = vmatpush1.bf16.msra.mxu0 0
    %792 = vmatprep.subr.bf16.mxu0 0
    %793 = vmatpush1.bf16.msra.mxu0 0
    %794 = vmatprep.subr.bf16.mxu0 0
    %795 = vmatpush1.bf16.msra.mxu0 0
    %796 = vmatprep.subr.bf16.mxu0 0
    %797 = vmatpush1.bf16.msra.mxu0 0
    %798 = vmatprep.subr.bf16.mxu0 0
    %799 = vmatpush1.bf16.msra.mxu0 0
    %800 = vmatprep.subr.bf16.mxu0 0
    %801 = vmatpush1.bf16.msra.mxu0 0
    %802 = vmatprep.subr.bf16.mxu0 0
    %803 = vmatpush1.bf16.msra.mxu0 0
    %804 = vmatprep.subr.bf16.mxu0 0
    %805 = vmatpush1.bf16.msra.mxu0 0
    %806 = vmatprep.subr.bf16.mxu0 0
    %807 = vmatpush1.bf16.msra.mxu0 0
    %808 = vmatprep.subr.bf16.mxu0 0
    %809 = vmatpush1.bf16.msra.mxu0 0
    %810 = vmatprep.subr.bf16.mxu0 0
    %811 = vmatpush1.bf16.msra.mxu0 0
    %812 = vmatprep.subr.bf16.mxu0 0
    %813 = vmatpush1.bf16.msra.mxu0 0
    %814 = vmatprep.mubr.bf16.mxu0 0
    %815 = vmatmul.mubr.bf16.gmra.mrb[0].mxu0 %v657
    %v816 = vpop.f32.mrb[0].mxu0
    %v817 = vadd.f32 %v776, %v816
    %v818 = vpop.f32.mrb[0].mxu0
    %v819 = vadd.f32 %v778, %v818
    %v820 = vpop.f32.mrb[0].mxu0
    %v821 = vpop.f32.mrb[0].mxu0
    %822 = vdwg.mxu0
    %823 = vst [vmem:[%s3] sm:$0xff] %v817
    %vm824 = vcmask 785408
    %825 = vst.msk [vmem:[%s3 + $0x8] sm:$0xff] %vm824, %v819
    // Predicated region
    $region22: #{jem_forward.3} parent=1 // pred_check
      _
    $region23: #{jem_forward.3} parent=1 // pred_check_branch
      %827 = sbr.rel (0) target = $region25
    $region24: #{jem_forward.3} parent=1 // pred_region
      _
    $region25: #{jem_forward.3} parent=1 // pred_fallthru
      _
    // Predicated region
    $region26: #{jem_forward.3} parent=1 // pred_check
      _
    $region27: #{jem_forward.3} parent=1 // pred_check_branch
      %829 = sbr.rel (0) target = $region29
    $region28: #{jem_forward.3} parent=1 // pred_region
      _
    $region29: #{jem_forward.3} parent=1 // pred_fallthru
      _
    %830 = vsyncpa [#allocation3], 1
    %831 = vsyncpa [#allocation5], 1

// kernel: jem_forward.4
$region0: #{jem_forward.4}
  #allocation0 [shape = 'u32[]', space=smem, size = 0x4, offset = 0x4, fixed_abs, tag = 'smem constant byte address 0x4 - core index']
  #allocation1 [shape = 'u32[144,128]{1,0:T(1,128)}', space=vmem, size = 0x12000, scoped, tag = 'internal scratch']
  %s0 = inlined_call_operand.vmem [shape: f32[10,224], index: 0, kind: input, shape index: {}]
  %s1 = inlined_call_operand.vmem [shape: bf16[6,224,224], index: 1, kind: input, shape index: {}]
  %s2 = inlined_call_operand.vmem [shape: bf16[6,224,224], index: 2, kind: input, shape index: {}]
  %s3 = inlined_call_operand.vmem [shape: bf16[6,224,224], index: 3, kind: input, shape index: {}]
  %s4 = inlined_call_operand.hbm [shape: bf16[6,224,224], index: 4, kind: input, shape index: {}]
  %s5 = inlined_call_operand.hbm [shape: f32[6,1,224], index: 5, kind: input, shape index: {}]
  %s6 = inlined_call_operand.hbm [shape: f32[6,1,224], index: 6, kind: input, shape index: {}]
  %s7 = inlined_call_operand.hbm [shape: f32[6,1,224], index: 7, kind: input, shape index: {}]
  %s8 = inlined_call_operand.hbm [shape: f32[6,1,224], index: 8, kind: input, shape index: {}]
  %s9 = inlined_call_operand.hbm [shape: f32[6,1,224], index: 9, kind: input, shape index: {}]
  %s10 = inlined_call_operand.hbm [shape: bf16[6,224,2048], index: 10, kind: input, shape index: {}]
  %s11 = inlined_call_operand.hbm [shape: f32[6,1,2048], index: 11, kind: input, shape index: {}]
  %s12 = inlined_call_operand.vmem [shape: bf16[6,2048,224], index: 12, kind: input, shape index: {}]
  %s13 = inlined_call_operand.hbm [shape: f32[6,1,224], index: 13, kind: input, shape index: {}]
  %s14 = inlined_call_operand.vmem [shape: f32[10,224], index: 14, kind: output, shape index: {}]
  %s15 = sld [smem:[#allocation0]]
  $region129: #{jem_forward.4} parent=0
    _
  %s17 = ssub.s32 1, %s15
  %s18 = scalar_select 0, %s17, %s15
  $region1: #{jem_forward.4} parent=0
    #allocation2 [shape = 'u8[688128]{0}', space=vmem, size = 0xa8000, scoped, tag = 'input window, operand 4, single buffered']
    #allocation3 [shape = 's32[2]{0}', space=sflag, size = 0x8, scoped, tag = 'scoped memory for jem_forward.4']
    #allocation4 [shape = 'u8[6144]{0}', space=vmem, size = 0x1800, scoped, tag = 'input window, operand 5, single buffered']
    #allocation5 [shape = 's32[1]{0}', space=sflag, size = 0x4, scoped, tag = 'scoped memory for jem_forward.4']
    #allocation6 [shape = 'u8[6144]{0}', space=vmem, size = 0x1800, scoped, tag = 'input window, operand 6, single buffered']
    #allocation7 [shape = 'u8[6144]{0}', space=vmem, size = 0x1800, scoped, tag = 'input window, operand 7, single buffered']
    #allocation8 [shape = 's32[1]{0}', space=sflag, size = 0x4, scoped, tag = 'scoped memory for jem_forward.4']
    #allocation9 [shape = 'u8[6144]{0}', space=vmem, size = 0x1800, scoped, tag = 'input window, operand 8, single buffered']
    #allocation10 [shape = 'u8[6144]{0}', space=vmem, size = 0x1800, scoped, tag = 'input window, operand 9, single buffered']
    #allocation11 [shape = 's32[1]{0}', space=sflag, size = 0x4, scoped, tag = 'scoped memory for jem_forward.4']
    #allocation12 [shape = 'u8[5505024]{0}', space=vmem, size = 0x540000, scoped, tag = 'input window, operand 10, single buffered']
    #allocation13 [shape = 'u8[49152]{0}', space=vmem, size = 0xc000, scoped, tag = 'input window, operand 11, single buffered']
    #allocation14 [shape = 's32[1]{0}', space=sflag, size = 0x4, scoped, tag = 'scoped memory for jem_forward.4']
    #allocation15 [shape = 'u8[6144]{0}', space=vmem, size = 0x1800, scoped, tag = 'input window, operand 13, single buffered']
    %19 = vsyncpa [#allocation3], 0
    %20 = vsyncpa [#allocation5], 0
    %21 = vsyncpa [#allocation8], 0
    %22 = vsyncpa [#allocation11], 0
    %23 = vsyncpa [#allocation14], 0
    loop: start=0, step=1, limit=8
    $region2: #{jem_forward.4} parent=1 // loop_pre_header
      _
    $region3: #{jem_forward.4} parent=1 // loop_header
      %s25 = sphi 0, %s29
      %p26 = scmp.ge.s32.totalorder %s25, 8
      %s32 = sphi 0, %s44
      %s33 = sphi 0, %s40
      %s34 = sphi 0, %s32
      %s35 = sphi 0, %s33
      %s36 = sphi 0, %s34
      %s37 = sphi 0, %s35
      %s47 = sphi 0, %s49
      %s50 = sphi 0, %s47
      %s51 = sphi 0, %s50
      %s67 = sphi 0, %s51
      %s71 = sphi 0, %s71
      %s73 = sphi 0, %s71
      %s74 = sphi 0, %s73
      %s88 = sphi 0, %s74
      %s92 = sphi 0, %s92
      %s94 = sphi 0, %s92
      %s95 = sphi 0, %s94
      %s109 = sphi 0, %s95
      %s113 = sphi 0, %s113
      %s115 = sphi 0, %s113
      %s116 = sphi 0, %s115
      %s130 = sphi 0, %s116
      %s134 = sphi 0, %s134
      %s136 = sphi 0, %s134
      %s137 = sphi 0, %s136
      %s151 = sphi 0, %s137
      %s155 = sphi 0, %s155
      %s157 = sphi 0, %s155
      %s158 = sphi 0, %s157
      %s172 = sphi 0, %s158
      %s176 = sphi 0, %s176
      %s178 = sphi 0, %s176
      %s179 = sphi 0, %s178
      %s193 = sphi 0, %s179
      %s197 = sphi 0, %s197
      %s199 = sphi 0, %s197
      %s200 = sphi 0, %s199
      %s214 = sphi 0, %s200
      %s218 = sphi 0, %s218
      %s220 = sphi 0, %s218
      %s221 = sphi 0, %s220
      %s235 = sphi 0, %s221
      %s239 = sphi 0, %s239
      %s241 = sphi 0, %s239
      %s242 = sphi 0, %s241
      %s256 = sphi 0, %s242
      %s260 = sphi 0, %s260
      %s262 = sphi 0, %s260
      %s263 = sphi 0, %s262
      %s277 = sphi 0, %s263
      %s281 = sphi 0, %s281
      %s283 = sphi 0, %s281
      %s284 = sphi 0, %s283
      %s298 = sphi 0, %s284
      %s302 = sphi 0, %s302
      %s304 = sphi 0, %s302
      %s305 = sphi 0, %s304
      %s319 = sphi 0, %s305
      %s323 = sphi 0, %s323
      %s325 = sphi 0, %s323
      %s326 = sphi 0, %s325
      %s340 = sphi 0, %s326
      %s346 = sphi 0, %s348
      %s349 = sphi 0, %s346
      %s350 = sphi 0, %s349
      %s366 = sphi 0, %s350
    $region4: #{jem_forward.4} parent=1 // loop_header_branch
      %28 = sbr.rel (%p26) target = $region8
    $region5: #{jem_forward.4} parent=1 // loop_body
      %s30 = ssub.s32 %s25, 1
      %s31 = ssub.s32 %s25, 2
      %s38 = sadd.s32 1, %s33
      %p39 = scmp.ge.s32.totalorder %s38, 6
      %s40 = scalar_select %p39, 0, %s38
      %s41 = sadd.s32 1, %s32
      %s42 = scalar_select %p39, %s41, %s32
      %p43 = scmp.ge.s32.totalorder %s42, 1
      %s44 = scalar_select %p43, 0, %s42
      %s45 = ssub.s32 %s32, %s44
      %p46 = scmp.eq.s32.totalorder %s45, 0
      %s48 = sadd.s32 %s47, 1
      %s49 = scalar_select %p46, %s47, %s48
      %p52 = pneg %p46
      %p53 = scmp.eq.s32.totalorder %s25, 5
      %p54 = por %p52, %p53
      %p55 = scmp.ne.s32.totalorder %s47, %s50
      %p56 = scmp.eq.s32.totalorder %s25, 0
      %p57 = por %p55, %p56
      %p58 = scmp.ne.s32.totalorder %s47, %s50
      %p59 = scmp.eq.s32.totalorder %s30, 5
      %p60 = por %p58, %p59
      %p61 = scmp.ne.s32.totalorder %s50, %s51
      %p62 = scmp.eq.s32.totalorder %s30, 0
      %p63 = por %p61, %p62
      %p64 = scmp.ne.s32.totalorder %s50, %s51
      %p65 = scmp.eq.s32.totalorder %s31, 5
      %p66 = por %p64, %p65
      %p68 = scmp.ne.s32.totalorder %s51, %s67
      %p69 = scmp.eq.s32.totalorder %s31, 0
      %p70 = por %p68, %p69
      %s72 = sadd.s32 %s71, 1
      %p75 = scmp.eq.s32.totalorder %s25, 5
      %p76 = scmp.ne.s32.totalorder %s71, %s73
      %p77 = scmp.eq.s32.totalorder %s25, 0
      %p78 = por %p76, %p77
      %p79 = scmp.ne.s32.totalorder %s71, %s73
      %p80 = scmp.eq.s32.totalorder %s30, 5
      %p81 = por %p79, %p80
      %p82 = scmp.ne.s32.totalorder %s73, %s74
      %p83 = scmp.eq.s32.totalorder %s30, 0
      %p84 = por %p82, %p83
      %p85 = scmp.ne.s32.totalorder %s73, %s74
      %p86 = scmp.eq.s32.totalorder %s31, 5
      %p87 = por %p85, %p86
      %p89 = scmp.ne.s32.totalorder %s74, %s88
      %p90 = scmp.eq.s32.totalorder %s31, 0
      %p91 = por %p89, %p90
      %s93 = sadd.s32 %s92, 1
      %p96 = scmp.eq.s32.totalorder %s25, 5
      %p97 = scmp.ne.s32.totalorder %s92, %s94
      %p98 = scmp.eq.s32.totalorder %s25, 0
      %p99 = por %p97, %p98
      %p100 = scmp.ne.s32.totalorder %s92, %s94
      %p101 = scmp.eq.s32.totalorder %s30, 5
      %p102 = por %p100, %p101
      %p103 = scmp.ne.s32.totalorder %s94, %s95
      %p104 = scmp.eq.s32.totalorder %s30, 0
      %p105 = por %p103, %p104
      %p106 = scmp.ne.s32.totalorder %s94, %s95
      %p107 = scmp.eq.s32.totalorder %s31, 5
      %p108 = por %p106, %p107
      %p110 = scmp.ne.s32.totalorder %s95, %s109
      %p111 = scmp.eq.s32.totalorder %s31, 0
      %p112 = por %p110, %p111
      %s114 = sadd.s32 %s113, 1
      %p117 = scmp.eq.s32.totalorder %s25, 5
      %p118 = scmp.ne.s32.totalorder %s113, %s115
      %p119 = scmp.eq.s32.totalorder %s25, 0
      %p120 = por %p118, %p119
      %p121 = scmp.ne.s32.totalorder %s113, %s115
      %p122 = scmp.eq.s32.totalorder %s30, 5
      %p123 = por %p121, %p122
      %p124 = scmp.ne.s32.totalorder %s115, %s116
      %p125 = scmp.eq.s32.totalorder %s30, 0
      %p126 = por %p124, %p125
      %p127 = scmp.ne.s32.totalorder %s115, %s116
      %p128 = scmp.eq.s32.totalorder %s31, 5
      %p129 = por %p127, %p128
      %p131 = scmp.ne.s32.totalorder %s116, %s130
      %p132 = scmp.eq.s32.totalorder %s31, 0
      %p133 = por %p131, %p132
      %s135 = sadd.s32 %s134, 1
      %p138 = scmp.eq.s32.totalorder %s25, 5
      %p139 = scmp.ne.s32.totalorder %s134, %s136
      %p140 = scmp.eq.s32.totalorder %s25, 0
      %p141 = por %p139, %p140
      %p142 = scmp.ne.s32.totalorder %s134, %s136
      %p143 = scmp.eq.s32.totalorder %s30, 5
      %p144 = por %p142, %p143
      %p145 = scmp.ne.s32.totalorder %s136, %s137
      %p146 = scmp.eq.s32.totalorder %s30, 0
      %p147 = por %p145, %p146
      %p148 = scmp.ne.s32.totalorder %s136, %s137
      %p149 = scmp.eq.s32.totalorder %s31, 5
      %p150 = por %p148, %p149
      %p152 = scmp.ne.s32.totalorder %s137, %s151
      %p153 = scmp.eq.s32.totalorder %s31, 0
      %p154 = por %p152, %p153
      %s156 = sadd.s32 %s155, 1
      %p159 = scmp.eq.s32.totalorder %s25, 5
      %p160 = scmp.ne.s32.totalorder %s155, %s157
      %p161 = scmp.eq.s32.totalorder %s25, 0
      %p162 = por %p160, %p161
      %p163 = scmp.ne.s32.totalorder %s155, %s157
      %p164 = scmp.eq.s32.totalorder %s30, 5
      %p165 = por %p163, %p164
      %p166 = scmp.ne.s32.totalorder %s157, %s158
      %p167 = scmp.eq.s32.totalorder %s30, 0
      %p168 = por %p166, %p167
      %p169 = scmp.ne.s32.totalorder %s157, %s158
      %p170 = scmp.eq.s32.totalorder %s31, 5
      %p171 = por %p169, %p170
      %p173 = scmp.ne.s32.totalorder %s158, %s172
      %p174 = scmp.eq.s32.totalorder %s31, 0
      %p175 = por %p173, %p174
      %s177 = sadd.s32 %s176, 1
      %p180 = scmp.eq.s32.totalorder %s25, 5
      %p181 = scmp.ne.s32.totalorder %s176, %s178
      %p182 = scmp.eq.s32.totalorder %s25, 0
      %p183 = por %p181, %p182
      %p184 = scmp.ne.s32.totalorder %s176, %s178
      %p185 = scmp.eq.s32.totalorder %s30, 5
      %p186 = por %p184, %p185
      %p187 = scmp.ne.s32.totalorder %s178, %s179
      %p188 = scmp.eq.s32.totalorder %s30, 0
      %p189 = por %p187, %p188
      %p190 = scmp.ne.s32.totalorder %s178, %s179
      %p191 = scmp.eq.s32.totalorder %s31, 5
      %p192 = por %p190, %p191
      %p194 = scmp.ne.s32.totalorder %s179, %s193
      %p195 = scmp.eq.s32.totalorder %s31, 0
      %p196 = por %p194, %p195
      %s198 = sadd.s32 %s197, 1
      %p201 = scmp.eq.s32.totalorder %s25, 5
      %p202 = scmp.ne.s32.totalorder %s197, %s199
      %p203 = scmp.eq.s32.totalorder %s25, 0
      %p204 = por %p202, %p203
      %p205 = scmp.ne.s32.totalorder %s197, %s199
      %p206 = scmp.eq.s32.totalorder %s30, 5
      %p207 = por %p205, %p206
      %p208 = scmp.ne.s32.totalorder %s199, %s200
      %p209 = scmp.eq.s32.totalorder %s30, 0
      %p210 = por %p208, %p209
      %p211 = scmp.ne.s32.totalorder %s199, %s200
      %p212 = scmp.eq.s32.totalorder %s31, 5
      %p213 = por %p211, %p212
      %p215 = scmp.ne.s32.totalorder %s200, %s214
      %p216 = scmp.eq.s32.totalorder %s31, 0
      %p217 = por %p215, %p216
      %s219 = sadd.s32 %s218, 1
      %p222 = scmp.eq.s32.totalorder %s25, 5
      %p223 = scmp.ne.s32.totalorder %s218, %s220
      %p224 = scmp.eq.s32.totalorder %s25, 0
      %p225 = por %p223, %p224
      %p226 = scmp.ne.s32.totalorder %s218, %s220
      %p227 = scmp.eq.s32.totalorder %s30, 5
      %p228 = por %p226, %p227
      %p229 = scmp.ne.s32.totalorder %s220, %s221
      %p230 = scmp.eq.s32.totalorder %s30, 0
      %p231 = por %p229, %p230
      %p232 = scmp.ne.s32.totalorder %s220, %s221
      %p233 = scmp.eq.s32.totalorder %s31, 5
      %p234 = por %p232, %p233
      %p236 = scmp.ne.s32.totalorder %s221, %s235
      %p237 = scmp.eq.s32.totalorder %s31, 0
      %p238 = por %p236, %p237
      %s240 = sadd.s32 %s239, 1
      %p243 = scmp.eq.s32.totalorder %s25, 5
      %p244 = scmp.ne.s32.totalorder %s239, %s241
      %p245 = scmp.eq.s32.totalorder %s25, 0
      %p246 = por %p244, %p245
      %p247 = scmp.ne.s32.totalorder %s239, %s241
      %p248 = scmp.eq.s32.totalorder %s30, 5
      %p249 = por %p247, %p248
      %p250 = scmp.ne.s32.totalorder %s241, %s242
      %p251 = scmp.eq.s32.totalorder %s30, 0
      %p252 = por %p250, %p251
      %p253 = scmp.ne.s32.totalorder %s241, %s242
      %p254 = scmp.eq.s32.totalorder %s31, 5
      %p255 = por %p253, %p254
      %p257 = scmp.ne.s32.totalorder %s242, %s256
      %p258 = scmp.eq.s32.totalorder %s31, 0
      %p259 = por %p257, %p258
      %s261 = sadd.s32 %s260, 1
      %p264 = scmp.eq.s32.totalorder %s25, 5
      %p265 = scmp.ne.s32.totalorder %s260, %s262
      %p266 = scmp.eq.s32.totalorder %s25, 0
      %p267 = por %p265, %p266
      %p268 = scmp.ne.s32.totalorder %s260, %s262
      %p269 = scmp.eq.s32.totalorder %s30, 5
      %p270 = por %p268, %p269
      %p271 = scmp.ne.s32.totalorder %s262, %s263
      %p272 = scmp.eq.s32.totalorder %s30, 0
      %p273 = por %p271, %p272
      %p274 = scmp.ne.s32.totalorder %s262, %s263
      %p275 = scmp.eq.s32.totalorder %s31, 5
      %p276 = por %p274, %p275
      %p278 = scmp.ne.s32.totalorder %s263, %s277
      %p279 = scmp.eq.s32.totalorder %s31, 0
      %p280 = por %p278, %p279
      %s282 = sadd.s32 %s281, 1
      %p285 = scmp.eq.s32.totalorder %s25, 5
      %p286 = scmp.ne.s32.totalorder %s281, %s283
      %p287 = scmp.eq.s32.totalorder %s25, 0
      %p288 = por %p286, %p287
      %p289 = scmp.ne.s32.totalorder %s281, %s283
      %p290 = scmp.eq.s32.totalorder %s30, 5
      %p291 = por %p289, %p290
      %p292 = scmp.ne.s32.totalorder %s283, %s284
      %p293 = scmp.eq.s32.totalorder %s30, 0
      %p294 = por %p292, %p293
      %p295 = scmp.ne.s32.totalorder %s283, %s284
      %p296 = scmp.eq.s32.totalorder %s31, 5
      %p297 = por %p295, %p296
      %p299 = scmp.ne.s32.totalorder %s284, %s298
      %p300 = scmp.eq.s32.totalorder %s31, 0
      %p301 = por %p299, %p300
      %s303 = sadd.s32 %s302, 1
      %p306 = scmp.eq.s32.totalorder %s25, 5
      %p307 = scmp.ne.s32.totalorder %s302, %s304
      %p308 = scmp.eq.s32.totalorder %s25, 0
      %p309 = por %p307, %p308
      %p310 = scmp.ne.s32.totalorder %s302, %s304
      %p311 = scmp.eq.s32.totalorder %s30, 5
      %p312 = por %p310, %p311
      %p313 = scmp.ne.s32.totalorder %s304, %s305
      %p314 = scmp.eq.s32.totalorder %s30, 0
      %p315 = por %p313, %p314
      %p316 = scmp.ne.s32.totalorder %s304, %s305
      %p317 = scmp.eq.s32.totalorder %s31, 5
      %p318 = por %p316, %p317
      %p320 = scmp.ne.s32.totalorder %s305, %s319
      %p321 = scmp.eq.s32.totalorder %s31, 0
      %p322 = por %p320, %p321
      %s324 = sadd.s32 %s323, 1
      %p327 = scmp.eq.s32.totalorder %s25, 5
      %p328 = scmp.ne.s32.totalorder %s323, %s325
      %p329 = scmp.eq.s32.totalorder %s25, 0
      %p330 = por %p328, %p329
      %p331 = scmp.ne.s32.totalorder %s323, %s325
      %p332 = scmp.eq.s32.totalorder %s30, 5
      %p333 = por %p331, %p332
      %p334 = scmp.ne.s32.totalorder %s325, %s326
      %p335 = scmp.eq.s32.totalorder %s30, 0
      %p336 = por %p334, %p335
      %p337 = scmp.ne.s32.totalorder %s325, %s326
      %p338 = scmp.eq.s32.totalorder %s31, 5
      %p339 = por %p337, %p338
      %p341 = scmp.ne.s32.totalorder %s326, %s340
      %p342 = scmp.eq.s32.totalorder %s31, 0
      %p343 = por %p341, %p342
      %s344 = ssub.s32 %s32, %s44
      %p345 = scmp.eq.s32.totalorder %s344, 0
      %s347 = sadd.s32 %s346, 1
      %s348 = scalar_select %p345, %s346, %s347
      %p351 = pneg %p345
      %p352 = scmp.eq.s32.totalorder %s25, 5
      %p353 = por %p351, %p352
      %p354 = scmp.ne.s32.totalorder %s346, %s349
      %p355 = scmp.eq.s32.totalorder %s25, 0
      %p356 = por %p354, %p355
      %p357 = scmp.ne.s32.totalorder %s346, %s349
      %p358 = scmp.eq.s32.totalorder %s30, 5
      %p359 = por %p357, %p358
      %p360 = scmp.ne.s32.totalorder %s349, %s350
      %p361 = scmp.eq.s32.totalorder %s30, 0
      %p362 = por %p360, %p361
      %p363 = scmp.ne.s32.totalorder %s349, %s350
      %p364 = scmp.eq.s32.totalorder %s31, 5
      %p365 = por %p363, %p364
      %p367 = scmp.ne.s32.totalorder %s350, %s366
      %p368 = scmp.eq.s32.totalorder %s31, 0
      %p369 = por %p367, %p368
      %p370 = scmp.le.s32.totalorder 1, %s25
      %p371 = scmp.lt.s32.totalorder %s25, 7
      %p372 = pnand %p370, %p371
      %p373 = pneg %p372
      // Predicated region
      $region9: #{jem_forward.4} parent=5 // pred_check
        _
      $region10: #{jem_forward.4} parent=5 // pred_check_branch
        %375 = sbr.rel (%p372) target = $region12
      $region11: #{jem_forward.4} parent=5 // pred_region
        %s376 = ssub.s32 %s25, 1
        // Predicated region
        $region13: #{jem_forward.4} parent=11 // pred_check
          %p377 = pneg %p63
        $region14: #{jem_forward.4} parent=11 // pred_check_branch
          %379 = sbr.rel (%p377) target = $region16
        $region15: #{jem_forward.4} parent=11 // pred_region
          %s380 = smul.u32 2, %s34
          %p381 = scmp.lt.s32.totalorder %s380, 1
          %s382 = scalar_select %p381, %s380, 1
          %s383 = smul.addr %s382, 2
          %s384 = smul.addr %s383, 8
          %s385 = scalar_lea.vmem %s0, %s384
          %s386 = smul.u32 2, %s34
        $region16: #{jem_forward.4} parent=11 // pred_fallthru
          _
        // Predicated region
        $region17: #{jem_forward.4} parent=11 // pred_check
          %p387 = pneg %p84
        $region18: #{jem_forward.4} parent=11 // pred_check_branch
          %389 = sbr.rel (%p387) target = $region20
        $region19: #{jem_forward.4} parent=11 // pred_region
          _
        $region20: #{jem_forward.4} parent=11 // pred_fallthru
          _
        // Predicated region
        $region21: #{jem_forward.4} parent=11 // pred_check
          %p390 = pneg %p105
        $region22: #{jem_forward.4} parent=11 // pred_check_branch
          %392 = sbr.rel (%p390) target = $region24
        $region23: #{jem_forward.4} parent=11 // pred_region
          _
        $region24: #{jem_forward.4} parent=11 // pred_fallthru
          _
        // Predicated region
        $region25: #{jem_forward.4} parent=11 // pred_check
          %p393 = pneg %p126
        $region26: #{jem_forward.4} parent=11 // pred_check_branch
          %395 = sbr.rel (%p393) target = $region28
        $region27: #{jem_forward.4} parent=11 // pred_region
          _
        $region28: #{jem_forward.4} parent=11 // pred_fallthru
          _
        // Predicated region
        $region29: #{jem_forward.4} parent=11 // pred_check
          %p396 = pneg %p147
        $region30: #{jem_forward.4} parent=11 // pred_check_branch
          %398 = sbr.rel (%p396) target = $region32
        $region31: #{jem_forward.4} parent=11 // pred_region
          %s400 = ssub.s32 21504, 21504
          %401 = vsyncadd [#allocation3], %s400
          %s402 = sshll.u32 [#allocation2], 4
          %s403 = int_to_ptr.vmem [resolvable:$true] %s402
          %408 = dma.hbm_to_vmem [thread:$0]  %s4, 21504, %s403, [#allocation3], 128, 128, 8
        $region32: #{jem_forward.4} parent=11 // pred_fallthru
          _
        // Predicated region
        $region33: #{jem_forward.4} parent=11 // pred_check
          %p409 = pneg %p168
        $region34: #{jem_forward.4} parent=11 // pred_check_branch
          %411 = sbr.rel (%p409) target = $region36
        $region35: #{jem_forward.4} parent=11 // pred_region
          %s413 = ssub.s32 192, 192
          %414 = vsyncadd [#allocation5], %s413
          %s415 = sshll.u32 [#allocation4], 4
          %s416 = int_to_ptr.vmem [resolvable:$true] %s415
          %421 = dma.hbm_to_vmem [thread:$0]  %s5, 192, %s416, [#allocation5], 32, 32, 2
        $region36: #{jem_forward.4} parent=11 // pred_fallthru
          _
        // Predicated region
        $region37: #{jem_forward.4} parent=11 // pred_check
          %p422 = pneg %p189
        $region38: #{jem_forward.4} parent=11 // pred_check_branch
          %424 = sbr.rel (%p422) target = $region40
        $region39: #{jem_forward.4} parent=11 // pred_region
          %s426 = ssub.s32 192, 192
          %427 = vsyncadd [#allocation5], %s426
          %s428 = sshll.u32 [#allocation6], 4
          %s429 = int_to_ptr.vmem [resolvable:$true] %s428
          %434 = dma.hbm_to_vmem [thread:$0]  %s6, 192, %s429, [#allocation5], 32, 32, 2
        $region40: #{jem_forward.4} parent=11 // pred_fallthru
          _
        // Predicated region
        $region41: #{jem_forward.4} parent=11 // pred_check
          %p435 = pneg %p210
        $region42: #{jem_forward.4} parent=11 // pred_check_branch
          %437 = sbr.rel (%p435) target = $region44
        $region43: #{jem_forward.4} parent=11 // pred_region
          %s439 = ssub.s32 192, 192
          %440 = vsyncadd [#allocation8], %s439
          %s441 = sshll.u32 [#allocation7], 4
          %s442 = int_to_ptr.vmem [resolvable:$true] %s441
          %447 = dma.hbm_to_vmem [thread:$0]  %s7, 192, %s442, [#allocation8], 32, 32, 2
        $region44: #{jem_forward.4} parent=11 // pred_fallthru
          _
        // Predicated region
        $region45: #{jem_forward.4} parent=11 // pred_check
          %p448 = pneg %p231
        $region46: #{jem_forward.4} parent=11 // pred_check_branch
          %450 = sbr.rel (%p448) target = $region48
        $region47: #{jem_forward.4} parent=11 // pred_region
          %s452 = ssub.s32 192, 192
          %453 = vsyncadd [#allocation8], %s452
          %s454 = sshll.u32 [#allocation9], 4
          %s455 = int_to_ptr.vmem [resolvable:$true] %s454
          %460 = dma.hbm_to_vmem [thread:$0]  %s8, 192, %s455, [#allocation8], 32, 32, 2
        $region48: #{jem_forward.4} parent=11 // pred_fallthru
          _
        // Predicated region
        $region49: #{jem_forward.4} parent=11 // pred_check
          %p461 = pneg %p252
        $region50: #{jem_forward.4} parent=11 // pred_check_branch
          %463 = sbr.rel (%p461) target = $region52
        $region51: #{jem_forward.4} parent=11 // pred_region
          %s465 = ssub.s32 192, 192
          %466 = vsyncadd [#allocation11], %s465
          %s467 = sshll.u32 [#allocation10], 4
          %s468 = int_to_ptr.vmem [resolvable:$true] %s467
          %473 = dma.hbm_to_vmem [thread:$0]  %s9, 192, %s468, [#allocation11], 32, 32, 2
        $region52: #{jem_forward.4} parent=11 // pred_fallthru
          _
        // Predicated region
        $region53: #{jem_forward.4} parent=11 // pred_check
          %p474 = pneg %p273
        $region54: #{jem_forward.4} parent=11 // pred_check_branch
          %476 = sbr.rel (%p474) target = $region56
        $region55: #{jem_forward.4} parent=11 // pred_region
          %s478 = ssub.s32 172032, 172032
          %479 = vsyncadd [#allocation11], %s478
          %s480 = sshll.u32 [#allocation12], 4
          %s481 = int_to_ptr.vmem [resolvable:$true] %s480
          %486 = dma.hbm_to_vmem [thread:$0]  %s10, 172032, %s481, [#allocation11], 1024, 1024, 64
        $region56: #{jem_forward.4} parent=11 // pred_fallthru
          _
        // Predicated region
        $region57: #{jem_forward.4} parent=11 // pred_check
          %p487 = pneg %p294
        $region58: #{jem_forward.4} parent=11 // pred_check_branch
          %489 = sbr.rel (%p487) target = $region60
        $region59: #{jem_forward.4} parent=11 // pred_region
          %s491 = ssub.s32 1536, 1536
          %492 = vsyncadd [#allocation14], %s491
          %s493 = sshll.u32 [#allocation13], 4
          %s494 = int_to_ptr.vmem [resolvable:$true] %s493
          %499 = dma.hbm_to_vmem [thread:$0]  %s11, 1536, %s494, [#allocation14], 256, 256, 16
        $region60: #{jem_forward.4} parent=11 // pred_fallthru
          _
        // Predicated region
        $region61: #{jem_forward.4} parent=11 // pred_check
          %p500 = pneg %p315
        $region62: #{jem_forward.4} parent=11 // pred_check_branch
          %502 = sbr.rel (%p500) target = $region64
        $region63: #{jem_forward.4} parent=11 // pred_region
          _
        $region64: #{jem_forward.4} parent=11 // pred_fallthru
          _
        // Predicated region
        $region65: #{jem_forward.4} parent=11 // pred_check
          %p503 = pneg %p336
        $region66: #{jem_forward.4} parent=11 // pred_check_branch
          %505 = sbr.rel (%p503) target = $region68
        $region67: #{jem_forward.4} parent=11 // pred_region
          %s507 = ssub.s32 192, 192
          %508 = vsyncadd [#allocation14], %s507
          %s509 = sshll.u32 [#allocation15], 4
          %s510 = int_to_ptr.vmem [resolvable:$true] %s509
          %515 = dma.hbm_to_vmem [thread:$0]  %s13, 192, %s510, [#allocation14], 32, 32, 2
        $region68: #{jem_forward.4} parent=11 // pred_fallthru
          _
      $region12: #{jem_forward.4} parent=5 // pred_fallthru
        _
      %p516 = scmp.lt.s32.totalorder %s25, 6
      // Predicated region
      $region69: #{jem_forward.4} parent=5 // pred_check
        %p517 = pneg %p516
      $region70: #{jem_forward.4} parent=5 // pred_check_branch
        %519 = sbr.rel (%p517) target = $region72
      $region71: #{jem_forward.4} parent=5 // pred_region
        _
      $region72: #{jem_forward.4} parent=5 // pred_fallthru
        _
      %p520 = scmp.le.s32.totalorder 1, %s25
      %p521 = scmp.lt.s32.totalorder %s25, 7
      %p522 = pnand %p520, %p521
      %p523 = pneg %p522
      // Predicated region
      $region73: #{jem_forward.4} parent=5 // pred_check
        _
      $region74: #{jem_forward.4} parent=5 // pred_check_branch
        %525 = sbr.rel (%p522) target = $region76
      $region75: #{jem_forward.4} parent=5 // pred_region
        %s526 = ssub.s32 %s25, 1
        // Predicated region
        $region77: #{jem_forward.4} parent=75 // pred_check
          %p527 = pneg %p147
        $region78: #{jem_forward.4} parent=75 // pred_check_branch
          %529 = sbr.rel (%p527) target = $region80
        $region79: #{jem_forward.4} parent=75 // pred_region
          %530 = dma.done [#allocation3], 21504
        $region80: #{jem_forward.4} parent=75 // pred_fallthru
          _
        // Predicated region
        $region81: #{jem_forward.4} parent=75 // pred_check
          %p531 = pneg %p168
        $region82: #{jem_forward.4} parent=75 // pred_check_branch
          %533 = sbr.rel (%p531) target = $region84
        $region83: #{jem_forward.4} parent=75 // pred_region
          %534 = dma.done [#allocation5], 192
        $region84: #{jem_forward.4} parent=75 // pred_fallthru
          _
        // Predicated region
        $region85: #{jem_forward.4} parent=75 // pred_check
          %p535 = pneg %p189
        $region86: #{jem_forward.4} parent=75 // pred_check_branch
          %537 = sbr.rel (%p535) target = $region88
        $region87: #{jem_forward.4} parent=75 // pred_region
          %538 = dma.done [#allocation5], 192
        $region88: #{jem_forward.4} parent=75 // pred_fallthru
          _
        // Predicated region
        $region89: #{jem_forward.4} parent=75 // pred_check
          %p539 = pneg %p210
        $region90: #{jem_forward.4} parent=75 // pred_check_branch
          %541 = sbr.rel (%p539) target = $region92
        $region91: #{jem_forward.4} parent=75 // pred_region
          %542 = dma.done [#allocation8], 192
        $region92: #{jem_forward.4} parent=75 // pred_fallthru
          _
        // Predicated region
        $region93: #{jem_forward.4} parent=75 // pred_check
          %p543 = pneg %p231
        $region94: #{jem_forward.4} parent=75 // pred_check_branch
          %545 = sbr.rel (%p543) target = $region96
        $region95: #{jem_forward.4} parent=75 // pred_region
          %546 = dma.done [#allocation8], 192
        $region96: #{jem_forward.4} parent=75 // pred_fallthru
          _
        // Predicated region
        $region97: #{jem_forward.4} parent=75 // pred_check
          %p547 = pneg %p252
        $region98: #{jem_forward.4} parent=75 // pred_check_branch
          %549 = sbr.rel (%p547) target = $region100
        $region99: #{jem_forward.4} parent=75 // pred_region
          %550 = dma.done [#allocation11], 192
        $region100: #{jem_forward.4} parent=75 // pred_fallthru
          _
        // Predicated region
        $region101: #{jem_forward.4} parent=75 // pred_check
          %p551 = pneg %p273
        $region102: #{jem_forward.4} parent=75 // pred_check_branch
          %553 = sbr.rel (%p551) target = $region104
        $region103: #{jem_forward.4} parent=75 // pred_region
          %554 = dma.done [#allocation11], 172032
        $region104: #{jem_forward.4} parent=75 // pred_fallthru
          _
        // Predicated region
        $region105: #{jem_forward.4} parent=75 // pred_check
          %p555 = pneg %p294
        $region106: #{jem_forward.4} parent=75 // pred_check_branch
          %557 = sbr.rel (%p555) target = $region108
        $region107: #{jem_forward.4} parent=75 // pred_region
          %558 = dma.done [#allocation14], 1536
        $region108: #{jem_forward.4} parent=75 // pred_fallthru
          _
        // Predicated region
        $region109: #{jem_forward.4} parent=75 // pred_check
          %p559 = pneg %p336
        $region110: #{jem_forward.4} parent=75 // pred_check_branch
          %561 = sbr.rel (%p559) target = $region112
        $region111: #{jem_forward.4} parent=75 // pred_region
          %562 = dma.done [#allocation14], 192
        $region112: #{jem_forward.4} parent=75 // pred_fallthru
          _
        %s563 = smul.u32 2, %s34
        %p564 = scmp.lt.s32.totalorder %s563, 1
        %s565 = scalar_select %p564, %s563, 1
        %s566 = smul.addr %s565, 2
        %s567 = smul.addr %s566, 8
        %s568 = scalar_lea.vmem %s0, %s567
        %p569 = pneg %p63
        %p570 = pneg %p60
        %p571 = pneg %p84
        %p572 = pneg %p81
        %p573 = pneg %p105
        %p574 = pneg %p102
        %p575 = pneg %p126
        %p576 = pneg %p123
        %p577 = pneg %p147
        %p578 = pneg %p144
        %p579 = pneg %p168
        %p580 = pneg %p165
        %p581 = pneg %p189
        %p582 = pneg %p186
        %p583 = pneg %p210
        %p584 = pneg %p207
        %p585 = pneg %p231
        %p586 = pneg %p228
        %p587 = pneg %p252
        %p588 = pneg %p249
        %p589 = pneg %p273
        %p590 = pneg %p270
        %p591 = pneg %p294
        %p592 = pneg %p291
        %p593 = pneg %p315
        %p594 = pneg %p312
        %p595 = pneg %p336
        %p596 = pneg %p333
        %p597 = pneg %p362
        %p598 = pneg %p359
        %s599 = smul.u32 2, %s34
        %p600 = scmp.lt.s32.totalorder %s599, 1
        %s601 = scalar_select %p600, %s599, 1
        %s602 = smul.addr %s601, 2
        %s603 = smul.addr %s602, 8
        %s604 = scalar_lea.vmem %s14, %s603
        %s605 = smul.u32 2, %s34
        %p606 = scmp.lt.s32.totalorder %s605, 1
        %s607 = scalar_select %p606, %s605, 1
        %s608 = smul.addr %s607, 2
        %s609 = smul.addr %s608, 8
        %s610 = scalar_lea.vmem %s0, %s609
        %s611 = smul.u32 2, %s34
        %s612 = smul.u32 2, %s34
        %p613 = scmp.lt.s32.totalorder %s612, 1
        %s614 = scalar_select %p613, %s612, 1
        %s615 = smul.addr %s614, 2
        %s616 = smul.addr %s615, 8
        %s617 = scalar_lea.vmem %s14, %s616
        %s618 = smul.u32 2, %s34
        %p624 = scmp.eq.s32.totalorder %s35, 0
        // Predicated region
        $region113: #{jem_forward.4} parent=75 // pred_check
          %p625 = pneg %p624
        $region114: #{jem_forward.4} parent=75 // pred_check_branch
          %627 = sbr.rel (%p625) target = $region116
        $region115: #{jem_forward.4} parent=75 // pred_region
          %v628 = vld [vmem:[%s610] sm:$0xff]
          %v629 = vld [vmem:[%s610 + $0x8] sm:$0xff]
          %v630 = vld [vmem:[%s610 + $0x10] sm:$0x3]
          %v631 = vld [vmem:[%s610 + $0x18] sm:$0x3]
          %632 = vst [vmem:[%s617] sm:$0xff] %v628
          %vm633 = vcmask 785408
          %634 = vst.msk [vmem:[%s617 + $0x8] sm:$0xff] %vm633, %v629
          %635 = vst [vmem:[%s617 + $0x10] sm:$0x3] %v630
          %vm636 = vcmask 779264
          %637 = vst.msk [vmem:[%s617 + $0x18] sm:$0x3] %vm636, %v631
        $region116: #{jem_forward.4} parent=75 // pred_fallthru
          _
        %v638 = vld [vmem:[%s617] sm:$0xff]
        %v639 = vld [vmem:[%s617 + $0x8] sm:$0xff]
        %v640 = vld [vmem:[%s617 + $0x10] sm:$0x3]
        %v641 = vld [vmem:[%s617 + $0x18] sm:$0x3]
        %s642 = smul.u32 %s35, 2
        %s643 = scalar_lea.vmem [#allocation6], %s642
        %v644 = vld [vmem:[%s643] sm:$0x3]
        %s645 = scalar_lea.vmem [#allocation7], %s642
        %v646 = vld [vmem:[%s645] sm:$0x3]
        %vm647 = vcmask 785408
        %v648 = vsel %vm647, %v639, 0.0
        %v649 = vadd.f32 %v638, %v648
        %650 = vadd.xlane.f32.xlu0 %v649
        %v651 = vpop.xlane.xlu0 %650
        %vm652 = vcmask 1041408
        %v653 = vsel %vm652, %v640, 0.0
        %vm654 = vcmask 779264
        %v655 = vsel %vm654, %v641, 0.0
        %v656 = vadd.f32 %v653, %v655
        %657 = vadd.xlane.f32.xlu0 %v656
        %v658 = vpop.xlane.xlu0 %657
        %v659 = vrcp.pop 224.0
        %v660 = vmul.f32 %v651, %v659
        %v661 = vmul.f32 %v658, %v659
        %v662 = vsub.f32 %v638, %v660
        %v663 = vsub.f32 %v639, %v660
        %v664 = vsub.f32 %v640, %v661
        %v665 = vsub.f32 %v641, %v661
        %v666 = vmul.f32 %v662, %v662
        %v667 = vmul.f32 %v663, %v663
        %v668 = vmul.f32 %v664, %v664
        %v669 = vmul.f32 %v665, %v665
        %v670 = vsel %vm647, %v667, 0.0
        %v671 = vadd.f32 %v666, %v670
        %672 = vadd.xlane.f32.xlu0 %v671
        %v673 = vpop.xlane.xlu0 %672
        %v674 = vsel %vm652, %v668, 0.0
        %v675 = vsel %vm654, %v669, 0.0
        %v676 = vadd.f32 %v674, %v675
        %677 = vadd.xlane.f32.xlu0 %v676
        %v678 = vpop.xlane.xlu0 %677
        %v679 = vmul.f32 %v673, %v659
        %v680 = vmul.f32 %v678, %v659
        %v681 = vadd.f32 %v679, 1e-05
        %v682 = vadd.f32 %v680, 1e-05
        %v683 = vrsqrt.pop %v681
        %v684 = vrsqrt.pop %v682
        %v685 = vmul.f32 %v662, %v683
        %v686 = vmul.f32 %v663, %v683
        %v687 = vmul.f32 %v664, %v684
        %v688 = vmul.f32 %v665, %v684
        %v690 = vlaneseq
        %v691 = vshrl.u32 %v690, 7
        %v692 = vsub.s32 0, %v691
        %v693 = vrot.slane %v644, %v692
        %v694 = vlaneseq
        %v695 = vshrl.u32 %v694, 7
        %v696 = vsub.s32 1, %v695
        %v697 = vrot.slane %v644, %v696
        %v700 = vmul.f32 %v685, %v693
        %v701 = vmul.f32 %v686, %v697
        %v702 = vmul.f32 %v687, %v693
        %v703 = vmul.f32 %v688, %v697
        %v705 = vlaneseq
        %v706 = vshrl.u32 %v705, 7
        %v707 = vsub.s32 0, %v706
        %v708 = vrot.slane %v646, %v707
        %v709 = vlaneseq
        %v710 = vshrl.u32 %v709, 7
        %v711 = vsub.s32 1, %v710
        %v712 = vrot.slane %v646, %v711
        %v715 = vadd.f32 %v700, %v708
        %v716 = vadd.f32 %v701, %v712
        %v717 = vadd.f32 %v702, %v708
        %v718 = vadd.f32 %v703, %v712
        %v719 = vpack.c.bf16 %v717, %v715
        %v720 = vpack.c.bf16 %v718, %v716
        %s721 = smul.u32 %s35, 56
        %s722 = smul.addr %s721, 4
        %s723 = scalar_lea.vmem %s1, %s722
        %v724 = vld [vmem:[%s723] sm:$0xff]
        %v725 = vld [vmem:[%s723 + $0x8] sm:$0xff]
        %v726 = vld [vmem:[%s723 + $0x10] sm:$0xff]
        %v727 = vld [vmem:[%s723 + $0x18] sm:$0xff]
        %v728 = vld [vmem:[%s723 + $0x20] sm:$0xff]
        %v729 = vld [vmem:[%s723 + $0x28] sm:$0xff]
        %v730 = vld [vmem:[%s723 + $0x30] sm:$0xff]
        %v731 = vld [vmem:[%s723 + $0x38] sm:$0xff]
        %v732 = vld [vmem:[%s723 + $0x40] sm:$0xff]
        %v733 = vld [vmem:[%s723 + $0x48] sm:$0xff]
        %v734 = vld [vmem:[%s723 + $0x50] sm:$0xff]
        %v735 = vld [vmem:[%s723 + $0x58] sm:$0xff]
        %v736 = vld [vmem:[%s723 + $0x60] sm:$0xff]
        %v737 = vld [vmem:[%s723 + $0x68] sm:$0xff]
        %v738 = vld [vmem:[%s723 + $0x70] sm:$0xff]
        %v739 = vld [vmem:[%s723 + $0x78] sm:$0xff]
        %v740 = vld [vmem:[%s723 + $0x80] sm:$0xff]
        %v741 = vld [vmem:[%s723 + $0x88] sm:$0xff]
        %v742 = vld [vmem:[%s723 + $0x90] sm:$0xff]
        %v743 = vld [vmem:[%s723 + $0x98] sm:$0xff]
        %v744 = vld [vmem:[%s723 + $0xa0] sm:$0xff]
        %v745 = vld [vmem:[%s723 + $0xa8] sm:$0xff]
        %v746 = vld [vmem:[%s723 + $0xb0] sm:$0xff]
        %v747 = vld [vmem:[%s723 + $0xb8] sm:$0xff]
        %v748 = vld [vmem:[%s723 + $0xc0] sm:$0xff]
        %v749 = vld [vmem:[%s723 + $0xc8] sm:$0xff]
        %v750 = vld [vmem:[%s723 + $0xd0] sm:$0xff]
        %v751 = vld [vmem:[%s723 + $0xd8] sm:$0xff]
        %v780 = vunpack.c.l.b16 %v724
        %v781 = vunpack.c.h.b16 %v724
        %v782 = vunpack.c.l.b16 %v725
        %v783 = vunpack.c.h.b16 %v725
        %v784 = vunpack.c.l.b16 %v726
        %v785 = vunpack.c.h.b16 %v726
        %v786 = vunpack.c.l.b16 %v727
        %v787 = vunpack.c.h.b16 %v727
        %v788 = vunpack.c.l.b16 %v728
        %v789 = vunpack.c.h.b16 %v728
        %v790 = vunpack.c.l.b16 %v729
        %v791 = vunpack.c.h.b16 %v729
        %v792 = vunpack.c.l.b16 %v730
        %v793 = vunpack.c.h.b16 %v730
        %v794 = vunpack.c.l.b16 %v731
        %v795 = vunpack.c.h.b16 %v731
        %v796 = vunpack.c.l.b16 %v732
        %v797 = vunpack.c.h.b16 %v732
        %v798 = vunpack.c.l.b16 %v733
        %v799 = vunpack.c.h.b16 %v733
        %v800 = vunpack.c.l.b16 %v734
        %v801 = vunpack.c.h.b16 %v734
        %v802 = vunpack.c.l.b16 %v735
        %v803 = vunpack.c.h.b16 %v735
        %v804 = vunpack.c.l.b16 %v736
        %v805 = vunpack.c.h.b16 %v736
        %v806 = vunpack.c.l.b16 %v737
        %v807 = vunpack.c.h.b16 %v737
        %v808 = vunpack.c.l.b16 %v738
        %v809 = vunpack.c.h.b16 %v738
        %v810 = vunpack.c.l.b16 %v739
        %v811 = vunpack.c.h.b16 %v739
        %v812 = vunpack.c.l.b16 %v740
        %v813 = vunpack.c.h.b16 %v740
        %v814 = vunpack.c.l.b16 %v741
        %v815 = vunpack.c.h.b16 %v741
        %v816 = vunpack.c.l.b16 %v742
        %v817 = vunpack.c.h.b16 %v742
        %v818 = vunpack.c.l.b16 %v743
        %v819 = vunpack.c.h.b16 %v743
        %v820 = vunpack.c.l.b16 %v744
        %v821 = vunpack.c.h.b16 %v744
        %v822 = vunpack.c.l.b16 %v745
        %v823 = vunpack.c.h.b16 %v745
        %v824 = vunpack.c.l.b16 %v746
        %v825 = vunpack.c.h.b16 %v746
        %v826 = vunpack.c.l.b16 %v747
        %v827 = vunpack.c.h.b16 %v747
        %v828 = vunpack.c.l.b16 %v748
        %v829 = vunpack.c.h.b16 %v748
        %v830 = vunpack.c.l.b16 %v749
        %v831 = vunpack.c.h.b16 %v749
        %v832 = vunpack.c.l.b16 %v750
        %v833 = vunpack.c.h.b16 %v750
        %v834 = vunpack.c.l.b16 %v751
        %v835 = vunpack.c.h.b16 %v751
        %v836 = vpack.c.b16 %v782, %v780
        %v837 = vpack.c.b16 %v783, %v781
        %v838 = vpack.c.b16 %v786, %v784
        %v839 = vpack.c.b16 %v787, %v785
        %v840 = vpack.c.b16 %v790, %v788
        %v841 = vpack.c.b16 %v791, %v789
        %v842 = vpack.c.b16 %v794, %v792
        %v843 = vpack.c.b16 %v795, %v793
        %v844 = vpack.c.b16 %v798, %v796
        %v845 = vpack.c.b16 %v799, %v797
        %v846 = vpack.c.b16 %v802, %v800
        %v847 = vpack.c.b16 %v803, %v801
        %v848 = vpack.c.b16 %v806, %v804
        %v849 = vpack.c.b16 %v807, %v805
        %v850 = vpack.c.b16 %v810, %v808
        %v851 = vpack.c.b16 %v811, %v809
        %v852 = vpack.c.b16 %v814, %v812
        %v853 = vpack.c.b16 %v815, %v813
        %v854 = vpack.c.b16 %v818, %v816
        %v855 = vpack.c.b16 %v819, %v817
        %v856 = vpack.c.b16 %v822, %v820
        %v857 = vpack.c.b16 %v823, %v821
        %v858 = vpack.c.b16 %v826, %v824
        %v859 = vpack.c.b16 %v827, %v825
        %v860 = vpack.c.b16 %v830, %v828
        %v861 = vpack.c.b16 %v831, %v829
        %v862 = vpack.c.b16 %v834, %v832
        %v863 = vpack.c.b16 %v835, %v833
        %v893 = vsel %vm647, %v720, 0
        %895 = vmatprep.subr.bf16.mxu0 %v837
        %896 = vmatpush1.bf16.msra.mxu0 %v836
        %897 = vmatprep.subr.bf16.mxu0 %v839
        %898 = vmatpush1.bf16.msra.mxu0 %v838
        %899 = vmatprep.subr.bf16.mxu0 %v841
        %900 = vmatpush1.bf16.msra.mxu0 %v840
        %901 = vmatprep.subr.bf16.mxu0 %v843
        %902 = vmatpush1.bf16.msra.mxu0 %v842
        %903 = vmatprep.subr.bf16.mxu0 %v845
        %904 = vmatpush1.bf16.msra.mxu0 %v844
        %905 = vmatprep.subr.bf16.mxu0 %v847
        %906 = vmatpush1.bf16.msra.mxu0 %v846
        %907 = vmatprep.subr.bf16.mxu0 %v849
        %908 = vmatpush1.bf16.msra.mxu0 %v848
        %909 = vmatprep.subr.bf16.mxu0 %v851
        %910 = vmatpush1.bf16.msra.mxu0 %v850
        %911 = vmatprep.subr.bf16.mxu0 %v853
        %912 = vmatpush1.bf16.msra.mxu0 %v852
        %913 = vmatprep.subr.bf16.mxu0 %v855
        %914 = vmatpush1.bf16.msra.mxu0 %v854
        %915 = vmatprep.subr.bf16.mxu0 %v857
        %916 = vmatpush1.bf16.msra.mxu0 %v856
        %917 = vmatprep.subr.bf16.mxu0 %v859
        %918 = vmatpush1.bf16.msra.mxu0 %v858
        %919 = vmatprep.subr.bf16.mxu0 %v861
        %920 = vmatpush1.bf16.msra.mxu0 %v860
        %921 = vmatprep.subr.bf16.mxu0 %v863
        %922 = vmatpush1.bf16.msra.mxu0 %v862
        %923 = vmatprep.subr.bf16.mxu0 0
        %924 = vmatpush1.bf16.msra.mxu0 0
        %925 = vmatprep.subr.bf16.mxu0 0
        %926 = vmatpush1.bf16.msra.mxu0 0
        %927 = vmatprep.mubr.bf16.mxu0 %v893
        %928 = vmatmul.mubr.bf16.gmra.mrb[0].mxu0 %v719
        %v929 = vpop.f32.mrb[0].mxu0
        %v930 = vadd.f32 0.0, %v929
        %v931 = vpop.f32.mrb[0].mxu0
        %v932 = vadd.f32 0.0, %v931
        %v933 = vpop.f32.mrb[0].mxu0
        %v934 = vadd.f32 0.0, %v933
        %v935 = vpop.f32.mrb[0].mxu0
        %v936 = vadd.f32 0.0, %v935
        %937 = vdwg.mxu0
        %s938 = smul.addr %s721, 4
        %s939 = scalar_lea.vmem %s2, %s938
        %v940 = vld [vmem:[%s939] sm:$0xff]
        %v941 = vld [vmem:[%s939 + $0x8] sm:$0xff]
        %v942 = vld [vmem:[%s939 + $0x10] sm:$0xff]
        %v943 = vld [vmem:[%s939 + $0x18] sm:$0xff]
        %v944 = vld [vmem:[%s939 + $0x20] sm:$0xff]
        %v945 = vld [vmem:[%s939 + $0x28] sm:$0xff]
        %v946 = vld [vmem:[%s939 + $0x30] sm:$0xff]
        %v947 = vld [vmem:[%s939 + $0x38] sm:$0xff]
        %v948 = vld [vmem:[%s939 + $0x40] sm:$0xff]
        %v949 = vld [vmem:[%s939 + $0x48] sm:$0xff]
        %v950 = vld [vmem:[%s939 + $0x50] sm:$0xff]
        %v951 = vld [vmem:[%s939 + $0x58] sm:$0xff]
        %v952 = vld [vmem:[%s939 + $0x60] sm:$0xff]
        %v953 = vld [vmem:[%s939 + $0x68] sm:$0xff]
        %v954 = vld [vmem:[%s939 + $0x70] sm:$0xff]
        %v955 = vld [vmem:[%s939 + $0x78] sm:$0xff]
        %v956 = vld [vmem:[%s939 + $0x80] sm:$0xff]
        %v957 = vld [vmem:[%s939 + $0x88] sm:$0xff]
        %v958 = vld [vmem:[%s939 + $0x90] sm:$0xff]
        %v959 = vld [vmem:[%s939 + $0x98] sm:$0xff]
        %v960 = vld [vmem:[%s939 + $0xa0] sm:$0xff]
        %v961 = vld [vmem:[%s939 + $0xa8] sm:$0xff]
        %v962 = vld [vmem:[%s939 + $0xb0] sm:$0xff]
        %v963 = vld [vmem:[%s939 + $0xb8] sm:$0xff]
        %v964 = vld [vmem:[%s939 + $0xc0] sm:$0xff]
        %v965 = vld [vmem:[%s939 + $0xc8] sm:$0xff]
        %v966 = vld [vmem:[%s939 + $0xd0] sm:$0xff]
        %v967 = vld [vmem:[%s939 + $0xd8] sm:$0xff]
        %v996 = vunpack.c.l.b16 %v940
        %v997 = vunpack.c.h.b16 %v940
        %v998 = vunpack.c.l.b16 %v941
        %v999 = vunpack.c.h.b16 %v941
        %v1000 = vunpack.c.l.b16 %v942
        %v1001 = vunpack.c.h.b16 %v942
        %v1002 = vunpack.c.l.b16 %v943
        %v1003 = vunpack.c.h.b16 %v943
        %v1004 = vunpack.c.l.b16 %v944
        %v1005 = vunpack.c.h.b16 %v944
        %v1006 = vunpack.c.l.b16 %v945
        %v1007 = vunpack.c.h.b16 %v945
        %v1008 = vunpack.c.l.b16 %v946
        %v1009 = vunpack.c.h.b16 %v946
        %v1010 = vunpack.c.l.b16 %v947
        %v1011 = vunpack.c.h.b16 %v947
        %v1012 = vunpack.c.l.b16 %v948
        %v1013 = vunpack.c.h.b16 %v948
        %v1014 = vunpack.c.l.b16 %v949
        %v1015 = vunpack.c.h.b16 %v949
        %v1016 = vunpack.c.l.b16 %v950
        %v1017 = vunpack.c.h.b16 %v950
        %v1018 = vunpack.c.l.b16 %v951
        %v1019 = vunpack.c.h.b16 %v951
        %v1020 = vunpack.c.l.b16 %v952
        %v1021 = vunpack.c.h.b16 %v952
        %v1022 = vunpack.c.l.b16 %v953
        %v1023 = vunpack.c.h.b16 %v953
        %v1024 = vunpack.c.l.b16 %v954
        %v1025 = vunpack.c.h.b16 %v954
        %v1026 = vunpack.c.l.b16 %v955
        %v1027 = vunpack.c.h.b16 %v955
        %v1028 = vunpack.c.l.b16 %v956
        %v1029 = vunpack.c.h.b16 %v956
        %v1030 = vunpack.c.l.b16 %v957
        %v1031 = vunpack.c.h.b16 %v957
        %v1032 = vunpack.c.l.b16 %v958
        %v1033 = vunpack.c.h.b16 %v958
        %v1034 = vunpack.c.l.b16 %v959
        %v1035 = vunpack.c.h.b16 %v959
        %v1036 = vunpack.c.l.b16 %v960
        %v1037 = vunpack.c.h.b16 %v960
        %v1038 = vunpack.c.l.b16 %v961
        %v1039 = vunpack.c.h.b16 %v961
        %v1040 = vunpack.c.l.b16 %v962
        %v1041 = vunpack.c.h.b16 %v962
        %v1042 = vunpack.c.l.b16 %v963
        %v1043 = vunpack.c.h.b16 %v963
        %v1044 = vunpack.c.l.b16 %v964
        %v1045 = vunpack.c.h.b16 %v964
        %v1046 = vunpack.c.l.b16 %v965
        %v1047 = vunpack.c.h.b16 %v965
        %v1048 = vunpack.c.l.b16 %v966
        %v1049 = vunpack.c.h.b16 %v966
        %v1050 = vunpack.c.l.b16 %v967
        %v1051 = vunpack.c.h.b16 %v967
        %v1052 = vpack.c.b16 %v998, %v996
        %v1053 = vpack.c.b16 %v999, %v997
        %v1054 = vpack.c.b16 %v1002, %v1000
        %v1055 = vpack.c.b16 %v1003, %v1001
        %v1056 = vpack.c.b16 %v1006, %v1004
        %v1057 = vpack.c.b16 %v1007, %v1005
        %v1058 = vpack.c.b16 %v1010, %v1008
        %v1059 = vpack.c.b16 %v1011, %v1009
        %v1060 = vpack.c.b16 %v1014, %v1012
        %v1061 = vpack.c.b16 %v1015, %v1013
        %v1062 = vpack.c.b16 %v1018, %v1016
        %v1063 = vpack.c.b16 %v1019, %v1017
        %v1064 = vpack.c.b16 %v1022, %v1020
        %v1065 = vpack.c.b16 %v1023, %v1021
        %v1066 = vpack.c.b16 %v1026, %v1024
        %v1067 = vpack.c.b16 %v1027, %v1025
        %v1068 = vpack.c.b16 %v1030, %v1028
        %v1069 = vpack.c.b16 %v1031, %v1029
        %v1070 = vpack.c.b16 %v1034, %v1032
        %v1071 = vpack.c.b16 %v1035, %v1033
        %v1072 = vpack.c.b16 %v1038, %v1036
        %v1073 = vpack.c.b16 %v1039, %v1037
        %v1074 = vpack.c.b16 %v1042, %v1040
        %v1075 = vpack.c.b16 %v1043, %v1041
        %v1076 = vpack.c.b16 %v1046, %v1044
        %v1077 = vpack.c.b16 %v1047, %v1045
        %v1078 = vpack.c.b16 %v1050, %v1048
        %v1079 = vpack.c.b16 %v1051, %v1049
        %1108 = vmatprep.subr.bf16.mxu0 %v1053
        %1109 = vmatpush1.bf16.msra.mxu0 %v1052
        %1110 = vmatprep.subr.bf16.mxu0 %v1055
        %1111 = vmatpush1.bf16.msra.mxu0 %v1054
        %1112 = vmatprep.subr.bf16.mxu0 %v1057
        %1113 = vmatpush1.bf16.msra.mxu0 %v1056
        %1114 = vmatprep.subr.bf16.mxu0 %v1059
        %1115 = vmatpush1.bf16.msra.mxu0 %v1058
        %1116 = vmatprep.subr.bf16.mxu0 %v1061
        %1117 = vmatpush1.bf16.msra.mxu0 %v1060
        %1118 = vmatprep.subr.bf16.mxu0 %v1063
        %1119 = vmatpush1.bf16.msra.mxu0 %v1062
        %1120 = vmatprep.subr.bf16.mxu0 %v1065
        %1121 = vmatpush1.bf16.msra.mxu0 %v1064
        %1122 = vmatprep.subr.bf16.mxu0 %v1067
        %1123 = vmatpush1.bf16.msra.mxu0 %v1066
        %1124 = vmatprep.subr.bf16.mxu0 %v1069
        %1125 = vmatpush1.bf16.msra.mxu0 %v1068
        %1126 = vmatprep.subr.bf16.mxu0 %v1071
        %1127 = vmatpush1.bf16.msra.mxu0 %v1070
        %1128 = vmatprep.subr.bf16.mxu0 %v1073
        %1129 = vmatpush1.bf16.msra.mxu0 %v1072
        %1130 = vmatprep.subr.bf16.mxu0 %v1075
        %1131 = vmatpush1.bf16.msra.mxu0 %v1074
        %1132 = vmatprep.subr.bf16.mxu0 %v1077
        %1133 = vmatpush1.bf16.msra.mxu0 %v1076
        %1134 = vmatprep.subr.bf16.mxu0 %v1079
        %1135 = vmatpush1.bf16.msra.mxu0 %v1078
        %1136 = vmatprep.subr.bf16.mxu0 0
        %1137 = vmatpush1.bf16.msra.mxu0 0
        %1138 = vmatprep.subr.bf16.mxu0 0
        %1139 = vmatpush1.bf16.msra.mxu0 0
        %1140 = vmatprep.mubr.bf16.mxu0 %v893
        %1141 = vmatmul.mubr.bf16.gmra.mrb[0].mxu0 %v719
        %v1142 = vpop.f32.mrb[0].mxu0
        %v1143 = vadd.f32 0.0, %v1142
        %v1144 = vpop.f32.mrb[0].mxu0
        %v1145 = vadd.f32 0.0, %v1144
        %v1146 = vpop.f32.mrb[0].mxu0
        %v1147 = vadd.f32 0.0, %v1146
        %v1148 = vpop.f32.mrb[0].mxu0
        %v1149 = vadd.f32 0.0, %v1148
        %1150 = vdwg.mxu0
        %s1151 = smul.addr %s721, 4
        %s1152 = scalar_lea.vmem %s3, %s1151
        %v1153 = vld [vmem:[%s1152] sm:$0xff]
        %v1154 = vld [vmem:[%s1152 + $0x8] sm:$0xff]
        %v1155 = vld [vmem:[%s1152 + $0x10] sm:$0xff]
        %v1156 = vld [vmem:[%s1152 + $0x18] sm:$0xff]
        %v1157 = vld [vmem:[%s1152 + $0x20] sm:$0xff]
        %v1158 = vld [vmem:[%s1152 + $0x28] sm:$0xff]
        %v1159 = vld [vmem:[%s1152 + $0x30] sm:$0xff]
        %v1160 = vld [vmem:[%s1152 + $0x38] sm:$0xff]
        %v1161 = vld [vmem:[%s1152 + $0x40] sm:$0xff]
        %v1162 = vld [vmem:[%s1152 + $0x48] sm:$0xff]
        %v1163 = vld [vmem:[%s1152 + $0x50] sm:$0xff]
        %v1164 = vld [vmem:[%s1152 + $0x58] sm:$0xff]
        %v1165 = vld [vmem:[%s1152 + $0x60] sm:$0xff]
        %v1166 = vld [vmem:[%s1152 + $0x68] sm:$0xff]
        %v1167 = vld [vmem:[%s1152 + $0x70] sm:$0xff]
        %v1168 = vld [vmem:[%s1152 + $0x78] sm:$0xff]
        %v1169 = vld [vmem:[%s1152 + $0x80] sm:$0xff]
        %v1170 = vld [vmem:[%s1152 + $0x88] sm:$0xff]
        %v1171 = vld [vmem:[%s1152 + $0x90] sm:$0xff]
        %v1172 = vld [vmem:[%s1152 + $0x98] sm:$0xff]
        %v1173 = vld [vmem:[%s1152 + $0xa0] sm:$0xff]
        %v1174 = vld [vmem:[%s1152 + $0xa8] sm:$0xff]
        %v1175 = vld [vmem:[%s1152 + $0xb0] sm:$0xff]
        %v1176 = vld [vmem:[%s1152 + $0xb8] sm:$0xff]
        %v1177 = vld [vmem:[%s1152 + $0xc0] sm:$0xff]
        %v1178 = vld [vmem:[%s1152 + $0xc8] sm:$0xff]
        %v1179 = vld [vmem:[%s1152 + $0xd0] sm:$0xff]
        %v1180 = vld [vmem:[%s1152 + $0xd8] sm:$0xff]
        %v1209 = vunpack.c.l.b16 %v1153
        %v1210 = vunpack.c.h.b16 %v1153
        %v1211 = vunpack.c.l.b16 %v1154
        %v1212 = vunpack.c.h.b16 %v1154
        %v1213 = vunpack.c.l.b16 %v1155
        %v1214 = vunpack.c.h.b16 %v1155
        %v1215 = vunpack.c.l.b16 %v1156
        %v1216 = vunpack.c.h.b16 %v1156
        %v1217 = vunpack.c.l.b16 %v1157
        %v1218 = vunpack.c.h.b16 %v1157
        %v1219 = vunpack.c.l.b16 %v1158
        %v1220 = vunpack.c.h.b16 %v1158
        %v1221 = vunpack.c.l.b16 %v1159
        %v1222 = vunpack.c.h.b16 %v1159
        %v1223 = vunpack.c.l.b16 %v1160
        %v1224 = vunpack.c.h.b16 %v1160
        %v1225 = vunpack.c.l.b16 %v1161
        %v1226 = vunpack.c.h.b16 %v1161
        %v1227 = vunpack.c.l.b16 %v1162
        %v1228 = vunpack.c.h.b16 %v1162
        %v1229 = vunpack.c.l.b16 %v1163
        %v1230 = vunpack.c.h.b16 %v1163
        %v1231 = vunpack.c.l.b16 %v1164
        %v1232 = vunpack.c.h.b16 %v1164
        %v1233 = vunpack.c.l.b16 %v1165
        %v1234 = vunpack.c.h.b16 %v1165
        %v1235 = vunpack.c.l.b16 %v1166
        %v1236 = vunpack.c.h.b16 %v1166
        %v1237 = vunpack.c.l.b16 %v1167
        %v1238 = vunpack.c.h.b16 %v1167
        %v1239 = vunpack.c.l.b16 %v1168
        %v1240 = vunpack.c.h.b16 %v1168
        %v1241 = vunpack.c.l.b16 %v1169
        %v1242 = vunpack.c.h.b16 %v1169
        %v1243 = vunpack.c.l.b16 %v1170
        %v1244 = vunpack.c.h.b16 %v1170
        %v1245 = vunpack.c.l.b16 %v1171
        %v1246 = vunpack.c.h.b16 %v1171
        %v1247 = vunpack.c.l.b16 %v1172
        %v1248 = vunpack.c.h.b16 %v1172
        %v1249 = vunpack.c.l.b16 %v1173
        %v1250 = vunpack.c.h.b16 %v1173
        %v1251 = vunpack.c.l.b16 %v1174
        %v1252 = vunpack.c.h.b16 %v1174
        %v1253 = vunpack.c.l.b16 %v1175
        %v1254 = vunpack.c.h.b16 %v1175
        %v1255 = vunpack.c.l.b16 %v1176
        %v1256 = vunpack.c.h.b16 %v1176
        %v1257 = vunpack.c.l.b16 %v1177
        %v1258 = vunpack.c.h.b16 %v1177
        %v1259 = vunpack.c.l.b16 %v1178
        %v1260 = vunpack.c.h.b16 %v1178
        %v1261 = vunpack.c.l.b16 %v1179
        %v1262 = vunpack.c.h.b16 %v1179
        %v1263 = vunpack.c.l.b16 %v1180
        %v1264 = vunpack.c.h.b16 %v1180
        %v1265 = vpack.c.b16 %v1211, %v1209
        %v1266 = vpack.c.b16 %v1212, %v1210
        %v1267 = vpack.c.b16 %v1215, %v1213
        %v1268 = vpack.c.b16 %v1216, %v1214
        %v1269 = vpack.c.b16 %v1219, %v1217
        %v1270 = vpack.c.b16 %v1220, %v1218
        %v1271 = vpack.c.b16 %v1223, %v1221
        %v1272 = vpack.c.b16 %v1224, %v1222
        %v1273 = vpack.c.b16 %v1227, %v1225
        %v1274 = vpack.c.b16 %v1228, %v1226
        %v1275 = vpack.c.b16 %v1231, %v1229
        %v1276 = vpack.c.b16 %v1232, %v1230
        %v1277 = vpack.c.b16 %v1235, %v1233
        %v1278 = vpack.c.b16 %v1236, %v1234
        %v1279 = vpack.c.b16 %v1239, %v1237
        %v1280 = vpack.c.b16 %v1240, %v1238
        %v1281 = vpack.c.b16 %v1243, %v1241
        %v1282 = vpack.c.b16 %v1244, %v1242
        %v1283 = vpack.c.b16 %v1247, %v1245
        %v1284 = vpack.c.b16 %v1248, %v1246
        %v1285 = vpack.c.b16 %v1251, %v1249
        %v1286 = vpack.c.b16 %v1252, %v1250
        %v1287 = vpack.c.b16 %v1255, %v1253
        %v1288 = vpack.c.b16 %v1256, %v1254
        %v1289 = vpack.c.b16 %v1259, %v1257
        %v1290 = vpack.c.b16 %v1260, %v1258
        %v1291 = vpack.c.b16 %v1263, %v1261
        %v1292 = vpack.c.b16 %v1264, %v1262
        %1321 = vmatprep.subr.bf16.mxu0 %v1266
        %1322 = vmatpush1.bf16.msra.mxu0 %v1265
        %1323 = vmatprep.subr.bf16.mxu0 %v1268
        %1324 = vmatpush1.bf16.msra.mxu0 %v1267
        %1325 = vmatprep.subr.bf16.mxu0 %v1270
        %1326 = vmatpush1.bf16.msra.mxu0 %v1269
        %1327 = vmatprep.subr.bf16.mxu0 %v1272
        %1328 = vmatpush1.bf16.msra.mxu0 %v1271
        %1329 = vmatprep.subr.bf16.mxu0 %v1274
        %1330 = vmatpush1.bf16.msra.mxu0 %v1273
        %1331 = vmatprep.subr.bf16.mxu0 %v1276
        %1332 = vmatpush1.bf16.msra.mxu0 %v1275
        %1333 = vmatprep.subr.bf16.mxu0 %v1278
        %1334 = vmatpush1.bf16.msra.mxu0 %v1277
        %1335 = vmatprep.subr.bf16.mxu0 %v1280
        %1336 = vmatpush1.bf16.msra.mxu0 %v1279
        %1337 = vmatprep.subr.bf16.mxu0 %v1282
        %1338 = vmatpush1.bf16.msra.mxu0 %v1281
        %1339 = vmatprep.subr.bf16.mxu0 %v1284
        %1340 = vmatpush1.bf16.msra.mxu0 %v1283
        %1341 = vmatprep.subr.bf16.mxu0 %v1286
        %1342 = vmatpush1.bf16.msra.mxu0 %v1285
        %1343 = vmatprep.subr.bf16.mxu0 %v1288
        %1344 = vmatpush1.bf16.msra.mxu0 %v1287
        %1345 = vmatprep.subr.bf16.mxu0 %v1290
        %1346 = vmatpush1.bf16.msra.mxu0 %v1289
        %1347 = vmatprep.subr.bf16.mxu0 %v1292
        %1348 = vmatpush1.bf16.msra.mxu0 %v1291
        %1349 = vmatprep.subr.bf16.mxu0 0
        %1350 = vmatpush1.bf16.msra.mxu0 0
        %1351 = vmatprep.subr.bf16.mxu0 0
        %1352 = vmatpush1.bf16.msra.mxu0 0
        %1353 = vmatprep.mubr.bf16.mxu0 %v893
        %1354 = vmatmul.mubr.bf16.gmra.mrb[0].mxu0 %v719
        %v1355 = vpop.f32.mrb[0].mxu0
        %v1356 = vadd.f32 0.0, %v1355
        %v1357 = vpop.f32.mrb[0].mxu0
        %v1358 = vadd.f32 0.0, %v1357
        %v1359 = vpop.f32.mrb[0].mxu0
        %v1360 = vadd.f32 0.0, %v1359
        %v1361 = vpop.f32.mrb[0].mxu0
        %v1362 = vadd.f32 0.0, %v1361
        %1363 = vdwg.mxu0
        %v1366 = vcombine.high %v930, %v930
        %v1368 = vunpack.c.l.s4 1966171168
        %v1369 = vunpack.c.0.s8 %v1368
        %v1370 = vlaneseq
        %v1371 = vshrl.u32 %v1370, 7
        %v1372 = vsub.s32 %v1369, %v1371
        %v1373 = vrot.slane %v930, %v1372
        %v1375 = vunpack.c.l.s4 1966171168
        %v1376 = vunpack.c.0.s8 %v1375
        %v1377 = vlaneseq
        %v1378 = vshrl.u32 %v1377, 7
        %v1379 = vsub.s32 %v1376, %v1378
        %v1380 = vrot.slane %v1366, %v1379
        %v1381 = vcombine.high %v1373, %v1373
        %v1382 = vcombine.high %v1380, %v1380
        %v1384 = vunpack.c.l.s4 1966171168
        %v1385 = vunpack.c.0.s8 %v1384
        %v1386 = vlaneseq
        %v1387 = vshrl.u32 %v1386, 7
        %v1388 = vsub.s32 %v1385, %v1387
        %v1389 = vrot.slane %v1373, %v1388
        %v1391 = vunpack.c.l.s4 1966171168
        %v1392 = vunpack.c.0.s8 %v1391
        %v1393 = vlaneseq
        %v1394 = vshrl.u32 %v1393, 7
        %v1395 = vsub.s32 %v1392, %v1394
        %v1396 = vrot.slane %v1380, %v1395
        %v1398 = vunpack.c.l.s4 1966171168
        %v1399 = vunpack.c.0.s8 %v1398
        %v1400 = vlaneseq
        %v1401 = vshrl.u32 %v1400, 7
        %v1402 = vsub.s32 %v1399, %v1401
        %v1403 = vrot.slane %v1381, %v1402
        %v1405 = vunpack.c.l.s4 1966171168
        %v1406 = vunpack.c.0.s8 %v1405
        %v1407 = vlaneseq
        %v1408 = vshrl.u32 %v1407, 7
        %v1409 = vsub.s32 %v1406, %v1408
        %v1410 = vrot.slane %v1382, %v1409
        %v1411 = vcombine.high %v1389, %v1389
        %v1412 = vcombine.high %v1396, %v1396
        %v1413 = vcombine.high %v1403, %v1403
        %v1414 = vcombine.high %v1410, %v1410
        %v1416 = vunpack.c.l.s4 1966171168
        %v1417 = vunpack.c.0.s8 %v1416
        %v1418 = vlaneseq
        %v1419 = vshrl.u32 %v1418, 7
        %v1420 = vsub.s32 %v1417, %v1419
        %v1421 = vrot.slane %v934, %v1420
        %v1422 = vcombine.high %v1421, %v1421
        %v1424 = vunpack.c.l.s4 1966171168
        %v1425 = vunpack.c.0.s8 %v1424
        %v1426 = vlaneseq
        %v1427 = vshrl.u32 %v1426, 7
        %v1428 = vsub.s32 %v1425, %v1427
        %v1429 = vrot.slane %v1421, %v1428
        %v1431 = vunpack.c.l.s4 1966171168
        %v1432 = vunpack.c.0.s8 %v1431
        %v1433 = vlaneseq
        %v1434 = vshrl.u32 %v1433, 7
        %v1435 = vsub.s32 %v1432, %v1434
        %v1436 = vrot.slane %v1422, %v1435
        %v1439 = vcombine.high %v1143, %v1143
        %v1441 = vunpack.c.l.s4 1966171168
        %v1442 = vunpack.c.0.s8 %v1441
        %v1443 = vlaneseq
        %v1444 = vshrl.u32 %v1443, 7
        %v1445 = vsub.s32 %v1442, %v1444
        %v1446 = vrot.slane %v1143, %v1445
        %v1448 = vunpack.c.l.s4 1966171168
        %v1449 = vunpack.c.0.s8 %v1448
        %v1450 = vlaneseq
        %v1451 = vshrl.u32 %v1450, 7
        %v1452 = vsub.s32 %v1449, %v1451
        %v1453 = vrot.slane %v1439, %v1452
        %v1454 = vcombine.high %v1446, %v1446
        %v1455 = vcombine.high %v1453, %v1453
        %v1457 = vunpack.c.l.s4 1966171168
        %v1458 = vunpack.c.0.s8 %v1457
        %v1459 = vlaneseq
        %v1460 = vshrl.u32 %v1459, 7
        %v1461 = vsub.s32 %v1458, %v1460
        %v1462 = vrot.slane %v1446, %v1461
        %v1464 = vunpack.c.l.s4 1966171168
        %v1465 = vunpack.c.0.s8 %v1464
        %v1466 = vlaneseq
        %v1467 = vshrl.u32 %v1466, 7
        %v1468 = vsub.s32 %v1465, %v1467
        %v1469 = vrot.slane %v1453, %v1468
        %v1471 = vunpack.c.l.s4 1966171168
        %v1472 = vunpack.c.0.s8 %v1471
        %v1473 = vlaneseq
        %v1474 = vshrl.u32 %v1473, 7
        %v1475 = vsub.s32 %v1472, %v1474
        %v1476 = vrot.slane %v1454, %v1475
        %v1478 = vunpack.c.l.s4 1966171168
        %v1479 = vunpack.c.0.s8 %v1478
        %v1480 = vlaneseq
        %v1481 = vshrl.u32 %v1480, 7
        %v1482 = vsub.s32 %v1479, %v1481
        %v1483 = vrot.slane %v1455, %v1482
        %v1484 = vcombine.high %v1462, %v1462
        %v1485 = vcombine.high %v1469, %v1469
        %v1486 = vcombine.high %v1476, %v1476
        %v1487 = vcombine.high %v1483, %v1483
        %v1489 = vunpack.c.l.s4 1966171168
        %v1490 = vunpack.c.0.s8 %v1489
        %v1491 = vlaneseq
        %v1492 = vshrl.u32 %v1491, 7
        %v1493 = vsub.s32 %v1490, %v1492
        %v1494 = vrot.slane %v1147, %v1493
        %v1495 = vcombine.high %v1494, %v1494
        %v1497 = vunpack.c.l.s4 1966171168
        %v1498 = vunpack.c.0.s8 %v1497
        %v1499 = vlaneseq
        %v1500 = vshrl.u32 %v1499, 7
        %v1501 = vsub.s32 %v1498, %v1500
        %v1502 = vrot.slane %v1494, %v1501
        %v1504 = vunpack.c.l.s4 1966171168
        %v1505 = vunpack.c.0.s8 %v1504
        %v1506 = vlaneseq
        %v1507 = vshrl.u32 %v1506, 7
        %v1508 = vsub.s32 %v1505, %v1507
        %v1509 = vrot.slane %v1495, %v1508
        %v1512 = vcombine.high %v1356, %v1356
        %v1514 = vunpack.c.l.s4 1966171168
        %v1515 = vunpack.c.0.s8 %v1514
        %v1516 = vlaneseq
        %v1517 = vshrl.u32 %v1516, 7
        %v1518 = vsub.s32 %v1515, %v1517
        %v1519 = vrot.slane %v1356, %v1518
        %v1521 = vunpack.c.l.s4 1966171168
        %v1522 = vunpack.c.0.s8 %v1521
        %v1523 = vlaneseq
        %v1524 = vshrl.u32 %v1523, 7
        %v1525 = vsub.s32 %v1522, %v1524
        %v1526 = vrot.slane %v1512, %v1525
        %v1527 = vcombine.high %v1519, %v1519
        %v1528 = vcombine.high %v1526, %v1526
        %v1530 = vunpack.c.l.s4 1966171168
        %v1531 = vunpack.c.0.s8 %v1530
        %v1532 = vlaneseq
        %v1533 = vshrl.u32 %v1532, 7
        %v1534 = vsub.s32 %v1531, %v1533
        %v1535 = vrot.slane %v1519, %v1534
        %v1537 = vunpack.c.l.s4 1966171168
        %v1538 = vunpack.c.0.s8 %v1537
        %v1539 = vlaneseq
        %v1540 = vshrl.u32 %v1539, 7
        %v1541 = vsub.s32 %v1538, %v1540
        %v1542 = vrot.slane %v1526, %v1541
        %v1544 = vunpack.c.l.s4 1966171168
        %v1545 = vunpack.c.0.s8 %v1544
        %v1546 = vlaneseq
        %v1547 = vshrl.u32 %v1546, 7
        %v1548 = vsub.s32 %v1545, %v1547
        %v1549 = vrot.slane %v1527, %v1548
        %v1551 = vunpack.c.l.s4 1966171168
        %v1552 = vunpack.c.0.s8 %v1551
        %v1553 = vlaneseq
        %v1554 = vshrl.u32 %v1553, 7
        %v1555 = vsub.s32 %v1552, %v1554
        %v1556 = vrot.slane %v1528, %v1555
        %v1557 = vcombine.high %v1535, %v1535
        %v1558 = vcombine.high %v1542, %v1542
        %v1559 = vcombine.high %v1549, %v1549
        %v1560 = vcombine.high %v1556, %v1556
        %v1562 = vunpack.c.l.s4 1966171168
        %v1563 = vunpack.c.0.s8 %v1562
        %v1564 = vlaneseq
        %v1565 = vshrl.u32 %v1564, 7
        %v1566 = vsub.s32 %v1563, %v1565
        %v1567 = vrot.slane %v1360, %v1566
        %v1568 = vcombine.high %v1567, %v1567
        %v1570 = vunpack.c.l.s4 1966171168
        %v1571 = vunpack.c.0.s8 %v1570
        %v1572 = vlaneseq
        %v1573 = vshrl.u32 %v1572, 7
        %v1574 = vsub.s32 %v1571, %v1573
        %v1575 = vrot.slane %v1567, %v1574
        %v1577 = vunpack.c.l.s4 1966171168
        %v1578 = vunpack.c.0.s8 %v1577
        %v1579 = vlaneseq
        %v1580 = vshrl.u32 %v1579, 7
        %v1581 = vsub.s32 %v1578, %v1580
        %v1582 = vrot.slane %v1568, %v1581
        %v1583 = vcombine.low %v1389, %v1403
        %v1584 = vcombine.low %v1411, %v1413
        %v1586 = vunpack.c.l.s4 1966171168
        %v1587 = vunpack.c.0.s8 %v1586
        %v1588 = vlaneseq
        %v1589 = vshrl.u32 %v1588, 7
        %v1590 = vsub.s32 %v1587, %v1589
        %v1591 = vrot.slane %v1583, %v1590
        %v1593 = vunpack.c.l.s4 1966171168
        %v1594 = vunpack.c.0.s8 %v1593
        %v1595 = vlaneseq
        %v1596 = vshrl.u32 %v1595, 7
        %v1597 = vsub.s32 %v1594, %v1596
        %v1598 = vrot.slane %v1584, %v1597
        %v1600 = vunpack.c.l.s4 1966171168
        %v1601 = vunpack.c.0.s8 %v1600
        %v1602 = vlaneseq
        %v1603 = vshrl.u32 %v1602, 7
        %v1604 = vsub.s32 %v1601, %v1603
        %v1605 = vrot.slane %v1396, %v1604
        %v1606 = vcombine.low %v1591, %v1598
        %v1608 = vunpack.c.l.s4 1966171168
        %v1609 = vunpack.c.0.s8 %v1608
        %v1610 = vlaneseq
        %v1611 = vshrl.u32 %v1610, 7
        %v1612 = vsub.s32 %v1609, %v1611
        %v1613 = vrot.slane %v1606, %v1612
        %v1615 = vunpack.c.l.s4 1966171168
        %v1616 = vunpack.c.0.s8 %v1615
        %v1617 = vlaneseq
        %v1618 = vshrl.u32 %v1617, 7
        %v1619 = vsub.s32 %v1616, %v1618
        %v1620 = vrot.slane %v1605, %v1619
        %v1621 = vcombine.low %v1613, %v1620
        %v1622 = vcombine.low %v1462, %v1476
        %v1623 = vcombine.low %v1484, %v1486
        %v1625 = vunpack.c.l.s4 1966171168
        %v1626 = vunpack.c.0.s8 %v1625
        %v1627 = vlaneseq
        %v1628 = vshrl.u32 %v1627, 7
        %v1629 = vsub.s32 %v1626, %v1628
        %v1630 = vrot.slane %v1622, %v1629
        %v1632 = vunpack.c.l.s4 1966171168
        %v1633 = vunpack.c.0.s8 %v1632
        %v1634 = vlaneseq
        %v1635 = vshrl.u32 %v1634, 7
        %v1636 = vsub.s32 %v1633, %v1635
        %v1637 = vrot.slane %v1623, %v1636
        %v1639 = vunpack.c.l.s4 1966171168
        %v1640 = vunpack.c.0.s8 %v1639
        %v1641 = vlaneseq
        %v1642 = vshrl.u32 %v1641, 7
        %v1643 = vsub.s32 %v1640, %v1642
        %v1644 = vrot.slane %v1469, %v1643
        %v1645 = vcombine.low %v1630, %v1637
        %v1647 = vunpack.c.l.s4 1966171168
        %v1648 = vunpack.c.0.s8 %v1647
        %v1649 = vlaneseq
        %v1650 = vshrl.u32 %v1649, 7
        %v1651 = vsub.s32 %v1648, %v1650
        %v1652 = vrot.slane %v1645, %v1651
        %v1654 = vunpack.c.l.s4 1966171168
        %v1655 = vunpack.c.0.s8 %v1654
        %v1656 = vlaneseq
        %v1657 = vshrl.u32 %v1656, 7
        %v1658 = vsub.s32 %v1655, %v1657
        %v1659 = vrot.slane %v1644, %v1658
        %v1660 = vcombine.low %v1652, %v1659
        %vm1661 = vcmask 228352
        %v1662 = vsel %vm1661, %v1621, 0
        %v1664 = vsel %vm1661, %v1660, 0
        %1666 = vmatprep.subr.mxu0 0.0
        %1667 = vmatpush1.xpose.msra.mxu0 %v1664
        %1668 = vmatprep.subr.mxu0 0.0
        %1669 = vmatpush1.xpose.msra.mxu0 0.0
        %1670 = vmatprep.subr.mxu0 0.0
        %1671 = vmatpush1.xpose.msra.mxu0 0.0
        %1672 = vmatprep.subr.mxu0 0.0
        %1673 = vmatpush1.xpose.msra.mxu0 0.0
        %1674 = vmatprep.subr.mxu0 0.0
        %1675 = vmatpush1.xpose.msra.mxu0 0.0
        %1676 = vmatprep.subr.mxu0 0.0
        %1677 = vmatpush1.xpose.msra.mxu0 0.0
        %1678 = vmatprep.subr.mxu0 0.0
        %1679 = vmatpush1.xpose.msra.mxu0 0.0
        %1680 = vmatprep.subr.mxu0 0.0
        %1681 = vmatpush1.xpose.msra.mxu0 0.0
        %1682 = vmatprep.subr.mxu0 0.0
        %1683 = vmatpush1.xpose.msra.mxu0 0.0
        %1684 = vmatprep.subr.mxu0 0.0
        %1685 = vmatpush1.xpose.msra.mxu0 0.0
        %1686 = vmatprep.subr.mxu0 0.0
        %1687 = vmatpush1.xpose.msra.mxu0 0.0
        %1688 = vmatprep.subr.mxu0 0.0
        %1689 = vmatpush1.xpose.msra.mxu0 0.0
        %1690 = vmatprep.subr.mxu0 0.0
        %1691 = vmatpush1.xpose.msra.mxu0 0.0
        %1692 = vmatprep.subr.mxu0 0.0
        %1693 = vmatpush1.xpose.msra.mxu0 0.0
        %1694 = vmatprep.subr.mxu0 0.0
        %1695 = vmatpush1.xpose.msra.mxu0 0.0
        %1696 = vmatprep.subr.mxu0 0.0
        %1697 = vmatpush1.xpose.msra.mxu0 0.0
        %1698 = vmatprep.subr.mxu0 0.0
        %1699 = vmatpush1.xpose.msra.mxu0 0.0
        %1700 = vmatprep.subr.mxu0 0.0
        %1701 = vmatpush1.xpose.msra.mxu0 0.0
        %1702 = vmatprep.subr.mxu0 0.0
        %1703 = vmatpush1.xpose.msra.mxu0 0.0
        %1704 = vmatprep.subr.mxu0 0.0
        %1705 = vmatpush1.xpose.msra.mxu0 0.0
        %1706 = vmatprep.subr.mxu0 0.0
        %1707 = vmatpush1.xpose.msra.mxu0 0.0
        %1708 = vmatprep.subr.mxu0 0.0
        %1709 = vmatpush1.xpose.msra.mxu0 0.0
        %1710 = vmatprep.subr.mxu0 0.0
        %1711 = vmatpush1.xpose.msra.mxu0 0.0
        %1712 = vmatprep.subr.mxu0 0.0
        %1713 = vmatpush1.xpose.msra.mxu0 0.0
        %1714 = vmatprep.subr.mxu0 0.0
        %1715 = vmatpush1.xpose.msra.mxu0 0.0
        %1716 = vmatprep.subr.mxu0 0.0
        %1717 = vmatpush1.xpose.msra.mxu0 0.0
        %1718 = vmatprep.subr.mxu0 0.0
        %1719 = vmatpush1.xpose.msra.mxu0 0.0
        %1720 = vmatprep.subr.mxu0 0.0
        %1721 = vmatpush1.xpose.msra.mxu0 0.0
        %1722 = vmatprep.subr.mxu0 0.0
        %1723 = vmatpush1.xpose.msra.mxu0 0.0
        %1724 = vmatprep.subr.mxu0 0.0
        %1725 = vmatpush1.xpose.msra.mxu0 0.0
        %1726 = vmatprep.subr.mxu0 0.0
        %1727 = vmatpush1.xpose.msra.mxu0 0.0
        %1728 = vmatprep.subr.mxu0 0.0
        %1729 = vmatpush1.xpose.msra.mxu0 0.0
        %1730 = vmatprep.mubr.f32.mxu0 0.0
        %1731 = vmatmul.mubr.f32.gmra.mrb[0].mxu0 %v1662
        %v1732 = vpop.f32.mrb[0].mxu0
        %v1733 = vadd.f32 0.0, %v1732
        %v1734 = vpop.f32.mrb[0].mxu0
        %1735 = vdwg.mxu0
        %v1736 = vcombine.low %v1410, %v1412
        %v1737 = vcombine.low %v1414, %v1429
        %v1739 = vunpack.c.l.s4 1966171168
        %v1740 = vunpack.c.0.s8 %v1739
        %v1741 = vlaneseq
        %v1742 = vshrl.u32 %v1741, 7
        %v1743 = vsub.s32 %v1740, %v1742
        %v1744 = vrot.slane %v1736, %v1743
        %v1746 = vunpack.c.l.s4 1966171168
        %v1747 = vunpack.c.0.s8 %v1746
        %v1748 = vlaneseq
        %v1749 = vshrl.u32 %v1748, 7
        %v1750 = vsub.s32 %v1747, %v1749
        %v1751 = vrot.slane %v1737, %v1750
        %v1753 = vunpack.c.l.s4 1966171168
        %v1754 = vunpack.c.0.s8 %v1753
        %v1755 = vlaneseq
        %v1756 = vshrl.u32 %v1755, 7
        %v1757 = vsub.s32 %v1754, %v1756
        %v1758 = vrot.slane %v1436, %v1757
        %v1759 = vcombine.low %v1744, %v1751
        %v1761 = vunpack.c.l.s4 1966171168
        %v1762 = vunpack.c.0.s8 %v1761
        %v1763 = vlaneseq
        %v1764 = vshrl.u32 %v1763, 7
        %v1765 = vsub.s32 %v1762, %v1764
        %v1766 = vrot.slane %v1759, %v1765
        %v1768 = vunpack.c.l.s4 1966171168
        %v1769 = vunpack.c.0.s8 %v1768
        %v1770 = vlaneseq
        %v1771 = vshrl.u32 %v1770, 7
        %v1772 = vsub.s32 %v1769, %v1771
        %v1773 = vrot.slane %v1758, %v1772
        %v1774 = vcombine.low %v1766, %v1773
        %v1775 = vcombine.low %v1483, %v1485
        %v1776 = vcombine.low %v1487, %v1502
        %v1778 = vunpack.c.l.s4 1966171168
        %v1779 = vunpack.c.0.s8 %v1778
        %v1780 = vlaneseq
        %v1781 = vshrl.u32 %v1780, 7
        %v1782 = vsub.s32 %v1779, %v1781
        %v1783 = vrot.slane %v1775, %v1782
        %v1785 = vunpack.c.l.s4 1966171168
        %v1786 = vunpack.c.0.s8 %v1785
        %v1787 = vlaneseq
        %v1788 = vshrl.u32 %v1787, 7
        %v1789 = vsub.s32 %v1786, %v1788
        %v1790 = vrot.slane %v1776, %v1789
        %v1792 = vunpack.c.l.s4 1966171168
        %v1793 = vunpack.c.0.s8 %v1792
        %v1794 = vlaneseq
        %v1795 = vshrl.u32 %v1794, 7
        %v1796 = vsub.s32 %v1793, %v1795
        %v1797 = vrot.slane %v1509, %v1796
        %v1798 = vcombine.low %v1783, %v1790
        %v1800 = vunpack.c.l.s4 1966171168
        %v1801 = vunpack.c.0.s8 %v1800
        %v1802 = vlaneseq
        %v1803 = vshrl.u32 %v1802, 7
        %v1804 = vsub.s32 %v1801, %v1803
        %v1805 = vrot.slane %v1798, %v1804
        %v1807 = vunpack.c.l.s4 1966171168
        %v1808 = vunpack.c.0.s8 %v1807
        %v1809 = vlaneseq
        %v1810 = vshrl.u32 %v1809, 7
        %v1811 = vsub.s32 %v1808, %v1810
        %v1812 = vrot.slane %v1797, %v1811
        %v1813 = vcombine.low %v1805, %v1812
        %v1814 = vsel %vm1661, %v1774, 0
        %v1816 = vsel %vm1661, %v1813, 0
        %1818 = vmatprep.subr.mxu0 0.0
        %1819 = vmatpush1.xpose.msra.mxu0 %v1816
        %1820 = vmatprep.subr.mxu0 0.0
        %1821 = vmatpush1.xpose.msra.mxu0 0.0
        %1822 = vmatprep.subr.mxu0 0.0
        %1823 = vmatpush1.xpose.msra.mxu0 0.0
        %1824 = vmatprep.subr.mxu0 0.0
        %1825 = vmatpush1.xpose.msra.mxu0 0.0
        %1826 = vmatprep.subr.mxu0 0.0
        %1827 = vmatpush1.xpose.msra.mxu0 0.0
        %1828 = vmatprep.subr.mxu0 0.0
        %1829 = vmatpush1.xpose.msra.mxu0 0.0
        %1830 = vmatprep.subr.mxu0 0.0
        %1831 = vmatpush1.xpose.msra.mxu0 0.0
        %1832 = vmatprep.subr.mxu0 0.0
        %1833 = vmatpush1.xpose.msra.mxu0 0.0
        %1834 = vmatprep.subr.mxu0 0.0
        %1835 = vmatpush1.xpose.msra.mxu0 0.0
        %1836 = vmatprep.subr.mxu0 0.0
        %1837 = vmatpush1.xpose.msra.mxu0 0.0
        %1838 = vmatprep.subr.mxu0 0.0
        %1839 = vmatpush1.xpose.msra.mxu0 0.0
        %1840 = vmatprep.subr.mxu0 0.0
        %1841 = vmatpush1.xpose.msra.mxu0 0.0
        %1842 = vmatprep.subr.mxu0 0.0
        %1843 = vmatpush1.xpose.msra.mxu0 0.0
        %1844 = vmatprep.subr.mxu0 0.0
        %1845 = vmatpush1.xpose.msra.mxu0 0.0
        %1846 = vmatprep.subr.mxu0 0.0
        %1847 = vmatpush1.xpose.msra.mxu0 0.0
        %1848 = vmatprep.subr.mxu0 0.0
        %1849 = vmatpush1.xpose.msra.mxu0 0.0
        %1850 = vmatprep.subr.mxu0 0.0
        %1851 = vmatpush1.xpose.msra.mxu0 0.0
        %1852 = vmatprep.subr.mxu0 0.0
        %1853 = vmatpush1.xpose.msra.mxu0 0.0
        %1854 = vmatprep.subr.mxu0 0.0
        %1855 = vmatpush1.xpose.msra.mxu0 0.0
        %1856 = vmatprep.subr.mxu0 0.0
        %1857 = vmatpush1.xpose.msra.mxu0 0.0
        %1858 = vmatprep.subr.mxu0 0.0
        %1859 = vmatpush1.xpose.msra.mxu0 0.0
        %1860 = vmatprep.subr.mxu0 0.0
        %1861 = vmatpush1.xpose.msra.mxu0 0.0
        %1862 = vmatprep.subr.mxu0 0.0
        %1863 = vmatpush1.xpose.msra.mxu0 0.0
        %1864 = vmatprep.subr.mxu0 0.0
        %1865 = vmatpush1.xpose.msra.mxu0 0.0
        %1866 = vmatprep.subr.mxu0 0.0
        %1867 = vmatpush1.xpose.msra.mxu0 0.0
        %1868 = vmatprep.subr.mxu0 0.0
        %1869 = vmatpush1.xpose.msra.mxu0 0.0
        %1870 = vmatprep.subr.mxu0 0.0
        %1871 = vmatpush1.xpose.msra.mxu0 0.0
        %1872 = vmatprep.subr.mxu0 0.0
        %1873 = vmatpush1.xpose.msra.mxu0 0.0
        %1874 = vmatprep.subr.mxu0 0.0
        %1875 = vmatpush1.xpose.msra.mxu0 0.0
        %1876 = vmatprep.subr.mxu0 0.0
        %1877 = vmatpush1.xpose.msra.mxu0 0.0
        %1878 = vmatprep.subr.mxu0 0.0
        %1879 = vmatpush1.xpose.msra.mxu0 0.0
        %1880 = vmatprep.subr.mxu0 0.0
        %1881 = vmatpush1.xpose.msra.mxu0 0.0
        %1882 = vmatprep.mubr.f32.mxu0 0.0
        %1883 = vmatmul.mubr.f32.gmra.mrb[0].mxu0 %v1814
        %v1884 = vpop.f32.mrb[0].mxu0
        %v1885 = vadd.f32 0.0, %v1884
        %v1886 = vpop.f32.mrb[0].mxu0
        %1887 = vdwg.mxu0
        %vm1888 = vcmask 36864
        %v1889 = vsel %vm1888, %v1733, -inf
        %1890 = vmax.xlane.f32.xlu0 %v1889
        %v1891 = vpop.xlane.xlu0 %1890
        %v1892 = vsel %vm1888, %v1885, -inf
        %1893 = vmax.xlane.f32.xlu0 %v1892
        %v1894 = vpop.xlane.xlu0 %1893
        %v1895 = vsub.f32 %v1733, %v1891
        %v1896 = vsub.f32 %v1885, %v1894
        %v1897 = vmul.f32 %v1895, 1.442695
        %v1898 = vpow.pop %v1897
        %v1899 = vmul.f32 %v1896, 1.442695
        %v1900 = vpow.pop %v1899
        %v1901 = vsel %vm1888, %v1898, 0.0
        %1902 = vadd.xlane.f32.xlu0 %v1901
        %v1903 = vpop.xlane.xlu0 %1902
        %v1904 = vsel %vm1888, %v1900, 0.0
        %1905 = vadd.xlane.f32.xlu0 %v1904
        %v1906 = vpop.xlane.xlu0 %1905
        %v1907 = vrcp.pop %v1903
        %v1908 = vrcp.pop %v1906
        %v1909 = vmul.f32 %v1898, %v1907
        %v1910 = vmul.f32 %v1900, %v1908
        %v1911 = vcombine.low %v1535, %v1549
        %v1912 = vcombine.low %v1557, %v1559
        %v1914 = vunpack.c.l.s4 1966171168
        %v1915 = vunpack.c.0.s8 %v1914
        %v1916 = vlaneseq
        %v1917 = vshrl.u32 %v1916, 7
        %v1918 = vsub.s32 %v1915, %v1917
        %v1919 = vrot.slane %v1911, %v1918
        %v1921 = vunpack.c.l.s4 1966171168
        %v1922 = vunpack.c.0.s8 %v1921
        %v1923 = vlaneseq
        %v1924 = vshrl.u32 %v1923, 7
        %v1925 = vsub.s32 %v1922, %v1924
        %v1926 = vrot.slane %v1912, %v1925
        %v1928 = vunpack.c.l.s4 1966171168
        %v1929 = vunpack.c.0.s8 %v1928
        %v1930 = vlaneseq
        %v1931 = vshrl.u32 %v1930, 7
        %v1932 = vsub.s32 %v1929, %v1931
        %v1933 = vrot.slane %v1542, %v1932
        %v1934 = vcombine.low %v1919, %v1926
        %v1936 = vunpack.c.l.s4 1966171168
        %v1937 = vunpack.c.0.s8 %v1936
        %v1938 = vlaneseq
        %v1939 = vshrl.u32 %v1938, 7
        %v1940 = vsub.s32 %v1937, %v1939
        %v1941 = vrot.slane %v1934, %v1940
        %v1943 = vunpack.c.l.s4 1966171168
        %v1944 = vunpack.c.0.s8 %v1943
        %v1945 = vlaneseq
        %v1946 = vshrl.u32 %v1945, 7
        %v1947 = vsub.s32 %v1944, %v1946
        %v1948 = vrot.slane %v1933, %v1947
        %v1949 = vcombine.low %v1941, %v1948
        %vm1950 = vcmask 39936
        %v1952 = vsel %vm1950, %v1909, 0
        %vm1954 = vcmask 1044480
        %v1955 = vsel %vm1954, %v1949, 0
        %1957 = vmatprep.subr.mxu0 0.0
        %1958 = vmatpush1.msra.mxu0 %v1955
        %1959 = vmatprep.subr.mxu0 0.0
        %1960 = vmatpush1.msra.mxu0 0.0
        %1961 = vmatprep.subr.mxu0 0.0
        %1962 = vmatpush1.msra.mxu0 0.0
        %1963 = vmatprep.subr.mxu0 0.0
        %1964 = vmatpush1.msra.mxu0 0.0
        %1965 = vmatprep.subr.mxu0 0.0
        %1966 = vmatpush1.msra.mxu0 0.0
        %1967 = vmatprep.subr.mxu0 0.0
        %1968 = vmatpush1.msra.mxu0 0.0
        %1969 = vmatprep.subr.mxu0 0.0
        %1970 = vmatpush1.msra.mxu0 0.0
        %1971 = vmatprep.subr.mxu0 0.0
        %1972 = vmatpush1.msra.mxu0 0.0
        %1973 = vmatprep.subr.mxu0 0.0
        %1974 = vmatpush1.msra.mxu0 0.0
        %1975 = vmatprep.subr.mxu0 0.0
        %1976 = vmatpush1.msra.mxu0 0.0
        %1977 = vmatprep.subr.mxu0 0.0
        %1978 = vmatpush1.msra.mxu0 0.0
        %1979 = vmatprep.subr.mxu0 0.0
        %1980 = vmatpush1.msra.mxu0 0.0
        %1981 = vmatprep.subr.mxu0 0.0
        %1982 = vmatpush1.msra.mxu0 0.0
        %1983 = vmatprep.subr.mxu0 0.0
        %1984 = vmatpush1.msra.mxu0 0.0
        %1985 = vmatprep.subr.mxu0 0.0
        %1986 = vmatpush1.msra.mxu0 0.0
        %1987 = vmatprep.subr.mxu0 0.0
        %1988 = vmatpush1.msra.mxu0 0.0
        %1989 = vmatprep.subr.mxu0 0.0
        %1990 = vmatpush1.msra.mxu0 0.0
        %1991 = vmatprep.subr.mxu0 0.0
        %1992 = vmatpush1.msra.mxu0 0.0
        %1993 = vmatprep.subr.mxu0 0.0
        %1994 = vmatpush1.msra.mxu0 0.0
        %1995 = vmatprep.subr.mxu0 0.0
        %1996 = vmatpush1.msra.mxu0 0.0
        %1997 = vmatprep.subr.mxu0 0.0
        %1998 = vmatpush1.msra.mxu0 0.0
        %1999 = vmatprep.subr.mxu0 0.0
        %2000 = vmatpush1.msra.mxu0 0.0
        %2001 = vmatprep.subr.mxu0 0.0
        %2002 = vmatpush1.msra.mxu0 0.0
        %2003 = vmatprep.subr.mxu0 0.0
        %2004 = vmatpush1.msra.mxu0 0.0
        %2005 = vmatprep.subr.mxu0 0.0
        %2006 = vmatpush1.msra.mxu0 0.0
        %2007 = vmatprep.subr.mxu0 0.0
        %2008 = vmatpush1.msra.mxu0 0.0
        %2009 = vmatprep.subr.mxu0 0.0
        %2010 = vmatpush1.msra.mxu0 0.0
        %2011 = vmatprep.subr.mxu0 0.0
        %2012 = vmatpush1.msra.mxu0 0.0
        %2013 = vmatprep.subr.mxu0 0.0
        %2014 = vmatpush1.msra.mxu0 0.0
        %2015 = vmatprep.subr.mxu0 0.0
        %2016 = vmatpush1.msra.mxu0 0.0
        %2017 = vmatprep.subr.mxu0 0.0
        %2018 = vmatpush1.msra.mxu0 0.0
        %2019 = vmatprep.subr.mxu0 0.0
        %2020 = vmatpush1.msra.mxu0 0.0
        %2021 = vmatprep.mubr.f32.mxu0 0.0
        %2022 = vmatmul.mubr.f32.gmra.mrb[0].mxu0 %v1952
        %v2023 = vpop.f32.mrb[0].mxu0
        %v2024 = vadd.f32 0.0, %v2023
        %v2025 = vpop.f32.mrb[0].mxu0
        %2026 = vdwg.mxu0
        %v2027 = vcombine.low %v1556, %v1558
        %v2028 = vcombine.low %v1560, %v1575
        %v2030 = vunpack.c.l.s4 1966171168
        %v2031 = vunpack.c.0.s8 %v2030
        %v2032 = vlaneseq
        %v2033 = vshrl.u32 %v2032, 7
        %v2034 = vsub.s32 %v2031, %v2033
        %v2035 = vrot.slane %v2027, %v2034
        %v2037 = vunpack.c.l.s4 1966171168
        %v2038 = vunpack.c.0.s8 %v2037
        %v2039 = vlaneseq
        %v2040 = vshrl.u32 %v2039, 7
        %v2041 = vsub.s32 %v2038, %v2040
        %v2042 = vrot.slane %v2028, %v2041
        %v2044 = vunpack.c.l.s4 1966171168
        %v2045 = vunpack.c.0.s8 %v2044
        %v2046 = vlaneseq
        %v2047 = vshrl.u32 %v2046, 7
        %v2048 = vsub.s32 %v2045, %v2047
        %v2049 = vrot.slane %v1582, %v2048
        %v2050 = vcombine.low %v2035, %v2042
        %v2052 = vunpack.c.l.s4 1966171168
        %v2053 = vunpack.c.0.s8 %v2052
        %v2054 = vlaneseq
        %v2055 = vshrl.u32 %v2054, 7
        %v2056 = vsub.s32 %v2053, %v2055
        %v2057 = vrot.slane %v2050, %v2056
        %v2059 = vunpack.c.l.s4 1966171168
        %v2060 = vunpack.c.0.s8 %v2059
        %v2061 = vlaneseq
        %v2062 = vshrl.u32 %v2061, 7
        %v2063 = vsub.s32 %v2060, %v2062
        %v2064 = vrot.slane %v2049, %v2063
        %v2065 = vcombine.low %v2057, %v2064
        %v2067 = vsel %vm1950, %v1910, 0
        %v2069 = vsel %vm1954, %v2065, 0
        %2071 = vmatprep.subr.mxu0 0.0
        %2072 = vmatpush1.msra.mxu0 %v2069
        %2073 = vmatprep.subr.mxu0 0.0
        %2074 = vmatpush1.msra.mxu0 0.0
        %2075 = vmatprep.subr.mxu0 0.0
        %2076 = vmatpush1.msra.mxu0 0.0
        %2077 = vmatprep.subr.mxu0 0.0
        %2078 = vmatpush1.msra.mxu0 0.0
        %2079 = vmatprep.subr.mxu0 0.0
        %2080 = vmatpush1.msra.mxu0 0.0
        %2081 = vmatprep.subr.mxu0 0.0
        %2082 = vmatpush1.msra.mxu0 0.0
        %2083 = vmatprep.subr.mxu0 0.0
        %2084 = vmatpush1.msra.mxu0 0.0
        %2085 = vmatprep.subr.mxu0 0.0
        %2086 = vmatpush1.msra.mxu0 0.0
        %2087 = vmatprep.subr.mxu0 0.0
        %2088 = vmatpush1.msra.mxu0 0.0
        %2089 = vmatprep.subr.mxu0 0.0
        %2090 = vmatpush1.msra.mxu0 0.0
        %2091 = vmatprep.subr.mxu0 0.0
        %2092 = vmatpush1.msra.mxu0 0.0
        %2093 = vmatprep.subr.mxu0 0.0
        %2094 = vmatpush1.msra.mxu0 0.0
        %2095 = vmatprep.subr.mxu0 0.0
        %2096 = vmatpush1.msra.mxu0 0.0
        %2097 = vmatprep.subr.mxu0 0.0
        %2098 = vmatpush1.msra.mxu0 0.0
        %2099 = vmatprep.subr.mxu0 0.0
        %2100 = vmatpush1.msra.mxu0 0.0
        %2101 = vmatprep.subr.mxu0 0.0
        %2102 = vmatpush1.msra.mxu0 0.0
        %2103 = vmatprep.subr.mxu0 0.0
        %2104 = vmatpush1.msra.mxu0 0.0
        %2105 = vmatprep.subr.mxu0 0.0
        %2106 = vmatpush1.msra.mxu0 0.0
        %2107 = vmatprep.subr.mxu0 0.0
        %2108 = vmatpush1.msra.mxu0 0.0
        %2109 = vmatprep.subr.mxu0 0.0
        %2110 = vmatpush1.msra.mxu0 0.0
        %2111 = vmatprep.subr.mxu0 0.0
        %2112 = vmatpush1.msra.mxu0 0.0
        %2113 = vmatprep.subr.mxu0 0.0
        %2114 = vmatpush1.msra.mxu0 0.0
        %2115 = vmatprep.subr.mxu0 0.0
        %2116 = vmatpush1.msra.mxu0 0.0
        %2117 = vmatprep.subr.mxu0 0.0
        %2118 = vmatpush1.msra.mxu0 0.0
        %2119 = vmatprep.subr.mxu0 0.0
        %2120 = vmatpush1.msra.mxu0 0.0
        %2121 = vmatprep.subr.mxu0 0.0
        %2122 = vmatpush1.msra.mxu0 0.0
        %2123 = vmatprep.subr.mxu0 0.0
        %2124 = vmatpush1.msra.mxu0 0.0
        %2125 = vmatprep.subr.mxu0 0.0
        %2126 = vmatpush1.msra.mxu0 0.0
        %2127 = vmatprep.subr.mxu0 0.0
        %2128 = vmatpush1.msra.mxu0 0.0
        %2129 = vmatprep.subr.mxu0 0.0
        %2130 = vmatpush1.msra.mxu0 0.0
        %2131 = vmatprep.subr.mxu0 0.0
        %2132 = vmatpush1.msra.mxu0 0.0
        %2133 = vmatprep.subr.mxu0 0.0
        %2134 = vmatpush1.msra.mxu0 0.0
        %2135 = vmatprep.mubr.f32.mxu0 0.0
        %2136 = vmatmul.mubr.f32.gmra.mrb[0].mxu0 %v2067
        %v2137 = vpop.f32.mrb[0].mxu0
        %v2138 = vadd.f32 0.0, %v2137
        %v2139 = vpop.f32.mrb[0].mxu0
        %2140 = vdwg.mxu0
        %2141 = vrot.lane.b32.xlu0 %v1621, 100
        %v2142 = vpop.permute.xlu0 %2141
        %2143 = vrot.lane.b32.xlu0 %v1660, 100
        %v2144 = vpop.permute.xlu0 %2143
        %v2145 = vsel %vm1661, %v2142, 0
        %v2147 = vsel %vm1661, %v2144, 0
        %2149 = vmatprep.subr.mxu0 0.0
        %2150 = vmatpush1.xpose.msra.mxu0 %v2147
        %2151 = vmatprep.subr.mxu0 0.0
        %2152 = vmatpush1.xpose.msra.mxu0 0.0
        %2153 = vmatprep.subr.mxu0 0.0
        %2154 = vmatpush1.xpose.msra.mxu0 0.0
        %2155 = vmatprep.subr.mxu0 0.0
        %2156 = vmatpush1.xpose.msra.mxu0 0.0
        %2157 = vmatprep.subr.mxu0 0.0
        %2158 = vmatpush1.xpose.msra.mxu0 0.0
        %2159 = vmatprep.subr.mxu0 0.0
        %2160 = vmatpush1.xpose.msra.mxu0 0.0
        %2161 = vmatprep.subr.mxu0 0.0
        %2162 = vmatpush1.xpose.msra.mxu0 0.0
        %2163 = vmatprep.subr.mxu0 0.0
        %2164 = vmatpush1.xpose.msra.mxu0 0.0
        %2165 = vmatprep.subr.mxu0 0.0
        %2166 = vmatpush1.xpose.msra.mxu0 0.0
        %2167 = vmatprep.subr.mxu0 0.0
        %2168 = vmatpush1.xpose.msra.mxu0 0.0
        %2169 = vmatprep.subr.mxu0 0.0
        %2170 = vmatpush1.xpose.msra.mxu0 0.0
        %2171 = vmatprep.subr.mxu0 0.0
        %2172 = vmatpush1.xpose.msra.mxu0 0.0
        %2173 = vmatprep.subr.mxu0 0.0
        %2174 = vmatpush1.xpose.msra.mxu0 0.0
        %2175 = vmatprep.subr.mxu0 0.0
        %2176 = vmatpush1.xpose.msra.mxu0 0.0
        %2177 = vmatprep.subr.mxu0 0.0
        %2178 = vmatpush1.xpose.msra.mxu0 0.0
        %2179 = vmatprep.subr.mxu0 0.0
        %2180 = vmatpush1.xpose.msra.mxu0 0.0
        %2181 = vmatprep.subr.mxu0 0.0
        %2182 = vmatpush1.xpose.msra.mxu0 0.0
        %2183 = vmatprep.subr.mxu0 0.0
        %2184 = vmatpush1.xpose.msra.mxu0 0.0
        %2185 = vmatprep.subr.mxu0 0.0
        %2186 = vmatpush1.xpose.msra.mxu0 0.0
        %2187 = vmatprep.subr.mxu0 0.0
        %2188 = vmatpush1.xpose.msra.mxu0 0.0
        %2189 = vmatprep.subr.mxu0 0.0
        %2190 = vmatpush1.xpose.msra.mxu0 0.0
        %2191 = vmatprep.subr.mxu0 0.0
        %2192 = vmatpush1.xpose.msra.mxu0 0.0
        %2193 = vmatprep.subr.mxu0 0.0
        %2194 = vmatpush1.xpose.msra.mxu0 0.0
        %2195 = vmatprep.subr.mxu0 0.0
        %2196 = vmatpush1.xpose.msra.mxu0 0.0
        %2197 = vmatprep.subr.mxu0 0.0
        %2198 = vmatpush1.xpose.msra.mxu0 0.0
        %2199 = vmatprep.subr.mxu0 0.0
        %2200 = vmatpush1.xpose.msra.mxu0 0.0
        %2201 = vmatprep.subr.mxu0 0.0
        %2202 = vmatpush1.xpose.msra.mxu0 0.0
        %2203 = vmatprep.subr.mxu0 0.0
        %2204 = vmatpush1.xpose.msra.mxu0 0.0
        %2205 = vmatprep.subr.mxu0 0.0
        %2206 = vmatpush1.xpose.msra.mxu0 0.0
        %2207 = vmatprep.subr.mxu0 0.0
        %2208 = vmatpush1.xpose.msra.mxu0 0.0
        %2209 = vmatprep.subr.mxu0 0.0
        %2210 = vmatpush1.xpose.msra.mxu0 0.0
        %2211 = vmatprep.subr.mxu0 0.0
        %2212 = vmatpush1.xpose.msra.mxu0 0.0
        %2213 = vmatprep.mubr.f32.mxu0 0.0
        %2214 = vmatmul.mubr.f32.gmra.mrb[0].mxu0 %v2145
        %v2215 = vpop.f32.mrb[0].mxu0
        %v2216 = vadd.f32 0.0, %v2215
        %v2217 = vpop.f32.mrb[0].mxu0
        %2218 = vdwg.mxu0
        %2219 = vrot.lane.b32.xlu0 %v1774, 100
        %v2220 = vpop.permute.xlu0 %2219
        %2221 = vrot.lane.b32.xlu0 %v1813, 100
        %v2222 = vpop.permute.xlu0 %2221
        %v2223 = vsel %vm1661, %v2220, 0
        %v2225 = vsel %vm1661, %v2222, 0
        %2227 = vmatprep.subr.mxu0 0.0
        %2228 = vmatpush1.xpose.msra.mxu0 %v2225
        %2229 = vmatprep.subr.mxu0 0.0
        %2230 = vmatpush1.xpose.msra.mxu0 0.0
        %2231 = vmatprep.subr.mxu0 0.0
        %2232 = vmatpush1.xpose.msra.mxu0 0.0
        %2233 = vmatprep.subr.mxu0 0.0
        %2234 = vmatpush1.xpose.msra.mxu0 0.0
        %2235 = vmatprep.subr.mxu0 0.0
        %2236 = vmatpush1.xpose.msra.mxu0 0.0
        %2237 = vmatprep.subr.mxu0 0.0
        %2238 = vmatpush1.xpose.msra.mxu0 0.0
        %2239 = vmatprep.subr.mxu0 0.0
        %2240 = vmatpush1.xpose.msra.mxu0 0.0
        %2241 = vmatprep.subr.mxu0 0.0
        %2242 = vmatpush1.xpose.msra.mxu0 0.0
        %2243 = vmatprep.subr.mxu0 0.0
        %2244 = vmatpush1.xpose.msra.mxu0 0.0
        %2245 = vmatprep.subr.mxu0 0.0
        %2246 = vmatpush1.xpose.msra.mxu0 0.0
        %2247 = vmatprep.subr.mxu0 0.0
        %2248 = vmatpush1.xpose.msra.mxu0 0.0
        %2249 = vmatprep.subr.mxu0 0.0
        %2250 = vmatpush1.xpose.msra.mxu0 0.0
        %2251 = vmatprep.subr.mxu0 0.0
        %2252 = vmatpush1.xpose.msra.mxu0 0.0
        %2253 = vmatprep.subr.mxu0 0.0
        %2254 = vmatpush1.xpose.msra.mxu0 0.0
        %2255 = vmatprep.subr.mxu0 0.0
        %2256 = vmatpush1.xpose.msra.mxu0 0.0
        %2257 = vmatprep.subr.mxu0 0.0
        %2258 = vmatpush1.xpose.msra.mxu0 0.0
        %2259 = vmatprep.subr.mxu0 0.0
        %2260 = vmatpush1.xpose.msra.mxu0 0.0
        %2261 = vmatprep.subr.mxu0 0.0
        %2262 = vmatpush1.xpose.msra.mxu0 0.0
        %2263 = vmatprep.subr.mxu0 0.0
        %2264 = vmatpush1.xpose.msra.mxu0 0.0
        %2265 = vmatprep.subr.mxu0 0.0
        %2266 = vmatpush1.xpose.msra.mxu0 0.0
        %2267 = vmatprep.subr.mxu0 0.0
        %2268 = vmatpush1.xpose.msra.mxu0 0.0
        %2269 = vmatprep.subr.mxu0 0.0
        %2270 = vmatpush1.xpose.msra.mxu0 0.0
        %2271 = vmatprep.subr.mxu0 0.0
        %2272 = vmatpush1.xpose.msra.mxu0 0.0
        %2273 = vmatprep.subr.mxu0 0.0
        %2274 = vmatpush1.xpose.msra.mxu0 0.0
        %2275 = vmatprep.subr.mxu0 0.0
        %2276 = vmatpush1.xpose.msra.mxu0 0.0
        %2277 = vmatprep.subr.mxu0 0.0
        %2278 = vmatpush1.xpose.msra.mxu0 0.0
        %2279 = vmatprep.subr.mxu0 0.0
        %2280 = vmatpush1.xpose.msra.mxu0 0.0
        %2281 = vmatprep.subr.mxu0 0.0
        %2282 = vmatpush1.xpose.msra.mxu0 0.0
        %2283 = vmatprep.subr.mxu0 0.0
        %2284 = vmatpush1.xpose.msra.mxu0 0.0
        %2285 = vmatprep.subr.mxu0 0.0
        %2286 = vmatpush1.xpose.msra.mxu0 0.0
        %2287 = vmatprep.subr.mxu0 0.0
        %2288 = vmatpush1.xpose.msra.mxu0 0.0
        %2289 = vmatprep.subr.mxu0 0.0
        %2290 = vmatpush1.xpose.msra.mxu0 0.0
        %2291 = vmatprep.mubr.f32.mxu0 0.0
        %2292 = vmatmul.mubr.f32.gmra.mrb[0].mxu0 %v2223
        %v2293 = vpop.f32.mrb[0].mxu0
        %v2294 = vadd.f32 0.0, %v2293
        %v2295 = vpop.f32.mrb[0].mxu0
        %2296 = vdwg.mxu0
        %v2297 = vsel %vm1888, %v2216, -inf
        %2298 = vmax.xlane.f32.xlu0 %v2297
        %v2299 = vpop.xlane.xlu0 %2298
        %v2300 = vsel %vm1888, %v2294, -inf
        %2301 = vmax.xlane.f32.xlu0 %v2300
        %v2302 = vpop.xlane.xlu0 %2301
        %v2303 = vsub.f32 %v2216, %v2299
        %v2304 = vsub.f32 %v2294, %v2302
        %v2305 = vmul.f32 %v2303, 1.442695
        %v2306 = vpow.pop %v2305
        %v2307 = vmul.f32 %v2304, 1.442695
        %v2308 = vpow.pop %v2307
        %v2309 = vsel %vm1888, %v2306, 0.0
        %2310 = vadd.xlane.f32.xlu0 %v2309
        %v2311 = vpop.xlane.xlu0 %2310
        %v2312 = vsel %vm1888, %v2308, 0.0
        %2313 = vadd.xlane.f32.xlu0 %v2312
        %v2314 = vpop.xlane.xlu0 %2313
        %v2315 = vrcp.pop %v2311
        %v2316 = vrcp.pop %v2314
        %v2317 = vmul.f32 %v2306, %v2315
        %v2318 = vmul.f32 %v2308, %v2316
        %2319 = vrot.lane.b32.xlu0 %v1949, 100
        %v2320 = vpop.permute.xlu0 %2319
        %v2322 = vsel %vm1950, %v2317, 0
        %v2324 = vsel %vm1954, %v2320, 0
        %2326 = vmatprep.subr.mxu0 0.0
        %2327 = vmatpush1.msra.mxu0 %v2324
        %2328 = vmatprep.subr.mxu0 0.0
        %2329 = vmatpush1.msra.mxu0 0.0
        %2330 = vmatprep.subr.mxu0 0.0
        %2331 = vmatpush1.msra.mxu0 0.0
        %2332 = vmatprep.subr.mxu0 0.0
        %2333 = vmatpush1.msra.mxu0 0.0
        %2334 = vmatprep.subr.mxu0 0.0
        %2335 = vmatpush1.msra.mxu0 0.0
        %2336 = vmatprep.subr.mxu0 0.0
        %2337 = vmatpush1.msra.mxu0 0.0
        %2338 = vmatprep.subr.mxu0 0.0
        %2339 = vmatpush1.msra.mxu0 0.0
        %2340 = vmatprep.subr.mxu0 0.0
        %2341 = vmatpush1.msra.mxu0 0.0
        %2342 = vmatprep.subr.mxu0 0.0
        %2343 = vmatpush1.msra.mxu0 0.0
        %2344 = vmatprep.subr.mxu0 0.0
        %2345 = vmatpush1.msra.mxu0 0.0
        %2346 = vmatprep.subr.mxu0 0.0
        %2347 = vmatpush1.msra.mxu0 0.0
        %2348 = vmatprep.subr.mxu0 0.0
        %2349 = vmatpush1.msra.mxu0 0.0
        %2350 = vmatprep.subr.mxu0 0.0
        %2351 = vmatpush1.msra.mxu0 0.0
        %2352 = vmatprep.subr.mxu0 0.0
        %2353 = vmatpush1.msra.mxu0 0.0
        %2354 = vmatprep.subr.mxu0 0.0
        %2355 = vmatpush1.msra.mxu0 0.0
        %2356 = vmatprep.subr.mxu0 0.0
        %2357 = vmatpush1.msra.mxu0 0.0
        %2358 = vmatprep.subr.mxu0 0.0
        %2359 = vmatpush1.msra.mxu0 0.0
        %2360 = vmatprep.subr.mxu0 0.0
        %2361 = vmatpush1.msra.mxu0 0.0
        %2362 = vmatprep.subr.mxu0 0.0
        %2363 = vmatpush1.msra.mxu0 0.0
        %2364 = vmatprep.subr.mxu0 0.0
        %2365 = vmatpush1.msra.mxu0 0.0
        %2366 = vmatprep.subr.mxu0 0.0
        %2367 = vmatpush1.msra.mxu0 0.0
        %2368 = vmatprep.subr.mxu0 0.0
        %2369 = vmatpush1.msra.mxu0 0.0
        %2370 = vmatprep.subr.mxu0 0.0
        %2371 = vmatpush1.msra.mxu0 0.0
        %2372 = vmatprep.subr.mxu0 0.0
        %2373 = vmatpush1.msra.mxu0 0.0
        %2374 = vmatprep.subr.mxu0 0.0
        %2375 = vmatpush1.msra.mxu0 0.0
        %2376 = vmatprep.subr.mxu0 0.0
        %2377 = vmatpush1.msra.mxu0 0.0
        %2378 = vmatprep.subr.mxu0 0.0
        %2379 = vmatpush1.msra.mxu0 0.0
        %2380 = vmatprep.subr.mxu0 0.0
        %2381 = vmatpush1.msra.mxu0 0.0
        %2382 = vmatprep.subr.mxu0 0.0
        %2383 = vmatpush1.msra.mxu0 0.0
        %2384 = vmatprep.subr.mxu0 0.0
        %2385 = vmatpush1.msra.mxu0 0.0
        %2386 = vmatprep.subr.mxu0 0.0
        %2387 = vmatpush1.msra.mxu0 0.0
        %2388 = vmatprep.subr.mxu0 0.0
        %2389 = vmatpush1.msra.mxu0 0.0
        %2390 = vmatprep.mubr.f32.mxu0 0.0
        %2391 = vmatmul.mubr.f32.gmra.mrb[0].mxu0 %v2322
        %v2392 = vpop.f32.mrb[0].mxu0
        %v2393 = vadd.f32 0.0, %v2392
        %v2394 = vpop.f32.mrb[0].mxu0
        %2395 = vdwg.mxu0
        %2396 = vrot.lane.b32.xlu0 %v2065, 100
        %v2397 = vpop.permute.xlu0 %2396
        %v2399 = vsel %vm1950, %v2318, 0
        %v2401 = vsel %vm1954, %v2397, 0
        %2403 = vmatprep.subr.mxu0 0.0
        %2404 = vmatpush1.msra.mxu0 %v2401
        %2405 = vmatprep.subr.mxu0 0.0
        %2406 = vmatpush1.msra.mxu0 0.0
        %2407 = vmatprep.subr.mxu0 0.0
        %2408 = vmatpush1.msra.mxu0 0.0
        %2409 = vmatprep.subr.mxu0 0.0
        %2410 = vmatpush1.msra.mxu0 0.0
        %2411 = vmatprep.subr.mxu0 0.0
        %2412 = vmatpush1.msra.mxu0 0.0
        %2413 = vmatprep.subr.mxu0 0.0
        %2414 = vmatpush1.msra.mxu0 0.0
        %2415 = vmatprep.subr.mxu0 0.0
        %2416 = vmatpush1.msra.mxu0 0.0
        %2417 = vmatprep.subr.mxu0 0.0
        %2418 = vmatpush1.msra.mxu0 0.0
        %2419 = vmatprep.subr.mxu0 0.0
        %2420 = vmatpush1.msra.mxu0 0.0
        %2421 = vmatprep.subr.mxu0 0.0
        %2422 = vmatpush1.msra.mxu0 0.0
        %2423 = vmatprep.subr.mxu0 0.0
        %2424 = vmatpush1.msra.mxu0 0.0
        %2425 = vmatprep.subr.mxu0 0.0
        %2426 = vmatpush1.msra.mxu0 0.0
        %2427 = vmatprep.subr.mxu0 0.0
        %2428 = vmatpush1.msra.mxu0 0.0
        %2429 = vmatprep.subr.mxu0 0.0
        %2430 = vmatpush1.msra.mxu0 0.0
        %2431 = vmatprep.subr.mxu0 0.0
        %2432 = vmatpush1.msra.mxu0 0.0
        %2433 = vmatprep.subr.mxu0 0.0
        %2434 = vmatpush1.msra.mxu0 0.0
        %2435 = vmatprep.subr.mxu0 0.0
        %2436 = vmatpush1.msra.mxu0 0.0
        %2437 = vmatprep.subr.mxu0 0.0
        %2438 = vmatpush1.msra.mxu0 0.0
        %2439 = vmatprep.subr.mxu0 0.0
        %2440 = vmatpush1.msra.mxu0 0.0
        %2441 = vmatprep.subr.mxu0 0.0
        %2442 = vmatpush1.msra.mxu0 0.0
        %2443 = vmatprep.subr.mxu0 0.0
        %2444 = vmatpush1.msra.mxu0 0.0
        %2445 = vmatprep.subr.mxu0 0.0
        %2446 = vmatpush1.msra.mxu0 0.0
        %2447 = vmatprep.subr.mxu0 0.0
        %2448 = vmatpush1.msra.mxu0 0.0
        %2449 = vmatprep.subr.mxu0 0.0
        %2450 = vmatpush1.msra.mxu0 0.0
        %2451 = vmatprep.subr.mxu0 0.0
        %2452 = vmatpush1.msra.mxu0 0.0
        %2453 = vmatprep.subr.mxu0 0.0
        %2454 = vmatpush1.msra.mxu0 0.0
        %2455 = vmatprep.subr.mxu0 0.0
        %2456 = vmatpush1.msra.mxu0 0.0
        %2457 = vmatprep.subr.mxu0 0.0
        %2458 = vmatpush1.msra.mxu0 0.0
        %2459 = vmatprep.subr.mxu0 0.0
        %2460 = vmatpush1.msra.mxu0 0.0
        %2461 = vmatprep.subr.mxu0 0.0
        %2462 = vmatpush1.msra.mxu0 0.0
        %2463 = vmatprep.subr.mxu0 0.0
        %2464 = vmatpush1.msra.mxu0 0.0
        %2465 = vmatprep.subr.mxu0 0.0
        %2466 = vmatpush1.msra.mxu0 0.0
        %2467 = vmatprep.mubr.f32.mxu0 0.0
        %2468 = vmatmul.mubr.f32.gmra.mrb[0].mxu0 %v2399
        %v2469 = vpop.f32.mrb[0].mxu0
        %v2470 = vadd.f32 0.0, %v2469
        %v2471 = vpop.f32.mrb[0].mxu0
        %2472 = vdwg.mxu0
        %2473 = vrot.lane.b32.xlu0 %v1621, 72
        %v2474 = vpop.permute.xlu0 %2473
        %2475 = vrot.lane.b32.xlu0 %v1660, 72
        %v2476 = vpop.permute.xlu0 %2475
        %v2477 = vsel %vm1661, %v2474, 0
        %v2479 = vsel %vm1661, %v2476, 0
        %2481 = vmatprep.subr.mxu0 0.0
        %2482 = vmatpush1.xpose.msra.mxu0 %v2479
        %2483 = vmatprep.subr.mxu0 0.0
        %2484 = vmatpush1.xpose.msra.mxu0 0.0
        %2485 = vmatprep.subr.mxu0 0.0
        %2486 = vmatpush1.xpose.msra.mxu0 0.0
        %2487 = vmatprep.subr.mxu0 0.0
        %2488 = vmatpush1.xpose.msra.mxu0 0.0
        %2489 = vmatprep.subr.mxu0 0.0
        %2490 = vmatpush1.xpose.msra.mxu0 0.0
        %2491 = vmatprep.subr.mxu0 0.0
        %2492 = vmatpush1.xpose.msra.mxu0 0.0
        %2493 = vmatprep.subr.mxu0 0.0
        %2494 = vmatpush1.xpose.msra.mxu0 0.0
        %2495 = vmatprep.subr.mxu0 0.0
        %2496 = vmatpush1.xpose.msra.mxu0 0.0
        %2497 = vmatprep.subr.mxu0 0.0
        %2498 = vmatpush1.xpose.msra.mxu0 0.0
        %2499 = vmatprep.subr.mxu0 0.0
        %2500 = vmatpush1.xpose.msra.mxu0 0.0
        %2501 = vmatprep.subr.mxu0 0.0
        %2502 = vmatpush1.xpose.msra.mxu0 0.0
        %2503 = vmatprep.subr.mxu0 0.0
        %2504 = vmatpush1.xpose.msra.mxu0 0.0
        %2505 = vmatprep.subr.mxu0 0.0
        %2506 = vmatpush1.xpose.msra.mxu0 0.0
        %2507 = vmatprep.subr.mxu0 0.0
        %2508 = vmatpush1.xpose.msra.mxu0 0.0
        %2509 = vmatprep.subr.mxu0 0.0
        %2510 = vmatpush1.xpose.msra.mxu0 0.0
        %2511 = vmatprep.subr.mxu0 0.0
        %2512 = vmatpush1.xpose.msra.mxu0 0.0
        %2513 = vmatprep.subr.mxu0 0.0
        %2514 = vmatpush1.xpose.msra.mxu0 0.0
        %2515 = vmatprep.subr.mxu0 0.0
        %2516 = vmatpush1.xpose.msra.mxu0 0.0
        %2517 = vmatprep.subr.mxu0 0.0
        %2518 = vmatpush1.xpose.msra.mxu0 0.0
        %2519 = vmatprep.subr.mxu0 0.0
        %2520 = vmatpush1.xpose.msra.mxu0 0.0
        %2521 = vmatprep.subr.mxu0 0.0
        %2522 = vmatpush1.xpose.msra.mxu0 0.0
        %2523 = vmatprep.subr.mxu0 0.0
        %2524 = vmatpush1.xpose.msra.mxu0 0.0
        %2525 = vmatprep.subr.mxu0 0.0
        %2526 = vmatpush1.xpose.msra.mxu0 0.0
        %2527 = vmatprep.subr.mxu0 0.0
        %2528 = vmatpush1.xpose.msra.mxu0 0.0
        %2529 = vmatprep.subr.mxu0 0.0
        %2530 = vmatpush1.xpose.msra.mxu0 0.0
        %2531 = vmatprep.subr.mxu0 0.0
        %2532 = vmatpush1.xpose.msra.mxu0 0.0
        %2533 = vmatprep.subr.mxu0 0.0
        %2534 = vmatpush1.xpose.msra.mxu0 0.0
        %2535 = vmatprep.subr.mxu0 0.0
        %2536 = vmatpush1.xpose.msra.mxu0 0.0
        %2537 = vmatprep.subr.mxu0 0.0
        %2538 = vmatpush1.xpose.msra.mxu0 0.0
        %2539 = vmatprep.subr.mxu0 0.0
        %2540 = vmatpush1.xpose.msra.mxu0 0.0
        %2541 = vmatprep.subr.mxu0 0.0
        %2542 = vmatpush1.xpose.msra.mxu0 0.0
        %2543 = vmatprep.subr.mxu0 0.0
        %2544 = vmatpush1.xpose.msra.mxu0 0.0
        %2545 = vmatprep.mubr.f32.mxu0 0.0
        %2546 = vmatmul.mubr.f32.gmra.mrb[0].mxu0 %v2477
        %v2547 = vpop.f32.mrb[0].mxu0
        %v2548 = vadd.f32 0.0, %v2547
        %v2549 = vpop.f32.mrb[0].mxu0
        %2550 = vdwg.mxu0
        %2551 = vrot.lane.b32.xlu0 %v1774, 72
        %v2552 = vpop.permute.xlu0 %2551
        %2553 = vrot.lane.b32.xlu0 %v1813, 72
        %v2554 = vpop.permute.xlu0 %2553
        %v2555 = vsel %vm1661, %v2552, 0
        %v2557 = vsel %vm1661, %v2554, 0
        %2559 = vmatprep.subr.mxu0 0.0
        %2560 = vmatpush1.xpose.msra.mxu0 %v2557
        %2561 = vmatprep.subr.mxu0 0.0
        %2562 = vmatpush1.xpose.msra.mxu0 0.0
        %2563 = vmatprep.subr.mxu0 0.0
        %2564 = vmatpush1.xpose.msra.mxu0 0.0
        %2565 = vmatprep.subr.mxu0 0.0
        %2566 = vmatpush1.xpose.msra.mxu0 0.0
        %2567 = vmatprep.subr.mxu0 0.0
        %2568 = vmatpush1.xpose.msra.mxu0 0.0
        %2569 = vmatprep.subr.mxu0 0.0
        %2570 = vmatpush1.xpose.msra.mxu0 0.0
        %2571 = vmatprep.subr.mxu0 0.0
        %2572 = vmatpush1.xpose.msra.mxu0 0.0
        %2573 = vmatprep.subr.mxu0 0.0
        %2574 = vmatpush1.xpose.msra.mxu0 0.0
        %2575 = vmatprep.subr.mxu0 0.0
        %2576 = vmatpush1.xpose.msra.mxu0 0.0
        %2577 = vmatprep.subr.mxu0 0.0
        %2578 = vmatpush1.xpose.msra.mxu0 0.0
        %2579 = vmatprep.subr.mxu0 0.0
        %2580 = vmatpush1.xpose.msra.mxu0 0.0
        %2581 = vmatprep.subr.mxu0 0.0
        %2582 = vmatpush1.xpose.msra.mxu0 0.0
        %2583 = vmatprep.subr.mxu0 0.0
        %2584 = vmatpush1.xpose.msra.mxu0 0.0
        %2585 = vmatprep.subr.mxu0 0.0
        %2586 = vmatpush1.xpose.msra.mxu0 0.0
        %2587 = vmatprep.subr.mxu0 0.0
        %2588 = vmatpush1.xpose.msra.mxu0 0.0
        %2589 = vmatprep.subr.mxu0 0.0
        %2590 = vmatpush1.xpose.msra.mxu0 0.0
        %2591 = vmatprep.subr.mxu0 0.0
        %2592 = vmatpush1.xpose.msra.mxu0 0.0
        %2593 = vmatprep.subr.mxu0 0.0
        %2594 = vmatpush1.xpose.msra.mxu0 0.0
        %2595 = vmatprep.subr.mxu0 0.0
        %2596 = vmatpush1.xpose.msra.mxu0 0.0
        %2597 = vmatprep.subr.mxu0 0.0
        %2598 = vmatpush1.xpose.msra.mxu0 0.0
        %2599 = vmatprep.subr.mxu0 0.0
        %2600 = vmatpush1.xpose.msra.mxu0 0.0
        %2601 = vmatprep.subr.mxu0 0.0
        %2602 = vmatpush1.xpose.msra.mxu0 0.0
        %2603 = vmatprep.subr.mxu0 0.0
        %2604 = vmatpush1.xpose.msra.mxu0 0.0
        %2605 = vmatprep.subr.mxu0 0.0
        %2606 = vmatpush1.xpose.msra.mxu0 0.0
        %2607 = vmatprep.subr.mxu0 0.0
        %2608 = vmatpush1.xpose.msra.mxu0 0.0
        %2609 = vmatprep.subr.mxu0 0.0
        %2610 = vmatpush1.xpose.msra.mxu0 0.0
        %2611 = vmatprep.subr.mxu0 0.0
        %2612 = vmatpush1.xpose.msra.mxu0 0.0
        %2613 = vmatprep.subr.mxu0 0.0
        %2614 = vmatpush1.xpose.msra.mxu0 0.0
        %2615 = vmatprep.subr.mxu0 0.0
        %2616 = vmatpush1.xpose.msra.mxu0 0.0
        %2617 = vmatprep.subr.mxu0 0.0
        %2618 = vmatpush1.xpose.msra.mxu0 0.0
        %2619 = vmatprep.subr.mxu0 0.0
        %2620 = vmatpush1.xpose.msra.mxu0 0.0
        %2621 = vmatprep.subr.mxu0 0.0
        %2622 = vmatpush1.xpose.msra.mxu0 0.0
        %2623 = vmatprep.mubr.f32.mxu0 0.0
        %2624 = vmatmul.mubr.f32.gmra.mrb[0].mxu0 %v2555
        %v2625 = vpop.f32.mrb[0].mxu0
        %v2626 = vadd.f32 0.0, %v2625
        %v2627 = vpop.f32.mrb[0].mxu0
        %2628 = vdwg.mxu0
        %v2629 = vsel %vm1888, %v2548, -inf
        %2630 = vmax.xlane.f32.xlu0 %v2629
        %v2631 = vpop.xlane.xlu0 %2630
        %v2632 = vsel %vm1888, %v2626, -inf
        %2633 = vmax.xlane.f32.xlu0 %v2632
        %v2634 = vpop.xlane.xlu0 %2633
        %v2635 = vsub.f32 %v2548, %v2631
        %v2636 = vsub.f32 %v2626, %v2634
        %v2637 = vmul.f32 %v2635, 1.442695
        %v2638 = vpow.pop %v2637
        %v2639 = vmul.f32 %v2636, 1.442695
        %v2640 = vpow.pop %v2639
        %v2641 = vsel %vm1888, %v2638, 0.0
        %2642 = vadd.xlane.f32.xlu0 %v2641
        %v2643 = vpop.xlane.xlu0 %2642
        %v2644 = vsel %vm1888, %v2640, 0.0
        %2645 = vadd.xlane.f32.xlu0 %v2644
        %v2646 = vpop.xlane.xlu0 %2645
        %v2647 = vrcp.pop %v2643
        %v2648 = vrcp.pop %v2646
        %v2649 = vmul.f32 %v2638, %v2647
        %v2650 = vmul.f32 %v2640, %v2648
        %2651 = vrot.lane.b32.xlu0 %v1949, 72
        %v2652 = vpop.permute.xlu0 %2651
        %v2654 = vsel %vm1950, %v2649, 0
        %v2656 = vsel %vm1954, %v2652, 0
        %2658 = vmatprep.subr.mxu0 0.0
        %2659 = vmatpush1.msra.mxu0 %v2656
        %2660 = vmatprep.subr.mxu0 0.0
        %2661 = vmatpush1.msra.mxu0 0.0
        %2662 = vmatprep.subr.mxu0 0.0
        %2663 = vmatpush1.msra.mxu0 0.0
        %2664 = vmatprep.subr.mxu0 0.0
        %2665 = vmatpush1.msra.mxu0 0.0
        %2666 = vmatprep.subr.mxu0 0.0
        %2667 = vmatpush1.msra.mxu0 0.0
        %2668 = vmatprep.subr.mxu0 0.0
        %2669 = vmatpush1.msra.mxu0 0.0
        %2670 = vmatprep.subr.mxu0 0.0
        %2671 = vmatpush1.msra.mxu0 0.0
        %2672 = vmatprep.subr.mxu0 0.0
        %2673 = vmatpush1.msra.mxu0 0.0
        %2674 = vmatprep.subr.mxu0 0.0
        %2675 = vmatpush1.msra.mxu0 0.0
        %2676 = vmatprep.subr.mxu0 0.0
        %2677 = vmatpush1.msra.mxu0 0.0
        %2678 = vmatprep.subr.mxu0 0.0
        %2679 = vmatpush1.msra.mxu0 0.0
        %2680 = vmatprep.subr.mxu0 0.0
        %2681 = vmatpush1.msra.mxu0 0.0
        %2682 = vmatprep.subr.mxu0 0.0
        %2683 = vmatpush1.msra.mxu0 0.0
        %2684 = vmatprep.subr.mxu0 0.0
        %2685 = vmatpush1.msra.mxu0 0.0
        %2686 = vmatprep.subr.mxu0 0.0
        %2687 = vmatpush1.msra.mxu0 0.0
        %2688 = vmatprep.subr.mxu0 0.0
        %2689 = vmatpush1.msra.mxu0 0.0
        %2690 = vmatprep.subr.mxu0 0.0
        %2691 = vmatpush1.msra.mxu0 0.0
        %2692 = vmatprep.subr.mxu0 0.0
        %2693 = vmatpush1.msra.mxu0 0.0
        %2694 = vmatprep.subr.mxu0 0.0
        %2695 = vmatpush1.msra.mxu0 0.0
        %2696 = vmatprep.subr.mxu0 0.0
        %2697 = vmatpush1.msra.mxu0 0.0
        %2698 = vmatprep.subr.mxu0 0.0
        %2699 = vmatpush1.msra.mxu0 0.0
        %2700 = vmatprep.subr.mxu0 0.0
        %2701 = vmatpush1.msra.mxu0 0.0
        %2702 = vmatprep.subr.mxu0 0.0
        %2703 = vmatpush1.msra.mxu0 0.0
        %2704 = vmatprep.subr.mxu0 0.0
        %2705 = vmatpush1.msra.mxu0 0.0
        %2706 = vmatprep.subr.mxu0 0.0
        %2707 = vmatpush1.msra.mxu0 0.0
        %2708 = vmatprep.subr.mxu0 0.0
        %2709 = vmatpush1.msra.mxu0 0.0
        %2710 = vmatprep.subr.mxu0 0.0
        %2711 = vmatpush1.msra.mxu0 0.0
        %2712 = vmatprep.subr.mxu0 0.0
        %2713 = vmatpush1.msra.mxu0 0.0
        %2714 = vmatprep.subr.mxu0 0.0
        %2715 = vmatpush1.msra.mxu0 0.0
        %2716 = vmatprep.subr.mxu0 0.0
        %2717 = vmatpush1.msra.mxu0 0.0
        %2718 = vmatprep.subr.mxu0 0.0
        %2719 = vmatpush1.msra.mxu0 0.0
        %2720 = vmatprep.subr.mxu0 0.0
        %2721 = vmatpush1.msra.mxu0 0.0
        %2722 = vmatprep.mubr.f32.mxu0 0.0
        %2723 = vmatmul.mubr.f32.gmra.mrb[0].mxu0 %v2654
        %v2724 = vpop.f32.mrb[0].mxu0
        %v2725 = vadd.f32 0.0, %v2724
        %v2726 = vpop.f32.mrb[0].mxu0
        %2727 = vdwg.mxu0
        %2728 = vrot.lane.b32.xlu0 %v2065, 72
        %v2729 = vpop.permute.xlu0 %2728
        %v2731 = vsel %vm1950, %v2650, 0
        %v2733 = vsel %vm1954, %v2729, 0
        %2735 = vmatprep.subr.mxu0 0.0
        %2736 = vmatpush1.msra.mxu0 %v2733
        %2737 = vmatprep.subr.mxu0 0.0
        %2738 = vmatpush1.msra.mxu0 0.0
        %2739 = vmatprep.subr.mxu0 0.0
        %2740 = vmatpush1.msra.mxu0 0.0
        %2741 = vmatprep.subr.mxu0 0.0
        %2742 = vmatpush1.msra.mxu0 0.0
        %2743 = vmatprep.subr.mxu0 0.0
        %2744 = vmatpush1.msra.mxu0 0.0
        %2745 = vmatprep.subr.mxu0 0.0
        %2746 = vmatpush1.msra.mxu0 0.0
        %2747 = vmatprep.subr.mxu0 0.0
        %2748 = vmatpush1.msra.mxu0 0.0
        %2749 = vmatprep.subr.mxu0 0.0
        %2750 = vmatpush1.msra.mxu0 0.0
        %2751 = vmatprep.subr.mxu0 0.0
        %2752 = vmatpush1.msra.mxu0 0.0
        %2753 = vmatprep.subr.mxu0 0.0
        %2754 = vmatpush1.msra.mxu0 0.0
        %2755 = vmatprep.subr.mxu0 0.0
        %2756 = vmatpush1.msra.mxu0 0.0
        %2757 = vmatprep.subr.mxu0 0.0
        %2758 = vmatpush1.msra.mxu0 0.0
        %2759 = vmatprep.subr.mxu0 0.0
        %2760 = vmatpush1.msra.mxu0 0.0
        %2761 = vmatprep.subr.mxu0 0.0
        %2762 = vmatpush1.msra.mxu0 0.0
        %2763 = vmatprep.subr.mxu0 0.0
        %2764 = vmatpush1.msra.mxu0 0.0
        %2765 = vmatprep.subr.mxu0 0.0
        %2766 = vmatpush1.msra.mxu0 0.0
        %2767 = vmatprep.subr.mxu0 0.0
        %2768 = vmatpush1.msra.mxu0 0.0
        %2769 = vmatprep.subr.mxu0 0.0
        %2770 = vmatpush1.msra.mxu0 0.0
        %2771 = vmatprep.subr.mxu0 0.0
        %2772 = vmatpush1.msra.mxu0 0.0
        %2773 = vmatprep.subr.mxu0 0.0
        %2774 = vmatpush1.msra.mxu0 0.0
        %2775 = vmatprep.subr.mxu0 0.0
        %2776 = vmatpush1.msra.mxu0 0.0
        %2777 = vmatprep.subr.mxu0 0.0
        %2778 = vmatpush1.msra.mxu0 0.0
        %2779 = vmatprep.subr.mxu0 0.0
        %2780 = vmatpush1.msra.mxu0 0.0
        %2781 = vmatprep.subr.mxu0 0.0
        %2782 = vmatpush1.msra.mxu0 0.0
        %2783 = vmatprep.subr.mxu0 0.0
        %2784 = vmatpush1.msra.mxu0 0.0
        %2785 = vmatprep.subr.mxu0 0.0
        %2786 = vmatpush1.msra.mxu0 0.0
        %2787 = vmatprep.subr.mxu0 0.0
        %2788 = vmatpush1.msra.mxu0 0.0
        %2789 = vmatprep.subr.mxu0 0.0
        %2790 = vmatpush1.msra.mxu0 0.0
        %2791 = vmatprep.subr.mxu0 0.0
        %2792 = vmatpush1.msra.mxu0 0.0
        %2793 = vmatprep.subr.mxu0 0.0
        %2794 = vmatpush1.msra.mxu0 0.0
        %2795 = vmatprep.subr.mxu0 0.0
        %2796 = vmatpush1.msra.mxu0 0.0
        %2797 = vmatprep.subr.mxu0 0.0
        %2798 = vmatpush1.msra.mxu0 0.0
        %2799 = vmatprep.mubr.f32.mxu0 0.0
        %2800 = vmatmul.mubr.f32.gmra.mrb[0].mxu0 %v2731
        %v2801 = vpop.f32.mrb[0].mxu0
        %v2802 = vadd.f32 0.0, %v2801
        %v2803 = vpop.f32.mrb[0].mxu0
        %2804 = vdwg.mxu0
        %2805 = vrot.lane.b32.xlu0 %v1621, 44
        %v2806 = vpop.permute.xlu0 %2805
        %2807 = vrot.lane.b32.xlu0 %v1660, 44
        %v2808 = vpop.permute.xlu0 %2807
        %v2809 = vsel %vm1661, %v2806, 0
        %v2811 = vsel %vm1661, %v2808, 0
        %2813 = vmatprep.subr.mxu0 0.0
        %2814 = vmatpush1.xpose.msra.mxu0 %v2811
        %2815 = vmatprep.subr.mxu0 0.0
        %2816 = vmatpush1.xpose.msra.mxu0 0.0
        %2817 = vmatprep.subr.mxu0 0.0
        %2818 = vmatpush1.xpose.msra.mxu0 0.0
        %2819 = vmatprep.subr.mxu0 0.0
        %2820 = vmatpush1.xpose.msra.mxu0 0.0
        %2821 = vmatprep.subr.mxu0 0.0
        %2822 = vmatpush1.xpose.msra.mxu0 0.0
        %2823 = vmatprep.subr.mxu0 0.0
        %2824 = vmatpush1.xpose.msra.mxu0 0.0
        %2825 = vmatprep.subr.mxu0 0.0
        %2826 = vmatpush1.xpose.msra.mxu0 0.0
        %2827 = vmatprep.subr.mxu0 0.0
        %2828 = vmatpush1.xpose.msra.mxu0 0.0
        %2829 = vmatprep.subr.mxu0 0.0
        %2830 = vmatpush1.xpose.msra.mxu0 0.0
        %2831 = vmatprep.subr.mxu0 0.0
        %2832 = vmatpush1.xpose.msra.mxu0 0.0
        %2833 = vmatprep.subr.mxu0 0.0
        %2834 = vmatpush1.xpose.msra.mxu0 0.0
        %2835 = vmatprep.subr.mxu0 0.0
        %2836 = vmatpush1.xpose.msra.mxu0 0.0
        %2837 = vmatprep.subr.mxu0 0.0
        %2838 = vmatpush1.xpose.msra.mxu0 0.0
        %2839 = vmatprep.subr.mxu0 0.0
        %2840 = vmatpush1.xpose.msra.mxu0 0.0
        %2841 = vmatprep.subr.mxu0 0.0
        %2842 = vmatpush1.xpose.msra.mxu0 0.0
        %2843 = vmatprep.subr.mxu0 0.0
        %2844 = vmatpush1.xpose.msra.mxu0 0.0
        %2845 = vmatprep.subr.mxu0 0.0
        %2846 = vmatpush1.xpose.msra.mxu0 0.0
        %2847 = vmatprep.subr.mxu0 0.0
        %2848 = vmatpush1.xpose.msra.mxu0 0.0
        %2849 = vmatprep.subr.mxu0 0.0
        %2850 = vmatpush1.xpose.msra.mxu0 0.0
        %2851 = vmatprep.subr.mxu0 0.0
        %2852 = vmatpush1.xpose.msra.mxu0 0.0
        %2853 = vmatprep.subr.mxu0 0.0
        %2854 = vmatpush1.xpose.msra.mxu0 0.0
        %2855 = vmatprep.subr.mxu0 0.0
        %2856 = vmatpush1.xpose.msra.mxu0 0.0
        %2857 = vmatprep.subr.mxu0 0.0
        %2858 = vmatpush1.xpose.msra.mxu0 0.0
        %2859 = vmatprep.subr.mxu0 0.0
        %2860 = vmatpush1.xpose.msra.mxu0 0.0
        %2861 = vmatprep.subr.mxu0 0.0
        %2862 = vmatpush1.xpose.msra.mxu0 0.0
        %2863 = vmatprep.subr.mxu0 0.0
        %2864 = vmatpush1.xpose.msra.mxu0 0.0
        %2865 = vmatprep.subr.mxu0 0.0
        %2866 = vmatpush1.xpose.msra.mxu0 0.0
        %2867 = vmatprep.subr.mxu0 0.0
        %2868 = vmatpush1.xpose.msra.mxu0 0.0
        %2869 = vmatprep.subr.mxu0 0.0
        %2870 = vmatpush1.xpose.msra.mxu0 0.0
        %2871 = vmatprep.subr.mxu0 0.0
        %2872 = vmatpush1.xpose.msra.mxu0 0.0
        %2873 = vmatprep.subr.mxu0 0.0
        %2874 = vmatpush1.xpose.msra.mxu0 0.0
        %2875 = vmatprep.subr.mxu0 0.0
        %2876 = vmatpush1.xpose.msra.mxu0 0.0
        %2877 = vmatprep.mubr.f32.mxu0 0.0
        %2878 = vmatmul.mubr.f32.gmra.mrb[0].mxu0 %v2809
        %v2879 = vpop.f32.mrb[0].mxu0
        %v2880 = vadd.f32 0.0, %v2879
        %v2881 = vpop.f32.mrb[0].mxu0
        %2882 = vdwg.mxu0
        %2883 = vrot.lane.b32.xlu0 %v1774, 44
        %v2884 = vpop.permute.xlu0 %2883
        %2885 = vrot.lane.b32.xlu0 %v1813, 44
        %v2886 = vpop.permute.xlu0 %2885
        %v2887 = vsel %vm1661, %v2884, 0
        %v2889 = vsel %vm1661, %v2886, 0
        %2891 = vmatprep.subr.mxu0 0.0
        %2892 = vmatpush1.xpose.msra.mxu0 %v2889
        %2893 = vmatprep.subr.mxu0 0.0
        %2894 = vmatpush1.xpose.msra.mxu0 0.0
        %2895 = vmatprep.subr.mxu0 0.0
        %2896 = vmatpush1.xpose.msra.mxu0 0.0
        %2897 = vmatprep.subr.mxu0 0.0
        %2898 = vmatpush1.xpose.msra.mxu0 0.0
        %2899 = vmatprep.subr.mxu0 0.0
        %2900 = vmatpush1.xpose.msra.mxu0 0.0
        %2901 = vmatprep.subr.mxu0 0.0
        %2902 = vmatpush1.xpose.msra.mxu0 0.0
        %2903 = vmatprep.subr.mxu0 0.0
        %2904 = vmatpush1.xpose.msra.mxu0 0.0
        %2905 = vmatprep.subr.mxu0 0.0
        %2906 = vmatpush1.xpose.msra.mxu0 0.0
        %2907 = vmatprep.subr.mxu0 0.0
        %2908 = vmatpush1.xpose.msra.mxu0 0.0
        %2909 = vmatprep.subr.mxu0 0.0
        %2910 = vmatpush1.xpose.msra.mxu0 0.0
        %2911 = vmatprep.subr.mxu0 0.0
        %2912 = vmatpush1.xpose.msra.mxu0 0.0
        %2913 = vmatprep.subr.mxu0 0.0
        %2914 = vmatpush1.xpose.msra.mxu0 0.0
        %2915 = vmatprep.subr.mxu0 0.0
        %2916 = vmatpush1.xpose.msra.mxu0 0.0
        %2917 = vmatprep.subr.mxu0 0.0
        %2918 = vmatpush1.xpose.msra.mxu0 0.0
        %2919 = vmatprep.subr.mxu0 0.0
        %2920 = vmatpush1.xpose.msra.mxu0 0.0
        %2921 = vmatprep.subr.mxu0 0.0
        %2922 = vmatpush1.xpose.msra.mxu0 0.0
        %2923 = vmatprep.subr.mxu0 0.0
        %2924 = vmatpush1.xpose.msra.mxu0 0.0
        %2925 = vmatprep.subr.mxu0 0.0
        %2926 = vmatpush1.xpose.msra.mxu0 0.0
        %2927 = vmatprep.subr.mxu0 0.0
        %2928 = vmatpush1.xpose.msra.mxu0 0.0
        %2929 = vmatprep.subr.mxu0 0.0
        %2930 = vmatpush1.xpose.msra.mxu0 0.0
        %2931 = vmatprep.subr.mxu0 0.0
        %2932 = vmatpush1.xpose.msra.mxu0 0.0
        %2933 = vmatprep.subr.mxu0 0.0
        %2934 = vmatpush1.xpose.msra.mxu0 0.0
        %2935 = vmatprep.subr.mxu0 0.0
        %2936 = vmatpush1.xpose.msra.mxu0 0.0
        %2937 = vmatprep.subr.mxu0 0.0
        %2938 = vmatpush1.xpose.msra.mxu0 0.0
        %2939 = vmatprep.subr.mxu0 0.0
        %2940 = vmatpush1.xpose.msra.mxu0 0.0
        %2941 = vmatprep.subr.mxu0 0.0
        %2942 = vmatpush1.xpose.msra.mxu0 0.0
        %2943 = vmatprep.subr.mxu0 0.0
        %2944 = vmatpush1.xpose.msra.mxu0 0.0
        %2945 = vmatprep.subr.mxu0 0.0
        %2946 = vmatpush1.xpose.msra.mxu0 0.0
        %2947 = vmatprep.subr.mxu0 0.0
        %2948 = vmatpush1.xpose.msra.mxu0 0.0
        %2949 = vmatprep.subr.mxu0 0.0
        %2950 = vmatpush1.xpose.msra.mxu0 0.0
        %2951 = vmatprep.subr.mxu0 0.0
        %2952 = vmatpush1.xpose.msra.mxu0 0.0
        %2953 = vmatprep.subr.mxu0 0.0
        %2954 = vmatpush1.xpose.msra.mxu0 0.0
        %2955 = vmatprep.mubr.f32.mxu0 0.0
        %2956 = vmatmul.mubr.f32.gmra.mrb[0].mxu0 %v2887
        %v2957 = vpop.f32.mrb[0].mxu0
        %v2958 = vadd.f32 0.0, %v2957
        %v2959 = vpop.f32.mrb[0].mxu0
        %2960 = vdwg.mxu0
        %v2961 = vsel %vm1888, %v2880, -inf
        %2962 = vmax.xlane.f32.xlu0 %v2961
        %v2963 = vpop.xlane.xlu0 %2962
        %v2964 = vsel %vm1888, %v2958, -inf
        %2965 = vmax.xlane.f32.xlu0 %v2964
        %v2966 = vpop.xlane.xlu0 %2965
        %v2967 = vsub.f32 %v2880, %v2963
        %v2968 = vsub.f32 %v2958, %v2966
        %v2969 = vmul.f32 %v2967, 1.442695
        %v2970 = vpow.pop %v2969
        %v2971 = vmul.f32 %v2968, 1.442695
        %v2972 = vpow.pop %v2971
        %v2973 = vsel %vm1888, %v2970, 0.0
        %2974 = vadd.xlane.f32.xlu0 %v2973
        %v2975 = vpop.xlane.xlu0 %2974
        %v2976 = vsel %vm1888, %v2972, 0.0
        %2977 = vadd.xlane.f32.xlu0 %v2976
        %v2978 = vpop.xlane.xlu0 %2977
        %v2979 = vrcp.pop %v2975
        %v2980 = vrcp.pop %v2978
        %v2981 = vmul.f32 %v2970, %v2979
        %v2982 = vmul.f32 %v2972, %v2980
        %2983 = vrot.lane.b32.xlu0 %v1949, 44
        %v2984 = vpop.permute.xlu0 %2983
        %v2986 = vsel %vm1950, %v2981, 0
        %v2988 = vsel %vm1954, %v2984, 0
        %2990 = vmatprep.subr.mxu0 0.0
        %2991 = vmatpush1.msra.mxu0 %v2988
        %2992 = vmatprep.subr.mxu0 0.0
        %2993 = vmatpush1.msra.mxu0 0.0
        %2994 = vmatprep.subr.mxu0 0.0
        %2995 = vmatpush1.msra.mxu0 0.0
        %2996 = vmatprep.subr.mxu0 0.0
        %2997 = vmatpush1.msra.mxu0 0.0
        %2998 = vmatprep.subr.mxu0 0.0
        %2999 = vmatpush1.msra.mxu0 0.0
        %3000 = vmatprep.subr.mxu0 0.0
        %3001 = vmatpush1.msra.mxu0 0.0
        %3002 = vmatprep.subr.mxu0 0.0
        %3003 = vmatpush1.msra.mxu0 0.0
        %3004 = vmatprep.subr.mxu0 0.0
        %3005 = vmatpush1.msra.mxu0 0.0
        %3006 = vmatprep.subr.mxu0 0.0
        %3007 = vmatpush1.msra.mxu0 0.0
        %3008 = vmatprep.subr.mxu0 0.0
        %3009 = vmatpush1.msra.mxu0 0.0
        %3010 = vmatprep.subr.mxu0 0.0
        %3011 = vmatpush1.msra.mxu0 0.0
        %3012 = vmatprep.subr.mxu0 0.0
        %3013 = vmatpush1.msra.mxu0 0.0
        %3014 = vmatprep.subr.mxu0 0.0
        %3015 = vmatpush1.msra.mxu0 0.0
        %3016 = vmatprep.subr.mxu0 0.0
        %3017 = vmatpush1.msra.mxu0 0.0
        %3018 = vmatprep.subr.mxu0 0.0
        %3019 = vmatpush1.msra.mxu0 0.0
        %3020 = vmatprep.subr.mxu0 0.0
        %3021 = vmatpush1.msra.mxu0 0.0
        %3022 = vmatprep.subr.mxu0 0.0
        %3023 = vmatpush1.msra.mxu0 0.0
        %3024 = vmatprep.subr.mxu0 0.0
        %3025 = vmatpush1.msra.mxu0 0.0
        %3026 = vmatprep.subr.mxu0 0.0
        %3027 = vmatpush1.msra.mxu0 0.0
        %3028 = vmatprep.subr.mxu0 0.0
        %3029 = vmatpush1.msra.mxu0 0.0
        %3030 = vmatprep.subr.mxu0 0.0
        %3031 = vmatpush1.msra.mxu0 0.0
        %3032 = vmatprep.subr.mxu0 0.0
        %3033 = vmatpush1.msra.mxu0 0.0
        %3034 = vmatprep.subr.mxu0 0.0
        %3035 = vmatpush1.msra.mxu0 0.0
        %3036 = vmatprep.subr.mxu0 0.0
        %3037 = vmatpush1.msra.mxu0 0.0
        %3038 = vmatprep.subr.mxu0 0.0
        %3039 = vmatpush1.msra.mxu0 0.0
        %3040 = vmatprep.subr.mxu0 0.0
        %3041 = vmatpush1.msra.mxu0 0.0
        %3042 = vmatprep.subr.mxu0 0.0
        %3043 = vmatpush1.msra.mxu0 0.0
        %3044 = vmatprep.subr.mxu0 0.0
        %3045 = vmatpush1.msra.mxu0 0.0
        %3046 = vmatprep.subr.mxu0 0.0
        %3047 = vmatpush1.msra.mxu0 0.0
        %3048 = vmatprep.subr.mxu0 0.0
        %3049 = vmatpush1.msra.mxu0 0.0
        %3050 = vmatprep.subr.mxu0 0.0
        %3051 = vmatpush1.msra.mxu0 0.0
        %3052 = vmatprep.subr.mxu0 0.0
        %3053 = vmatpush1.msra.mxu0 0.0
        %3054 = vmatprep.mubr.f32.mxu0 0.0
        %3055 = vmatmul.mubr.f32.gmra.mrb[0].mxu0 %v2986
        %v3056 = vpop.f32.mrb[0].mxu0
        %v3057 = vadd.f32 0.0, %v3056
        %v3058 = vpop.f32.mrb[0].mxu0
        %3059 = vdwg.mxu0
        %3060 = vrot.lane.b32.xlu0 %v2065, 44
        %v3061 = vpop.permute.xlu0 %3060
        %v3063 = vsel %vm1950, %v2982, 0
        %v3065 = vsel %vm1954, %v3061, 0
        %3067 = vmatprep.subr.mxu0 0.0
        %3068 = vmatpush1.msra.mxu0 %v3065
        %3069 = vmatprep.subr.mxu0 0.0
        %3070 = vmatpush1.msra.mxu0 0.0
        %3071 = vmatprep.subr.mxu0 0.0
        %3072 = vmatpush1.msra.mxu0 0.0
        %3073 = vmatprep.subr.mxu0 0.0
        %3074 = vmatpush1.msra.mxu0 0.0
        %3075 = vmatprep.subr.mxu0 0.0
        %3076 = vmatpush1.msra.mxu0 0.0
        %3077 = vmatprep.subr.mxu0 0.0
        %3078 = vmatpush1.msra.mxu0 0.0
        %3079 = vmatprep.subr.mxu0 0.0
        %3080 = vmatpush1.msra.mxu0 0.0
        %3081 = vmatprep.subr.mxu0 0.0
        %3082 = vmatpush1.msra.mxu0 0.0
        %3083 = vmatprep.subr.mxu0 0.0
        %3084 = vmatpush1.msra.mxu0 0.0
        %3085 = vmatprep.subr.mxu0 0.0
        %3086 = vmatpush1.msra.mxu0 0.0
        %3087 = vmatprep.subr.mxu0 0.0
        %3088 = vmatpush1.msra.mxu0 0.0
        %3089 = vmatprep.subr.mxu0 0.0
        %3090 = vmatpush1.msra.mxu0 0.0
        %3091 = vmatprep.subr.mxu0 0.0
        %3092 = vmatpush1.msra.mxu0 0.0
        %3093 = vmatprep.subr.mxu0 0.0
        %3094 = vmatpush1.msra.mxu0 0.0
        %3095 = vmatprep.subr.mxu0 0.0
        %3096 = vmatpush1.msra.mxu0 0.0
        %3097 = vmatprep.subr.mxu0 0.0
        %3098 = vmatpush1.msra.mxu0 0.0
        %3099 = vmatprep.subr.mxu0 0.0
        %3100 = vmatpush1.msra.mxu0 0.0
        %3101 = vmatprep.subr.mxu0 0.0
        %3102 = vmatpush1.msra.mxu0 0.0
        %3103 = vmatprep.subr.mxu0 0.0
        %3104 = vmatpush1.msra.mxu0 0.0
        %3105 = vmatprep.subr.mxu0 0.0
        %3106 = vmatpush1.msra.mxu0 0.0
        %3107 = vmatprep.subr.mxu0 0.0
        %3108 = vmatpush1.msra.mxu0 0.0
        %3109 = vmatprep.subr.mxu0 0.0
        %3110 = vmatpush1.msra.mxu0 0.0
        %3111 = vmatprep.subr.mxu0 0.0
        %3112 = vmatpush1.msra.mxu0 0.0
        %3113 = vmatprep.subr.mxu0 0.0
        %3114 = vmatpush1.msra.mxu0 0.0
        %3115 = vmatprep.subr.mxu0 0.0
        %3116 = vmatpush1.msra.mxu0 0.0
        %3117 = vmatprep.subr.mxu0 0.0
        %3118 = vmatpush1.msra.mxu0 0.0
        %3119 = vmatprep.subr.mxu0 0.0
        %3120 = vmatpush1.msra.mxu0 0.0
        %3121 = vmatprep.subr.mxu0 0.0
        %3122 = vmatpush1.msra.mxu0 0.0
        %3123 = vmatprep.subr.mxu0 0.0
        %3124 = vmatpush1.msra.mxu0 0.0
        %3125 = vmatprep.subr.mxu0 0.0
        %3126 = vmatpush1.msra.mxu0 0.0
        %3127 = vmatprep.subr.mxu0 0.0
        %3128 = vmatpush1.msra.mxu0 0.0
        %3129 = vmatprep.subr.mxu0 0.0
        %3130 = vmatpush1.msra.mxu0 0.0
        %3131 = vmatprep.mubr.f32.mxu0 0.0
        %3132 = vmatmul.mubr.f32.gmra.mrb[0].mxu0 %v3063
        %v3133 = vpop.f32.mrb[0].mxu0
        %v3134 = vadd.f32 0.0, %v3133
        %v3135 = vpop.f32.mrb[0].mxu0
        %3136 = vdwg.mxu0
        %v3139 = vcombine.low %v930, %v932
        %v3140 = vcombine.high %v930, %v932
        %v3142 = vunpack.c.l.s4 1966171168
        %v3143 = vunpack.c.0.s8 %v3142
        %v3144 = vlaneseq
        %v3145 = vshrl.u32 %v3144, 7
        %v3146 = vsub.s32 %v3143, %v3145
        %v3147 = vrot.slane %v3139, %v3146
        %v3149 = vunpack.c.l.s4 1966171168
        %v3150 = vunpack.c.0.s8 %v3149
        %v3151 = vlaneseq
        %v3152 = vshrl.u32 %v3151, 7
        %v3153 = vsub.s32 %v3150, %v3152
        %v3154 = vrot.slane %v3140, %v3153
        %v3155 = vcombine.high %v3147, %v3147
        %v3156 = vcombine.high %v3154, %v3154
        %v3158 = vunpack.c.l.s4 1966171168
        %v3159 = vunpack.c.0.s8 %v3158
        %v3160 = vlaneseq
        %v3161 = vshrl.u32 %v3160, 7
        %v3162 = vsub.s32 %v3159, %v3161
        %v3163 = vrot.slane %v3147, %v3162
        %v3165 = vunpack.c.l.s4 1966171168
        %v3166 = vunpack.c.0.s8 %v3165
        %v3167 = vlaneseq
        %v3168 = vshrl.u32 %v3167, 7
        %v3169 = vsub.s32 %v3166, %v3168
        %v3170 = vrot.slane %v3154, %v3169
        %v3172 = vunpack.c.l.s4 1966171168
        %v3173 = vunpack.c.0.s8 %v3172
        %v3174 = vlaneseq
        %v3175 = vshrl.u32 %v3174, 7
        %v3176 = vsub.s32 %v3173, %v3175
        %v3177 = vrot.slane %v3155, %v3176
        %v3179 = vunpack.c.l.s4 1966171168
        %v3180 = vunpack.c.0.s8 %v3179
        %v3181 = vlaneseq
        %v3182 = vshrl.u32 %v3181, 7
        %v3183 = vsub.s32 %v3180, %v3182
        %v3184 = vrot.slane %v3156, %v3183
        %v3185 = vcombine.high %v3163, %v3163
        %v3186 = vcombine.high %v3170, %v3170
        %v3187 = vcombine.high %v3177, %v3177
        %v3188 = vcombine.high %v3184, %v3184
        %v3189 = vcombine.low %v934, %v936
        %v3191 = vunpack.c.l.s4 1966171168
        %v3192 = vunpack.c.0.s8 %v3191
        %v3193 = vlaneseq
        %v3194 = vshrl.u32 %v3193, 7
        %v3195 = vsub.s32 %v3192, %v3194
        %v3196 = vrot.slane %v3189, %v3195
        %v3197 = vcombine.high %v3196, %v3196
        %v3199 = vunpack.c.l.s4 1966171168
        %v3200 = vunpack.c.0.s8 %v3199
        %v3201 = vlaneseq
        %v3202 = vshrl.u32 %v3201, 7
        %v3203 = vsub.s32 %v3200, %v3202
        %v3204 = vrot.slane %v3196, %v3203
        %v3206 = vunpack.c.l.s4 1966171168
        %v3207 = vunpack.c.0.s8 %v3206
        %v3208 = vlaneseq
        %v3209 = vshrl.u32 %v3208, 7
        %v3210 = vsub.s32 %v3207, %v3209
        %v3211 = vrot.slane %v3197, %v3210
        %v3214 = vcombine.low %v1143, %v1145
        %v3215 = vcombine.high %v1143, %v1145
        %v3217 = vunpack.c.l.s4 1966171168
        %v3218 = vunpack.c.0.s8 %v3217
        %v3219 = vlaneseq
        %v3220 = vshrl.u32 %v3219, 7
        %v3221 = vsub.s32 %v3218, %v3220
        %v3222 = vrot.slane %v3214, %v3221
        %v3224 = vunpack.c.l.s4 1966171168
        %v3225 = vunpack.c.0.s8 %v3224
        %v3226 = vlaneseq
        %v3227 = vshrl.u32 %v3226, 7
        %v3228 = vsub.s32 %v3225, %v3227
        %v3229 = vrot.slane %v3215, %v3228
        %v3230 = vcombine.high %v3222, %v3222
        %v3231 = vcombine.high %v3229, %v3229
        %v3233 = vunpack.c.l.s4 1966171168
        %v3234 = vunpack.c.0.s8 %v3233
        %v3235 = vlaneseq
        %v3236 = vshrl.u32 %v3235, 7
        %v3237 = vsub.s32 %v3234, %v3236
        %v3238 = vrot.slane %v3222, %v3237
        %v3240 = vunpack.c.l.s4 1966171168
        %v3241 = vunpack.c.0.s8 %v3240
        %v3242 = vlaneseq
        %v3243 = vshrl.u32 %v3242, 7
        %v3244 = vsub.s32 %v3241, %v3243
        %v3245 = vrot.slane %v3229, %v3244
        %v3247 = vunpack.c.l.s4 1966171168
        %v3248 = vunpack.c.0.s8 %v3247
        %v3249 = vlaneseq
        %v3250 = vshrl.u32 %v3249, 7
        %v3251 = vsub.s32 %v3248, %v3250
        %v3252 = vrot.slane %v3230, %v3251
        %v3254 = vunpack.c.l.s4 1966171168
        %v3255 = vunpack.c.0.s8 %v3254
        %v3256 = vlaneseq
        %v3257 = vshrl.u32 %v3256, 7
        %v3258 = vsub.s32 %v3255, %v3257
        %v3259 = vrot.slane %v3231, %v3258
        %v3260 = vcombine.high %v3238, %v3238
        %v3261 = vcombine.high %v3245, %v3245
        %v3262 = vcombine.high %v3252, %v3252
        %v3263 = vcombine.high %v3259, %v3259
        %v3264 = vcombine.low %v1147, %v1149
        %v3266 = vunpack.c.l.s4 1966171168
        %v3267 = vunpack.c.0.s8 %v3266
        %v3268 = vlaneseq
        %v3269 = vshrl.u32 %v3268, 7
        %v3270 = vsub.s32 %v3267, %v3269
        %v3271 = vrot.slane %v3264, %v3270
        %v3272 = vcombine.high %v3271, %v3271
        %v3274 = vunpack.c.l.s4 1966171168
        %v3275 = vunpack.c.0.s8 %v3274
        %v3276 = vlaneseq
        %v3277 = vshrl.u32 %v3276, 7
        %v3278 = vsub.s32 %v3275, %v3277
        %v3279 = vrot.slane %v3271, %v3278
        %v3281 = vunpack.c.l.s4 1966171168
        %v3282 = vunpack.c.0.s8 %v3281
        %v3283 = vlaneseq
        %v3284 = vshrl.u32 %v3283, 7
        %v3285 = vsub.s32 %v3282, %v3284
        %v3286 = vrot.slane %v3272, %v3285
        %v3289 = vcombine.low %v1356, %v1358
        %v3290 = vcombine.high %v1356, %v1358
        %v3292 = vunpack.c.l.s4 1966171168
        %v3293 = vunpack.c.0.s8 %v3292
        %v3294 = vlaneseq
        %v3295 = vshrl.u32 %v3294, 7
        %v3296 = vsub.s32 %v3293, %v3295
        %v3297 = vrot.slane %v3289, %v3296
        %v3299 = vunpack.c.l.s4 1966171168
        %v3300 = vunpack.c.0.s8 %v3299
        %v3301 = vlaneseq
        %v3302 = vshrl.u32 %v3301, 7
        %v3303 = vsub.s32 %v3300, %v3302
        %v3304 = vrot.slane %v3290, %v3303
        %v3305 = vcombine.high %v3297, %v3297
        %v3306 = vcombine.high %v3304, %v3304
        %v3308 = vunpack.c.l.s4 1966171168
        %v3309 = vunpack.c.0.s8 %v3308
        %v3310 = vlaneseq
        %v3311 = vshrl.u32 %v3310, 7
        %v3312 = vsub.s32 %v3309, %v3311
        %v3313 = vrot.slane %v3297, %v3312
        %v3315 = vunpack.c.l.s4 1966171168
        %v3316 = vunpack.c.0.s8 %v3315
        %v3317 = vlaneseq
        %v3318 = vshrl.u32 %v3317, 7
        %v3319 = vsub.s32 %v3316, %v3318
        %v3320 = vrot.slane %v3304, %v3319
        %v3322 = vunpack.c.l.s4 1966171168
        %v3323 = vunpack.c.0.s8 %v3322
        %v3324 = vlaneseq
        %v3325 = vshrl.u32 %v3324, 7
        %v3326 = vsub.s32 %v3323, %v3325
        %v3327 = vrot.slane %v3305, %v3326
        %v3329 = vunpack.c.l.s4 1966171168
        %v3330 = vunpack.c.0.s8 %v3329
        %v3331 = vlaneseq
        %v3332 = vshrl.u32 %v3331, 7
        %v3333 = vsub.s32 %v3330, %v3332
        %v3334 = vrot.slane %v3306, %v3333
        %v3335 = vcombine.high %v3313, %v3313
        %v3336 = vcombine.high %v3320, %v3320
        %v3337 = vcombine.high %v3327, %v3327
        %v3338 = vcombine.high %v3334, %v3334
        %v3339 = vcombine.low %v1360, %v1362
        %v3341 = vunpack.c.l.s4 1966171168
        %v3342 = vunpack.c.0.s8 %v3341
        %v3343 = vlaneseq
        %v3344 = vshrl.u32 %v3343, 7
        %v3345 = vsub.s32 %v3342, %v3344
        %v3346 = vrot.slane %v3339, %v3345
        %v3347 = vcombine.high %v3346, %v3346
        %v3349 = vunpack.c.l.s4 1966171168
        %v3350 = vunpack.c.0.s8 %v3349
        %v3351 = vlaneseq
        %v3352 = vshrl.u32 %v3351, 7
        %v3353 = vsub.s32 %v3350, %v3352
        %v3354 = vrot.slane %v3346, %v3353
        %v3356 = vunpack.c.l.s4 1966171168
        %v3357 = vunpack.c.0.s8 %v3356
        %v3358 = vlaneseq
        %v3359 = vshrl.u32 %v3358, 7
        %v3360 = vsub.s32 %v3357, %v3359
        %v3361 = vrot.slane %v3347, %v3360
        %v3362 = vcombine.low %v3163, %v3177
        %v3363 = vcombine.low %v3185, %v3187
        %v3365 = vunpack.c.l.s4 1966171168
        %v3366 = vunpack.c.0.s8 %v3365
        %v3367 = vlaneseq
        %v3368 = vshrl.u32 %v3367, 7
        %v3369 = vsub.s32 %v3366, %v3368
        %v3370 = vrot.slane %v3362, %v3369
        %v3372 = vunpack.c.l.s4 1966171168
        %v3373 = vunpack.c.0.s8 %v3372
        %v3374 = vlaneseq
        %v3375 = vshrl.u32 %v3374, 7
        %v3376 = vsub.s32 %v3373, %v3375
        %v3377 = vrot.slane %v3363, %v3376
        %v3379 = vunpack.c.l.s4 1966171168
        %v3380 = vunpack.c.0.s8 %v3379
        %v3381 = vlaneseq
        %v3382 = vshrl.u32 %v3381, 7
        %v3383 = vsub.s32 %v3380, %v3382
        %v3384 = vrot.slane %v3170, %v3383
        %v3385 = vcombine.low %v3370, %v3377
        %v3386 = vcombine.high %v3370, %v3377
        %v3387 = vcombine.high %v3384, %v3384
        %v3389 = vunpack.c.l.s4 1966171168
        %v3390 = vunpack.c.0.s8 %v3389
        %v3391 = vlaneseq
        %v3392 = vshrl.u32 %v3391, 7
        %v3393 = vsub.s32 %v3390, %v3392
        %v3394 = vrot.slane %v3385, %v3393
        %v3396 = vunpack.c.l.s4 1966171168
        %v3397 = vunpack.c.0.s8 %v3396
        %v3398 = vlaneseq
        %v3399 = vshrl.u32 %v3398, 7
        %v3400 = vsub.s32 %v3397, %v3399
        %v3401 = vrot.slane %v3386, %v3400
        %v3403 = vunpack.c.l.s4 1966171168
        %v3404 = vunpack.c.0.s8 %v3403
        %v3405 = vlaneseq
        %v3406 = vshrl.u32 %v3405, 7
        %v3407 = vsub.s32 %v3404, %v3406
        %v3408 = vrot.slane %v3384, %v3407
        %v3410 = vunpack.c.l.s4 1966171168
        %v3411 = vunpack.c.0.s8 %v3410
        %v3412 = vlaneseq
        %v3413 = vshrl.u32 %v3412, 7
        %v3414 = vsub.s32 %v3411, %v3413
        %v3415 = vrot.slane %v3387, %v3414
        %v3416 = vcombine.low %v3394, %v3408
        %v3417 = vcombine.low %v3401, %v3415
        %3418 = vrot.lane.b32.xlu0 %v3416, 16
        %v3419 = vpop.permute.xlu0 %3418
        %3420 = vrot.lane.b32.xlu0 %v3417, 16
        %v3421 = vpop.permute.xlu0 %3420
        %vm3422 = vcmask 130048
        %v3423 = vsel %vm3422, %v3419, %v3421
        %v3424 = vcombine.low %v3238, %v3252
        %v3425 = vcombine.low %v3260, %v3262
        %v3427 = vunpack.c.l.s4 1966171168
        %v3428 = vunpack.c.0.s8 %v3427
        %v3429 = vlaneseq
        %v3430 = vshrl.u32 %v3429, 7
        %v3431 = vsub.s32 %v3428, %v3430
        %v3432 = vrot.slane %v3424, %v3431
        %v3434 = vunpack.c.l.s4 1966171168
        %v3435 = vunpack.c.0.s8 %v3434
        %v3436 = vlaneseq
        %v3437 = vshrl.u32 %v3436, 7
        %v3438 = vsub.s32 %v3435, %v3437
        %v3439 = vrot.slane %v3425, %v3438
        %v3441 = vunpack.c.l.s4 1966171168
        %v3442 = vunpack.c.0.s8 %v3441
        %v3443 = vlaneseq
        %v3444 = vshrl.u32 %v3443, 7
        %v3445 = vsub.s32 %v3442, %v3444
        %v3446 = vrot.slane %v3245, %v3445
        %v3447 = vcombine.low %v3432, %v3439
        %v3448 = vcombine.high %v3432, %v3439
        %v3449 = vcombine.high %v3446, %v3446
        %v3451 = vunpack.c.l.s4 1966171168
        %v3452 = vunpack.c.0.s8 %v3451
        %v3453 = vlaneseq
        %v3454 = vshrl.u32 %v3453, 7
        %v3455 = vsub.s32 %v3452, %v3454
        %v3456 = vrot.slane %v3447, %v3455
        %v3458 = vunpack.c.l.s4 1966171168
        %v3459 = vunpack.c.0.s8 %v3458
        %v3460 = vlaneseq
        %v3461 = vshrl.u32 %v3460, 7
        %v3462 = vsub.s32 %v3459, %v3461
        %v3463 = vrot.slane %v3448, %v3462
        %v3465 = vunpack.c.l.s4 1966171168
        %v3466 = vunpack.c.0.s8 %v3465
        %v3467 = vlaneseq
        %v3468 = vshrl.u32 %v3467, 7
        %v3469 = vsub.s32 %v3466, %v3468
        %v3470 = vrot.slane %v3446, %v3469
        %v3472 = vunpack.c.l.s4 1966171168
        %v3473 = vunpack.c.0.s8 %v3472
        %v3474 = vlaneseq
        %v3475 = vshrl.u32 %v3474, 7
        %v3476 = vsub.s32 %v3473, %v3475
        %v3477 = vrot.slane %v3449, %v3476
        %v3478 = vcombine.low %v3456, %v3470
        %v3479 = vcombine.low %v3463, %v3477
        %3480 = vrot.lane.b32.xlu0 %v3478, 16
        %v3481 = vpop.permute.xlu0 %3480
        %3482 = vrot.lane.b32.xlu0 %v3479, 16
        %v3483 = vpop.permute.xlu0 %3482
        %v3484 = vsel %vm3422, %v3481, %v3483
        %v3485 = vsel %vm1661, %v3423, 0
        %v3487 = vsel %vm1661, %v3484, 0
        %3489 = vmatprep.subr.mxu0 0.0
        %3490 = vmatpush1.xpose.msra.mxu0 %v3487
        %3491 = vmatprep.subr.mxu0 0.0
        %3492 = vmatpush1.xpose.msra.mxu0 0.0
        %3493 = vmatprep.subr.mxu0 0.0
        %3494 = vmatpush1.xpose.msra.mxu0 0.0
        %3495 = vmatprep.subr.mxu0 0.0
        %3496 = vmatpush1.xpose.msra.mxu0 0.0
        %3497 = vmatprep.subr.mxu0 0.0
        %3498 = vmatpush1.xpose.msra.mxu0 0.0
        %3499 = vmatprep.subr.mxu0 0.0
        %3500 = vmatpush1.xpose.msra.mxu0 0.0
        %3501 = vmatprep.subr.mxu0 0.0
        %3502 = vmatpush1.xpose.msra.mxu0 0.0
        %3503 = vmatprep.subr.mxu0 0.0
        %3504 = vmatpush1.xpose.msra.mxu0 0.0
        %3505 = vmatprep.subr.mxu0 0.0
        %3506 = vmatpush1.xpose.msra.mxu0 0.0
        %3507 = vmatprep.subr.mxu0 0.0
        %3508 = vmatpush1.xpose.msra.mxu0 0.0
        %3509 = vmatprep.subr.mxu0 0.0
        %3510 = vmatpush1.xpose.msra.mxu0 0.0
        %3511 = vmatprep.subr.mxu0 0.0
        %3512 = vmatpush1.xpose.msra.mxu0 0.0
        %3513 = vmatprep.subr.mxu0 0.0
        %3514 = vmatpush1.xpose.msra.mxu0 0.0
        %3515 = vmatprep.subr.mxu0 0.0
        %3516 = vmatpush1.xpose.msra.mxu0 0.0
        %3517 = vmatprep.subr.mxu0 0.0
        %3518 = vmatpush1.xpose.msra.mxu0 0.0
        %3519 = vmatprep.subr.mxu0 0.0
        %3520 = vmatpush1.xpose.msra.mxu0 0.0
        %3521 = vmatprep.subr.mxu0 0.0
        %3522 = vmatpush1.xpose.msra.mxu0 0.0
        %3523 = vmatprep.subr.mxu0 0.0
        %3524 = vmatpush1.xpose.msra.mxu0 0.0
        %3525 = vmatprep.subr.mxu0 0.0
        %3526 = vmatpush1.xpose.msra.mxu0 0.0
        %3527 = vmatprep.subr.mxu0 0.0
        %3528 = vmatpush1.xpose.msra.mxu0 0.0
        %3529 = vmatprep.subr.mxu0 0.0
        %3530 = vmatpush1.xpose.msra.mxu0 0.0
        %3531 = vmatprep.subr.mxu0 0.0
        %3532 = vmatpush1.xpose.msra.mxu0 0.0
        %3533 = vmatprep.subr.mxu0 0.0
        %3534 = vmatpush1.xpose.msra.mxu0 0.0
        %3535 = vmatprep.subr.mxu0 0.0
        %3536 = vmatpush1.xpose.msra.mxu0 0.0
        %3537 = vmatprep.subr.mxu0 0.0
        %3538 = vmatpush1.xpose.msra.mxu0 0.0
        %3539 = vmatprep.subr.mxu0 0.0
        %3540 = vmatpush1.xpose.msra.mxu0 0.0
        %3541 = vmatprep.subr.mxu0 0.0
        %3542 = vmatpush1.xpose.msra.mxu0 0.0
        %3543 = vmatprep.subr.mxu0 0.0
        %3544 = vmatpush1.xpose.msra.mxu0 0.0
        %3545 = vmatprep.subr.mxu0 0.0
        %3546 = vmatpush1.xpose.msra.mxu0 0.0
        %3547 = vmatprep.subr.mxu0 0.0
        %3548 = vmatpush1.xpose.msra.mxu0 0.0
        %3549 = vmatprep.subr.mxu0 0.0
        %3550 = vmatpush1.xpose.msra.mxu0 0.0
        %3551 = vmatprep.subr.mxu0 0.0
        %3552 = vmatpush1.xpose.msra.mxu0 0.0
        %3553 = vmatprep.mubr.f32.mxu0 0.0
        %3554 = vmatmul.mubr.f32.gmra.mrb[0].mxu0 %v3485
        %v3555 = vpop.f32.mrb[0].mxu0
        %v3556 = vadd.f32 0.0, %v3555
        %v3557 = vpop.f32.mrb[0].mxu0
        %3558 = vdwg.mxu0
        %v3559 = vcombine.low %v3184, %v3186
        %v3560 = vcombine.low %v3188, %v3204
        %v3562 = vunpack.c.l.s4 1966171168
        %v3563 = vunpack.c.0.s8 %v3562
        %v3564 = vlaneseq
        %v3565 = vshrl.u32 %v3564, 7
        %v3566 = vsub.s32 %v3563, %v3565
        %v3567 = vrot.slane %v3559, %v3566
        %v3569 = vunpack.c.l.s4 1966171168
        %v3570 = vunpack.c.0.s8 %v3569
        %v3571 = vlaneseq
        %v3572 = vshrl.u32 %v3571, 7
        %v3573 = vsub.s32 %v3570, %v3572
        %v3574 = vrot.slane %v3560, %v3573
        %v3576 = vunpack.c.l.s4 1966171168
        %v3577 = vunpack.c.0.s8 %v3576
        %v3578 = vlaneseq
        %v3579 = vshrl.u32 %v3578, 7
        %v3580 = vsub.s32 %v3577, %v3579
        %v3581 = vrot.slane %v3211, %v3580
        %v3582 = vcombine.low %v3567, %v3574
        %v3583 = vcombine.high %v3567, %v3574
        %v3584 = vcombine.high %v3581, %v3581
        %v3586 = vunpack.c.l.s4 1966171168
        %v3587 = vunpack.c.0.s8 %v3586
        %v3588 = vlaneseq
        %v3589 = vshrl.u32 %v3588, 7
        %v3590 = vsub.s32 %v3587, %v3589
        %v3591 = vrot.slane %v3582, %v3590
        %v3593 = vunpack.c.l.s4 1966171168
        %v3594 = vunpack.c.0.s8 %v3593
        %v3595 = vlaneseq
        %v3596 = vshrl.u32 %v3595, 7
        %v3597 = vsub.s32 %v3594, %v3596
        %v3598 = vrot.slane %v3583, %v3597
        %v3600 = vunpack.c.l.s4 1966171168
        %v3601 = vunpack.c.0.s8 %v3600
        %v3602 = vlaneseq
        %v3603 = vshrl.u32 %v3602, 7
        %v3604 = vsub.s32 %v3601, %v3603
        %v3605 = vrot.slane %v3581, %v3604
        %v3607 = vunpack.c.l.s4 1966171168
        %v3608 = vunpack.c.0.s8 %v3607
        %v3609 = vlaneseq
        %v3610 = vshrl.u32 %v3609, 7
        %v3611 = vsub.s32 %v3608, %v3610
        %v3612 = vrot.slane %v3584, %v3611
        %v3613 = vcombine.low %v3591, %v3605
        %v3614 = vcombine.low %v3598, %v3612
        %3615 = vrot.lane.b32.xlu0 %v3613, 16
        %v3616 = vpop.permute.xlu0 %3615
        %3617 = vrot.lane.b32.xlu0 %v3614, 16
        %v3618 = vpop.permute.xlu0 %3617
        %v3619 = vsel %vm3422, %v3616, %v3618
        %v3620 = vcombine.low %v3259, %v3261
        %v3621 = vcombine.low %v3263, %v3279
        %v3623 = vunpack.c.l.s4 1966171168
        %v3624 = vunpack.c.0.s8 %v3623
        %v3625 = vlaneseq
        %v3626 = vshrl.u32 %v3625, 7
        %v3627 = vsub.s32 %v3624, %v3626
        %v3628 = vrot.slane %v3620, %v3627
        %v3630 = vunpack.c.l.s4 1966171168
        %v3631 = vunpack.c.0.s8 %v3630
        %v3632 = vlaneseq
        %v3633 = vshrl.u32 %v3632, 7
        %v3634 = vsub.s32 %v3631, %v3633
        %v3635 = vrot.slane %v3621, %v3634
        %v3637 = vunpack.c.l.s4 1966171168
        %v3638 = vunpack.c.0.s8 %v3637
        %v3639 = vlaneseq
        %v3640 = vshrl.u32 %v3639, 7
        %v3641 = vsub.s32 %v3638, %v3640
        %v3642 = vrot.slane %v3286, %v3641
        %v3643 = vcombine.low %v3628, %v3635
        %v3644 = vcombine.high %v3628, %v3635
        %v3645 = vcombine.high %v3642, %v3642
        %v3647 = vunpack.c.l.s4 1966171168
        %v3648 = vunpack.c.0.s8 %v3647
        %v3649 = vlaneseq
        %v3650 = vshrl.u32 %v3649, 7
        %v3651 = vsub.s32 %v3648, %v3650
        %v3652 = vrot.slane %v3643, %v3651
        %v3654 = vunpack.c.l.s4 1966171168
        %v3655 = vunpack.c.0.s8 %v3654
        %v3656 = vlaneseq
        %v3657 = vshrl.u32 %v3656, 7
        %v3658 = vsub.s32 %v3655, %v3657
        %v3659 = vrot.slane %v3644, %v3658
        %v3661 = vunpack.c.l.s4 1966171168
        %v3662 = vunpack.c.0.s8 %v3661
        %v3663 = vlaneseq
        %v3664 = vshrl.u32 %v3663, 7
        %v3665 = vsub.s32 %v3662, %v3664
        %v3666 = vrot.slane %v3642, %v3665
        %v3668 = vunpack.c.l.s4 1966171168
        %v3669 = vunpack.c.0.s8 %v3668
        %v3670 = vlaneseq
        %v3671 = vshrl.u32 %v3670, 7
        %v3672 = vsub.s32 %v3669, %v3671
        %v3673 = vrot.slane %v3645, %v3672
        %v3674 = vcombine.low %v3652, %v3666
        %v3675 = vcombine.low %v3659, %v3673
        %3676 = vrot.lane.b32.xlu0 %v3674, 16
        %v3677 = vpop.permute.xlu0 %3676
        %3678 = vrot.lane.b32.xlu0 %v3675, 16
        %v3679 = vpop.permute.xlu0 %3678
        %v3680 = vsel %vm3422, %v3677, %v3679
        %v3681 = vsel %vm1661, %v3619, 0
        %v3683 = vsel %vm1661, %v3680, 0
        %3685 = vmatprep.subr.mxu0 0.0
        %3686 = vmatpush1.xpose.msra.mxu0 %v3683
        %3687 = vmatprep.subr.mxu0 0.0
        %3688 = vmatpush1.xpose.msra.mxu0 0.0
        %3689 = vmatprep.subr.mxu0 0.0
        %3690 = vmatpush1.xpose.msra.mxu0 0.0
        %3691 = vmatprep.subr.mxu0 0.0
        %3692 = vmatpush1.xpose.msra.mxu0 0.0
        %3693 = vmatprep.subr.mxu0 0.0
        %3694 = vmatpush1.xpose.msra.mxu0 0.0
        %3695 = vmatprep.subr.mxu0 0.0
        %3696 = vmatpush1.xpose.msra.mxu0 0.0
        %3697 = vmatprep.subr.mxu0 0.0
        %3698 = vmatpush1.xpose.msra.mxu0 0.0
        %3699 = vmatprep.subr.mxu0 0.0
        %3700 = vmatpush1.xpose.msra.mxu0 0.0
        %3701 = vmatprep.subr.mxu0 0.0
        %3702 = vmatpush1.xpose.msra.mxu0 0.0
        %3703 = vmatprep.subr.mxu0 0.0
        %3704 = vmatpush1.xpose.msra.mxu0 0.0
        %3705 = vmatprep.subr.mxu0 0.0
        %3706 = vmatpush1.xpose.msra.mxu0 0.0
        %3707 = vmatprep.subr.mxu0 0.0
        %3708 = vmatpush1.xpose.msra.mxu0 0.0
        %3709 = vmatprep.subr.mxu0 0.0
        %3710 = vmatpush1.xpose.msra.mxu0 0.0
        %3711 = vmatprep.subr.mxu0 0.0
        %3712 = vmatpush1.xpose.msra.mxu0 0.0
        %3713 = vmatprep.subr.mxu0 0.0
        %3714 = vmatpush1.xpose.msra.mxu0 0.0
        %3715 = vmatprep.subr.mxu0 0.0
        %3716 = vmatpush1.xpose.msra.mxu0 0.0
        %3717 = vmatprep.subr.mxu0 0.0
        %3718 = vmatpush1.xpose.msra.mxu0 0.0
        %3719 = vmatprep.subr.mxu0 0.0
        %3720 = vmatpush1.xpose.msra.mxu0 0.0
        %3721 = vmatprep.subr.mxu0 0.0
        %3722 = vmatpush1.xpose.msra.mxu0 0.0
        %3723 = vmatprep.subr.mxu0 0.0
        %3724 = vmatpush1.xpose.msra.mxu0 0.0
        %3725 = vmatprep.subr.mxu0 0.0
        %3726 = vmatpush1.xpose.msra.mxu0 0.0
        %3727 = vmatprep.subr.mxu0 0.0
        %3728 = vmatpush1.xpose.msra.mxu0 0.0
        %3729 = vmatprep.subr.mxu0 0.0
        %3730 = vmatpush1.xpose.msra.mxu0 0.0
        %3731 = vmatprep.subr.mxu0 0.0
        %3732 = vmatpush1.xpose.msra.mxu0 0.0
        %3733 = vmatprep.subr.mxu0 0.0
        %3734 = vmatpush1.xpose.msra.mxu0 0.0
        %3735 = vmatprep.subr.mxu0 0.0
        %3736 = vmatpush1.xpose.msra.mxu0 0.0
        %3737 = vmatprep.subr.mxu0 0.0
        %3738 = vmatpush1.xpose.msra.mxu0 0.0
        %3739 = vmatprep.subr.mxu0 0.0
        %3740 = vmatpush1.xpose.msra.mxu0 0.0
        %3741 = vmatprep.subr.mxu0 0.0
        %3742 = vmatpush1.xpose.msra.mxu0 0.0
        %3743 = vmatprep.subr.mxu0 0.0
        %3744 = vmatpush1.xpose.msra.mxu0 0.0
        %3745 = vmatprep.subr.mxu0 0.0
        %3746 = vmatpush1.xpose.msra.mxu0 0.0
        %3747 = vmatprep.subr.mxu0 0.0
        %3748 = vmatpush1.xpose.msra.mxu0 0.0
        %3749 = vmatprep.mubr.f32.mxu0 0.0
        %3750 = vmatmul.mubr.f32.gmra.mrb[0].mxu0 %v3681
        %v3751 = vpop.f32.mrb[0].mxu0
        %v3752 = vadd.f32 0.0, %v3751
        %v3753 = vpop.f32.mrb[0].mxu0
        %3754 = vdwg.mxu0
        %v3755 = vsel %vm1888, %v3556, -inf
        %3756 = vmax.xlane.f32.xlu0 %v3755
        %v3757 = vpop.xlane.xlu0 %3756
        %v3758 = vsel %vm1888, %v3752, -inf
        %3759 = vmax.xlane.f32.xlu0 %v3758
        %v3760 = vpop.xlane.xlu0 %3759
        %v3761 = vsub.f32 %v3556, %v3757
        %v3762 = vsub.f32 %v3752, %v3760
        %v3763 = vmul.f32 %v3761, 1.442695
        %v3764 = vpow.pop %v3763
        %v3765 = vmul.f32 %v3762, 1.442695
        %v3766 = vpow.pop %v3765
        %v3767 = vsel %vm1888, %v3764, 0.0
        %3768 = vadd.xlane.f32.xlu0 %v3767
        %v3769 = vpop.xlane.xlu0 %3768
        %v3770 = vsel %vm1888, %v3766, 0.0
        %3771 = vadd.xlane.f32.xlu0 %v3770
        %v3772 = vpop.xlane.xlu0 %3771
        %v3773 = vrcp.pop %v3769
        %v3774 = vrcp.pop %v3772
        %v3775 = vmul.f32 %v3764, %v3773
        %v3776 = vmul.f32 %v3766, %v3774
        %v3777 = vcombine.low %v3313, %v3327
        %v3778 = vcombine.low %v3335, %v3337
        %v3780 = vunpack.c.l.s4 1966171168
        %v3781 = vunpack.c.0.s8 %v3780
        %v3782 = vlaneseq
        %v3783 = vshrl.u32 %v3782, 7
        %v3784 = vsub.s32 %v3781, %v3783
        %v3785 = vrot.slane %v3777, %v3784
        %v3787 = vunpack.c.l.s4 1966171168
        %v3788 = vunpack.c.0.s8 %v3787
        %v3789 = vlaneseq
        %v3790 = vshrl.u32 %v3789, 7
        %v3791 = vsub.s32 %v3788, %v3790
        %v3792 = vrot.slane %v3778, %v3791
        %v3794 = vunpack.c.l.s4 1966171168
        %v3795 = vunpack.c.0.s8 %v3794
        %v3796 = vlaneseq
        %v3797 = vshrl.u32 %v3796, 7
        %v3798 = vsub.s32 %v3795, %v3797
        %v3799 = vrot.slane %v3320, %v3798
        %v3800 = vcombine.low %v3785, %v3792
        %v3801 = vcombine.high %v3785, %v3792
        %v3802 = vcombine.high %v3799, %v3799
        %v3804 = vunpack.c.l.s4 1966171168
        %v3805 = vunpack.c.0.s8 %v3804
        %v3806 = vlaneseq
        %v3807 = vshrl.u32 %v3806, 7
        %v3808 = vsub.s32 %v3805, %v3807
        %v3809 = vrot.slane %v3800, %v3808
        %v3811 = vunpack.c.l.s4 1966171168
        %v3812 = vunpack.c.0.s8 %v3811
        %v3813 = vlaneseq
        %v3814 = vshrl.u32 %v3813, 7
        %v3815 = vsub.s32 %v3812, %v3814
        %v3816 = vrot.slane %v3801, %v3815
        %v3818 = vunpack.c.l.s4 1966171168
        %v3819 = vunpack.c.0.s8 %v3818
        %v3820 = vlaneseq
        %v3821 = vshrl.u32 %v3820, 7
        %v3822 = vsub.s32 %v3819, %v3821
        %v3823 = vrot.slane %v3799, %v3822
        %v3825 = vunpack.c.l.s4 1966171168
        %v3826 = vunpack.c.0.s8 %v3825
        %v3827 = vlaneseq
        %v3828 = vshrl.u32 %v3827, 7
        %v3829 = vsub.s32 %v3826, %v3828
        %v3830 = vrot.slane %v3802, %v3829
        %v3831 = vcombine.low %v3809, %v3823
        %v3832 = vcombine.low %v3816, %v3830
        %3833 = vrot.lane.b32.xlu0 %v3831, 16
        %v3834 = vpop.permute.xlu0 %3833
        %3835 = vrot.lane.b32.xlu0 %v3832, 16
        %v3836 = vpop.permute.xlu0 %3835
        %v3837 = vsel %vm3422, %v3834, %v3836
        %v3839 = vsel %vm1950, %v3775, 0
        %v3841 = vsel %vm1954, %v3837, 0
        %3843 = vmatprep.subr.mxu0 0.0
        %3844 = vmatpush1.msra.mxu0 %v3841
        %3845 = vmatprep.subr.mxu0 0.0
        %3846 = vmatpush1.msra.mxu0 0.0
        %3847 = vmatprep.subr.mxu0 0.0
        %3848 = vmatpush1.msra.mxu0 0.0
        %3849 = vmatprep.subr.mxu0 0.0
        %3850 = vmatpush1.msra.mxu0 0.0
        %3851 = vmatprep.subr.mxu0 0.0
        %3852 = vmatpush1.msra.mxu0 0.0
        %3853 = vmatprep.subr.mxu0 0.0
        %3854 = vmatpush1.msra.mxu0 0.0
        %3855 = vmatprep.subr.mxu0 0.0
        %3856 = vmatpush1.msra.mxu0 0.0
        %3857 = vmatprep.subr.mxu0 0.0
        %3858 = vmatpush1.msra.mxu0 0.0
        %3859 = vmatprep.subr.mxu0 0.0
        %3860 = vmatpush1.msra.mxu0 0.0
        %3861 = vmatprep.subr.mxu0 0.0
        %3862 = vmatpush1.msra.mxu0 0.0
        %3863 = vmatprep.subr.mxu0 0.0
        %3864 = vmatpush1.msra.mxu0 0.0
        %3865 = vmatprep.subr.mxu0 0.0
        %3866 = vmatpush1.msra.mxu0 0.0
        %3867 = vmatprep.subr.mxu0 0.0
        %3868 = vmatpush1.msra.mxu0 0.0
        %3869 = vmatprep.subr.mxu0 0.0
        %3870 = vmatpush1.msra.mxu0 0.0
        %3871 = vmatprep.subr.mxu0 0.0
        %3872 = vmatpush1.msra.mxu0 0.0
        %3873 = vmatprep.subr.mxu0 0.0
        %3874 = vmatpush1.msra.mxu0 0.0
        %3875 = vmatprep.subr.mxu0 0.0
        %3876 = vmatpush1.msra.mxu0 0.0
        %3877 = vmatprep.subr.mxu0 0.0
        %3878 = vmatpush1.msra.mxu0 0.0
        %3879 = vmatprep.subr.mxu0 0.0
        %3880 = vmatpush1.msra.mxu0 0.0
        %3881 = vmatprep.subr.mxu0 0.0
        %3882 = vmatpush1.msra.mxu0 0.0
        %3883 = vmatprep.subr.mxu0 0.0
        %3884 = vmatpush1.msra.mxu0 0.0
        %3885 = vmatprep.subr.mxu0 0.0
        %3886 = vmatpush1.msra.mxu0 0.0
        %3887 = vmatprep.subr.mxu0 0.0
        %3888 = vmatpush1.msra.mxu0 0.0
        %3889 = vmatprep.subr.mxu0 0.0
        %3890 = vmatpush1.msra.mxu0 0.0
        %3891 = vmatprep.subr.mxu0 0.0
        %3892 = vmatpush1.msra.mxu0 0.0
        %3893 = vmatprep.subr.mxu0 0.0
        %3894 = vmatpush1.msra.mxu0 0.0
        %3895 = vmatprep.subr.mxu0 0.0
        %3896 = vmatpush1.msra.mxu0 0.0
        %3897 = vmatprep.subr.mxu0 0.0
        %3898 = vmatpush1.msra.mxu0 0.0
        %3899 = vmatprep.subr.mxu0 0.0
        %3900 = vmatpush1.msra.mxu0 0.0
        %3901 = vmatprep.subr.mxu0 0.0
        %3902 = vmatpush1.msra.mxu0 0.0
        %3903 = vmatprep.subr.mxu0 0.0
        %3904 = vmatpush1.msra.mxu0 0.0
        %3905 = vmatprep.subr.mxu0 0.0
        %3906 = vmatpush1.msra.mxu0 0.0
        %3907 = vmatprep.mubr.f32.mxu0 0.0
        %3908 = vmatmul.mubr.f32.gmra.mrb[0].mxu0 %v3839
        %v3909 = vpop.f32.mrb[0].mxu0
        %v3910 = vadd.f32 0.0, %v3909
        %v3911 = vpop.f32.mrb[0].mxu0
        %3912 = vdwg.mxu0
        %v3913 = vcombine.low %v3334, %v3336
        %v3914 = vcombine.low %v3338, %v3354
        %v3916 = vunpack.c.l.s4 1966171168
        %v3917 = vunpack.c.0.s8 %v3916
        %v3918 = vlaneseq
        %v3919 = vshrl.u32 %v3918, 7
        %v3920 = vsub.s32 %v3917, %v3919
        %v3921 = vrot.slane %v3913, %v3920
        %v3923 = vunpack.c.l.s4 1966171168
        %v3924 = vunpack.c.0.s8 %v3923
        %v3925 = vlaneseq
        %v3926 = vshrl.u32 %v3925, 7
        %v3927 = vsub.s32 %v3924, %v3926
        %v3928 = vrot.slane %v3914, %v3927
        %v3930 = vunpack.c.l.s4 1966171168
        %v3931 = vunpack.c.0.s8 %v3930
        %v3932 = vlaneseq
        %v3933 = vshrl.u32 %v3932, 7
        %v3934 = vsub.s32 %v3931, %v3933
        %v3935 = vrot.slane %v3361, %v3934
        %v3936 = vcombine.low %v3921, %v3928
        %v3937 = vcombine.high %v3921, %v3928
        %v3938 = vcombine.high %v3935, %v3935
        %v3940 = vunpack.c.l.s4 1966171168
        %v3941 = vunpack.c.0.s8 %v3940
        %v3942 = vlaneseq
        %v3943 = vshrl.u32 %v3942, 7
        %v3944 = vsub.s32 %v3941, %v3943
        %v3945 = vrot.slane %v3936, %v3944
        %v3947 = vunpack.c.l.s4 1966171168
        %v3948 = vunpack.c.0.s8 %v3947
        %v3949 = vlaneseq
        %v3950 = vshrl.u32 %v3949, 7
        %v3951 = vsub.s32 %v3948, %v3950
        %v3952 = vrot.slane %v3937, %v3951
        %v3954 = vunpack.c.l.s4 1966171168
        %v3955 = vunpack.c.0.s8 %v3954
        %v3956 = vlaneseq
        %v3957 = vshrl.u32 %v3956, 7
        %v3958 = vsub.s32 %v3955, %v3957
        %v3959 = vrot.slane %v3935, %v3958
        %v3961 = vunpack.c.l.s4 1966171168
        %v3962 = vunpack.c.0.s8 %v3961
        %v3963 = vlaneseq
        %v3964 = vshrl.u32 %v3963, 7
        %v3965 = vsub.s32 %v3962, %v3964
        %v3966 = vrot.slane %v3938, %v3965
        %v3967 = vcombine.low %v3945, %v3959
        %v3968 = vcombine.low %v3952, %v3966
        %3969 = vrot.lane.b32.xlu0 %v3967, 16
        %v3970 = vpop.permute.xlu0 %3969
        %3971 = vrot.lane.b32.xlu0 %v3968, 16
        %v3972 = vpop.permute.xlu0 %3971
        %v3973 = vsel %vm3422, %v3970, %v3972
        %v3975 = vsel %vm1950, %v3776, 0
        %v3977 = vsel %vm1954, %v3973, 0
        %3979 = vmatprep.subr.mxu0 0.0
        %3980 = vmatpush1.msra.mxu0 %v3977
        %3981 = vmatprep.subr.mxu0 0.0
        %3982 = vmatpush1.msra.mxu0 0.0
        %3983 = vmatprep.subr.mxu0 0.0
        %3984 = vmatpush1.msra.mxu0 0.0
        %3985 = vmatprep.subr.mxu0 0.0
        %3986 = vmatpush1.msra.mxu0 0.0
        %3987 = vmatprep.subr.mxu0 0.0
        %3988 = vmatpush1.msra.mxu0 0.0
        %3989 = vmatprep.subr.mxu0 0.0
        %3990 = vmatpush1.msra.mxu0 0.0
        %3991 = vmatprep.subr.mxu0 0.0
        %3992 = vmatpush1.msra.mxu0 0.0
        %3993 = vmatprep.subr.mxu0 0.0
        %3994 = vmatpush1.msra.mxu0 0.0
        %3995 = vmatprep.subr.mxu0 0.0
        %3996 = vmatpush1.msra.mxu0 0.0
        %3997 = vmatprep.subr.mxu0 0.0
        %3998 = vmatpush1.msra.mxu0 0.0
        %3999 = vmatprep.subr.mxu0 0.0
        %4000 = vmatpush1.msra.mxu0 0.0
        %4001 = vmatprep.subr.mxu0 0.0
        %4002 = vmatpush1.msra.mxu0 0.0
        %4003 = vmatprep.subr.mxu0 0.0
        %4004 = vmatpush1.msra.mxu0 0.0
        %4005 = vmatprep.subr.mxu0 0.0
        %4006 = vmatpush1.msra.mxu0 0.0
        %4007 = vmatprep.subr.mxu0 0.0
        %4008 = vmatpush1.msra.mxu0 0.0
        %4009 = vmatprep.subr.mxu0 0.0
        %4010 = vmatpush1.msra.mxu0 0.0
        %4011 = vmatprep.subr.mxu0 0.0
        %4012 = vmatpush1.msra.mxu0 0.0
        %4013 = vmatprep.subr.mxu0 0.0
        %4014 = vmatpush1.msra.mxu0 0.0
        %4015 = vmatprep.subr.mxu0 0.0
        %4016 = vmatpush1.msra.mxu0 0.0
        %4017 = vmatprep.subr.mxu0 0.0
        %4018 = vmatpush1.msra.mxu0 0.0
        %4019 = vmatprep.subr.mxu0 0.0
        %4020 = vmatpush1.msra.mxu0 0.0
        %4021 = vmatprep.subr.mxu0 0.0
        %4022 = vmatpush1.msra.mxu0 0.0
        %4023 = vmatprep.subr.mxu0 0.0
        %4024 = vmatpush1.msra.mxu0 0.0
        %4025 = vmatprep.subr.mxu0 0.0
        %4026 = vmatpush1.msra.mxu0 0.0
        %4027 = vmatprep.subr.mxu0 0.0
        %4028 = vmatpush1.msra.mxu0 0.0
        %4029 = vmatprep.subr.mxu0 0.0
        %4030 = vmatpush1.msra.mxu0 0.0
        %4031 = vmatprep.subr.mxu0 0.0
        %4032 = vmatpush1.msra.mxu0 0.0
        %4033 = vmatprep.subr.mxu0 0.0
        %4034 = vmatpush1.msra.mxu0 0.0
        %4035 = vmatprep.subr.mxu0 0.0
        %4036 = vmatpush1.msra.mxu0 0.0
        %4037 = vmatprep.subr.mxu0 0.0
        %4038 = vmatpush1.msra.mxu0 0.0
        %4039 = vmatprep.subr.mxu0 0.0
        %4040 = vmatpush1.msra.mxu0 0.0
        %4041 = vmatprep.subr.mxu0 0.0
        %4042 = vmatpush1.msra.mxu0 0.0
        %4043 = vmatprep.mubr.f32.mxu0 0.0
        %4044 = vmatmul.mubr.f32.gmra.mrb[0].mxu0 %v3975
        %v4045 = vpop.f32.mrb[0].mxu0
        %v4046 = vadd.f32 0.0, %v4045
        %v4047 = vpop.f32.mrb[0].mxu0
        %4048 = vdwg.mxu0
        %v4049 = vcombine.high %v932, %v932
        %v4051 = vunpack.c.l.s4 1966171168
        %v4052 = vunpack.c.0.s8 %v4051
        %v4053 = vlaneseq
        %v4054 = vshrl.u32 %v4053, 7
        %v4055 = vsub.s32 %v4052, %v4054
        %v4056 = vrot.slane %v932, %v4055
        %v4058 = vunpack.c.l.s4 1966171168
        %v4059 = vunpack.c.0.s8 %v4058
        %v4060 = vlaneseq
        %v4061 = vshrl.u32 %v4060, 7
        %v4062 = vsub.s32 %v4059, %v4061
        %v4063 = vrot.slane %v4049, %v4062
        %v4064 = vcombine.high %v4056, %v4056
        %v4065 = vcombine.high %v4063, %v4063
        %v4067 = vunpack.c.l.s4 1966171168
        %v4068 = vunpack.c.0.s8 %v4067
        %v4069 = vlaneseq
        %v4070 = vshrl.u32 %v4069, 7
        %v4071 = vsub.s32 %v4068, %v4070
        %v4072 = vrot.slane %v4056, %v4071
        %v4074 = vunpack.c.l.s4 1966171168
        %v4075 = vunpack.c.0.s8 %v4074
        %v4076 = vlaneseq
        %v4077 = vshrl.u32 %v4076, 7
        %v4078 = vsub.s32 %v4075, %v4077
        %v4079 = vrot.slane %v4063, %v4078
        %v4081 = vunpack.c.l.s4 1966171168
        %v4082 = vunpack.c.0.s8 %v4081
        %v4083 = vlaneseq
        %v4084 = vshrl.u32 %v4083, 7
        %v4085 = vsub.s32 %v4082, %v4084
        %v4086 = vrot.slane %v4064, %v4085
        %v4088 = vunpack.c.l.s4 1966171168
        %v4089 = vunpack.c.0.s8 %v4088
        %v4090 = vlaneseq
        %v4091 = vshrl.u32 %v4090, 7
        %v4092 = vsub.s32 %v4089, %v4091
        %v4093 = vrot.slane %v4065, %v4092
        %v4094 = vcombine.high %v4072, %v4072
        %v4095 = vcombine.high %v4079, %v4079
        %v4096 = vcombine.high %v4086, %v4086
        %v4097 = vcombine.high %v4093, %v4093
        %v4099 = vunpack.c.l.s4 1966171168
        %v4100 = vunpack.c.0.s8 %v4099
        %v4101 = vlaneseq
        %v4102 = vshrl.u32 %v4101, 7
        %v4103 = vsub.s32 %v4100, %v4102
        %v4104 = vrot.slane %v936, %v4103
        %v4105 = vcombine.high %v4104, %v4104
        %v4107 = vunpack.c.l.s4 1966171168
        %v4108 = vunpack.c.0.s8 %v4107
        %v4109 = vlaneseq
        %v4110 = vshrl.u32 %v4109, 7
        %v4111 = vsub.s32 %v4108, %v4110
        %v4112 = vrot.slane %v4104, %v4111
        %v4114 = vunpack.c.l.s4 1966171168
        %v4115 = vunpack.c.0.s8 %v4114
        %v4116 = vlaneseq
        %v4117 = vshrl.u32 %v4116, 7
        %v4118 = vsub.s32 %v4115, %v4117
        %v4119 = vrot.slane %v4105, %v4118
        %v4120 = vcombine.high %v1145, %v1145
        %v4122 = vunpack.c.l.s4 1966171168
        %v4123 = vunpack.c.0.s8 %v4122
        %v4124 = vlaneseq
        %v4125 = vshrl.u32 %v4124, 7
        %v4126 = vsub.s32 %v4123, %v4125
        %v4127 = vrot.slane %v1145, %v4126
        %v4129 = vunpack.c.l.s4 1966171168
        %v4130 = vunpack.c.0.s8 %v4129
        %v4131 = vlaneseq
        %v4132 = vshrl.u32 %v4131, 7
        %v4133 = vsub.s32 %v4130, %v4132
        %v4134 = vrot.slane %v4120, %v4133
        %v4135 = vcombine.high %v4127, %v4127
        %v4136 = vcombine.high %v4134, %v4134
        %v4138 = vunpack.c.l.s4 1966171168
        %v4139 = vunpack.c.0.s8 %v4138
        %v4140 = vlaneseq
        %v4141 = vshrl.u32 %v4140, 7
        %v4142 = vsub.s32 %v4139, %v4141
        %v4143 = vrot.slane %v4127, %v4142
        %v4145 = vunpack.c.l.s4 1966171168
        %v4146 = vunpack.c.0.s8 %v4145
        %v4147 = vlaneseq
        %v4148 = vshrl.u32 %v4147, 7
        %v4149 = vsub.s32 %v4146, %v4148
        %v4150 = vrot.slane %v4134, %v4149
        %v4152 = vunpack.c.l.s4 1966171168
        %v4153 = vunpack.c.0.s8 %v4152
        %v4154 = vlaneseq
        %v4155 = vshrl.u32 %v4154, 7
        %v4156 = vsub.s32 %v4153, %v4155
        %v4157 = vrot.slane %v4135, %v4156
        %v4159 = vunpack.c.l.s4 1966171168
        %v4160 = vunpack.c.0.s8 %v4159
        %v4161 = vlaneseq
        %v4162 = vshrl.u32 %v4161, 7
        %v4163 = vsub.s32 %v4160, %v4162
        %v4164 = vrot.slane %v4136, %v4163
        %v4165 = vcombine.high %v4143, %v4143
        %v4166 = vcombine.high %v4150, %v4150
        %v4167 = vcombine.high %v4157, %v4157
        %v4168 = vcombine.high %v4164, %v4164
        %v4170 = vunpack.c.l.s4 1966171168
        %v4171 = vunpack.c.0.s8 %v4170
        %v4172 = vlaneseq
        %v4173 = vshrl.u32 %v4172, 7
        %v4174 = vsub.s32 %v4171, %v4173
        %v4175 = vrot.slane %v1149, %v4174
        %v4176 = vcombine.high %v4175, %v4175
        %v4178 = vunpack.c.l.s4 1966171168
        %v4179 = vunpack.c.0.s8 %v4178
        %v4180 = vlaneseq
        %v4181 = vshrl.u32 %v4180, 7
        %v4182 = vsub.s32 %v4179, %v4181
        %v4183 = vrot.slane %v4175, %v4182
        %v4185 = vunpack.c.l.s4 1966171168
        %v4186 = vunpack.c.0.s8 %v4185
        %v4187 = vlaneseq
        %v4188 = vshrl.u32 %v4187, 7
        %v4189 = vsub.s32 %v4186, %v4188
        %v4190 = vrot.slane %v4176, %v4189
        %v4191 = vcombine.high %v1358, %v1358
        %v4193 = vunpack.c.l.s4 1966171168
        %v4194 = vunpack.c.0.s8 %v4193
        %v4195 = vlaneseq
        %v4196 = vshrl.u32 %v4195, 7
        %v4197 = vsub.s32 %v4194, %v4196
        %v4198 = vrot.slane %v1358, %v4197
        %v4200 = vunpack.c.l.s4 1966171168
        %v4201 = vunpack.c.0.s8 %v4200
        %v4202 = vlaneseq
        %v4203 = vshrl.u32 %v4202, 7
        %v4204 = vsub.s32 %v4201, %v4203
        %v4205 = vrot.slane %v4191, %v4204
        %v4206 = vcombine.high %v4198, %v4198
        %v4207 = vcombine.high %v4205, %v4205
        %v4209 = vunpack.c.l.s4 1966171168
        %v4210 = vunpack.c.0.s8 %v4209
        %v4211 = vlaneseq
        %v4212 = vshrl.u32 %v4211, 7
        %v4213 = vsub.s32 %v4210, %v4212
        %v4214 = vrot.slane %v4198, %v4213
        %v4216 = vunpack.c.l.s4 1966171168
        %v4217 = vunpack.c.0.s8 %v4216
        %v4218 = vlaneseq
        %v4219 = vshrl.u32 %v4218, 7
        %v4220 = vsub.s32 %v4217, %v4219
        %v4221 = vrot.slane %v4205, %v4220
        %v4223 = vunpack.c.l.s4 1966171168
        %v4224 = vunpack.c.0.s8 %v4223
        %v4225 = vlaneseq
        %v4226 = vshrl.u32 %v4225, 7
        %v4227 = vsub.s32 %v4224, %v4226
        %v4228 = vrot.slane %v4206, %v4227
        %v4230 = vunpack.c.l.s4 1966171168
        %v4231 = vunpack.c.0.s8 %v4230
        %v4232 = vlaneseq
        %v4233 = vshrl.u32 %v4232, 7
        %v4234 = vsub.s32 %v4231, %v4233
        %v4235 = vrot.slane %v4207, %v4234
        %v4236 = vcombine.high %v4214, %v4214
        %v4237 = vcombine.high %v4221, %v4221
        %v4238 = vcombine.high %v4228, %v4228
        %v4239 = vcombine.high %v4235, %v4235
        %v4241 = vunpack.c.l.s4 1966171168
        %v4242 = vunpack.c.0.s8 %v4241
        %v4243 = vlaneseq
        %v4244 = vshrl.u32 %v4243, 7
        %v4245 = vsub.s32 %v4242, %v4244
        %v4246 = vrot.slane %v1362, %v4245
        %v4247 = vcombine.high %v4246, %v4246
        %v4249 = vunpack.c.l.s4 1966171168
        %v4250 = vunpack.c.0.s8 %v4249
        %v4251 = vlaneseq
        %v4252 = vshrl.u32 %v4251, 7
        %v4253 = vsub.s32 %v4250, %v4252
        %v4254 = vrot.slane %v4246, %v4253
        %v4256 = vunpack.c.l.s4 1966171168
        %v4257 = vunpack.c.0.s8 %v4256
        %v4258 = vlaneseq
        %v4259 = vshrl.u32 %v4258, 7
        %v4260 = vsub.s32 %v4257, %v4259
        %v4261 = vrot.slane %v4247, %v4260
        %v4262 = vcombine.low %v4072, %v4086
        %v4263 = vcombine.low %v4094, %v4096
        %v4265 = vunpack.c.l.s4 1966171168
        %v4266 = vunpack.c.0.s8 %v4265
        %v4267 = vlaneseq
        %v4268 = vshrl.u32 %v4267, 7
        %v4269 = vsub.s32 %v4266, %v4268
        %v4270 = vrot.slane %v4262, %v4269
        %v4272 = vunpack.c.l.s4 1966171168
        %v4273 = vunpack.c.0.s8 %v4272
        %v4274 = vlaneseq
        %v4275 = vshrl.u32 %v4274, 7
        %v4276 = vsub.s32 %v4273, %v4275
        %v4277 = vrot.slane %v4263, %v4276
        %v4279 = vunpack.c.l.s4 1966171168
        %v4280 = vunpack.c.0.s8 %v4279
        %v4281 = vlaneseq
        %v4282 = vshrl.u32 %v4281, 7
        %v4283 = vsub.s32 %v4280, %v4282
        %v4284 = vrot.slane %v4079, %v4283
        %v4285 = vcombine.low %v4270, %v4277
        %v4287 = vunpack.c.l.s4 1966171168
        %v4288 = vunpack.c.0.s8 %v4287
        %v4289 = vlaneseq
        %v4290 = vshrl.u32 %v4289, 7
        %v4291 = vsub.s32 %v4288, %v4290
        %v4292 = vrot.slane %v4285, %v4291
        %v4294 = vunpack.c.l.s4 1966171168
        %v4295 = vunpack.c.0.s8 %v4294
        %v4296 = vlaneseq
        %v4297 = vshrl.u32 %v4296, 7
        %v4298 = vsub.s32 %v4295, %v4297
        %v4299 = vrot.slane %v4284, %v4298
        %v4300 = vcombine.low %v4292, %v4299
        %4301 = vrot.lane.b32.xlu0 %v4300, 116
        %v4302 = vpop.permute.xlu0 %4301
        %v4303 = vcombine.low %v4143, %v4157
        %v4304 = vcombine.low %v4165, %v4167
        %v4306 = vunpack.c.l.s4 1966171168
        %v4307 = vunpack.c.0.s8 %v4306
        %v4308 = vlaneseq
        %v4309 = vshrl.u32 %v4308, 7
        %v4310 = vsub.s32 %v4307, %v4309
        %v4311 = vrot.slane %v4303, %v4310
        %v4313 = vunpack.c.l.s4 1966171168
        %v4314 = vunpack.c.0.s8 %v4313
        %v4315 = vlaneseq
        %v4316 = vshrl.u32 %v4315, 7
        %v4317 = vsub.s32 %v4314, %v4316
        %v4318 = vrot.slane %v4304, %v4317
        %v4320 = vunpack.c.l.s4 1966171168
        %v4321 = vunpack.c.0.s8 %v4320
        %v4322 = vlaneseq
        %v4323 = vshrl.u32 %v4322, 7
        %v4324 = vsub.s32 %v4321, %v4323
        %v4325 = vrot.slane %v4150, %v4324
        %v4326 = vcombine.low %v4311, %v4318
        %v4328 = vunpack.c.l.s4 1966171168
        %v4329 = vunpack.c.0.s8 %v4328
        %v4330 = vlaneseq
        %v4331 = vshrl.u32 %v4330, 7
        %v4332 = vsub.s32 %v4329, %v4331
        %v4333 = vrot.slane %v4326, %v4332
        %v4335 = vunpack.c.l.s4 1966171168
        %v4336 = vunpack.c.0.s8 %v4335
        %v4337 = vlaneseq
        %v4338 = vshrl.u32 %v4337, 7
        %v4339 = vsub.s32 %v4336, %v4338
        %v4340 = vrot.slane %v4325, %v4339
        %v4341 = vcombine.low %v4333, %v4340
        %4342 = vrot.lane.b32.xlu0 %v4341, 116
        %v4343 = vpop.permute.xlu0 %4342
        %v4344 = vsel %vm1661, %v4302, 0
        %v4346 = vsel %vm1661, %v4343, 0
        %4348 = vmatprep.subr.mxu0 0.0
        %4349 = vmatpush1.xpose.msra.mxu0 %v4346
        %4350 = vmatprep.subr.mxu0 0.0
        %4351 = vmatpush1.xpose.msra.mxu0 0.0
        %4352 = vmatprep.subr.mxu0 0.0
        %4353 = vmatpush1.xpose.msra.mxu0 0.0
        %4354 = vmatprep.subr.mxu0 0.0
        %4355 = vmatpush1.xpose.msra.mxu0 0.0
        %4356 = vmatprep.subr.mxu0 0.0
        %4357 = vmatpush1.xpose.msra.mxu0 0.0
        %4358 = vmatprep.subr.mxu0 0.0
        %4359 = vmatpush1.xpose.msra.mxu0 0.0
        %4360 = vmatprep.subr.mxu0 0.0
        %4361 = vmatpush1.xpose.msra.mxu0 0.0
        %4362 = vmatprep.subr.mxu0 0.0
        %4363 = vmatpush1.xpose.msra.mxu0 0.0
        %4364 = vmatprep.subr.mxu0 0.0
        %4365 = vmatpush1.xpose.msra.mxu0 0.0
        %4366 = vmatprep.subr.mxu0 0.0
        %4367 = vmatpush1.xpose.msra.mxu0 0.0
        %4368 = vmatprep.subr.mxu0 0.0
        %4369 = vmatpush1.xpose.msra.mxu0 0.0
        %4370 = vmatprep.subr.mxu0 0.0
        %4371 = vmatpush1.xpose.msra.mxu0 0.0
        %4372 = vmatprep.subr.mxu0 0.0
        %4373 = vmatpush1.xpose.msra.mxu0 0.0
        %4374 = vmatprep.subr.mxu0 0.0
        %4375 = vmatpush1.xpose.msra.mxu0 0.0
        %4376 = vmatprep.subr.mxu0 0.0
        %4377 = vmatpush1.xpose.msra.mxu0 0.0
        %4378 = vmatprep.subr.mxu0 0.0
        %4379 = vmatpush1.xpose.msra.mxu0 0.0
        %4380 = vmatprep.subr.mxu0 0.0
        %4381 = vmatpush1.xpose.msra.mxu0 0.0
        %4382 = vmatprep.subr.mxu0 0.0
        %4383 = vmatpush1.xpose.msra.mxu0 0.0
        %4384 = vmatprep.subr.mxu0 0.0
        %4385 = vmatpush1.xpose.msra.mxu0 0.0
        %4386 = vmatprep.subr.mxu0 0.0
        %4387 = vmatpush1.xpose.msra.mxu0 0.0
        %4388 = vmatprep.subr.mxu0 0.0
        %4389 = vmatpush1.xpose.msra.mxu0 0.0
        %4390 = vmatprep.subr.mxu0 0.0
        %4391 = vmatpush1.xpose.msra.mxu0 0.0
        %4392 = vmatprep.subr.mxu0 0.0
        %4393 = vmatpush1.xpose.msra.mxu0 0.0
        %4394 = vmatprep.subr.mxu0 0.0
        %4395 = vmatpush1.xpose.msra.mxu0 0.0
        %4396 = vmatprep.subr.mxu0 0.0
        %4397 = vmatpush1.xpose.msra.mxu0 0.0
        %4398 = vmatprep.subr.mxu0 0.0
        %4399 = vmatpush1.xpose.msra.mxu0 0.0
        %4400 = vmatprep.subr.mxu0 0.0
        %4401 = vmatpush1.xpose.msra.mxu0 0.0
        %4402 = vmatprep.subr.mxu0 0.0
        %4403 = vmatpush1.xpose.msra.mxu0 0.0
        %4404 = vmatprep.subr.mxu0 0.0
        %4405 = vmatpush1.xpose.msra.mxu0 0.0
        %4406 = vmatprep.subr.mxu0 0.0
        %4407 = vmatpush1.xpose.msra.mxu0 0.0
        %4408 = vmatprep.subr.mxu0 0.0
        %4409 = vmatpush1.xpose.msra.mxu0 0.0
        %4410 = vmatprep.subr.mxu0 0.0
        %4411 = vmatpush1.xpose.msra.mxu0 0.0
        %4412 = vmatprep.mubr.f32.mxu0 0.0
        %4413 = vmatmul.mubr.f32.gmra.mrb[0].mxu0 %v4344
        %v4414 = vpop.f32.mrb[0].mxu0
        %v4415 = vadd.f32 0.0, %v4414
        %v4416 = vpop.f32.mrb[0].mxu0
        %4417 = vdwg.mxu0
        %v4418 = vcombine.low %v4093, %v4095
        %v4419 = vcombine.low %v4097, %v4112
        %v4421 = vunpack.c.l.s4 1966171168
        %v4422 = vunpack.c.0.s8 %v4421
        %v4423 = vlaneseq
        %v4424 = vshrl.u32 %v4423, 7
        %v4425 = vsub.s32 %v4422, %v4424
        %v4426 = vrot.slane %v4418, %v4425
        %v4428 = vunpack.c.l.s4 1966171168
        %v4429 = vunpack.c.0.s8 %v4428
        %v4430 = vlaneseq
        %v4431 = vshrl.u32 %v4430, 7
        %v4432 = vsub.s32 %v4429, %v4431
        %v4433 = vrot.slane %v4419, %v4432
        %v4435 = vunpack.c.l.s4 1966171168
        %v4436 = vunpack.c.0.s8 %v4435
        %v4437 = vlaneseq
        %v4438 = vshrl.u32 %v4437, 7
        %v4439 = vsub.s32 %v4436, %v4438
        %v4440 = vrot.slane %v4119, %v4439
        %v4441 = vcombine.low %v4426, %v4433
        %v4443 = vunpack.c.l.s4 1966171168
        %v4444 = vunpack.c.0.s8 %v4443
        %v4445 = vlaneseq
        %v4446 = vshrl.u32 %v4445, 7
        %v4447 = vsub.s32 %v4444, %v4446
        %v4448 = vrot.slane %v4441, %v4447
        %v4450 = vunpack.c.l.s4 1966171168
        %v4451 = vunpack.c.0.s8 %v4450
        %v4452 = vlaneseq
        %v4453 = vshrl.u32 %v4452, 7
        %v4454 = vsub.s32 %v4451, %v4453
        %v4455 = vrot.slane %v4440, %v4454
        %v4456 = vcombine.low %v4448, %v4455
        %4457 = vrot.lane.b32.xlu0 %v4456, 116
        %v4458 = vpop.permute.xlu0 %4457
        %v4459 = vcombine.low %v4164, %v4166
        %v4460 = vcombine.low %v4168, %v4183
        %v4462 = vunpack.c.l.s4 1966171168
        %v4463 = vunpack.c.0.s8 %v4462
        %v4464 = vlaneseq
        %v4465 = vshrl.u32 %v4464, 7
        %v4466 = vsub.s32 %v4463, %v4465
        %v4467 = vrot.slane %v4459, %v4466
        %v4469 = vunpack.c.l.s4 1966171168
        %v4470 = vunpack.c.0.s8 %v4469
        %v4471 = vlaneseq
        %v4472 = vshrl.u32 %v4471, 7
        %v4473 = vsub.s32 %v4470, %v4472
        %v4474 = vrot.slane %v4460, %v4473
        %v4476 = vunpack.c.l.s4 1966171168
        %v4477 = vunpack.c.0.s8 %v4476
        %v4478 = vlaneseq
        %v4479 = vshrl.u32 %v4478, 7
        %v4480 = vsub.s32 %v4477, %v4479
        %v4481 = vrot.slane %v4190, %v4480
        %v4482 = vcombine.low %v4467, %v4474
        %v4484 = vunpack.c.l.s4 1966171168
        %v4485 = vunpack.c.0.s8 %v4484
        %v4486 = vlaneseq
        %v4487 = vshrl.u32 %v4486, 7
        %v4488 = vsub.s32 %v4485, %v4487
        %v4489 = vrot.slane %v4482, %v4488
        %v4491 = vunpack.c.l.s4 1966171168
        %v4492 = vunpack.c.0.s8 %v4491
        %v4493 = vlaneseq
        %v4494 = vshrl.u32 %v4493, 7
        %v4495 = vsub.s32 %v4492, %v4494
        %v4496 = vrot.slane %v4481, %v4495
        %v4497 = vcombine.low %v4489, %v4496
        %4498 = vrot.lane.b32.xlu0 %v4497, 116
        %v4499 = vpop.permute.xlu0 %4498
        %v4500 = vsel %vm1661, %v4458, 0
        %v4502 = vsel %vm1661, %v4499, 0
        %4504 = vmatprep.subr.mxu0 0.0
        %4505 = vmatpush1.xpose.msra.mxu0 %v4502
        %4506 = vmatprep.subr.mxu0 0.0
        %4507 = vmatpush1.xpose.msra.mxu0 0.0
        %4508 = vmatprep.subr.mxu0 0.0
        %4509 = vmatpush1.xpose.msra.mxu0 0.0
        %4510 = vmatprep.subr.mxu0 0.0
        %4511 = vmatpush1.xpose.msra.mxu0 0.0
        %4512 = vmatprep.subr.mxu0 0.0
        %4513 = vmatpush1.xpose.msra.mxu0 0.0
        %4514 = vmatprep.subr.mxu0 0.0
        %4515 = vmatpush1.xpose.msra.mxu0 0.0
        %4516 = vmatprep.subr.mxu0 0.0
        %4517 = vmatpush1.xpose.msra.mxu0 0.0
        %4518 = vmatprep.subr.mxu0 0.0
        %4519 = vmatpush1.xpose.msra.mxu0 0.0
        %4520 = vmatprep.subr.mxu0 0.0
        %4521 = vmatpush1.xpose.msra.mxu0 0.0
        %4522 = vmatprep.subr.mxu0 0.0
        %4523 = vmatpush1.xpose.msra.mxu0 0.0
        %4524 = vmatprep.subr.mxu0 0.0
        %4525 = vmatpush1.xpose.msra.mxu0 0.0
        %4526 = vmatprep.subr.mxu0 0.0
        %4527 = vmatpush1.xpose.msra.mxu0 0.0
        %4528 = vmatprep.subr.mxu0 0.0
        %4529 = vmatpush1.xpose.msra.mxu0 0.0
        %4530 = vmatprep.subr.mxu0 0.0
        %4531 = vmatpush1.xpose.msra.mxu0 0.0
        %4532 = vmatprep.subr.mxu0 0.0
        %4533 = vmatpush1.xpose.msra.mxu0 0.0
        %4534 = vmatprep.subr.mxu0 0.0
        %4535 = vmatpush1.xpose.msra.mxu0 0.0
        %4536 = vmatprep.subr.mxu0 0.0
        %4537 = vmatpush1.xpose.msra.mxu0 0.0
        %4538 = vmatprep.subr.mxu0 0.0
        %4539 = vmatpush1.xpose.msra.mxu0 0.0
        %4540 = vmatprep.subr.mxu0 0.0
        %4541 = vmatpush1.xpose.msra.mxu0 0.0
        %4542 = vmatprep.subr.mxu0 0.0
        %4543 = vmatpush1.xpose.msra.mxu0 0.0
        %4544 = vmatprep.subr.mxu0 0.0
        %4545 = vmatpush1.xpose.msra.mxu0 0.0
        %4546 = vmatprep.subr.mxu0 0.0
        %4547 = vmatpush1.xpose.msra.mxu0 0.0
        %4548 = vmatprep.subr.mxu0 0.0
        %4549 = vmatpush1.xpose.msra.mxu0 0.0
        %4550 = vmatprep.subr.mxu0 0.0
        %4551 = vmatpush1.xpose.msra.mxu0 0.0
        %4552 = vmatprep.subr.mxu0 0.0
        %4553 = vmatpush1.xpose.msra.mxu0 0.0
        %4554 = vmatprep.subr.mxu0 0.0
        %4555 = vmatpush1.xpose.msra.mxu0 0.0
        %4556 = vmatprep.subr.mxu0 0.0
        %4557 = vmatpush1.xpose.msra.mxu0 0.0
        %4558 = vmatprep.subr.mxu0 0.0
        %4559 = vmatpush1.xpose.msra.mxu0 0.0
        %4560 = vmatprep.subr.mxu0 0.0
        %4561 = vmatpush1.xpose.msra.mxu0 0.0
        %4562 = vmatprep.subr.mxu0 0.0
        %4563 = vmatpush1.xpose.msra.mxu0 0.0
        %4564 = vmatprep.subr.mxu0 0.0
        %4565 = vmatpush1.xpose.msra.mxu0 0.0
        %4566 = vmatprep.subr.mxu0 0.0
        %4567 = vmatpush1.xpose.msra.mxu0 0.0
        %4568 = vmatprep.mubr.f32.mxu0 0.0
        %4569 = vmatmul.mubr.f32.gmra.mrb[0].mxu0 %v4500
        %v4570 = vpop.f32.mrb[0].mxu0
        %v4571 = vadd.f32 0.0, %v4570
        %v4572 = vpop.f32.mrb[0].mxu0
        %4573 = vdwg.mxu0
        %v4574 = vsel %vm1888, %v4415, -inf
        %4575 = vmax.xlane.f32.xlu0 %v4574
        %v4576 = vpop.xlane.xlu0 %4575
        %v4577 = vsel %vm1888, %v4571, -inf
        %4578 = vmax.xlane.f32.xlu0 %v4577
        %v4579 = vpop.xlane.xlu0 %4578
        %v4580 = vsub.f32 %v4415, %v4576
        %v4581 = vsub.f32 %v4571, %v4579
        %v4582 = vmul.f32 %v4580, 1.442695
        %v4583 = vpow.pop %v4582
        %v4584 = vmul.f32 %v4581, 1.442695
        %v4585 = vpow.pop %v4584
        %v4586 = vsel %vm1888, %v4583, 0.0
        %4587 = vadd.xlane.f32.xlu0 %v4586
        %v4588 = vpop.xlane.xlu0 %4587
        %v4589 = vsel %vm1888, %v4585, 0.0
        %4590 = vadd.xlane.f32.xlu0 %v4589
        %v4591 = vpop.xlane.xlu0 %4590
        %v4592 = vrcp.pop %v4588
        %v4593 = vrcp.pop %v4591
        %v4594 = vmul.f32 %v4583, %v4592
        %v4595 = vmul.f32 %v4585, %v4593
        %v4596 = vcombine.low %v4214, %v4228
        %v4597 = vcombine.low %v4236, %v4238
        %v4599 = vunpack.c.l.s4 1966171168
        %v4600 = vunpack.c.0.s8 %v4599
        %v4601 = vlaneseq
        %v4602 = vshrl.u32 %v4601, 7
        %v4603 = vsub.s32 %v4600, %v4602
        %v4604 = vrot.slane %v4596, %v4603
        %v4606 = vunpack.c.l.s4 1966171168
        %v4607 = vunpack.c.0.s8 %v4606
        %v4608 = vlaneseq
        %v4609 = vshrl.u32 %v4608, 7
        %v4610 = vsub.s32 %v4607, %v4609
        %v4611 = vrot.slane %v4597, %v4610
        %v4613 = vunpack.c.l.s4 1966171168
        %v4614 = vunpack.c.0.s8 %v4613
        %v4615 = vlaneseq
        %v4616 = vshrl.u32 %v4615, 7
        %v4617 = vsub.s32 %v4614, %v4616
        %v4618 = vrot.slane %v4221, %v4617
        %v4619 = vcombine.low %v4604, %v4611
        %v4621 = vunpack.c.l.s4 1966171168
        %v4622 = vunpack.c.0.s8 %v4621
        %v4623 = vlaneseq
        %v4624 = vshrl.u32 %v4623, 7
        %v4625 = vsub.s32 %v4622, %v4624
        %v4626 = vrot.slane %v4619, %v4625
        %v4628 = vunpack.c.l.s4 1966171168
        %v4629 = vunpack.c.0.s8 %v4628
        %v4630 = vlaneseq
        %v4631 = vshrl.u32 %v4630, 7
        %v4632 = vsub.s32 %v4629, %v4631
        %v4633 = vrot.slane %v4618, %v4632
        %v4634 = vcombine.low %v4626, %v4633
        %4635 = vrot.lane.b32.xlu0 %v4634, 116
        %v4636 = vpop.permute.xlu0 %4635
        %v4638 = vsel %vm1950, %v4594, 0
        %v4640 = vsel %vm1954, %v4636, 0
        %4642 = vmatprep.subr.mxu0 0.0
        %4643 = vmatpush1.msra.mxu0 %v4640
        %4644 = vmatprep.subr.mxu0 0.0
        %4645 = vmatpush1.msra.mxu0 0.0
        %4646 = vmatprep.subr.mxu0 0.0
        %4647 = vmatpush1.msra.mxu0 0.0
        %4648 = vmatprep.subr.mxu0 0.0
        %4649 = vmatpush1.msra.mxu0 0.0
        %4650 = vmatprep.subr.mxu0 0.0
        %4651 = vmatpush1.msra.mxu0 0.0
        %4652 = vmatprep.subr.mxu0 0.0
        %4653 = vmatpush1.msra.mxu0 0.0
        %4654 = vmatprep.subr.mxu0 0.0
        %4655 = vmatpush1.msra.mxu0 0.0
        %4656 = vmatprep.subr.mxu0 0.0
        %4657 = vmatpush1.msra.mxu0 0.0
        %4658 = vmatprep.subr.mxu0 0.0
        %4659 = vmatpush1.msra.mxu0 0.0
        %4660 = vmatprep.subr.mxu0 0.0
        %4661 = vmatpush1.msra.mxu0 0.0
        %4662 = vmatprep.subr.mxu0 0.0
        %4663 = vmatpush1.msra.mxu0 0.0
        %4664 = vmatprep.subr.mxu0 0.0
        %4665 = vmatpush1.msra.mxu0 0.0
        %4666 = vmatprep.subr.mxu0 0.0
        %4667 = vmatpush1.msra.mxu0 0.0
        %4668 = vmatprep.subr.mxu0 0.0
        %4669 = vmatpush1.msra.mxu0 0.0
        %4670 = vmatprep.subr.mxu0 0.0
        %4671 = vmatpush1.msra.mxu0 0.0
        %4672 = vmatprep.subr.mxu0 0.0
        %4673 = vmatpush1.msra.mxu0 0.0
        %4674 = vmatprep.subr.mxu0 0.0
        %4675 = vmatpush1.msra.mxu0 0.0
        %4676 = vmatprep.subr.mxu0 0.0
        %4677 = vmatpush1.msra.mxu0 0.0
        %4678 = vmatprep.subr.mxu0 0.0
        %4679 = vmatpush1.msra.mxu0 0.0
        %4680 = vmatprep.subr.mxu0 0.0
        %4681 = vmatpush1.msra.mxu0 0.0
        %4682 = vmatprep.subr.mxu0 0.0
        %4683 = vmatpush1.msra.mxu0 0.0
        %4684 = vmatprep.subr.mxu0 0.0
        %4685 = vmatpush1.msra.mxu0 0.0
        %4686 = vmatprep.subr.mxu0 0.0
        %4687 = vmatpush1.msra.mxu0 0.0
        %4688 = vmatprep.subr.mxu0 0.0
        %4689 = vmatpush1.msra.mxu0 0.0
        %4690 = vmatprep.subr.mxu0 0.0
        %4691 = vmatpush1.msra.mxu0 0.0
        %4692 = vmatprep.subr.mxu0 0.0
        %4693 = vmatpush1.msra.mxu0 0.0
        %4694 = vmatprep.subr.mxu0 0.0
        %4695 = vmatpush1.msra.mxu0 0.0
        %4696 = vmatprep.subr.mxu0 0.0
        %4697 = vmatpush1.msra.mxu0 0.0
        %4698 = vmatprep.subr.mxu0 0.0
        %4699 = vmatpush1.msra.mxu0 0.0
        %4700 = vmatprep.subr.mxu0 0.0
        %4701 = vmatpush1.msra.mxu0 0.0
        %4702 = vmatprep.subr.mxu0 0.0
        %4703 = vmatpush1.msra.mxu0 0.0
        %4704 = vmatprep.subr.mxu0 0.0
        %4705 = vmatpush1.msra.mxu0 0.0
        %4706 = vmatprep.mubr.f32.mxu0 0.0
        %4707 = vmatmul.mubr.f32.gmra.mrb[0].mxu0 %v4638
        %v4708 = vpop.f32.mrb[0].mxu0
        %v4709 = vadd.f32 0.0, %v4708
        %v4710 = vpop.f32.mrb[0].mxu0
        %4711 = vdwg.mxu0
        %v4712 = vcombine.low %v4235, %v4237
        %v4713 = vcombine.low %v4239, %v4254
        %v4715 = vunpack.c.l.s4 1966171168
        %v4716 = vunpack.c.0.s8 %v4715
        %v4717 = vlaneseq
        %v4718 = vshrl.u32 %v4717, 7
        %v4719 = vsub.s32 %v4716, %v4718
        %v4720 = vrot.slane %v4712, %v4719
        %v4722 = vunpack.c.l.s4 1966171168
        %v4723 = vunpack.c.0.s8 %v4722
        %v4724 = vlaneseq
        %v4725 = vshrl.u32 %v4724, 7
        %v4726 = vsub.s32 %v4723, %v4725
        %v4727 = vrot.slane %v4713, %v4726
        %v4729 = vunpack.c.l.s4 1966171168
        %v4730 = vunpack.c.0.s8 %v4729
        %v4731 = vlaneseq
        %v4732 = vshrl.u32 %v4731, 7
        %v4733 = vsub.s32 %v4730, %v4732
        %v4734 = vrot.slane %v4261, %v4733
        %v4735 = vcombine.low %v4720, %v4727
        %v4737 = vunpack.c.l.s4 1966171168
        %v4738 = vunpack.c.0.s8 %v4737
        %v4739 = vlaneseq
        %v4740 = vshrl.u32 %v4739, 7
        %v4741 = vsub.s32 %v4738, %v4740
        %v4742 = vrot.slane %v4735, %v4741
        %v4744 = vunpack.c.l.s4 1966171168
        %v4745 = vunpack.c.0.s8 %v4744
        %v4746 = vlaneseq
        %v4747 = vshrl.u32 %v4746, 7
        %v4748 = vsub.s32 %v4745, %v4747
        %v4749 = vrot.slane %v4734, %v4748
        %v4750 = vcombine.low %v4742, %v4749
        %4751 = vrot.lane.b32.xlu0 %v4750, 116
        %v4752 = vpop.permute.xlu0 %4751
        %v4754 = vsel %vm1950, %v4595, 0
        %v4756 = vsel %vm1954, %v4752, 0
        %4758 = vmatprep.subr.mxu0 0.0
        %4759 = vmatpush1.msra.mxu0 %v4756
        %4760 = vmatprep.subr.mxu0 0.0
        %4761 = vmatpush1.msra.mxu0 0.0
        %4762 = vmatprep.subr.mxu0 0.0
        %4763 = vmatpush1.msra.mxu0 0.0
        %4764 = vmatprep.subr.mxu0 0.0
        %4765 = vmatpush1.msra.mxu0 0.0
        %4766 = vmatprep.subr.mxu0 0.0
        %4767 = vmatpush1.msra.mxu0 0.0
        %4768 = vmatprep.subr.mxu0 0.0
        %4769 = vmatpush1.msra.mxu0 0.0
        %4770 = vmatprep.subr.mxu0 0.0
        %4771 = vmatpush1.msra.mxu0 0.0
        %4772 = vmatprep.subr.mxu0 0.0
        %4773 = vmatpush1.msra.mxu0 0.0
        %4774 = vmatprep.subr.mxu0 0.0
        %4775 = vmatpush1.msra.mxu0 0.0
        %4776 = vmatprep.subr.mxu0 0.0
        %4777 = vmatpush1.msra.mxu0 0.0
        %4778 = vmatprep.subr.mxu0 0.0
        %4779 = vmatpush1.msra.mxu0 0.0
        %4780 = vmatprep.subr.mxu0 0.0
        %4781 = vmatpush1.msra.mxu0 0.0
        %4782 = vmatprep.subr.mxu0 0.0
        %4783 = vmatpush1.msra.mxu0 0.0
        %4784 = vmatprep.subr.mxu0 0.0
        %4785 = vmatpush1.msra.mxu0 0.0
        %4786 = vmatprep.subr.mxu0 0.0
        %4787 = vmatpush1.msra.mxu0 0.0
        %4788 = vmatprep.subr.mxu0 0.0
        %4789 = vmatpush1.msra.mxu0 0.0
        %4790 = vmatprep.subr.mxu0 0.0
        %4791 = vmatpush1.msra.mxu0 0.0
        %4792 = vmatprep.subr.mxu0 0.0
        %4793 = vmatpush1.msra.mxu0 0.0
        %4794 = vmatprep.subr.mxu0 0.0
        %4795 = vmatpush1.msra.mxu0 0.0
        %4796 = vmatprep.subr.mxu0 0.0
        %4797 = vmatpush1.msra.mxu0 0.0
        %4798 = vmatprep.subr.mxu0 0.0
        %4799 = vmatpush1.msra.mxu0 0.0
        %4800 = vmatprep.subr.mxu0 0.0
        %4801 = vmatpush1.msra.mxu0 0.0
        %4802 = vmatprep.subr.mxu0 0.0
        %4803 = vmatpush1.msra.mxu0 0.0
        %4804 = vmatprep.subr.mxu0 0.0
        %4805 = vmatpush1.msra.mxu0 0.0
        %4806 = vmatprep.subr.mxu0 0.0
        %4807 = vmatpush1.msra.mxu0 0.0
        %4808 = vmatprep.subr.mxu0 0.0
        %4809 = vmatpush1.msra.mxu0 0.0
        %4810 = vmatprep.subr.mxu0 0.0
        %4811 = vmatpush1.msra.mxu0 0.0
        %4812 = vmatprep.subr.mxu0 0.0
        %4813 = vmatpush1.msra.mxu0 0.0
        %4814 = vmatprep.subr.mxu0 0.0
        %4815 = vmatpush1.msra.mxu0 0.0
        %4816 = vmatprep.subr.mxu0 0.0
        %4817 = vmatpush1.msra.mxu0 0.0
        %4818 = vmatprep.subr.mxu0 0.0
        %4819 = vmatpush1.msra.mxu0 0.0
        %4820 = vmatprep.subr.mxu0 0.0
        %4821 = vmatpush1.msra.mxu0 0.0
        %4822 = vmatprep.mubr.f32.mxu0 0.0
        %4823 = vmatmul.mubr.f32.gmra.mrb[0].mxu0 %v4754
        %v4824 = vpop.f32.mrb[0].mxu0
        %v4825 = vadd.f32 0.0, %v4824
        %v4826 = vpop.f32.mrb[0].mxu0
        %4827 = vdwg.mxu0
        %4828 = vrot.lane.b32.xlu0 %v4300, 88
        %v4829 = vpop.permute.xlu0 %4828
        %4830 = vrot.lane.b32.xlu0 %v4341, 88
        %v4831 = vpop.permute.xlu0 %4830
        %v4832 = vsel %vm1661, %v4829, 0
        %v4834 = vsel %vm1661, %v4831, 0
        %4836 = vmatprep.subr.mxu0 0.0
        %4837 = vmatpush1.xpose.msra.mxu0 %v4834
        %4838 = vmatprep.subr.mxu0 0.0
        %4839 = vmatpush1.xpose.msra.mxu0 0.0
        %4840 = vmatprep.subr.mxu0 0.0
        %4841 = vmatpush1.xpose.msra.mxu0 0.0
        %4842 = vmatprep.subr.mxu0 0.0
        %4843 = vmatpush1.xpose.msra.mxu0 0.0
        %4844 = vmatprep.subr.mxu0 0.0
        %4845 = vmatpush1.xpose.msra.mxu0 0.0
        %4846 = vmatprep.subr.mxu0 0.0
        %4847 = vmatpush1.xpose.msra.mxu0 0.0
        %4848 = vmatprep.subr.mxu0 0.0
        %4849 = vmatpush1.xpose.msra.mxu0 0.0
        %4850 = vmatprep.subr.mxu0 0.0
        %4851 = vmatpush1.xpose.msra.mxu0 0.0
        %4852 = vmatprep.subr.mxu0 0.0
        %4853 = vmatpush1.xpose.msra.mxu0 0.0
        %4854 = vmatprep.subr.mxu0 0.0
        %4855 = vmatpush1.xpose.msra.mxu0 0.0
        %4856 = vmatprep.subr.mxu0 0.0
        %4857 = vmatpush1.xpose.msra.mxu0 0.0
        %4858 = vmatprep.subr.mxu0 0.0
        %4859 = vmatpush1.xpose.msra.mxu0 0.0
        %4860 = vmatprep.subr.mxu0 0.0
        %4861 = vmatpush1.xpose.msra.mxu0 0.0
        %4862 = vmatprep.subr.mxu0 0.0
        %4863 = vmatpush1.xpose.msra.mxu0 0.0
        %4864 = vmatprep.subr.mxu0 0.0
        %4865 = vmatpush1.xpose.msra.mxu0 0.0
        %4866 = vmatprep.subr.mxu0 0.0
        %4867 = vmatpush1.xpose.msra.mxu0 0.0
        %4868 = vmatprep.subr.mxu0 0.0
        %4869 = vmatpush1.xpose.msra.mxu0 0.0
        %4870 = vmatprep.subr.mxu0 0.0
        %4871 = vmatpush1.xpose.msra.mxu0 0.0
        %4872 = vmatprep.subr.mxu0 0.0
        %4873 = vmatpush1.xpose.msra.mxu0 0.0
        %4874 = vmatprep.subr.mxu0 0.0
        %4875 = vmatpush1.xpose.msra.mxu0 0.0
        %4876 = vmatprep.subr.mxu0 0.0
        %4877 = vmatpush1.xpose.msra.mxu0 0.0
        %4878 = vmatprep.subr.mxu0 0.0
        %4879 = vmatpush1.xpose.msra.mxu0 0.0
        %4880 = vmatprep.subr.mxu0 0.0
        %4881 = vmatpush1.xpose.msra.mxu0 0.0
        %4882 = vmatprep.subr.mxu0 0.0
        %4883 = vmatpush1.xpose.msra.mxu0 0.0
        %4884 = vmatprep.subr.mxu0 0.0
        %4885 = vmatpush1.xpose.msra.mxu0 0.0
        %4886 = vmatprep.subr.mxu0 0.0
        %4887 = vmatpush1.xpose.msra.mxu0 0.0
        %4888 = vmatprep.subr.mxu0 0.0
        %4889 = vmatpush1.xpose.msra.mxu0 0.0
        %4890 = vmatprep.subr.mxu0 0.0
        %4891 = vmatpush1.xpose.msra.mxu0 0.0
        %4892 = vmatprep.subr.mxu0 0.0
        %4893 = vmatpush1.xpose.msra.mxu0 0.0
        %4894 = vmatprep.subr.mxu0 0.0
        %4895 = vmatpush1.xpose.msra.mxu0 0.0
        %4896 = vmatprep.subr.mxu0 0.0
        %4897 = vmatpush1.xpose.msra.mxu0 0.0
        %4898 = vmatprep.subr.mxu0 0.0
        %4899 = vmatpush1.xpose.msra.mxu0 0.0
        %4900 = vmatprep.mubr.f32.mxu0 0.0
        %4901 = vmatmul.mubr.f32.gmra.mrb[0].mxu0 %v4832
        %v4902 = vpop.f32.mrb[0].mxu0
        %v4903 = vadd.f32 0.0, %v4902
        %v4904 = vpop.f32.mrb[0].mxu0
        %4905 = vdwg.mxu0
        %4906 = vrot.lane.b32.xlu0 %v4456, 88
        %v4907 = vpop.permute.xlu0 %4906
        %4908 = vrot.lane.b32.xlu0 %v4497, 88
        %v4909 = vpop.permute.xlu0 %4908
        %v4910 = vsel %vm1661, %v4907, 0
        %v4912 = vsel %vm1661, %v4909, 0
        %4914 = vmatprep.subr.mxu0 0.0
        %4915 = vmatpush1.xpose.msra.mxu0 %v4912
        %4916 = vmatprep.subr.mxu0 0.0
        %4917 = vmatpush1.xpose.msra.mxu0 0.0
        %4918 = vmatprep.subr.mxu0 0.0
        %4919 = vmatpush1.xpose.msra.mxu0 0.0
        %4920 = vmatprep.subr.mxu0 0.0
        %4921 = vmatpush1.xpose.msra.mxu0 0.0
        %4922 = vmatprep.subr.mxu0 0.0
        %4923 = vmatpush1.xpose.msra.mxu0 0.0
        %4924 = vmatprep.subr.mxu0 0.0
        %4925 = vmatpush1.xpose.msra.mxu0 0.0
        %4926 = vmatprep.subr.mxu0 0.0
        %4927 = vmatpush1.xpose.msra.mxu0 0.0
        %4928 = vmatprep.subr.mxu0 0.0
        %4929 = vmatpush1.xpose.msra.mxu0 0.0
        %4930 = vmatprep.subr.mxu0 0.0
        %4931 = vmatpush1.xpose.msra.mxu0 0.0
        %4932 = vmatprep.subr.mxu0 0.0
        %4933 = vmatpush1.xpose.msra.mxu0 0.0
        %4934 = vmatprep.subr.mxu0 0.0
        %4935 = vmatpush1.xpose.msra.mxu0 0.0
        %4936 = vmatprep.subr.mxu0 0.0
        %4937 = vmatpush1.xpose.msra.mxu0 0.0
        %4938 = vmatprep.subr.mxu0 0.0
        %4939 = vmatpush1.xpose.msra.mxu0 0.0
        %4940 = vmatprep.subr.mxu0 0.0
        %4941 = vmatpush1.xpose.msra.mxu0 0.0
        %4942 = vmatprep.subr.mxu0 0.0
        %4943 = vmatpush1.xpose.msra.mxu0 0.0
        %4944 = vmatprep.subr.mxu0 0.0
        %4945 = vmatpush1.xpose.msra.mxu0 0.0
        %4946 = vmatprep.subr.mxu0 0.0
        %4947 = vmatpush1.xpose.msra.mxu0 0.0
        %4948 = vmatprep.subr.mxu0 0.0
        %4949 = vmatpush1.xpose.msra.mxu0 0.0
        %4950 = vmatprep.subr.mxu0 0.0
        %4951 = vmatpush1.xpose.msra.mxu0 0.0
        %4952 = vmatprep.subr.mxu0 0.0
        %4953 = vmatpush1.xpose.msra.mxu0 0.0
        %4954 = vmatprep.subr.mxu0 0.0
        %4955 = vmatpush1.xpose.msra.mxu0 0.0
        %4956 = vmatprep.subr.mxu0 0.0
        %4957 = vmatpush1.xpose.msra.mxu0 0.0
        %4958 = vmatprep.subr.mxu0 0.0
        %4959 = vmatpush1.xpose.msra.mxu0 0.0
        %4960 = vmatprep.subr.mxu0 0.0
        %4961 = vmatpush1.xpose.msra.mxu0 0.0
        %4962 = vmatprep.subr.mxu0 0.0
        %4963 = vmatpush1.xpose.msra.mxu0 0.0
        %4964 = vmatprep.subr.mxu0 0.0
        %4965 = vmatpush1.xpose.msra.mxu0 0.0
        %4966 = vmatprep.subr.mxu0 0.0
        %4967 = vmatpush1.xpose.msra.mxu0 0.0
        %4968 = vmatprep.subr.mxu0 0.0
        %4969 = vmatpush1.xpose.msra.mxu0 0.0
        %4970 = vmatprep.subr.mxu0 0.0
        %4971 = vmatpush1.xpose.msra.mxu0 0.0
        %4972 = vmatprep.subr.mxu0 0.0
        %4973 = vmatpush1.xpose.msra.mxu0 0.0
        %4974 = vmatprep.subr.mxu0 0.0
        %4975 = vmatpush1.xpose.msra.mxu0 0.0
        %4976 = vmatprep.subr.mxu0 0.0
        %4977 = vmatpush1.xpose.msra.mxu0 0.0
        %4978 = vmatprep.mubr.f32.mxu0 0.0
        %4979 = vmatmul.mubr.f32.gmra.mrb[0].mxu0 %v4910
        %v4980 = vpop.f32.mrb[0].mxu0
        %v4981 = vadd.f32 0.0, %v4980
        %v4982 = vpop.f32.mrb[0].mxu0
        %4983 = vdwg.mxu0
        %v4984 = vsel %vm1888, %v4903, -inf
        %4985 = vmax.xlane.f32.xlu0 %v4984
        %v4986 = vpop.xlane.xlu0 %4985
        %v4987 = vsel %vm1888, %v4981, -inf
        %4988 = vmax.xlane.f32.xlu0 %v4987
        %v4989 = vpop.xlane.xlu0 %4988
        %v4990 = vsub.f32 %v4903, %v4986
        %v4991 = vsub.f32 %v4981, %v4989
        %v4992 = vmul.f32 %v4990, 1.442695
        %v4993 = vpow.pop %v4992
        %v4994 = vmul.f32 %v4991, 1.442695
        %v4995 = vpow.pop %v4994
        %v4996 = vsel %vm1888, %v4993, 0.0
        %4997 = vadd.xlane.f32.xlu0 %v4996
        %v4998 = vpop.xlane.xlu0 %4997
        %v4999 = vsel %vm1888, %v4995, 0.0
        %5000 = vadd.xlane.f32.xlu0 %v4999
        %v5001 = vpop.xlane.xlu0 %5000
        %v5002 = vrcp.pop %v4998
        %v5003 = vrcp.pop %v5001
        %v5004 = vmul.f32 %v4993, %v5002
        %v5005 = vmul.f32 %v4995, %v5003
        %5006 = vrot.lane.b32.xlu0 %v4634, 88
        %v5007 = vpop.permute.xlu0 %5006
        %v5009 = vsel %vm1950, %v5004, 0
        %v5011 = vsel %vm1954, %v5007, 0
        %5013 = vmatprep.subr.mxu0 0.0
        %5014 = vmatpush1.msra.mxu0 %v5011
        %5015 = vmatprep.subr.mxu0 0.0
        %5016 = vmatpush1.msra.mxu0 0.0
        %5017 = vmatprep.subr.mxu0 0.0
        %5018 = vmatpush1.msra.mxu0 0.0
        %5019 = vmatprep.subr.mxu0 0.0
        %5020 = vmatpush1.msra.mxu0 0.0
        %5021 = vmatprep.subr.mxu0 0.0
        %5022 = vmatpush1.msra.mxu0 0.0
        %5023 = vmatprep.subr.mxu0 0.0
        %5024 = vmatpush1.msra.mxu0 0.0
        %5025 = vmatprep.subr.mxu0 0.0
        %5026 = vmatpush1.msra.mxu0 0.0
        %5027 = vmatprep.subr.mxu0 0.0
        %5028 = vmatpush1.msra.mxu0 0.0
        %5029 = vmatprep.subr.mxu0 0.0
        %5030 = vmatpush1.msra.mxu0 0.0
        %5031 = vmatprep.subr.mxu0 0.0
        %5032 = vmatpush1.msra.mxu0 0.0
        %5033 = vmatprep.subr.mxu0 0.0
        %5034 = vmatpush1.msra.mxu0 0.0
        %5035 = vmatprep.subr.mxu0 0.0
        %5036 = vmatpush1.msra.mxu0 0.0
        %5037 = vmatprep.subr.mxu0 0.0
        %5038 = vmatpush1.msra.mxu0 0.0
        %5039 = vmatprep.subr.mxu0 0.0
        %5040 = vmatpush1.msra.mxu0 0.0
        %5041 = vmatprep.subr.mxu0 0.0
        %5042 = vmatpush1.msra.mxu0 0.0
        %5043 = vmatprep.subr.mxu0 0.0
        %5044 = vmatpush1.msra.mxu0 0.0
        %5045 = vmatprep.subr.mxu0 0.0
        %5046 = vmatpush1.msra.mxu0 0.0
        %5047 = vmatprep.subr.mxu0 0.0
        %5048 = vmatpush1.msra.mxu0 0.0
        %5049 = vmatprep.subr.mxu0 0.0
        %5050 = vmatpush1.msra.mxu0 0.0
        %5051 = vmatprep.subr.mxu0 0.0
        %5052 = vmatpush1.msra.mxu0 0.0
        %5053 = vmatprep.subr.mxu0 0.0
        %5054 = vmatpush1.msra.mxu0 0.0
        %5055 = vmatprep.subr.mxu0 0.0
        %5056 = vmatpush1.msra.mxu0 0.0
        %5057 = vmatprep.subr.mxu0 0.0
        %5058 = vmatpush1.msra.mxu0 0.0
        %5059 = vmatprep.subr.mxu0 0.0
        %5060 = vmatpush1.msra.mxu0 0.0
        %5061 = vmatprep.subr.mxu0 0.0
        %5062 = vmatpush1.msra.mxu0 0.0
        %5063 = vmatprep.subr.mxu0 0.0
        %5064 = vmatpush1.msra.mxu0 0.0
        %5065 = vmatprep.subr.mxu0 0.0
        %5066 = vmatpush1.msra.mxu0 0.0
        %5067 = vmatprep.subr.mxu0 0.0
        %5068 = vmatpush1.msra.mxu0 0.0
        %5069 = vmatprep.subr.mxu0 0.0
        %5070 = vmatpush1.msra.mxu0 0.0
        %5071 = vmatprep.subr.mxu0 0.0
        %5072 = vmatpush1.msra.mxu0 0.0
        %5073 = vmatprep.subr.mxu0 0.0
        %5074 = vmatpush1.msra.mxu0 0.0
        %5075 = vmatprep.subr.mxu0 0.0
        %5076 = vmatpush1.msra.mxu0 0.0
        %5077 = vmatprep.mubr.f32.mxu0 0.0
        %5078 = vmatmul.mubr.f32.gmra.mrb[0].mxu0 %v5009
        %v5079 = vpop.f32.mrb[0].mxu0
        %v5080 = vadd.f32 0.0, %v5079
        %v5081 = vpop.f32.mrb[0].mxu0
        %5082 = vdwg.mxu0
        %5083 = vrot.lane.b32.xlu0 %v4750, 88
        %v5084 = vpop.permute.xlu0 %5083
        %v5086 = vsel %vm1950, %v5005, 0
        %v5088 = vsel %vm1954, %v5084, 0
        %5090 = vmatprep.subr.mxu0 0.0
        %5091 = vmatpush1.msra.mxu0 %v5088
        %5092 = vmatprep.subr.mxu0 0.0
        %5093 = vmatpush1.msra.mxu0 0.0
        %5094 = vmatprep.subr.mxu0 0.0
        %5095 = vmatpush1.msra.mxu0 0.0
        %5096 = vmatprep.subr.mxu0 0.0
        %5097 = vmatpush1.msra.mxu0 0.0
        %5098 = vmatprep.subr.mxu0 0.0
        %5099 = vmatpush1.msra.mxu0 0.0
        %5100 = vmatprep.subr.mxu0 0.0
        %5101 = vmatpush1.msra.mxu0 0.0
        %5102 = vmatprep.subr.mxu0 0.0
        %5103 = vmatpush1.msra.mxu0 0.0
        %5104 = vmatprep.subr.mxu0 0.0
        %5105 = vmatpush1.msra.mxu0 0.0
        %5106 = vmatprep.subr.mxu0 0.0
        %5107 = vmatpush1.msra.mxu0 0.0
        %5108 = vmatprep.subr.mxu0 0.0
        %5109 = vmatpush1.msra.mxu0 0.0
        %5110 = vmatprep.subr.mxu0 0.0
        %5111 = vmatpush1.msra.mxu0 0.0
        %5112 = vmatprep.subr.mxu0 0.0
        %5113 = vmatpush1.msra.mxu0 0.0
        %5114 = vmatprep.subr.mxu0 0.0
        %5115 = vmatpush1.msra.mxu0 0.0
        %5116 = vmatprep.subr.mxu0 0.0
        %5117 = vmatpush1.msra.mxu0 0.0
        %5118 = vmatprep.subr.mxu0 0.0
        %5119 = vmatpush1.msra.mxu0 0.0
        %5120 = vmatprep.subr.mxu0 0.0
        %5121 = vmatpush1.msra.mxu0 0.0
        %5122 = vmatprep.subr.mxu0 0.0
        %5123 = vmatpush1.msra.mxu0 0.0
        %5124 = vmatprep.subr.mxu0 0.0
        %5125 = vmatpush1.msra.mxu0 0.0
        %5126 = vmatprep.subr.mxu0 0.0
        %5127 = vmatpush1.msra.mxu0 0.0
        %5128 = vmatprep.subr.mxu0 0.0
        %5129 = vmatpush1.msra.mxu0 0.0
        %5130 = vmatprep.subr.mxu0 0.0
        %5131 = vmatpush1.msra.mxu0 0.0
        %5132 = vmatprep.subr.mxu0 0.0
        %5133 = vmatpush1.msra.mxu0 0.0
        %5134 = vmatprep.subr.mxu0 0.0
        %5135 = vmatpush1.msra.mxu0 0.0
        %5136 = vmatprep.subr.mxu0 0.0
        %5137 = vmatpush1.msra.mxu0 0.0
        %5138 = vmatprep.subr.mxu0 0.0
        %5139 = vmatpush1.msra.mxu0 0.0
        %5140 = vmatprep.subr.mxu0 0.0
        %5141 = vmatpush1.msra.mxu0 0.0
        %5142 = vmatprep.subr.mxu0 0.0
        %5143 = vmatpush1.msra.mxu0 0.0
        %5144 = vmatprep.subr.mxu0 0.0
        %5145 = vmatpush1.msra.mxu0 0.0
        %5146 = vmatprep.subr.mxu0 0.0
        %5147 = vmatpush1.msra.mxu0 0.0
        %5148 = vmatprep.subr.mxu0 0.0
        %5149 = vmatpush1.msra.mxu0 0.0
        %5150 = vmatprep.subr.mxu0 0.0
        %5151 = vmatpush1.msra.mxu0 0.0
        %5152 = vmatprep.subr.mxu0 0.0
        %5153 = vmatpush1.msra.mxu0 0.0
        %5154 = vmatprep.mubr.f32.mxu0 0.0
        %5155 = vmatmul.mubr.f32.gmra.mrb[0].mxu0 %v5086
        %v5156 = vpop.f32.mrb[0].mxu0
        %v5157 = vadd.f32 0.0, %v5156
        %v5158 = vpop.f32.mrb[0].mxu0
        %5159 = vdwg.mxu0
        %5160 = vrot.lane.b32.xlu0 %v4300, 60
        %v5161 = vpop.permute.xlu0 %5160
        %5162 = vrot.lane.b32.xlu0 %v4341, 60
        %v5163 = vpop.permute.xlu0 %5162
        %v5164 = vsel %vm1661, %v5161, 0
        %v5166 = vsel %vm1661, %v5163, 0
        %5168 = vmatprep.subr.mxu0 0.0
        %5169 = vmatpush1.xpose.msra.mxu0 %v5166
        %5170 = vmatprep.subr.mxu0 0.0
        %5171 = vmatpush1.xpose.msra.mxu0 0.0
        %5172 = vmatprep.subr.mxu0 0.0
        %5173 = vmatpush1.xpose.msra.mxu0 0.0
        %5174 = vmatprep.subr.mxu0 0.0
        %5175 = vmatpush1.xpose.msra.mxu0 0.0
        %5176 = vmatprep.subr.mxu0 0.0
        %5177 = vmatpush1.xpose.msra.mxu0 0.0
        %5178 = vmatprep.subr.mxu0 0.0
        %5179 = vmatpush1.xpose.msra.mxu0 0.0
        %5180 = vmatprep.subr.mxu0 0.0
        %5181 = vmatpush1.xpose.msra.mxu0 0.0
        %5182 = vmatprep.subr.mxu0 0.0
        %5183 = vmatpush1.xpose.msra.mxu0 0.0
        %5184 = vmatprep.subr.mxu0 0.0
        %5185 = vmatpush1.xpose.msra.mxu0 0.0
        %5186 = vmatprep.subr.mxu0 0.0
        %5187 = vmatpush1.xpose.msra.mxu0 0.0
        %5188 = vmatprep.subr.mxu0 0.0
        %5189 = vmatpush1.xpose.msra.mxu0 0.0
        %5190 = vmatprep.subr.mxu0 0.0
        %5191 = vmatpush1.xpose.msra.mxu0 0.0
        %5192 = vmatprep.subr.mxu0 0.0
        %5193 = vmatpush1.xpose.msra.mxu0 0.0
        %5194 = vmatprep.subr.mxu0 0.0
        %5195 = vmatpush1.xpose.msra.mxu0 0.0
        %5196 = vmatprep.subr.mxu0 0.0
        %5197 = vmatpush1.xpose.msra.mxu0 0.0
        %5198 = vmatprep.subr.mxu0 0.0
        %5199 = vmatpush1.xpose.msra.mxu0 0.0
        %5200 = vmatprep.subr.mxu0 0.0
        %5201 = vmatpush1.xpose.msra.mxu0 0.0
        %5202 = vmatprep.subr.mxu0 0.0
        %5203 = vmatpush1.xpose.msra.mxu0 0.0
        %5204 = vmatprep.subr.mxu0 0.0
        %5205 = vmatpush1.xpose.msra.mxu0 0.0
        %5206 = vmatprep.subr.mxu0 0.0
        %5207 = vmatpush1.xpose.msra.mxu0 0.0
        %5208 = vmatprep.subr.mxu0 0.0
        %5209 = vmatpush1.xpose.msra.mxu0 0.0
        %5210 = vmatprep.subr.mxu0 0.0
        %5211 = vmatpush1.xpose.msra.mxu0 0.0
        %5212 = vmatprep.subr.mxu0 0.0
        %5213 = vmatpush1.xpose.msra.mxu0 0.0
        %5214 = vmatprep.subr.mxu0 0.0
        %5215 = vmatpush1.xpose.msra.mxu0 0.0
        %5216 = vmatprep.subr.mxu0 0.0
        %5217 = vmatpush1.xpose.msra.mxu0 0.0
        %5218 = vmatprep.subr.mxu0 0.0
        %5219 = vmatpush1.xpose.msra.mxu0 0.0
        %5220 = vmatprep.subr.mxu0 0.0
        %5221 = vmatpush1.xpose.msra.mxu0 0.0
        %5222 = vmatprep.subr.mxu0 0.0
        %5223 = vmatpush1.xpose.msra.mxu0 0.0
        %5224 = vmatprep.subr.mxu0 0.0
        %5225 = vmatpush1.xpose.msra.mxu0 0.0
        %5226 = vmatprep.subr.mxu0 0.0
        %5227 = vmatpush1.xpose.msra.mxu0 0.0
        %5228 = vmatprep.subr.mxu0 0.0
        %5229 = vmatpush1.xpose.msra.mxu0 0.0
        %5230 = vmatprep.subr.mxu0 0.0
        %5231 = vmatpush1.xpose.msra.mxu0 0.0
        %5232 = vmatprep.mubr.f32.mxu0 0.0
        %5233 = vmatmul.mubr.f32.gmra.mrb[0].mxu0 %v5164
        %v5234 = vpop.f32.mrb[0].mxu0
        %v5235 = vadd.f32 0.0, %v5234
        %v5236 = vpop.f32.mrb[0].mxu0
        %5237 = vdwg.mxu0
        %5238 = vrot.lane.b32.xlu0 %v4456, 60
        %v5239 = vpop.permute.xlu0 %5238
        %5240 = vrot.lane.b32.xlu0 %v4497, 60
        %v5241 = vpop.permute.xlu0 %5240
        %v5242 = vsel %vm1661, %v5239, 0
        %v5244 = vsel %vm1661, %v5241, 0
        %5246 = vmatprep.subr.mxu0 0.0
        %5247 = vmatpush1.xpose.msra.mxu0 %v5244
        %5248 = vmatprep.subr.mxu0 0.0
        %5249 = vmatpush1.xpose.msra.mxu0 0.0
        %5250 = vmatprep.subr.mxu0 0.0
        %5251 = vmatpush1.xpose.msra.mxu0 0.0
        %5252 = vmatprep.subr.mxu0 0.0
        %5253 = vmatpush1.xpose.msra.mxu0 0.0
        %5254 = vmatprep.subr.mxu0 0.0
        %5255 = vmatpush1.xpose.msra.mxu0 0.0
        %5256 = vmatprep.subr.mxu0 0.0
        %5257 = vmatpush1.xpose.msra.mxu0 0.0
        %5258 = vmatprep.subr.mxu0 0.0
        %5259 = vmatpush1.xpose.msra.mxu0 0.0
        %5260 = vmatprep.subr.mxu0 0.0
        %5261 = vmatpush1.xpose.msra.mxu0 0.0
        %5262 = vmatprep.subr.mxu0 0.0
        %5263 = vmatpush1.xpose.msra.mxu0 0.0
        %5264 = vmatprep.subr.mxu0 0.0
        %5265 = vmatpush1.xpose.msra.mxu0 0.0
        %5266 = vmatprep.subr.mxu0 0.0
        %5267 = vmatpush1.xpose.msra.mxu0 0.0
        %5268 = vmatprep.subr.mxu0 0.0
        %5269 = vmatpush1.xpose.msra.mxu0 0.0
        %5270 = vmatprep.subr.mxu0 0.0
        %5271 = vmatpush1.xpose.msra.mxu0 0.0
        %5272 = vmatprep.subr.mxu0 0.0
        %5273 = vmatpush1.xpose.msra.mxu0 0.0
        %5274 = vmatprep.subr.mxu0 0.0
        %5275 = vmatpush1.xpose.msra.mxu0 0.0
        %5276 = vmatprep.subr.mxu0 0.0
        %5277 = vmatpush1.xpose.msra.mxu0 0.0
        %5278 = vmatprep.subr.mxu0 0.0
        %5279 = vmatpush1.xpose.msra.mxu0 0.0
        %5280 = vmatprep.subr.mxu0 0.0
        %5281 = vmatpush1.xpose.msra.mxu0 0.0
        %5282 = vmatprep.subr.mxu0 0.0
        %5283 = vmatpush1.xpose.msra.mxu0 0.0
        %5284 = vmatprep.subr.mxu0 0.0
        %5285 = vmatpush1.xpose.msra.mxu0 0.0
        %5286 = vmatprep.subr.mxu0 0.0
        %5287 = vmatpush1.xpose.msra.mxu0 0.0
        %5288 = vmatprep.subr.mxu0 0.0
        %5289 = vmatpush1.xpose.msra.mxu0 0.0
        %5290 = vmatprep.subr.mxu0 0.0
        %5291 = vmatpush1.xpose.msra.mxu0 0.0
        %5292 = vmatprep.subr.mxu0 0.0
        %5293 = vmatpush1.xpose.msra.mxu0 0.0
        %5294 = vmatprep.subr.mxu0 0.0
        %5295 = vmatpush1.xpose.msra.mxu0 0.0
        %5296 = vmatprep.subr.mxu0 0.0
        %5297 = vmatpush1.xpose.msra.mxu0 0.0
        %5298 = vmatprep.subr.mxu0 0.0
        %5299 = vmatpush1.xpose.msra.mxu0 0.0
        %5300 = vmatprep.subr.mxu0 0.0
        %5301 = vmatpush1.xpose.msra.mxu0 0.0
        %5302 = vmatprep.subr.mxu0 0.0
        %5303 = vmatpush1.xpose.msra.mxu0 0.0
        %5304 = vmatprep.subr.mxu0 0.0
        %5305 = vmatpush1.xpose.msra.mxu0 0.0
        %5306 = vmatprep.subr.mxu0 0.0
        %5307 = vmatpush1.xpose.msra.mxu0 0.0
        %5308 = vmatprep.subr.mxu0 0.0
        %5309 = vmatpush1.xpose.msra.mxu0 0.0
        %5310 = vmatprep.mubr.f32.mxu0 0.0
        %5311 = vmatmul.mubr.f32.gmra.mrb[0].mxu0 %v5242
        %v5312 = vpop.f32.mrb[0].mxu0
        %v5313 = vadd.f32 0.0, %v5312
        %v5314 = vpop.f32.mrb[0].mxu0
        %5315 = vdwg.mxu0
        %v5316 = vsel %vm1888, %v5235, -inf
        %5317 = vmax.xlane.f32.xlu0 %v5316
        %v5318 = vpop.xlane.xlu0 %5317
        %v5319 = vsel %vm1888, %v5313, -inf
        %5320 = vmax.xlane.f32.xlu0 %v5319
        %v5321 = vpop.xlane.xlu0 %5320
        %v5322 = vsub.f32 %v5235, %v5318
        %v5323 = vsub.f32 %v5313, %v5321
        %v5324 = vmul.f32 %v5322, 1.442695
        %v5325 = vpow.pop %v5324
        %v5326 = vmul.f32 %v5323, 1.442695
        %v5327 = vpow.pop %v5326
        %v5328 = vsel %vm1888, %v5325, 0.0
        %5329 = vadd.xlane.f32.xlu0 %v5328
        %v5330 = vpop.xlane.xlu0 %5329
        %v5331 = vsel %vm1888, %v5327, 0.0
        %5332 = vadd.xlane.f32.xlu0 %v5331
        %v5333 = vpop.xlane.xlu0 %5332
        %v5334 = vrcp.pop %v5330
        %v5335 = vrcp.pop %v5333
        %v5336 = vmul.f32 %v5325, %v5334
        %v5337 = vmul.f32 %v5327, %v5335
        %5338 = vrot.lane.b32.xlu0 %v4634, 60
        %v5339 = vpop.permute.xlu0 %5338
        %v5341 = vsel %vm1950, %v5336, 0
        %v5343 = vsel %vm1954, %v5339, 0
        %5345 = vmatprep.subr.mxu0 0.0
        %5346 = vmatpush1.msra.mxu0 %v5343
        %5347 = vmatprep.subr.mxu0 0.0
        %5348 = vmatpush1.msra.mxu0 0.0
        %5349 = vmatprep.subr.mxu0 0.0
        %5350 = vmatpush1.msra.mxu0 0.0
        %5351 = vmatprep.subr.mxu0 0.0
        %5352 = vmatpush1.msra.mxu0 0.0
        %5353 = vmatprep.subr.mxu0 0.0
        %5354 = vmatpush1.msra.mxu0 0.0
        %5355 = vmatprep.subr.mxu0 0.0
        %5356 = vmatpush1.msra.mxu0 0.0
        %5357 = vmatprep.subr.mxu0 0.0
        %5358 = vmatpush1.msra.mxu0 0.0
        %5359 = vmatprep.subr.mxu0 0.0
        %5360 = vmatpush1.msra.mxu0 0.0
        %5361 = vmatprep.subr.mxu0 0.0
        %5362 = vmatpush1.msra.mxu0 0.0
        %5363 = vmatprep.subr.mxu0 0.0
        %5364 = vmatpush1.msra.mxu0 0.0
        %5365 = vmatprep.subr.mxu0 0.0
        %5366 = vmatpush1.msra.mxu0 0.0
        %5367 = vmatprep.subr.mxu0 0.0
        %5368 = vmatpush1.msra.mxu0 0.0
        %5369 = vmatprep.subr.mxu0 0.0
        %5370 = vmatpush1.msra.mxu0 0.0
        %5371 = vmatprep.subr.mxu0 0.0
        %5372 = vmatpush1.msra.mxu0 0.0
        %5373 = vmatprep.subr.mxu0 0.0
        %5374 = vmatpush1.msra.mxu0 0.0
        %5375 = vmatprep.subr.mxu0 0.0
        %5376 = vmatpush1.msra.mxu0 0.0
        %5377 = vmatprep.subr.mxu0 0.0
        %5378 = vmatpush1.msra.mxu0 0.0
        %5379 = vmatprep.subr.mxu0 0.0
        %5380 = vmatpush1.msra.mxu0 0.0
        %5381 = vmatprep.subr.mxu0 0.0
        %5382 = vmatpush1.msra.mxu0 0.0
        %5383 = vmatprep.subr.mxu0 0.0
        %5384 = vmatpush1.msra.mxu0 0.0
        %5385 = vmatprep.subr.mxu0 0.0
        %5386 = vmatpush1.msra.mxu0 0.0
        %5387 = vmatprep.subr.mxu0 0.0
        %5388 = vmatpush1.msra.mxu0 0.0
        %5389 = vmatprep.subr.mxu0 0.0
        %5390 = vmatpush1.msra.mxu0 0.0
        %5391 = vmatprep.subr.mxu0 0.0
        %5392 = vmatpush1.msra.mxu0 0.0
        %5393 = vmatprep.subr.mxu0 0.0
        %5394 = vmatpush1.msra.mxu0 0.0
        %5395 = vmatprep.subr.mxu0 0.0
        %5396 = vmatpush1.msra.mxu0 0.0
        %5397 = vmatprep.subr.mxu0 0.0
        %5398 = vmatpush1.msra.mxu0 0.0
        %5399 = vmatprep.subr.mxu0 0.0
        %5400 = vmatpush1.msra.mxu0 0.0
        %5401 = vmatprep.subr.mxu0 0.0
        %5402 = vmatpush1.msra.mxu0 0.0
        %5403 = vmatprep.subr.mxu0 0.0
        %5404 = vmatpush1.msra.mxu0 0.0
        %5405 = vmatprep.subr.mxu0 0.0
        %5406 = vmatpush1.msra.mxu0 0.0
        %5407 = vmatprep.subr.mxu0 0.0
        %5408 = vmatpush1.msra.mxu0 0.0
        %5409 = vmatprep.mubr.f32.mxu0 0.0
        %5410 = vmatmul.mubr.f32.gmra.mrb[0].mxu0 %v5341
        %v5411 = vpop.f32.mrb[0].mxu0
        %v5412 = vadd.f32 0.0, %v5411
        %v5413 = vpop.f32.mrb[0].mxu0
        %5414 = vdwg.mxu0
        %5415 = vrot.lane.b32.xlu0 %v4750, 60
        %v5416 = vpop.permute.xlu0 %5415
        %v5418 = vsel %vm1950, %v5337, 0
        %v5420 = vsel %vm1954, %v5416, 0
        %5422 = vmatprep.subr.mxu0 0.0
        %5423 = vmatpush1.msra.mxu0 %v5420
        %5424 = vmatprep.subr.mxu0 0.0
        %5425 = vmatpush1.msra.mxu0 0.0
        %5426 = vmatprep.subr.mxu0 0.0
        %5427 = vmatpush1.msra.mxu0 0.0
        %5428 = vmatprep.subr.mxu0 0.0
        %5429 = vmatpush1.msra.mxu0 0.0
        %5430 = vmatprep.subr.mxu0 0.0
        %5431 = vmatpush1.msra.mxu0 0.0
        %5432 = vmatprep.subr.mxu0 0.0
        %5433 = vmatpush1.msra.mxu0 0.0
        %5434 = vmatprep.subr.mxu0 0.0
        %5435 = vmatpush1.msra.mxu0 0.0
        %5436 = vmatprep.subr.mxu0 0.0
        %5437 = vmatpush1.msra.mxu0 0.0
        %5438 = vmatprep.subr.mxu0 0.0
        %5439 = vmatpush1.msra.mxu0 0.0
        %5440 = vmatprep.subr.mxu0 0.0
        %5441 = vmatpush1.msra.mxu0 0.0
        %5442 = vmatprep.subr.mxu0 0.0
        %5443 = vmatpush1.msra.mxu0 0.0
        %5444 = vmatprep.subr.mxu0 0.0
        %5445 = vmatpush1.msra.mxu0 0.0
        %5446 = vmatprep.subr.mxu0 0.0
        %5447 = vmatpush1.msra.mxu0 0.0
        %5448 = vmatprep.subr.mxu0 0.0
        %5449 = vmatpush1.msra.mxu0 0.0
        %5450 = vmatprep.subr.mxu0 0.0
        %5451 = vmatpush1.msra.mxu0 0.0
        %5452 = vmatprep.subr.mxu0 0.0
        %5453 = vmatpush1.msra.mxu0 0.0
        %5454 = vmatprep.subr.mxu0 0.0
        %5455 = vmatpush1.msra.mxu0 0.0
        %5456 = vmatprep.subr.mxu0 0.0
        %5457 = vmatpush1.msra.mxu0 0.0
        %5458 = vmatprep.subr.mxu0 0.0
        %5459 = vmatpush1.msra.mxu0 0.0
        %5460 = vmatprep.subr.mxu0 0.0
        %5461 = vmatpush1.msra.mxu0 0.0
        %5462 = vmatprep.subr.mxu0 0.0
        %5463 = vmatpush1.msra.mxu0 0.0
        %5464 = vmatprep.subr.mxu0 0.0
        %5465 = vmatpush1.msra.mxu0 0.0
        %5466 = vmatprep.subr.mxu0 0.0
        %5467 = vmatpush1.msra.mxu0 0.0
        %5468 = vmatprep.subr.mxu0 0.0
        %5469 = vmatpush1.msra.mxu0 0.0
        %5470 = vmatprep.subr.mxu0 0.0
        %5471 = vmatpush1.msra.mxu0 0.0
        %5472 = vmatprep.subr.mxu0 0.0
        %5473 = vmatpush1.msra.mxu0 0.0
        %5474 = vmatprep.subr.mxu0 0.0
        %5475 = vmatpush1.msra.mxu0 0.0
        %5476 = vmatprep.subr.mxu0 0.0
        %5477 = vmatpush1.msra.mxu0 0.0
        %5478 = vmatprep.subr.mxu0 0.0
        %5479 = vmatpush1.msra.mxu0 0.0
        %5480 = vmatprep.subr.mxu0 0.0
        %5481 = vmatpush1.msra.mxu0 0.0
        %5482 = vmatprep.subr.mxu0 0.0
        %5483 = vmatpush1.msra.mxu0 0.0
        %5484 = vmatprep.subr.mxu0 0.0
        %5485 = vmatpush1.msra.mxu0 0.0
        %5486 = vmatprep.mubr.f32.mxu0 0.0
        %5487 = vmatmul.mubr.f32.gmra.mrb[0].mxu0 %v5418
        %v5488 = vpop.f32.mrb[0].mxu0
        %v5489 = vadd.f32 0.0, %v5488
        %v5490 = vpop.f32.mrb[0].mxu0
        %5491 = vdwg.mxu0
        %5494 = vrot.lane.b32.xlu0 %v2393, 28
        %v5495 = vpop.permute.xlu0 %5494
        %5496 = vrot.lane.b32.xlu0 %v2470, 28
        %v5497 = vpop.permute.xlu0 %5496
        %5502 = vrot.lane.b32.xlu0 %v2725, 56
        %v5503 = vpop.permute.xlu0 %5502
        %5504 = vrot.lane.b32.xlu0 %v2802, 56
        %v5505 = vpop.permute.xlu0 %5504
        %5510 = vrot.lane.b32.xlu0 %v3057, 84
        %v5511 = vpop.permute.xlu0 %5510
        %5512 = vrot.lane.b32.xlu0 %v3134, 84
        %v5513 = vpop.permute.xlu0 %5512
        %5518 = vrot.lane.b32.xlu0 %v3910, 112
        %v5519 = vpop.permute.xlu0 %5518
        %5520 = vrot.lane.b32.xlu0 %v4046, 112
        %v5521 = vpop.permute.xlu0 %5520
        %5526 = vrot.lane.b32.xlu0 %v4709, 12
        %v5527 = vpop.permute.xlu0 %5526
        %5528 = vrot.lane.b32.xlu0 %v4825, 12
        %v5529 = vpop.permute.xlu0 %5528
        %5534 = vrot.lane.b32.xlu0 %v5080, 40
        %v5535 = vpop.permute.xlu0 %5534
        %5536 = vrot.lane.b32.xlu0 %v5157, 40
        %v5537 = vpop.permute.xlu0 %5536
        %5542 = vrot.lane.b32.xlu0 %v5412, 68
        %v5543 = vpop.permute.xlu0 %5542
        %5544 = vrot.lane.b32.xlu0 %v5489, 68
        %v5545 = vpop.permute.xlu0 %5544
        %v5548 = vsel %vm1661, %v2024, %v5495
        %v5549 = vsel %vm1661, %v2138, %v5497
        %vm5550 = vcmask 457728
        %v5551 = vsel %vm5550, %v5548, %v5503
        %v5552 = vsel %vm5550, %v5549, %v5505
        %vm5553 = vcmask 687104
        %v5554 = vsel %vm5553, %v5551, %v5511
        %v5555 = vsel %vm5553, %v5552, %v5513
        %vm5556 = vcmask 916480
        %v5557 = vsel %vm5556, %v5554, %v5519
        %v5558 = vsel %vm5556, %v5555, %v5521
        %vm5559 = vcmask 97280
        %v5560 = vsel %vm5559, %v5519, %v5527
        %v5561 = vsel %vm5559, %v5521, %v5529
        %vm5562 = vcmask 326656
        %v5563 = vsel %vm5562, %v5560, %v5535
        %v5564 = vsel %vm5562, %v5561, %v5537
        %vm5565 = vcmask 556032
        %v5566 = vsel %vm5565, %v5563, %v5543
        %v5567 = vsel %vm5565, %v5564, %v5545
        %v5572 = vcombine.low %v5557, %v5566
        %v5573 = vcombine.high %v5557, %v5566
        %v5575 = vunpack.c.l.s4 1966171168
        %v5576 = vunpack.c.0.s8 %v5575
        %v5577 = vlaneseq
        %v5578 = vshrl.u32 %v5577, 7
        %v5579 = vsub.s32 %v5576, %v5578
        %v5580 = vrot.slane %v5572, %v5579
        %v5582 = vunpack.c.l.s4 1966171168
        %v5583 = vunpack.c.0.s8 %v5582
        %v5584 = vlaneseq
        %v5585 = vshrl.u32 %v5584, 7
        %v5586 = vsub.s32 %v5583, %v5585
        %v5587 = vrot.slane %v5573, %v5586
        %v5588 = vcombine.high %v5580, %v5580
        %v5590 = vunpack.c.l.s4 1966171168
        %v5591 = vunpack.c.0.s8 %v5590
        %v5592 = vlaneseq
        %v5593 = vshrl.u32 %v5592, 7
        %v5594 = vsub.s32 %v5591, %v5593
        %v5595 = vrot.slane %v5580, %v5594
        %v5597 = vunpack.c.l.s4 1966171168
        %v5598 = vunpack.c.0.s8 %v5597
        %v5599 = vlaneseq
        %v5600 = vshrl.u32 %v5599, 7
        %v5601 = vsub.s32 %v5598, %v5600
        %v5602 = vrot.slane %v5587, %v5601
        %v5604 = vunpack.c.l.s4 1966171168
        %v5605 = vunpack.c.0.s8 %v5604
        %v5606 = vlaneseq
        %v5607 = vshrl.u32 %v5606, 7
        %v5608 = vsub.s32 %v5605, %v5607
        %v5609 = vrot.slane %v5588, %v5608
        %v5610 = vcombine.high %v5595, %v5595
        %v5611 = vcombine.high %v5609, %v5609
        %v5612 = vcombine.low %v5558, %v5567
        %v5613 = vcombine.high %v5558, %v5567
        %v5615 = vunpack.c.l.s4 1966171168
        %v5616 = vunpack.c.0.s8 %v5615
        %v5617 = vlaneseq
        %v5618 = vshrl.u32 %v5617, 7
        %v5619 = vsub.s32 %v5616, %v5618
        %v5620 = vrot.slane %v5612, %v5619
        %v5622 = vunpack.c.l.s4 1966171168
        %v5623 = vunpack.c.0.s8 %v5622
        %v5624 = vlaneseq
        %v5625 = vshrl.u32 %v5624, 7
        %v5626 = vsub.s32 %v5623, %v5625
        %v5627 = vrot.slane %v5613, %v5626
        %v5628 = vcombine.high %v5620, %v5620
        %v5630 = vunpack.c.l.s4 1966171168
        %v5631 = vunpack.c.0.s8 %v5630
        %v5632 = vlaneseq
        %v5633 = vshrl.u32 %v5632, 7
        %v5634 = vsub.s32 %v5631, %v5633
        %v5635 = vrot.slane %v5620, %v5634
        %v5637 = vunpack.c.l.s4 1966171168
        %v5638 = vunpack.c.0.s8 %v5637
        %v5639 = vlaneseq
        %v5640 = vshrl.u32 %v5639, 7
        %v5641 = vsub.s32 %v5638, %v5640
        %v5642 = vrot.slane %v5627, %v5641
        %v5644 = vunpack.c.l.s4 1966171168
        %v5645 = vunpack.c.0.s8 %v5644
        %v5646 = vlaneseq
        %v5647 = vshrl.u32 %v5646, 7
        %v5648 = vsub.s32 %v5645, %v5647
        %v5649 = vrot.slane %v5628, %v5648
        %v5650 = vcombine.high %v5635, %v5635
        %v5651 = vcombine.high %v5649, %v5649
        %v5652 = vcombine.low %v5595, %v5609
        %v5653 = vcombine.low %v5610, %v5611
        %v5654 = vcombine.low %v5602, %v5635
        %v5655 = vcombine.low %v5649, %v5650
        %v5657 = vunpack.c.l.s4 1966171168
        %v5658 = vunpack.c.0.s8 %v5657
        %v5659 = vlaneseq
        %v5660 = vshrl.u32 %v5659, 7
        %v5661 = vsub.s32 %v5658, %v5660
        %v5662 = vrot.slane %v5652, %v5661
        %v5664 = vunpack.c.l.s4 1966171168
        %v5665 = vunpack.c.0.s8 %v5664
        %v5666 = vlaneseq
        %v5667 = vshrl.u32 %v5666, 7
        %v5668 = vsub.s32 %v5665, %v5667
        %v5669 = vrot.slane %v5653, %v5668
        %v5671 = vunpack.c.l.s4 1966171168
        %v5672 = vunpack.c.0.s8 %v5671
        %v5673 = vlaneseq
        %v5674 = vshrl.u32 %v5673, 7
        %v5675 = vsub.s32 %v5672, %v5674
        %v5676 = vrot.slane %v5654, %v5675
        %v5678 = vunpack.c.l.s4 1966171168
        %v5679 = vunpack.c.0.s8 %v5678
        %v5680 = vlaneseq
        %v5681 = vshrl.u32 %v5680, 7
        %v5682 = vsub.s32 %v5679, %v5681
        %v5683 = vrot.slane %v5655, %v5682
        %v5684 = vcombine.low %v5662, %v5669
        %v5685 = vcombine.high %v5662, %v5669
        %v5686 = vcombine.low %v5676, %v5683
        %v5687 = vcombine.high %v5676, %v5683
        %v5689 = vunpack.c.l.s4 1966171168
        %v5690 = vunpack.c.0.s8 %v5689
        %v5691 = vlaneseq
        %v5692 = vshrl.u32 %v5691, 7
        %v5693 = vsub.s32 %v5690, %v5692
        %v5694 = vrot.slane %v5684, %v5693
        %v5696 = vunpack.c.l.s4 1966171168
        %v5697 = vunpack.c.0.s8 %v5696
        %v5698 = vlaneseq
        %v5699 = vshrl.u32 %v5698, 7
        %v5700 = vsub.s32 %v5697, %v5699
        %v5701 = vrot.slane %v5685, %v5700
        %v5703 = vunpack.c.l.s4 1966171168
        %v5704 = vunpack.c.0.s8 %v5703
        %v5705 = vlaneseq
        %v5706 = vshrl.u32 %v5705, 7
        %v5707 = vsub.s32 %v5704, %v5706
        %v5708 = vrot.slane %v5686, %v5707
        %v5710 = vunpack.c.l.s4 1966171168
        %v5711 = vunpack.c.0.s8 %v5710
        %v5712 = vlaneseq
        %v5713 = vshrl.u32 %v5712, 7
        %v5714 = vsub.s32 %v5711, %v5713
        %v5715 = vrot.slane %v5687, %v5714
        %v5716 = vcombine.low %v5694, %v5708
        %v5717 = vcombine.low %v5701, %v5715
        %v5718 = vcombine.low %v5651, %v5642
        %v5720 = vunpack.c.l.s4 1966171168
        %v5721 = vunpack.c.0.s8 %v5720
        %v5722 = vlaneseq
        %v5723 = vshrl.u32 %v5722, 7
        %v5724 = vsub.s32 %v5721, %v5723
        %v5725 = vrot.slane %v5718, %v5724
        %v5726 = vcombine.high %v5725, %v5725
        %v5728 = vunpack.c.l.s4 1966171168
        %v5729 = vunpack.c.0.s8 %v5728
        %v5730 = vlaneseq
        %v5731 = vshrl.u32 %v5730, 7
        %v5732 = vsub.s32 %v5729, %v5731
        %v5733 = vrot.slane %v5725, %v5732
        %v5735 = vunpack.c.l.s4 1966171168
        %v5736 = vunpack.c.0.s8 %v5735
        %v5737 = vlaneseq
        %v5738 = vshrl.u32 %v5737, 7
        %v5739 = vsub.s32 %v5736, %v5738
        %v5740 = vrot.slane %v5726, %v5739
        %v5745 = vpack.c.bf16 %v5733, %v5716
        %v5746 = vpack.c.bf16 %v5740, %v5717
        %s5747 = smul.addr %s721, 4
        %s5748 = scalar_lea.vmem [#allocation2], %s5747
        %v5749 = vld [vmem:[%s5748] sm:$0xff]
        %v5750 = vld [vmem:[%s5748 + $0x8] sm:$0xff]
        %v5751 = vld [vmem:[%s5748 + $0x10] sm:$0xff]
        %v5752 = vld [vmem:[%s5748 + $0x18] sm:$0xff]
        %v5753 = vld [vmem:[%s5748 + $0x20] sm:$0xff]
        %v5754 = vld [vmem:[%s5748 + $0x28] sm:$0xff]
        %v5755 = vld [vmem:[%s5748 + $0x30] sm:$0xff]
        %v5756 = vld [vmem:[%s5748 + $0x38] sm:$0xff]
        %v5757 = vld [vmem:[%s5748 + $0x40] sm:$0xff]
        %v5758 = vld [vmem:[%s5748 + $0x48] sm:$0xff]
        %v5759 = vld [vmem:[%s5748 + $0x50] sm:$0xff]
        %v5760 = vld [vmem:[%s5748 + $0x58] sm:$0xff]
        %v5761 = vld [vmem:[%s5748 + $0x60] sm:$0xff]
        %v5762 = vld [vmem:[%s5748 + $0x68] sm:$0xff]
        %v5763 = vld [vmem:[%s5748 + $0x70] sm:$0xff]
        %v5764 = vld [vmem:[%s5748 + $0x78] sm:$0xff]
        %v5765 = vld [vmem:[%s5748 + $0x80] sm:$0xff]
        %v5766 = vld [vmem:[%s5748 + $0x88] sm:$0xff]
        %v5767 = vld [vmem:[%s5748 + $0x90] sm:$0xff]
        %v5768 = vld [vmem:[%s5748 + $0x98] sm:$0xff]
        %v5769 = vld [vmem:[%s5748 + $0xa0] sm:$0xff]
        %v5770 = vld [vmem:[%s5748 + $0xa8] sm:$0xff]
        %v5771 = vld [vmem:[%s5748 + $0xb0] sm:$0xff]
        %v5772 = vld [vmem:[%s5748 + $0xb8] sm:$0xff]
        %v5773 = vld [vmem:[%s5748 + $0xc0] sm:$0xff]
        %v5774 = vld [vmem:[%s5748 + $0xc8] sm:$0xff]
        %v5775 = vld [vmem:[%s5748 + $0xd0] sm:$0xff]
        %v5776 = vld [vmem:[%s5748 + $0xd8] sm:$0xff]
        %s5777 = scalar_lea.vmem [#allocation4], %s642
        %v5778 = vld [vmem:[%s5777] sm:$0x3]
        %v5780 = vlaneseq
        %v5781 = vshrl.u32 %v5780, 7
        %v5782 = vsub.s32 0, %v5781
        %v5783 = vrot.slane %v5778, %v5782
        %v5784 = vlaneseq
        %v5785 = vshrl.u32 %v5784, 7
        %v5786 = vsub.s32 1, %v5785
        %v5787 = vrot.slane %v5778, %v5786
        %v5818 = vunpack.c.l.b16 %v5749
        %v5819 = vunpack.c.h.b16 %v5749
        %v5820 = vunpack.c.l.b16 %v5750
        %v5821 = vunpack.c.h.b16 %v5750
        %v5822 = vunpack.c.l.b16 %v5751
        %v5823 = vunpack.c.h.b16 %v5751
        %v5824 = vunpack.c.l.b16 %v5752
        %v5825 = vunpack.c.h.b16 %v5752
        %v5826 = vunpack.c.l.b16 %v5753
        %v5827 = vunpack.c.h.b16 %v5753
        %v5828 = vunpack.c.l.b16 %v5754
        %v5829 = vunpack.c.h.b16 %v5754
        %v5830 = vunpack.c.l.b16 %v5755
        %v5831 = vunpack.c.h.b16 %v5755
        %v5832 = vunpack.c.l.b16 %v5756
        %v5833 = vunpack.c.h.b16 %v5756
        %v5834 = vunpack.c.l.b16 %v5757
        %v5835 = vunpack.c.h.b16 %v5757
        %v5836 = vunpack.c.l.b16 %v5758
        %v5837 = vunpack.c.h.b16 %v5758
        %v5838 = vunpack.c.l.b16 %v5759
        %v5839 = vunpack.c.h.b16 %v5759
        %v5840 = vunpack.c.l.b16 %v5760
        %v5841 = vunpack.c.h.b16 %v5760
        %v5842 = vunpack.c.l.b16 %v5761
        %v5843 = vunpack.c.h.b16 %v5761
        %v5844 = vunpack.c.l.b16 %v5762
        %v5845 = vunpack.c.h.b16 %v5762
        %v5846 = vunpack.c.l.b16 %v5763
        %v5847 = vunpack.c.h.b16 %v5763
        %v5848 = vunpack.c.l.b16 %v5764
        %v5849 = vunpack.c.h.b16 %v5764
        %v5850 = vunpack.c.l.b16 %v5765
        %v5851 = vunpack.c.h.b16 %v5765
        %v5852 = vunpack.c.l.b16 %v5766
        %v5853 = vunpack.c.h.b16 %v5766
        %v5854 = vunpack.c.l.b16 %v5767
        %v5855 = vunpack.c.h.b16 %v5767
        %v5856 = vunpack.c.l.b16 %v5768
        %v5857 = vunpack.c.h.b16 %v5768
        %v5858 = vunpack.c.l.b16 %v5769
        %v5859 = vunpack.c.h.b16 %v5769
        %v5860 = vunpack.c.l.b16 %v5770
        %v5861 = vunpack.c.h.b16 %v5770
        %v5862 = vunpack.c.l.b16 %v5771
        %v5863 = vunpack.c.h.b16 %v5771
        %v5864 = vunpack.c.l.b16 %v5772
        %v5865 = vunpack.c.h.b16 %v5772
        %v5866 = vunpack.c.l.b16 %v5773
        %v5867 = vunpack.c.h.b16 %v5773
        %v5868 = vunpack.c.l.b16 %v5774
        %v5869 = vunpack.c.h.b16 %v5774
        %v5870 = vunpack.c.l.b16 %v5775
        %v5871 = vunpack.c.h.b16 %v5775
        %v5872 = vunpack.c.l.b16 %v5776
        %v5873 = vunpack.c.h.b16 %v5776
        %v5874 = vpack.c.b16 %v5820, %v5818
        %v5875 = vpack.c.b16 %v5821, %v5819
        %v5876 = vpack.c.b16 %v5824, %v5822
        %v5877 = vpack.c.b16 %v5825, %v5823
        %v5878 = vpack.c.b16 %v5828, %v5826
        %v5879 = vpack.c.b16 %v5829, %v5827
        %v5880 = vpack.c.b16 %v5832, %v5830
        %v5881 = vpack.c.b16 %v5833, %v5831
        %v5882 = vpack.c.b16 %v5836, %v5834
        %v5883 = vpack.c.b16 %v5837, %v5835
        %v5884 = vpack.c.b16 %v5840, %v5838
        %v5885 = vpack.c.b16 %v5841, %v5839
        %v5886 = vpack.c.b16 %v5844, %v5842
        %v5887 = vpack.c.b16 %v5845, %v5843
        %v5888 = vpack.c.b16 %v5848, %v5846
        %v5889 = vpack.c.b16 %v5849, %v5847
        %v5890 = vpack.c.b16 %v5852, %v5850
        %v5891 = vpack.c.b16 %v5853, %v5851
        %v5892 = vpack.c.b16 %v5856, %v5854
        %v5893 = vpack.c.b16 %v5857, %v5855
        %v5894 = vpack.c.b16 %v5860, %v5858
        %v5895 = vpack.c.b16 %v5861, %v5859
        %v5896 = vpack.c.b16 %v5864, %v5862
        %v5897 = vpack.c.b16 %v5865, %v5863
        %v5898 = vpack.c.b16 %v5868, %v5866
        %v5899 = vpack.c.b16 %v5869, %v5867
        %v5900 = vpack.c.b16 %v5872, %v5870
        %v5901 = vpack.c.b16 %v5873, %v5871
        %v5931 = vsel %vm647, %v5746, 0
        %5933 = vmatprep.subr.bf16.mxu0 %v5875
        %5934 = vmatpush1.bf16.msra.mxu0 %v5874
        %5935 = vmatprep.subr.bf16.mxu0 %v5877
        %5936 = vmatpush1.bf16.msra.mxu0 %v5876
        %5937 = vmatprep.subr.bf16.mxu0 %v5879
        %5938 = vmatpush1.bf16.msra.mxu0 %v5878
        %5939 = vmatprep.subr.bf16.mxu0 %v5881
        %5940 = vmatpush1.bf16.msra.mxu0 %v5880
        %5941 = vmatprep.subr.bf16.mxu0 %v5883
        %5942 = vmatpush1.bf16.msra.mxu0 %v5882
        %5943 = vmatprep.subr.bf16.mxu0 %v5885
        %5944 = vmatpush1.bf16.msra.mxu0 %v5884
        %5945 = vmatprep.subr.bf16.mxu0 %v5887
        %5946 = vmatpush1.bf16.msra.mxu0 %v5886
        %5947 = vmatprep.subr.bf16.mxu0 %v5889
        %5948 = vmatpush1.bf16.msra.mxu0 %v5888
        %5949 = vmatprep.subr.bf16.mxu0 %v5891
        %5950 = vmatpush1.bf16.msra.mxu0 %v5890
        %5951 = vmatprep.subr.bf16.mxu0 %v5893
        %5952 = vmatpush1.bf16.msra.mxu0 %v5892
        %5953 = vmatprep.subr.bf16.mxu0 %v5895
        %5954 = vmatpush1.bf16.msra.mxu0 %v5894
        %5955 = vmatprep.subr.bf16.mxu0 %v5897
        %5956 = vmatpush1.bf16.msra.mxu0 %v5896
        %5957 = vmatprep.subr.bf16.mxu0 %v5899
        %5958 = vmatpush1.bf16.msra.mxu0 %v5898
        %5959 = vmatprep.subr.bf16.mxu0 %v5901
        %5960 = vmatpush1.bf16.msra.mxu0 %v5900
        %5961 = vmatprep.subr.bf16.mxu0 0
        %5962 = vmatpush1.bf16.msra.mxu0 0
        %5963 = vmatprep.subr.bf16.mxu0 0
        %5964 = vmatpush1.bf16.msra.mxu0 0
        %5965 = vmatprep.mubr.bf16.mxu0 %v5931
        %5966 = vmatmul.mubr.bf16.gmra.mrb[0].mxu0 %v5745
        %v5967 = vpop.f32.mrb[0].mxu0
        %v5968 = vadd.f32 %v5783, %v5967
        %v5969 = vpop.f32.mrb[0].mxu0
        %v5970 = vadd.f32 %v5787, %v5969
        %v5971 = vpop.f32.mrb[0].mxu0
        %v5972 = vadd.f32 %v5783, %v5971
        %v5973 = vpop.f32.mrb[0].mxu0
        %v5974 = vadd.f32 %v5787, %v5973
        %5975 = vdwg.mxu0
        %v5976 = vadd.f32 %v638, %v5968
        %v5977 = vadd.f32 %v639, %v5970
        %v5978 = vadd.f32 %v640, %v5972
        %v5979 = vadd.f32 %v641, %v5974
        %s5980 = scalar_lea.vmem [#allocation9], %s642
        %v5981 = vld [vmem:[%s5980] sm:$0x3]
        %s5982 = scalar_lea.vmem [#allocation10], %s642
        %v5983 = vld [vmem:[%s5982] sm:$0x3]
        %v5984 = vsel %vm647, %v5977, 0.0
        %v5985 = vadd.f32 %v5976, %v5984
        %5986 = vadd.xlane.f32.xlu0 %v5985
        %v5987 = vpop.xlane.xlu0 %5986
        %v5988 = vsel %vm652, %v5978, 0.0
        %v5989 = vsel %vm654, %v5979, 0.0
        %v5990 = vadd.f32 %v5988, %v5989
        %5991 = vadd.xlane.f32.xlu0 %v5990
        %v5992 = vpop.xlane.xlu0 %5991
        %v5993 = vmul.f32 %v5987, %v659
        %v5994 = vmul.f32 %v5992, %v659
        %v5995 = vsub.f32 %v5976, %v5993
        %v5996 = vsub.f32 %v5977, %v5993
        %v5997 = vsub.f32 %v5978, %v5994
        %v5998 = vsub.f32 %v5979, %v5994
        %v5999 = vmul.f32 %v5995, %v5995
        %v6000 = vmul.f32 %v5996, %v5996
        %v6001 = vmul.f32 %v5997, %v5997
        %v6002 = vmul.f32 %v5998, %v5998
        %v6003 = vsel %vm647, %v6000, 0.0
        %v6004 = vadd.f32 %v5999, %v6003
        %6005 = vadd.xlane.f32.xlu0 %v6004
        %v6006 = vpop.xlane.xlu0 %6005
        %v6007 = vsel %vm652, %v6001, 0.0
        %v6008 = vsel %vm654, %v6002, 0.0
        %v6009 = vadd.f32 %v6007, %v6008
        %6010 = vadd.xlane.f32.xlu0 %v6009
        %v6011 = vpop.xlane.xlu0 %6010
        %v6012 = vmul.f32 %v6006, %v659
        %v6013 = vmul.f32 %v6011, %v659
        %v6014 = vadd.f32 %v6012, 1e-05
        %v6015 = vadd.f32 %v6013, 1e-05
        %v6016 = vrsqrt.pop %v6014
        %v6017 = vrsqrt.pop %v6015
        %v6018 = vmul.f32 %v5995, %v6016
        %v6019 = vmul.f32 %v5996, %v6016
        %v6020 = vmul.f32 %v5997, %v6017
        %v6021 = vmul.f32 %v5998, %v6017
        %v6023 = vlaneseq
        %v6024 = vshrl.u32 %v6023, 7
        %v6025 = vsub.s32 0, %v6024
        %v6026 = vrot.slane %v5981, %v6025
        %v6027 = vlaneseq
        %v6028 = vshrl.u32 %v6027, 7
        %v6029 = vsub.s32 1, %v6028
        %v6030 = vrot.slane %v5981, %v6029
        %v6033 = vmul.f32 %v6018, %v6026
        %v6034 = vmul.f32 %v6019, %v6030
        %v6035 = vmul.f32 %v6020, %v6026
        %v6036 = vmul.f32 %v6021, %v6030
        %v6038 = vlaneseq
        %v6039 = vshrl.u32 %v6038, 7
        %v6040 = vsub.s32 0, %v6039
        %v6041 = vrot.slane %v5983, %v6040
        %v6042 = vlaneseq
        %v6043 = vshrl.u32 %v6042, 7
        %v6044 = vsub.s32 1, %v6043
        %v6045 = vrot.slane %v5983, %v6044
        %v6048 = vadd.f32 %v6033, %v6041
        %v6049 = vadd.f32 %v6034, %v6045
        %v6050 = vadd.f32 %v6035, %v6041
        %v6051 = vadd.f32 %v6036, %v6045
        %v6052 = vpack.c.bf16 %v6050, %v6048
        %v6053 = vpack.c.bf16 %v6051, %v6049
        %s6054 = smul.u32 %s35, 448
        %s6055 = smul.addr %s6054, 4
        %s6056 = scalar_lea.vmem [#allocation12], %s6055
        %v6057 = vld [vmem:[%s6056] sm:$0xff]
        %v6058 = vld [vmem:[%s6056 + $0x8] sm:$0xff]
        %v6059 = vld [vmem:[%s6056 + $0x10] sm:$0xff]
        %v6060 = vld [vmem:[%s6056 + $0x18] sm:$0xff]
        %v6061 = vld [vmem:[%s6056 + $0x20] sm:$0xff]
        %v6062 = vld [vmem:[%s6056 + $0x28] sm:$0xff]
        %v6063 = vld [vmem:[%s6056 + $0x30] sm:$0xff]
        %v6064 = vld [vmem:[%s6056 + $0x38] sm:$0xff]
        %v6065 = vld [vmem:[%s6056 + $0x40] sm:$0xff]
        %v6066 = vld [vmem:[%s6056 + $0x48] sm:$0xff]
        %v6067 = vld [vmem:[%s6056 + $0x50] sm:$0xff]
        %v6068 = vld [vmem:[%s6056 + $0x58] sm:$0xff]
        %v6069 = vld [vmem:[%s6056 + $0x60] sm:$0xff]
        %v6070 = vld [vmem:[%s6056 + $0x68] sm:$0xff]
        %v6071 = vld [vmem:[%s6056 + $0x70] sm:$0xff]
        %v6072 = vld [vmem:[%s6056 + $0x78] sm:$0xff]
        %v6073 = vld [vmem:[%s6056 + $0x80] sm:$0xff]
        %v6074 = vld [vmem:[%s6056 + $0x88] sm:$0xff]
        %v6075 = vld [vmem:[%s6056 + $0x90] sm:$0xff]
        %v6076 = vld [vmem:[%s6056 + $0x98] sm:$0xff]
        %v6077 = vld [vmem:[%s6056 + $0xa0] sm:$0xff]
        %v6078 = vld [vmem:[%s6056 + $0xa8] sm:$0xff]
        %v6079 = vld [vmem:[%s6056 + $0xb0] sm:$0xff]
        %v6080 = vld [vmem:[%s6056 + $0xb8] sm:$0xff]
        %v6081 = vld [vmem:[%s6056 + $0xc0] sm:$0xff]
        %v6082 = vld [vmem:[%s6056 + $0xc8] sm:$0xff]
        %v6083 = vld [vmem:[%s6056 + $0xd0] sm:$0xff]
        %v6084 = vld [vmem:[%s6056 + $0xd8] sm:$0xff]
        %v6085 = vld [vmem:[%s6056 + $0xe0] sm:$0xff]
        %v6086 = vld [vmem:[%s6056 + $0xe8] sm:$0xff]
        %v6087 = vld [vmem:[%s6056 + $0xf0] sm:$0xff]
        %v6088 = vld [vmem:[%s6056 + $0xf8] sm:$0xff]
        %v6089 = vld [vmem:[%s6056 + $0x100] sm:$0xff]
        %v6090 = vld [vmem:[%s6056 + $0x108] sm:$0xff]
        %v6091 = vld [vmem:[%s6056 + $0x110] sm:$0xff]
        %v6092 = vld [vmem:[%s6056 + $0x118] sm:$0xff]
        %v6093 = vld [vmem:[%s6056 + $0x120] sm:$0xff]
        %v6094 = vld [vmem:[%s6056 + $0x128] sm:$0xff]
        %v6095 = vld [vmem:[%s6056 + $0x130] sm:$0xff]
        %v6096 = vld [vmem:[%s6056 + $0x138] sm:$0xff]
        %v6097 = vld [vmem:[%s6056 + $0x140] sm:$0xff]
        %v6098 = vld [vmem:[%s6056 + $0x148] sm:$0xff]
        %v6099 = vld [vmem:[%s6056 + $0x150] sm:$0xff]
        %v6100 = vld [vmem:[%s6056 + $0x158] sm:$0xff]
        %v6101 = vld [vmem:[%s6056 + $0x160] sm:$0xff]
        %v6102 = vld [vmem:[%s6056 + $0x168] sm:$0xff]
        %v6103 = vld [vmem:[%s6056 + $0x170] sm:$0xff]
        %v6104 = vld [vmem:[%s6056 + $0x178] sm:$0xff]
        %v6105 = vld [vmem:[%s6056 + $0x180] sm:$0xff]
        %v6106 = vld [vmem:[%s6056 + $0x188] sm:$0xff]
        %v6107 = vld [vmem:[%s6056 + $0x190] sm:$0xff]
        %v6108 = vld [vmem:[%s6056 + $0x198] sm:$0xff]
        %v6109 = vld [vmem:[%s6056 + $0x1a0] sm:$0xff]
        %v6110 = vld [vmem:[%s6056 + $0x1a8] sm:$0xff]
        %v6111 = vld [vmem:[%s6056 + $0x1b0] sm:$0xff]
        %v6112 = vld [vmem:[%s6056 + $0x1b8] sm:$0xff]
        %v6113 = vld [vmem:[%s6056 + $0x1c0] sm:$0xff]
        %v6114 = vld [vmem:[%s6056 + $0x1c8] sm:$0xff]
        %v6115 = vld [vmem:[%s6056 + $0x1d0] sm:$0xff]
        %v6116 = vld [vmem:[%s6056 + $0x1d8] sm:$0xff]
        %v6117 = vld [vmem:[%s6056 + $0x1e0] sm:$0xff]
        %v6118 = vld [vmem:[%s6056 + $0x1e8] sm:$0xff]
        %v6119 = vld [vmem:[%s6056 + $0x1f0] sm:$0xff]
        %v6120 = vld [vmem:[%s6056 + $0x1f8] sm:$0xff]
        %v6121 = vld [vmem:[%s6056 + $0x200] sm:$0xff]
        %v6122 = vld [vmem:[%s6056 + $0x208] sm:$0xff]
        %v6123 = vld [vmem:[%s6056 + $0x210] sm:$0xff]
        %v6124 = vld [vmem:[%s6056 + $0x218] sm:$0xff]
        %v6125 = vld [vmem:[%s6056 + $0x220] sm:$0xff]
        %v6126 = vld [vmem:[%s6056 + $0x228] sm:$0xff]
        %v6127 = vld [vmem:[%s6056 + $0x230] sm:$0xff]
        %v6128 = vld [vmem:[%s6056 + $0x238] sm:$0xff]
        %v6129 = vld [vmem:[%s6056 + $0x240] sm:$0xff]
        %v6130 = vld [vmem:[%s6056 + $0x248] sm:$0xff]
        %v6131 = vld [vmem:[%s6056 + $0x250] sm:$0xff]
        %v6132 = vld [vmem:[%s6056 + $0x258] sm:$0xff]
        %v6133 = vld [vmem:[%s6056 + $0x260] sm:$0xff]
        %v6134 = vld [vmem:[%s6056 + $0x268] sm:$0xff]
        %v6135 = vld [vmem:[%s6056 + $0x270] sm:$0xff]
        %v6136 = vld [vmem:[%s6056 + $0x278] sm:$0xff]
        %v6137 = vld [vmem:[%s6056 + $0x280] sm:$0xff]
        %v6138 = vld [vmem:[%s6056 + $0x288] sm:$0xff]
        %v6139 = vld [vmem:[%s6056 + $0x290] sm:$0xff]
        %v6140 = vld [vmem:[%s6056 + $0x298] sm:$0xff]
        %v6141 = vld [vmem:[%s6056 + $0x2a0] sm:$0xff]
        %v6142 = vld [vmem:[%s6056 + $0x2a8] sm:$0xff]
        %v6143 = vld [vmem:[%s6056 + $0x2b0] sm:$0xff]
        %v6144 = vld [vmem:[%s6056 + $0x2b8] sm:$0xff]
        %v6145 = vld [vmem:[%s6056 + $0x2c0] sm:$0xff]
        %v6146 = vld [vmem:[%s6056 + $0x2c8] sm:$0xff]
        %v6147 = vld [vmem:[%s6056 + $0x2d0] sm:$0xff]
        %v6148 = vld [vmem:[%s6056 + $0x2d8] sm:$0xff]
        %v6149 = vld [vmem:[%s6056 + $0x2e0] sm:$0xff]
        %v6150 = vld [vmem:[%s6056 + $0x2e8] sm:$0xff]
        %v6151 = vld [vmem:[%s6056 + $0x2f0] sm:$0xff]
        %v6152 = vld [vmem:[%s6056 + $0x2f8] sm:$0xff]
        %v6153 = vld [vmem:[%s6056 + $0x300] sm:$0xff]
        %v6154 = vld [vmem:[%s6056 + $0x308] sm:$0xff]
        %v6155 = vld [vmem:[%s6056 + $0x310] sm:$0xff]
        %v6156 = vld [vmem:[%s6056 + $0x318] sm:$0xff]
        %v6157 = vld [vmem:[%s6056 + $0x320] sm:$0xff]
        %v6158 = vld [vmem:[%s6056 + $0x328] sm:$0xff]
        %v6159 = vld [vmem:[%s6056 + $0x330] sm:$0xff]
        %v6160 = vld [vmem:[%s6056 + $0x338] sm:$0xff]
        %v6161 = vld [vmem:[%s6056 + $0x340] sm:$0xff]
        %v6162 = vld [vmem:[%s6056 + $0x348] sm:$0xff]
        %v6163 = vld [vmem:[%s6056 + $0x350] sm:$0xff]
        %v6164 = vld [vmem:[%s6056 + $0x358] sm:$0xff]
        %v6165 = vld [vmem:[%s6056 + $0x360] sm:$0xff]
        %v6166 = vld [vmem:[%s6056 + $0x368] sm:$0xff]
        %v6167 = vld [vmem:[%s6056 + $0x370] sm:$0xff]
        %v6168 = vld [vmem:[%s6056 + $0x378] sm:$0xff]
        %v6169 = vld [vmem:[%s6056 + $0x380] sm:$0xff]
        %v6170 = vld [vmem:[%s6056 + $0x388] sm:$0xff]
        %v6171 = vld [vmem:[%s6056 + $0x390] sm:$0xff]
        %v6172 = vld [vmem:[%s6056 + $0x398] sm:$0xff]
        %v6173 = vld [vmem:[%s6056 + $0x3a0] sm:$0xff]
        %v6174 = vld [vmem:[%s6056 + $0x3a8] sm:$0xff]
        %v6175 = vld [vmem:[%s6056 + $0x3b0] sm:$0xff]
        %v6176 = vld [vmem:[%s6056 + $0x3b8] sm:$0xff]
        %v6177 = vld [vmem:[%s6056 + $0x3c0] sm:$0xff]
        %v6178 = vld [vmem:[%s6056 + $0x3c8] sm:$0xff]
        %v6179 = vld [vmem:[%s6056 + $0x3d0] sm:$0xff]
        %v6180 = vld [vmem:[%s6056 + $0x3d8] sm:$0xff]
        %v6181 = vld [vmem:[%s6056 + $0x3e0] sm:$0xff]
        %v6182 = vld [vmem:[%s6056 + $0x3e8] sm:$0xff]
        %v6183 = vld [vmem:[%s6056 + $0x3f0] sm:$0xff]
        %v6184 = vld [vmem:[%s6056 + $0x3f8] sm:$0xff]
        %v6185 = vld [vmem:[%s6056 + $0x400] sm:$0xff]
        %v6186 = vld [vmem:[%s6056 + $0x408] sm:$0xff]
        %v6187 = vld [vmem:[%s6056 + $0x410] sm:$0xff]
        %v6188 = vld [vmem:[%s6056 + $0x418] sm:$0xff]
        %v6189 = vld [vmem:[%s6056 + $0x420] sm:$0xff]
        %v6190 = vld [vmem:[%s6056 + $0x428] sm:$0xff]
        %v6191 = vld [vmem:[%s6056 + $0x430] sm:$0xff]
        %v6192 = vld [vmem:[%s6056 + $0x438] sm:$0xff]
        %v6193 = vld [vmem:[%s6056 + $0x440] sm:$0xff]
        %v6194 = vld [vmem:[%s6056 + $0x448] sm:$0xff]
        %v6195 = vld [vmem:[%s6056 + $0x450] sm:$0xff]
        %v6196 = vld [vmem:[%s6056 + $0x458] sm:$0xff]
        %v6197 = vld [vmem:[%s6056 + $0x460] sm:$0xff]
        %v6198 = vld [vmem:[%s6056 + $0x468] sm:$0xff]
        %v6199 = vld [vmem:[%s6056 + $0x470] sm:$0xff]
        %v6200 = vld [vmem:[%s6056 + $0x478] sm:$0xff]
        %v6201 = vld [vmem:[%s6056 + $0x480] sm:$0xff]
        %v6202 = vld [vmem:[%s6056 + $0x488] sm:$0xff]
        %v6203 = vld [vmem:[%s6056 + $0x490] sm:$0xff]
        %v6204 = vld [vmem:[%s6056 + $0x498] sm:$0xff]
        %v6205 = vld [vmem:[%s6056 + $0x4a0] sm:$0xff]
        %v6206 = vld [vmem:[%s6056 + $0x4a8] sm:$0xff]
        %v6207 = vld [vmem:[%s6056 + $0x4b0] sm:$0xff]
        %v6208 = vld [vmem:[%s6056 + $0x4b8] sm:$0xff]
        %v6209 = vld [vmem:[%s6056 + $0x4c0] sm:$0xff]
        %v6210 = vld [vmem:[%s6056 + $0x4c8] sm:$0xff]
        %v6211 = vld [vmem:[%s6056 + $0x4d0] sm:$0xff]
        %v6212 = vld [vmem:[%s6056 + $0x4d8] sm:$0xff]
        %v6213 = vld [vmem:[%s6056 + $0x4e0] sm:$0xff]
        %v6214 = vld [vmem:[%s6056 + $0x4e8] sm:$0xff]
        %v6215 = vld [vmem:[%s6056 + $0x4f0] sm:$0xff]
        %v6216 = vld [vmem:[%s6056 + $0x4f8] sm:$0xff]
        %v6217 = vld [vmem:[%s6056 + $0x500] sm:$0xff]
        %v6218 = vld [vmem:[%s6056 + $0x508] sm:$0xff]
        %v6219 = vld [vmem:[%s6056 + $0x510] sm:$0xff]
        %v6220 = vld [vmem:[%s6056 + $0x518] sm:$0xff]
        %v6221 = vld [vmem:[%s6056 + $0x520] sm:$0xff]
        %v6222 = vld [vmem:[%s6056 + $0x528] sm:$0xff]
        %v6223 = vld [vmem:[%s6056 + $0x530] sm:$0xff]
        %v6224 = vld [vmem:[%s6056 + $0x538] sm:$0xff]
        %v6225 = vld [vmem:[%s6056 + $0x540] sm:$0xff]
        %v6226 = vld [vmem:[%s6056 + $0x548] sm:$0xff]
        %v6227 = vld [vmem:[%s6056 + $0x550] sm:$0xff]
        %v6228 = vld [vmem:[%s6056 + $0x558] sm:$0xff]
        %v6229 = vld [vmem:[%s6056 + $0x560] sm:$0xff]
        %v6230 = vld [vmem:[%s6056 + $0x568] sm:$0xff]
        %v6231 = vld [vmem:[%s6056 + $0x570] sm:$0xff]
        %v6232 = vld [vmem:[%s6056 + $0x578] sm:$0xff]
        %v6233 = vld [vmem:[%s6056 + $0x580] sm:$0xff]
        %v6234 = vld [vmem:[%s6056 + $0x588] sm:$0xff]
        %v6235 = vld [vmem:[%s6056 + $0x590] sm:$0xff]
        %v6236 = vld [vmem:[%s6056 + $0x598] sm:$0xff]
        %v6237 = vld [vmem:[%s6056 + $0x5a0] sm:$0xff]
        %v6238 = vld [vmem:[%s6056 + $0x5a8] sm:$0xff]
        %v6239 = vld [vmem:[%s6056 + $0x5b0] sm:$0xff]
        %v6240 = vld [vmem:[%s6056 + $0x5b8] sm:$0xff]
        %v6241 = vld [vmem:[%s6056 + $0x5c0] sm:$0xff]
        %v6242 = vld [vmem:[%s6056 + $0x5c8] sm:$0xff]
        %v6243 = vld [vmem:[%s6056 + $0x5d0] sm:$0xff]
        %v6244 = vld [vmem:[%s6056 + $0x5d8] sm:$0xff]
        %v6245 = vld [vmem:[%s6056 + $0x5e0] sm:$0xff]
        %v6246 = vld [vmem:[%s6056 + $0x5e8] sm:$0xff]
        %v6247 = vld [vmem:[%s6056 + $0x5f0] sm:$0xff]
        %v6248 = vld [vmem:[%s6056 + $0x5f8] sm:$0xff]
        %v6249 = vld [vmem:[%s6056 + $0x600] sm:$0xff]
        %v6250 = vld [vmem:[%s6056 + $0x608] sm:$0xff]
        %v6251 = vld [vmem:[%s6056 + $0x610] sm:$0xff]
        %v6252 = vld [vmem:[%s6056 + $0x618] sm:$0xff]
        %v6253 = vld [vmem:[%s6056 + $0x620] sm:$0xff]
        %v6254 = vld [vmem:[%s6056 + $0x628] sm:$0xff]
        %v6255 = vld [vmem:[%s6056 + $0x630] sm:$0xff]
        %v6256 = vld [vmem:[%s6056 + $0x638] sm:$0xff]
        %v6257 = vld [vmem:[%s6056 + $0x640] sm:$0xff]
        %v6258 = vld [vmem:[%s6056 + $0x648] sm:$0xff]
        %v6259 = vld [vmem:[%s6056 + $0x650] sm:$0xff]
        %v6260 = vld [vmem:[%s6056 + $0x658] sm:$0xff]
        %v6261 = vld [vmem:[%s6056 + $0x660] sm:$0xff]
        %v6262 = vld [vmem:[%s6056 + $0x668] sm:$0xff]
        %v6263 = vld [vmem:[%s6056 + $0x670] sm:$0xff]
        %v6264 = vld [vmem:[%s6056 + $0x678] sm:$0xff]
        %v6265 = vld [vmem:[%s6056 + $0x680] sm:$0xff]
        %v6266 = vld [vmem:[%s6056 + $0x688] sm:$0xff]
        %v6267 = vld [vmem:[%s6056 + $0x690] sm:$0xff]
        %v6268 = vld [vmem:[%s6056 + $0x698] sm:$0xff]
        %v6269 = vld [vmem:[%s6056 + $0x6a0] sm:$0xff]
        %v6270 = vld [vmem:[%s6056 + $0x6a8] sm:$0xff]
        %v6271 = vld [vmem:[%s6056 + $0x6b0] sm:$0xff]
        %v6272 = vld [vmem:[%s6056 + $0x6b8] sm:$0xff]
        %v6273 = vld [vmem:[%s6056 + $0x6c0] sm:$0xff]
        %v6274 = vld [vmem:[%s6056 + $0x6c8] sm:$0xff]
        %v6275 = vld [vmem:[%s6056 + $0x6d0] sm:$0xff]
        %v6276 = vld [vmem:[%s6056 + $0x6d8] sm:$0xff]
        %v6277 = vld [vmem:[%s6056 + $0x6e0] sm:$0xff]
        %v6278 = vld [vmem:[%s6056 + $0x6e8] sm:$0xff]
        %v6279 = vld [vmem:[%s6056 + $0x6f0] sm:$0xff]
        %v6280 = vld [vmem:[%s6056 + $0x6f8] sm:$0xff]
        %s6281 = smul.u32 %s35, 16
        %s6282 = scalar_lea.vmem [#allocation13], %s6281
        %v6283 = vld [vmem:[%s6282] sm:$0xff]
        %v6284 = vld [vmem:[%s6282 + $0x8] sm:$0xff]
        %v6287 = vlaneseq
        %v6288 = vshrl.u32 %v6287, 7
        %v6289 = vsub.s32 0, %v6288
        %v6290 = vrot.slane %v6283, %v6289
        %v6291 = vlaneseq
        %v6292 = vshrl.u32 %v6291, 7
        %v6293 = vsub.s32 1, %v6292
        %v6294 = vrot.slane %v6283, %v6293
        %v6295 = vlaneseq
        %v6296 = vshrl.u32 %v6295, 7
        %v6297 = vsub.s32 2, %v6296
        %v6298 = vrot.slane %v6283, %v6297
        %v6299 = vlaneseq
        %v6300 = vshrl.u32 %v6299, 7
        %v6301 = vsub.s32 3, %v6300
        %v6302 = vrot.slane %v6283, %v6301
        %v6303 = vlaneseq
        %v6304 = vshrl.u32 %v6303, 7
        %v6305 = vsub.s32 4, %v6304
        %v6306 = vrot.slane %v6283, %v6305
        %v6307 = vlaneseq
        %v6308 = vshrl.u32 %v6307, 7
        %v6309 = vsub.s32 5, %v6308
        %v6310 = vrot.slane %v6283, %v6309
        %v6311 = vlaneseq
        %v6312 = vshrl.u32 %v6311, 7
        %v6313 = vsub.s32 6, %v6312
        %v6314 = vrot.slane %v6283, %v6313
        %v6315 = vlaneseq
        %v6316 = vshrl.u32 %v6315, 7
        %v6317 = vsub.s32 7, %v6316
        %v6318 = vrot.slane %v6283, %v6317
        %v6319 = vlaneseq
        %v6320 = vshrl.u32 %v6319, 7
        %v6321 = vsub.s32 0, %v6320
        %v6322 = vrot.slane %v6284, %v6321
        %v6323 = vlaneseq
        %v6324 = vshrl.u32 %v6323, 7
        %v6325 = vsub.s32 1, %v6324
        %v6326 = vrot.slane %v6284, %v6325
        %v6327 = vlaneseq
        %v6328 = vshrl.u32 %v6327, 7
        %v6329 = vsub.s32 2, %v6328
        %v6330 = vrot.slane %v6284, %v6329
        %v6331 = vlaneseq
        %v6332 = vshrl.u32 %v6331, 7
        %v6333 = vsub.s32 3, %v6332
        %v6334 = vrot.slane %v6284, %v6333
        %v6335 = vlaneseq
        %v6336 = vshrl.u32 %v6335, 7
        %v6337 = vsub.s32 4, %v6336
        %v6338 = vrot.slane %v6284, %v6337
        %v6339 = vlaneseq
        %v6340 = vshrl.u32 %v6339, 7
        %v6341 = vsub.s32 5, %v6340
        %v6342 = vrot.slane %v6284, %v6341
        %v6343 = vlaneseq
        %v6344 = vshrl.u32 %v6343, 7
        %v6345 = vsub.s32 6, %v6344
        %v6346 = vrot.slane %v6284, %v6345
        %v6347 = vlaneseq
        %v6348 = vshrl.u32 %v6347, 7
        %v6349 = vsub.s32 7, %v6348
        %v6350 = vrot.slane %v6284, %v6349
        %v6591 = vunpack.c.l.b16 %v6057
        %v6592 = vunpack.c.h.b16 %v6057
        %v6593 = vunpack.c.l.b16 %v6058
        %v6594 = vunpack.c.h.b16 %v6058
        %v6595 = vunpack.c.l.b16 %v6059
        %v6596 = vunpack.c.h.b16 %v6059
        %v6597 = vunpack.c.l.b16 %v6060
        %v6598 = vunpack.c.h.b16 %v6060
        %v6599 = vunpack.c.l.b16 %v6061
        %v6600 = vunpack.c.h.b16 %v6061
        %v6601 = vunpack.c.l.b16 %v6062
        %v6602 = vunpack.c.h.b16 %v6062
        %v6603 = vunpack.c.l.b16 %v6063
        %v6604 = vunpack.c.h.b16 %v6063
        %v6605 = vunpack.c.l.b16 %v6064
        %v6606 = vunpack.c.h.b16 %v6064
        %v6607 = vunpack.c.l.b16 %v6065
        %v6608 = vunpack.c.h.b16 %v6065
        %v6609 = vunpack.c.l.b16 %v6066
        %v6610 = vunpack.c.h.b16 %v6066
        %v6611 = vunpack.c.l.b16 %v6067
        %v6612 = vunpack.c.h.b16 %v6067
        %v6613 = vunpack.c.l.b16 %v6068
        %v6614 = vunpack.c.h.b16 %v6068
        %v6615 = vunpack.c.l.b16 %v6069
        %v6616 = vunpack.c.h.b16 %v6069
        %v6617 = vunpack.c.l.b16 %v6070
        %v6618 = vunpack.c.h.b16 %v6070
        %v6619 = vunpack.c.l.b16 %v6071
        %v6620 = vunpack.c.h.b16 %v6071
        %v6621 = vunpack.c.l.b16 %v6072
        %v6622 = vunpack.c.h.b16 %v6072
        %v6623 = vunpack.c.l.b16 %v6073
        %v6624 = vunpack.c.h.b16 %v6073
        %v6625 = vunpack.c.l.b16 %v6074
        %v6626 = vunpack.c.h.b16 %v6074
        %v6627 = vunpack.c.l.b16 %v6075
        %v6628 = vunpack.c.h.b16 %v6075
        %v6629 = vunpack.c.l.b16 %v6076
        %v6630 = vunpack.c.h.b16 %v6076
        %v6631 = vunpack.c.l.b16 %v6077
        %v6632 = vunpack.c.h.b16 %v6077
        %v6633 = vunpack.c.l.b16 %v6078
        %v6634 = vunpack.c.h.b16 %v6078
        %v6635 = vunpack.c.l.b16 %v6079
        %v6636 = vunpack.c.h.b16 %v6079
        %v6637 = vunpack.c.l.b16 %v6080
        %v6638 = vunpack.c.h.b16 %v6080
        %v6639 = vunpack.c.l.b16 %v6081
        %v6640 = vunpack.c.h.b16 %v6081
        %v6641 = vunpack.c.l.b16 %v6082
        %v6642 = vunpack.c.h.b16 %v6082
        %v6643 = vunpack.c.l.b16 %v6083
        %v6644 = vunpack.c.h.b16 %v6083
        %v6645 = vunpack.c.l.b16 %v6084
        %v6646 = vunpack.c.h.b16 %v6084
        %v6647 = vunpack.c.l.b16 %v6085
        %v6648 = vunpack.c.h.b16 %v6085
        %v6649 = vunpack.c.l.b16 %v6086
        %v6650 = vunpack.c.h.b16 %v6086
        %v6651 = vunpack.c.l.b16 %v6087
        %v6652 = vunpack.c.h.b16 %v6087
        %v6653 = vunpack.c.l.b16 %v6088
        %v6654 = vunpack.c.h.b16 %v6088
        %v6655 = vunpack.c.l.b16 %v6089
        %v6656 = vunpack.c.h.b16 %v6089
        %v6657 = vunpack.c.l.b16 %v6090
        %v6658 = vunpack.c.h.b16 %v6090
        %v6659 = vunpack.c.l.b16 %v6091
        %v6660 = vunpack.c.h.b16 %v6091
        %v6661 = vunpack.c.l.b16 %v6092
        %v6662 = vunpack.c.h.b16 %v6092
        %v6663 = vunpack.c.l.b16 %v6093
        %v6664 = vunpack.c.h.b16 %v6093
        %v6665 = vunpack.c.l.b16 %v6094
        %v6666 = vunpack.c.h.b16 %v6094
        %v6667 = vunpack.c.l.b16 %v6095
        %v6668 = vunpack.c.h.b16 %v6095
        %v6669 = vunpack.c.l.b16 %v6096
        %v6670 = vunpack.c.h.b16 %v6096
        %v6671 = vunpack.c.l.b16 %v6097
        %v6672 = vunpack.c.h.b16 %v6097
        %v6673 = vunpack.c.l.b16 %v6098
        %v6674 = vunpack.c.h.b16 %v6098
        %v6675 = vunpack.c.l.b16 %v6099
        %v6676 = vunpack.c.h.b16 %v6099
        %v6677 = vunpack.c.l.b16 %v6100
        %v6678 = vunpack.c.h.b16 %v6100
        %v6679 = vunpack.c.l.b16 %v6101
        %v6680 = vunpack.c.h.b16 %v6101
        %v6681 = vunpack.c.l.b16 %v6102
        %v6682 = vunpack.c.h.b16 %v6102
        %v6683 = vunpack.c.l.b16 %v6103
        %v6684 = vunpack.c.h.b16 %v6103
        %v6685 = vunpack.c.l.b16 %v6104
        %v6686 = vunpack.c.h.b16 %v6104
        %v6687 = vunpack.c.l.b16 %v6105
        %v6688 = vunpack.c.h.b16 %v6105
        %v6689 = vunpack.c.l.b16 %v6106
        %v6690 = vunpack.c.h.b16 %v6106
        %v6691 = vunpack.c.l.b16 %v6107
        %v6692 = vunpack.c.h.b16 %v6107
        %v6693 = vunpack.c.l.b16 %v6108
        %v6694 = vunpack.c.h.b16 %v6108
        %v6695 = vunpack.c.l.b16 %v6109
        %v6696 = vunpack.c.h.b16 %v6109
        %v6697 = vunpack.c.l.b16 %v6110
        %v6698 = vunpack.c.h.b16 %v6110
        %v6699 = vunpack.c.l.b16 %v6111
        %v6700 = vunpack.c.h.b16 %v6111
        %v6701 = vunpack.c.l.b16 %v6112
        %v6702 = vunpack.c.h.b16 %v6112
        %v6703 = vunpack.c.l.b16 %v6113
        %v6704 = vunpack.c.h.b16 %v6113
        %v6705 = vunpack.c.l.b16 %v6114
        %v6706 = vunpack.c.h.b16 %v6114
        %v6707 = vunpack.c.l.b16 %v6115
        %v6708 = vunpack.c.h.b16 %v6115
        %v6709 = vunpack.c.l.b16 %v6116
        %v6710 = vunpack.c.h.b16 %v6116
        %v6711 = vunpack.c.l.b16 %v6117
        %v6712 = vunpack.c.h.b16 %v6117
        %v6713 = vunpack.c.l.b16 %v6118
        %v6714 = vunpack.c.h.b16 %v6118
        %v6715 = vunpack.c.l.b16 %v6119
        %v6716 = vunpack.c.h.b16 %v6119
        %v6717 = vunpack.c.l.b16 %v6120
        %v6718 = vunpack.c.h.b16 %v6120
        %v6719 = vunpack.c.l.b16 %v6121
        %v6720 = vunpack.c.h.b16 %v6121
        %v6721 = vunpack.c.l.b16 %v6122
        %v6722 = vunpack.c.h.b16 %v6122
        %v6723 = vunpack.c.l.b16 %v6123
        %v6724 = vunpack.c.h.b16 %v6123
        %v6725 = vunpack.c.l.b16 %v6124
        %v6726 = vunpack.c.h.b16 %v6124
        %v6727 = vunpack.c.l.b16 %v6125
        %v6728 = vunpack.c.h.b16 %v6125
        %v6729 = vunpack.c.l.b16 %v6126
        %v6730 = vunpack.c.h.b16 %v6126
        %v6731 = vunpack.c.l.b16 %v6127
        %v6732 = vunpack.c.h.b16 %v6127
        %v6733 = vunpack.c.l.b16 %v6128
        %v6734 = vunpack.c.h.b16 %v6128
        %v6735 = vunpack.c.l.b16 %v6129
        %v6736 = vunpack.c.h.b16 %v6129
        %v6737 = vunpack.c.l.b16 %v6130
        %v6738 = vunpack.c.h.b16 %v6130
        %v6739 = vunpack.c.l.b16 %v6131
        %v6740 = vunpack.c.h.b16 %v6131
        %v6741 = vunpack.c.l.b16 %v6132
        %v6742 = vunpack.c.h.b16 %v6132
        %v6743 = vunpack.c.l.b16 %v6133
        %v6744 = vunpack.c.h.b16 %v6133
        %v6745 = vunpack.c.l.b16 %v6134
        %v6746 = vunpack.c.h.b16 %v6134
        %v6747 = vunpack.c.l.b16 %v6135
        %v6748 = vunpack.c.h.b16 %v6135
        %v6749 = vunpack.c.l.b16 %v6136
        %v6750 = vunpack.c.h.b16 %v6136
        %v6751 = vunpack.c.l.b16 %v6137
        %v6752 = vunpack.c.h.b16 %v6137
        %v6753 = vunpack.c.l.b16 %v6138
        %v6754 = vunpack.c.h.b16 %v6138
        %v6755 = vunpack.c.l.b16 %v6139
        %v6756 = vunpack.c.h.b16 %v6139
        %v6757 = vunpack.c.l.b16 %v6140
        %v6758 = vunpack.c.h.b16 %v6140
        %v6759 = vunpack.c.l.b16 %v6141
        %v6760 = vunpack.c.h.b16 %v6141
        %v6761 = vunpack.c.l.b16 %v6142
        %v6762 = vunpack.c.h.b16 %v6142
        %v6763 = vunpack.c.l.b16 %v6143
        %v6764 = vunpack.c.h.b16 %v6143
        %v6765 = vunpack.c.l.b16 %v6144
        %v6766 = vunpack.c.h.b16 %v6144
        %v6767 = vunpack.c.l.b16 %v6145
        %v6768 = vunpack.c.h.b16 %v6145
        %v6769 = vunpack.c.l.b16 %v6146
        %v6770 = vunpack.c.h.b16 %v6146
        %v6771 = vunpack.c.l.b16 %v6147
        %v6772 = vunpack.c.h.b16 %v6147
        %v6773 = vunpack.c.l.b16 %v6148
        %v6774 = vunpack.c.h.b16 %v6148
        %v6775 = vunpack.c.l.b16 %v6149
        %v6776 = vunpack.c.h.b16 %v6149
        %v6777 = vunpack.c.l.b16 %v6150
        %v6778 = vunpack.c.h.b16 %v6150
        %v6779 = vunpack.c.l.b16 %v6151
        %v6780 = vunpack.c.h.b16 %v6151
        %v6781 = vunpack.c.l.b16 %v6152
        %v6782 = vunpack.c.h.b16 %v6152
        %v6783 = vunpack.c.l.b16 %v6153
        %v6784 = vunpack.c.h.b16 %v6153
        %v6785 = vunpack.c.l.b16 %v6154
        %v6786 = vunpack.c.h.b16 %v6154
        %v6787 = vunpack.c.l.b16 %v6155
        %v6788 = vunpack.c.h.b16 %v6155
        %v6789 = vunpack.c.l.b16 %v6156
        %v6790 = vunpack.c.h.b16 %v6156
        %v6791 = vunpack.c.l.b16 %v6157
        %v6792 = vunpack.c.h.b16 %v6157
        %v6793 = vunpack.c.l.b16 %v6158
        %v6794 = vunpack.c.h.b16 %v6158
        %v6795 = vunpack.c.l.b16 %v6159
        %v6796 = vunpack.c.h.b16 %v6159
        %v6797 = vunpack.c.l.b16 %v6160
        %v6798 = vunpack.c.h.b16 %v6160
        %v6799 = vunpack.c.l.b16 %v6161
        %v6800 = vunpack.c.h.b16 %v6161
        %v6801 = vunpack.c.l.b16 %v6162
        %v6802 = vunpack.c.h.b16 %v6162
        %v6803 = vunpack.c.l.b16 %v6163
        %v6804 = vunpack.c.h.b16 %v6163
        %v6805 = vunpack.c.l.b16 %v6164
        %v6806 = vunpack.c.h.b16 %v6164
        %v6807 = vunpack.c.l.b16 %v6165
        %v6808 = vunpack.c.h.b16 %v6165
        %v6809 = vunpack.c.l.b16 %v6166
        %v6810 = vunpack.c.h.b16 %v6166
        %v6811 = vunpack.c.l.b16 %v6167
        %v6812 = vunpack.c.h.b16 %v6167
        %v6813 = vunpack.c.l.b16 %v6168
        %v6814 = vunpack.c.h.b16 %v6168
        %v6815 = vunpack.c.l.b16 %v6169
        %v6816 = vunpack.c.h.b16 %v6169
        %v6817 = vunpack.c.l.b16 %v6170
        %v6818 = vunpack.c.h.b16 %v6170
        %v6819 = vunpack.c.l.b16 %v6171
        %v6820 = vunpack.c.h.b16 %v6171
        %v6821 = vunpack.c.l.b16 %v6172
        %v6822 = vunpack.c.h.b16 %v6172
        %v6823 = vunpack.c.l.b16 %v6173
        %v6824 = vunpack.c.h.b16 %v6173
        %v6825 = vunpack.c.l.b16 %v6174
        %v6826 = vunpack.c.h.b16 %v6174
        %v6827 = vunpack.c.l.b16 %v6175
        %v6828 = vunpack.c.h.b16 %v6175
        %v6829 = vunpack.c.l.b16 %v6176
        %v6830 = vunpack.c.h.b16 %v6176
        %v6831 = vunpack.c.l.b16 %v6177
        %v6832 = vunpack.c.h.b16 %v6177
        %v6833 = vunpack.c.l.b16 %v6178
        %v6834 = vunpack.c.h.b16 %v6178
        %v6835 = vunpack.c.l.b16 %v6179
        %v6836 = vunpack.c.h.b16 %v6179
        %v6837 = vunpack.c.l.b16 %v6180
        %v6838 = vunpack.c.h.b16 %v6180
        %v6839 = vunpack.c.l.b16 %v6181
        %v6840 = vunpack.c.h.b16 %v6181
        %v6841 = vunpack.c.l.b16 %v6182
        %v6842 = vunpack.c.h.b16 %v6182
        %v6843 = vunpack.c.l.b16 %v6183
        %v6844 = vunpack.c.h.b16 %v6183
        %v6845 = vunpack.c.l.b16 %v6184
        %v6846 = vunpack.c.h.b16 %v6184
        %v6847 = vunpack.c.l.b16 %v6185
        %v6848 = vunpack.c.h.b16 %v6185
        %v6849 = vunpack.c.l.b16 %v6186
        %v6850 = vunpack.c.h.b16 %v6186
        %v6851 = vunpack.c.l.b16 %v6187
        %v6852 = vunpack.c.h.b16 %v6187
        %v6853 = vunpack.c.l.b16 %v6188
        %v6854 = vunpack.c.h.b16 %v6188
        %v6855 = vunpack.c.l.b16 %v6189
        %v6856 = vunpack.c.h.b16 %v6189
        %v6857 = vunpack.c.l.b16 %v6190
        %v6858 = vunpack.c.h.b16 %v6190
        %v6859 = vunpack.c.l.b16 %v6191
        %v6860 = vunpack.c.h.b16 %v6191
        %v6861 = vunpack.c.l.b16 %v6192
        %v6862 = vunpack.c.h.b16 %v6192
        %v6863 = vunpack.c.l.b16 %v6193
        %v6864 = vunpack.c.h.b16 %v6193
        %v6865 = vunpack.c.l.b16 %v6194
        %v6866 = vunpack.c.h.b16 %v6194
        %v6867 = vunpack.c.l.b16 %v6195
        %v6868 = vunpack.c.h.b16 %v6195
        %v6869 = vunpack.c.l.b16 %v6196
        %v6870 = vunpack.c.h.b16 %v6196
        %v6871 = vunpack.c.l.b16 %v6197
        %v6872 = vunpack.c.h.b16 %v6197
        %v6873 = vunpack.c.l.b16 %v6198
        %v6874 = vunpack.c.h.b16 %v6198
        %v6875 = vunpack.c.l.b16 %v6199
        %v6876 = vunpack.c.h.b16 %v6199
        %v6877 = vunpack.c.l.b16 %v6200
        %v6878 = vunpack.c.h.b16 %v6200
        %v6879 = vunpack.c.l.b16 %v6201
        %v6880 = vunpack.c.h.b16 %v6201
        %v6881 = vunpack.c.l.b16 %v6202
        %v6882 = vunpack.c.h.b16 %v6202
        %v6883 = vunpack.c.l.b16 %v6203
        %v6884 = vunpack.c.h.b16 %v6203
        %v6885 = vunpack.c.l.b16 %v6204
        %v6886 = vunpack.c.h.b16 %v6204
        %v6887 = vunpack.c.l.b16 %v6205
        %v6888 = vunpack.c.h.b16 %v6205
        %v6889 = vunpack.c.l.b16 %v6206
        %v6890 = vunpack.c.h.b16 %v6206
        %v6891 = vunpack.c.l.b16 %v6207
        %v6892 = vunpack.c.h.b16 %v6207
        %v6893 = vunpack.c.l.b16 %v6208
        %v6894 = vunpack.c.h.b16 %v6208
        %v6895 = vunpack.c.l.b16 %v6209
        %v6896 = vunpack.c.h.b16 %v6209
        %v6897 = vunpack.c.l.b16 %v6210
        %v6898 = vunpack.c.h.b16 %v6210
        %v6899 = vunpack.c.l.b16 %v6211
        %v6900 = vunpack.c.h.b16 %v6211
        %v6901 = vunpack.c.l.b16 %v6212
        %v6902 = vunpack.c.h.b16 %v6212
        %v6903 = vunpack.c.l.b16 %v6213
        %v6904 = vunpack.c.h.b16 %v6213
        %v6905 = vunpack.c.l.b16 %v6214
        %v6906 = vunpack.c.h.b16 %v6214
        %v6907 = vunpack.c.l.b16 %v6215
        %v6908 = vunpack.c.h.b16 %v6215
        %v6909 = vunpack.c.l.b16 %v6216
        %v6910 = vunpack.c.h.b16 %v6216
        %v6911 = vunpack.c.l.b16 %v6217
        %v6912 = vunpack.c.h.b16 %v6217
        %v6913 = vunpack.c.l.b16 %v6218
        %v6914 = vunpack.c.h.b16 %v6218
        %v6915 = vunpack.c.l.b16 %v6219
        %v6916 = vunpack.c.h.b16 %v6219
        %v6917 = vunpack.c.l.b16 %v6220
        %v6918 = vunpack.c.h.b16 %v6220
        %v6919 = vunpack.c.l.b16 %v6221
        %v6920 = vunpack.c.h.b16 %v6221
        %v6921 = vunpack.c.l.b16 %v6222
        %v6922 = vunpack.c.h.b16 %v6222
        %v6923 = vunpack.c.l.b16 %v6223
        %v6924 = vunpack.c.h.b16 %v6223
        %v6925 = vunpack.c.l.b16 %v6224
        %v6926 = vunpack.c.h.b16 %v6224
        %v6927 = vunpack.c.l.b16 %v6225
        %v6928 = vunpack.c.h.b16 %v6225
        %v6929 = vunpack.c.l.b16 %v6226
        %v6930 = vunpack.c.h.b16 %v6226
        %v6931 = vunpack.c.l.b16 %v6227
        %v6932 = vunpack.c.h.b16 %v6227
        %v6933 = vunpack.c.l.b16 %v6228
        %v6934 = vunpack.c.h.b16 %v6228
        %v6935 = vunpack.c.l.b16 %v6229
        %v6936 = vunpack.c.h.b16 %v6229
        %v6937 = vunpack.c.l.b16 %v6230
        %v6938 = vunpack.c.h.b16 %v6230
        %v6939 = vunpack.c.l.b16 %v6231
        %v6940 = vunpack.c.h.b16 %v6231
        %v6941 = vunpack.c.l.b16 %v6232
        %v6942 = vunpack.c.h.b16 %v6232
        %v6943 = vunpack.c.l.b16 %v6233
        %v6944 = vunpack.c.h.b16 %v6233
        %v6945 = vunpack.c.l.b16 %v6234
        %v6946 = vunpack.c.h.b16 %v6234
        %v6947 = vunpack.c.l.b16 %v6235
        %v6948 = vunpack.c.h.b16 %v6235
        %v6949 = vunpack.c.l.b16 %v6236
        %v6950 = vunpack.c.h.b16 %v6236
        %v6951 = vunpack.c.l.b16 %v6237
        %v6952 = vunpack.c.h.b16 %v6237
        %v6953 = vunpack.c.l.b16 %v6238
        %v6954 = vunpack.c.h.b16 %v6238
        %v6955 = vunpack.c.l.b16 %v6239
        %v6956 = vunpack.c.h.b16 %v6239
        %v6957 = vunpack.c.l.b16 %v6240
        %v6958 = vunpack.c.h.b16 %v6240
        %v6959 = vunpack.c.l.b16 %v6241
        %v6960 = vunpack.c.h.b16 %v6241
        %v6961 = vunpack.c.l.b16 %v6242
        %v6962 = vunpack.c.h.b16 %v6242
        %v6963 = vunpack.c.l.b16 %v6243
        %v6964 = vunpack.c.h.b16 %v6243
        %v6965 = vunpack.c.l.b16 %v6244
        %v6966 = vunpack.c.h.b16 %v6244
        %v6967 = vunpack.c.l.b16 %v6245
        %v6968 = vunpack.c.h.b16 %v6245
        %v6969 = vunpack.c.l.b16 %v6246
        %v6970 = vunpack.c.h.b16 %v6246
        %v6971 = vunpack.c.l.b16 %v6247
        %v6972 = vunpack.c.h.b16 %v6247
        %v6973 = vunpack.c.l.b16 %v6248
        %v6974 = vunpack.c.h.b16 %v6248
        %v6975 = vunpack.c.l.b16 %v6249
        %v6976 = vunpack.c.h.b16 %v6249
        %v6977 = vunpack.c.l.b16 %v6250
        %v6978 = vunpack.c.h.b16 %v6250
        %v6979 = vunpack.c.l.b16 %v6251
        %v6980 = vunpack.c.h.b16 %v6251
        %v6981 = vunpack.c.l.b16 %v6252
        %v6982 = vunpack.c.h.b16 %v6252
        %v6983 = vunpack.c.l.b16 %v6253
        %v6984 = vunpack.c.h.b16 %v6253
        %v6985 = vunpack.c.l.b16 %v6254
        %v6986 = vunpack.c.h.b16 %v6254
        %v6987 = vunpack.c.l.b16 %v6255
        %v6988 = vunpack.c.h.b16 %v6255
        %v6989 = vunpack.c.l.b16 %v6256
        %v6990 = vunpack.c.h.b16 %v6256
        %v6991 = vunpack.c.l.b16 %v6257
        %v6992 = vunpack.c.h.b16 %v6257
        %v6993 = vunpack.c.l.b16 %v6258
        %v6994 = vunpack.c.h.b16 %v6258
        %v6995 = vunpack.c.l.b16 %v6259
        %v6996 = vunpack.c.h.b16 %v6259
        %v6997 = vunpack.c.l.b16 %v6260
        %v6998 = vunpack.c.h.b16 %v6260
        %v6999 = vunpack.c.l.b16 %v6261
        %v7000 = vunpack.c.h.b16 %v6261
        %v7001 = vunpack.c.l.b16 %v6262
        %v7002 = vunpack.c.h.b16 %v6262
        %v7003 = vunpack.c.l.b16 %v6263
        %v7004 = vunpack.c.h.b16 %v6263
        %v7005 = vunpack.c.l.b16 %v6264
        %v7006 = vunpack.c.h.b16 %v6264
        %v7007 = vunpack.c.l.b16 %v6265
        %v7008 = vunpack.c.h.b16 %v6265
        %v7009 = vunpack.c.l.b16 %v6266
        %v7010 = vunpack.c.h.b16 %v6266
        %v7011 = vunpack.c.l.b16 %v6267
        %v7012 = vunpack.c.h.b16 %v6267
        %v7013 = vunpack.c.l.b16 %v6268
        %v7014 = vunpack.c.h.b16 %v6268
        %v7015 = vunpack.c.l.b16 %v6269
        %v7016 = vunpack.c.h.b16 %v6269
        %v7017 = vunpack.c.l.b16 %v6270
        %v7018 = vunpack.c.h.b16 %v6270
        %v7019 = vunpack.c.l.b16 %v6271
        %v7020 = vunpack.c.h.b16 %v6271
        %v7021 = vunpack.c.l.b16 %v6272
        %v7022 = vunpack.c.h.b16 %v6272
        %v7023 = vunpack.c.l.b16 %v6273
        %v7024 = vunpack.c.h.b16 %v6273
        %v7025 = vunpack.c.l.b16 %v6274
        %v7026 = vunpack.c.h.b16 %v6274
        %v7027 = vunpack.c.l.b16 %v6275
        %v7028 = vunpack.c.h.b16 %v6275
        %v7029 = vunpack.c.l.b16 %v6276
        %v7030 = vunpack.c.h.b16 %v6276
        %v7031 = vunpack.c.l.b16 %v6277
        %v7032 = vunpack.c.h.b16 %v6277
        %v7033 = vunpack.c.l.b16 %v6278
        %v7034 = vunpack.c.h.b16 %v6278
        %v7035 = vunpack.c.l.b16 %v6279
        %v7036 = vunpack.c.h.b16 %v6279
        %v7037 = vunpack.c.l.b16 %v6280
        %v7038 = vunpack.c.h.b16 %v6280
        %v7039 = vpack.c.b16 %v6607, %v6591
        %v7040 = vpack.c.b16 %v6608, %v6592
        %v7041 = vpack.c.b16 %v6609, %v6593
        %v7042 = vpack.c.b16 %v6610, %v6594
        %v7043 = vpack.c.b16 %v6611, %v6595
        %v7044 = vpack.c.b16 %v6612, %v6596
        %v7045 = vpack.c.b16 %v6613, %v6597
        %v7046 = vpack.c.b16 %v6614, %v6598
        %v7047 = vpack.c.b16 %v6615, %v6599
        %v7048 = vpack.c.b16 %v6616, %v6600
        %v7049 = vpack.c.b16 %v6617, %v6601
        %v7050 = vpack.c.b16 %v6618, %v6602
        %v7051 = vpack.c.b16 %v6619, %v6603
        %v7052 = vpack.c.b16 %v6620, %v6604
        %v7053 = vpack.c.b16 %v6621, %v6605
        %v7054 = vpack.c.b16 %v6622, %v6606
        %v7055 = vpack.c.b16 %v6639, %v6623
        %v7056 = vpack.c.b16 %v6640, %v6624
        %v7057 = vpack.c.b16 %v6641, %v6625
        %v7058 = vpack.c.b16 %v6642, %v6626
        %v7059 = vpack.c.b16 %v6643, %v6627
        %v7060 = vpack.c.b16 %v6644, %v6628
        %v7061 = vpack.c.b16 %v6645, %v6629
        %v7062 = vpack.c.b16 %v6646, %v6630
        %v7063 = vpack.c.b16 %v6647, %v6631
        %v7064 = vpack.c.b16 %v6648, %v6632
        %v7065 = vpack.c.b16 %v6649, %v6633
        %v7066 = vpack.c.b16 %v6650, %v6634
        %v7067 = vpack.c.b16 %v6651, %v6635
        %v7068 = vpack.c.b16 %v6652, %v6636
        %v7069 = vpack.c.b16 %v6653, %v6637
        %v7070 = vpack.c.b16 %v6654, %v6638
        %v7071 = vpack.c.b16 %v6671, %v6655
        %v7072 = vpack.c.b16 %v6672, %v6656
        %v7073 = vpack.c.b16 %v6673, %v6657
        %v7074 = vpack.c.b16 %v6674, %v6658
        %v7075 = vpack.c.b16 %v6675, %v6659
        %v7076 = vpack.c.b16 %v6676, %v6660
        %v7077 = vpack.c.b16 %v6677, %v6661
        %v7078 = vpack.c.b16 %v6678, %v6662
        %v7079 = vpack.c.b16 %v6679, %v6663
        %v7080 = vpack.c.b16 %v6680, %v6664
        %v7081 = vpack.c.b16 %v6681, %v6665
        %v7082 = vpack.c.b16 %v6682, %v6666
        %v7083 = vpack.c.b16 %v6683, %v6667
        %v7084 = vpack.c.b16 %v6684, %v6668
        %v7085 = vpack.c.b16 %v6685, %v6669
        %v7086 = vpack.c.b16 %v6686, %v6670
        %v7087 = vpack.c.b16 %v6703, %v6687
        %v7088 = vpack.c.b16 %v6704, %v6688
        %v7089 = vpack.c.b16 %v6705, %v6689
        %v7090 = vpack.c.b16 %v6706, %v6690
        %v7091 = vpack.c.b16 %v6707, %v6691
        %v7092 = vpack.c.b16 %v6708, %v6692
        %v7093 = vpack.c.b16 %v6709, %v6693
        %v7094 = vpack.c.b16 %v6710, %v6694
        %v7095 = vpack.c.b16 %v6711, %v6695
        %v7096 = vpack.c.b16 %v6712, %v6696
        %v7097 = vpack.c.b16 %v6713, %v6697
        %v7098 = vpack.c.b16 %v6714, %v6698
        %v7099 = vpack.c.b16 %v6715, %v6699
        %v7100 = vpack.c.b16 %v6716, %v6700
        %v7101 = vpack.c.b16 %v6717, %v6701
        %v7102 = vpack.c.b16 %v6718, %v6702
        %v7103 = vpack.c.b16 %v6735, %v6719
        %v7104 = vpack.c.b16 %v6736, %v6720
        %v7105 = vpack.c.b16 %v6737, %v6721
        %v7106 = vpack.c.b16 %v6738, %v6722
        %v7107 = vpack.c.b16 %v6739, %v6723
        %v7108 = vpack.c.b16 %v6740, %v6724
        %v7109 = vpack.c.b16 %v6741, %v6725
        %v7110 = vpack.c.b16 %v6742, %v6726
        %v7111 = vpack.c.b16 %v6743, %v6727
        %v7112 = vpack.c.b16 %v6744, %v6728
        %v7113 = vpack.c.b16 %v6745, %v6729
        %v7114 = vpack.c.b16 %v6746, %v6730
        %v7115 = vpack.c.b16 %v6747, %v6731
        %v7116 = vpack.c.b16 %v6748, %v6732
        %v7117 = vpack.c.b16 %v6749, %v6733
        %v7118 = vpack.c.b16 %v6750, %v6734
        %v7119 = vpack.c.b16 %v6767, %v6751
        %v7120 = vpack.c.b16 %v6768, %v6752
        %v7121 = vpack.c.b16 %v6769, %v6753
        %v7122 = vpack.c.b16 %v6770, %v6754
        %v7123 = vpack.c.b16 %v6771, %v6755
        %v7124 = vpack.c.b16 %v6772, %v6756
        %v7125 = vpack.c.b16 %v6773, %v6757
        %v7126 = vpack.c.b16 %v6774, %v6758
        %v7127 = vpack.c.b16 %v6775, %v6759
        %v7128 = vpack.c.b16 %v6776, %v6760
        %v7129 = vpack.c.b16 %v6777, %v6761
        %v7130 = vpack.c.b16 %v6778, %v6762
        %v7131 = vpack.c.b16 %v6779, %v6763
        %v7132 = vpack.c.b16 %v6780, %v6764
        %v7133 = vpack.c.b16 %v6781, %v6765
        %v7134 = vpack.c.b16 %v6782, %v6766
        %v7135 = vpack.c.b16 %v6799, %v6783
        %v7136 = vpack.c.b16 %v6800, %v6784
        %v7137 = vpack.c.b16 %v6801, %v6785
        %v7138 = vpack.c.b16 %v6802, %v6786
        %v7139 = vpack.c.b16 %v6803, %v6787
        %v7140 = vpack.c.b16 %v6804, %v6788
        %v7141 = vpack.c.b16 %v6805, %v6789
        %v7142 = vpack.c.b16 %v6806, %v6790
        %v7143 = vpack.c.b16 %v6807, %v6791
        %v7144 = vpack.c.b16 %v6808, %v6792
        %v7145 = vpack.c.b16 %v6809, %v6793
        %v7146 = vpack.c.b16 %v6810, %v6794
        %v7147 = vpack.c.b16 %v6811, %v6795
        %v7148 = vpack.c.b16 %v6812, %v6796
        %v7149 = vpack.c.b16 %v6813, %v6797
        %v7150 = vpack.c.b16 %v6814, %v6798
        %v7151 = vpack.c.b16 %v6831, %v6815
        %v7152 = vpack.c.b16 %v6832, %v6816
        %v7153 = vpack.c.b16 %v6833, %v6817
        %v7154 = vpack.c.b16 %v6834, %v6818
        %v7155 = vpack.c.b16 %v6835, %v6819
        %v7156 = vpack.c.b16 %v6836, %v6820
        %v7157 = vpack.c.b16 %v6837, %v6821
        %v7158 = vpack.c.b16 %v6838, %v6822
        %v7159 = vpack.c.b16 %v6839, %v6823
        %v7160 = vpack.c.b16 %v6840, %v6824
        %v7161 = vpack.c.b16 %v6841, %v6825
        %v7162 = vpack.c.b16 %v6842, %v6826
        %v7163 = vpack.c.b16 %v6843, %v6827
        %v7164 = vpack.c.b16 %v6844, %v6828
        %v7165 = vpack.c.b16 %v6845, %v6829
        %v7166 = vpack.c.b16 %v6846, %v6830
        %v7167 = vpack.c.b16 %v6863, %v6847
        %v7168 = vpack.c.b16 %v6864, %v6848
        %v7169 = vpack.c.b16 %v6865, %v6849
        %v7170 = vpack.c.b16 %v6866, %v6850
        %v7171 = vpack.c.b16 %v6867, %v6851
        %v7172 = vpack.c.b16 %v6868, %v6852
        %v7173 = vpack.c.b16 %v6869, %v6853
        %v7174 = vpack.c.b16 %v6870, %v6854
        %v7175 = vpack.c.b16 %v6871, %v6855
        %v7176 = vpack.c.b16 %v6872, %v6856
        %v7177 = vpack.c.b16 %v6873, %v6857
        %v7178 = vpack.c.b16 %v6874, %v6858
        %v7179 = vpack.c.b16 %v6875, %v6859
        %v7180 = vpack.c.b16 %v6876, %v6860
        %v7181 = vpack.c.b16 %v6877, %v6861
        %v7182 = vpack.c.b16 %v6878, %v6862
        %v7183 = vpack.c.b16 %v6895, %v6879
        %v7184 = vpack.c.b16 %v6896, %v6880
        %v7185 = vpack.c.b16 %v6897, %v6881
        %v7186 = vpack.c.b16 %v6898, %v6882
        %v7187 = vpack.c.b16 %v6899, %v6883
        %v7188 = vpack.c.b16 %v6900, %v6884
        %v7189 = vpack.c.b16 %v6901, %v6885
        %v7190 = vpack.c.b16 %v6902, %v6886
        %v7191 = vpack.c.b16 %v6903, %v6887
        %v7192 = vpack.c.b16 %v6904, %v6888
        %v7193 = vpack.c.b16 %v6905, %v6889
        %v7194 = vpack.c.b16 %v6906, %v6890
        %v7195 = vpack.c.b16 %v6907, %v6891
        %v7196 = vpack.c.b16 %v6908, %v6892
        %v7197 = vpack.c.b16 %v6909, %v6893
        %v7198 = vpack.c.b16 %v6910, %v6894
        %v7199 = vpack.c.b16 %v6927, %v6911
        %v7200 = vpack.c.b16 %v6928, %v6912
        %v7201 = vpack.c.b16 %v6929, %v6913
        %v7202 = vpack.c.b16 %v6930, %v6914
        %v7203 = vpack.c.b16 %v6931, %v6915
        %v7204 = vpack.c.b16 %v6932, %v6916
        %v7205 = vpack.c.b16 %v6933, %v6917
        %v7206 = vpack.c.b16 %v6934, %v6918
        %v7207 = vpack.c.b16 %v6935, %v6919
        %v7208 = vpack.c.b16 %v6936, %v6920
        %v7209 = vpack.c.b16 %v6937, %v6921
        %v7210 = vpack.c.b16 %v6938, %v6922
        %v7211 = vpack.c.b16 %v6939, %v6923
        %v7212 = vpack.c.b16 %v6940, %v6924
        %v7213 = vpack.c.b16 %v6941, %v6925
        %v7214 = vpack.c.b16 %v6942, %v6926
        %v7215 = vpack.c.b16 %v6959, %v6943
        %v7216 = vpack.c.b16 %v6960, %v6944
        %v7217 = vpack.c.b16 %v6961, %v6945
        %v7218 = vpack.c.b16 %v6962, %v6946
        %v7219 = vpack.c.b16 %v6963, %v6947
        %v7220 = vpack.c.b16 %v6964, %v6948
        %v7221 = vpack.c.b16 %v6965, %v6949
        %v7222 = vpack.c.b16 %v6966, %v6950
        %v7223 = vpack.c.b16 %v6967, %v6951
        %v7224 = vpack.c.b16 %v6968, %v6952
        %v7225 = vpack.c.b16 %v6969, %v6953
        %v7226 = vpack.c.b16 %v6970, %v6954
        %v7227 = vpack.c.b16 %v6971, %v6955
        %v7228 = vpack.c.b16 %v6972, %v6956
        %v7229 = vpack.c.b16 %v6973, %v6957
        %v7230 = vpack.c.b16 %v6974, %v6958
        %v7231 = vpack.c.b16 %v6991, %v6975
        %v7232 = vpack.c.b16 %v6992, %v6976
        %v7233 = vpack.c.b16 %v6993, %v6977
        %v7234 = vpack.c.b16 %v6994, %v6978
        %v7235 = vpack.c.b16 %v6995, %v6979
        %v7236 = vpack.c.b16 %v6996, %v6980
        %v7237 = vpack.c.b16 %v6997, %v6981
        %v7238 = vpack.c.b16 %v6998, %v6982
        %v7239 = vpack.c.b16 %v6999, %v6983
        %v7240 = vpack.c.b16 %v7000, %v6984
        %v7241 = vpack.c.b16 %v7001, %v6985
        %v7242 = vpack.c.b16 %v7002, %v6986
        %v7243 = vpack.c.b16 %v7003, %v6987
        %v7244 = vpack.c.b16 %v7004, %v6988
        %v7245 = vpack.c.b16 %v7005, %v6989
        %v7246 = vpack.c.b16 %v7006, %v6990
        %v7247 = vpack.c.b16 %v7023, %v7007
        %v7248 = vpack.c.b16 %v7024, %v7008
        %v7249 = vpack.c.b16 %v7025, %v7009
        %v7250 = vpack.c.b16 %v7026, %v7010
        %v7251 = vpack.c.b16 %v7027, %v7011
        %v7252 = vpack.c.b16 %v7028, %v7012
        %v7253 = vpack.c.b16 %v7029, %v7013
        %v7254 = vpack.c.b16 %v7030, %v7014
        %v7255 = vpack.c.b16 %v7031, %v7015
        %v7256 = vpack.c.b16 %v7032, %v7016
        %v7257 = vpack.c.b16 %v7033, %v7017
        %v7258 = vpack.c.b16 %v7034, %v7018
        %v7259 = vpack.c.b16 %v7035, %v7019
        %v7260 = vpack.c.b16 %v7036, %v7020
        %v7261 = vpack.c.b16 %v7037, %v7021
        %v7262 = vpack.c.b16 %v7038, %v7022
        %v7488 = vsel %vm647, %v6053, 0
        %7490 = vmatprep.subr.bf16.mxu0 %v7040
        %7491 = vmatpush1.bf16.msra.mxu0 %v7039
        %7492 = vmatprep.subr.bf16.mxu0 %v7056
        %7493 = vmatpush1.bf16.msra.mxu0 %v7055
        %7494 = vmatprep.subr.bf16.mxu0 %v7072
        %7495 = vmatpush1.bf16.msra.mxu0 %v7071
        %7496 = vmatprep.subr.bf16.mxu0 %v7088
        %7497 = vmatpush1.bf16.msra.mxu0 %v7087
        %7498 = vmatprep.subr.bf16.mxu0 %v7104
        %7499 = vmatpush1.bf16.msra.mxu0 %v7103
        %7500 = vmatprep.subr.bf16.mxu0 %v7120
        %7501 = vmatpush1.bf16.msra.mxu0 %v7119
        %7502 = vmatprep.subr.bf16.mxu0 %v7136
        %7503 = vmatpush1.bf16.msra.mxu0 %v7135
        %7504 = vmatprep.subr.bf16.mxu0 %v7152
        %7505 = vmatpush1.bf16.msra.mxu0 %v7151
        %7506 = vmatprep.subr.bf16.mxu0 %v7168
        %7507 = vmatpush1.bf16.msra.mxu0 %v7167
        %7508 = vmatprep.subr.bf16.mxu0 %v7184
        %7509 = vmatpush1.bf16.msra.mxu0 %v7183
        %7510 = vmatprep.subr.bf16.mxu0 %v7200
        %7511 = vmatpush1.bf16.msra.mxu0 %v7199
        %7512 = vmatprep.subr.bf16.mxu0 %v7216
        %7513 = vmatpush1.bf16.msra.mxu0 %v7215
        %7514 = vmatprep.subr.bf16.mxu0 %v7232
        %7515 = vmatpush1.bf16.msra.mxu0 %v7231
        %7516 = vmatprep.subr.bf16.mxu0 %v7248
        %7517 = vmatpush1.bf16.msra.mxu0 %v7247
        %7518 = vmatprep.subr.bf16.mxu0 0
        %7519 = vmatpush1.bf16.msra.mxu0 0
        %7520 = vmatprep.subr.bf16.mxu0 0
        %7521 = vmatpush1.bf16.msra.mxu0 0
        %7522 = vmatprep.mubr.bf16.mxu0 %v7488
        %7523 = vmatmul.mubr.bf16.gmra.mrb[0].mxu0 %v6052
        %v7524 = vpop.f32.mrb[0].mxu0
        %v7525 = vadd.f32 %v6290, %v7524
        %v7526 = vpop.f32.mrb[0].mxu0
        %v7527 = vadd.f32 %v6294, %v7526
        %v7528 = vpop.f32.mrb[0].mxu0
        %v7529 = vadd.f32 %v6290, %v7528
        %v7530 = vpop.f32.mrb[0].mxu0
        %v7531 = vadd.f32 %v6294, %v7530
        %7532 = vdwg.mxu0
        %7533 = vmatprep.subr.bf16.mxu0 %v7042
        %7534 = vmatpush1.bf16.msra.mxu0 %v7041
        %7535 = vmatprep.subr.bf16.mxu0 %v7058
        %7536 = vmatpush1.bf16.msra.mxu0 %v7057
        %7537 = vmatprep.subr.bf16.mxu0 %v7074
        %7538 = vmatpush1.bf16.msra.mxu0 %v7073
        %7539 = vmatprep.subr.bf16.mxu0 %v7090
        %7540 = vmatpush1.bf16.msra.mxu0 %v7089
        %7541 = vmatprep.subr.bf16.mxu0 %v7106
        %7542 = vmatpush1.bf16.msra.mxu0 %v7105
        %7543 = vmatprep.subr.bf16.mxu0 %v7122
        %7544 = vmatpush1.bf16.msra.mxu0 %v7121
        %7545 = vmatprep.subr.bf16.mxu0 %v7138
        %7546 = vmatpush1.bf16.msra.mxu0 %v7137
        %7547 = vmatprep.subr.bf16.mxu0 %v7154
        %7548 = vmatpush1.bf16.msra.mxu0 %v7153
        %7549 = vmatprep.subr.bf16.mxu0 %v7170
        %7550 = vmatpush1.bf16.msra.mxu0 %v7169
        %7551 = vmatprep.subr.bf16.mxu0 %v7186
        %7552 = vmatpush1.bf16.msra.mxu0 %v7185
        %7553 = vmatprep.subr.bf16.mxu0 %v7202
        %7554 = vmatpush1.bf16.msra.mxu0 %v7201
        %7555 = vmatprep.subr.bf16.mxu0 %v7218
        %7556 = vmatpush1.bf16.msra.mxu0 %v7217
        %7557 = vmatprep.subr.bf16.mxu0 %v7234
        %7558 = vmatpush1.bf16.msra.mxu0 %v7233
        %7559 = vmatprep.subr.bf16.mxu0 %v7250
        %7560 = vmatpush1.bf16.msra.mxu0 %v7249
        %7561 = vmatprep.subr.bf16.mxu0 0
        %7562 = vmatpush1.bf16.msra.mxu0 0
        %7563 = vmatprep.subr.bf16.mxu0 0
        %7564 = vmatpush1.bf16.msra.mxu0 0
        %7565 = vmatprep.mubr.bf16.mxu0 %v7488
        %7566 = vmatmul.mubr.bf16.gmra.mrb[0].mxu0 %v6052
        %v7567 = vpop.f32.mrb[0].mxu0
        %v7568 = vadd.f32 %v6298, %v7567
        %v7569 = vpop.f32.mrb[0].mxu0
        %v7570 = vadd.f32 %v6302, %v7569
        %v7571 = vpop.f32.mrb[0].mxu0
        %v7572 = vadd.f32 %v6298, %v7571
        %v7573 = vpop.f32.mrb[0].mxu0
        %v7574 = vadd.f32 %v6302, %v7573
        %7575 = vdwg.mxu0
        %7576 = vmatprep.subr.bf16.mxu0 %v7044
        %7577 = vmatpush1.bf16.msra.mxu0 %v7043
        %7578 = vmatprep.subr.bf16.mxu0 %v7060
        %7579 = vmatpush1.bf16.msra.mxu0 %v7059
        %7580 = vmatprep.subr.bf16.mxu0 %v7076
        %7581 = vmatpush1.bf16.msra.mxu0 %v7075
        %7582 = vmatprep.subr.bf16.mxu0 %v7092
        %7583 = vmatpush1.bf16.msra.mxu0 %v7091
        %7584 = vmatprep.subr.bf16.mxu0 %v7108
        %7585 = vmatpush1.bf16.msra.mxu0 %v7107
        %7586 = vmatprep.subr.bf16.mxu0 %v7124
        %7587 = vmatpush1.bf16.msra.mxu0 %v7123
        %7588 = vmatprep.subr.bf16.mxu0 %v7140
        %7589 = vmatpush1.bf16.msra.mxu0 %v7139
        %7590 = vmatprep.subr.bf16.mxu0 %v7156
        %7591 = vmatpush1.bf16.msra.mxu0 %v7155
        %7592 = vmatprep.subr.bf16.mxu0 %v7172
        %7593 = vmatpush1.bf16.msra.mxu0 %v7171
        %7594 = vmatprep.subr.bf16.mxu0 %v7188
        %7595 = vmatpush1.bf16.msra.mxu0 %v7187
        %7596 = vmatprep.subr.bf16.mxu0 %v7204
        %7597 = vmatpush1.bf16.msra.mxu0 %v7203
        %7598 = vmatprep.subr.bf16.mxu0 %v7220
        %7599 = vmatpush1.bf16.msra.mxu0 %v7219
        %7600 = vmatprep.subr.bf16.mxu0 %v7236
        %7601 = vmatpush1.bf16.msra.mxu0 %v7235
        %7602 = vmatprep.subr.bf16.mxu0 %v7252
        %7603 = vmatpush1.bf16.msra.mxu0 %v7251
        %7604 = vmatprep.subr.bf16.mxu0 0
        %7605 = vmatpush1.bf16.msra.mxu0 0
        %7606 = vmatprep.subr.bf16.mxu0 0
        %7607 = vmatpush1.bf16.msra.mxu0 0
        %7608 = vmatprep.mubr.bf16.mxu0 %v7488
        %7609 = vmatmul.mubr.bf16.gmra.mrb[0].mxu0 %v6052
        %v7610 = vpop.f32.mrb[0].mxu0
        %v7611 = vadd.f32 %v6306, %v7610
        %v7612 = vpop.f32.mrb[0].mxu0
        %v7613 = vadd.f32 %v6310, %v7612
        %v7614 = vpop.f32.mrb[0].mxu0
        %v7615 = vadd.f32 %v6306, %v7614
        %v7616 = vpop.f32.mrb[0].mxu0
        %v7617 = vadd.f32 %v6310, %v7616
        %7618 = vdwg.mxu0
        %7619 = vmatprep.subr.bf16.mxu0 %v7046
        %7620 = vmatpush1.bf16.msra.mxu0 %v7045
        %7621 = vmatprep.subr.bf16.mxu0 %v7062
        %7622 = vmatpush1.bf16.msra.mxu0 %v7061
        %7623 = vmatprep.subr.bf16.mxu0 %v7078
        %7624 = vmatpush1.bf16.msra.mxu0 %v7077
        %7625 = vmatprep.subr.bf16.mxu0 %v7094
        %7626 = vmatpush1.bf16.msra.mxu0 %v7093
        %7627 = vmatprep.subr.bf16.mxu0 %v7110
        %7628 = vmatpush1.bf16.msra.mxu0 %v7109
        %7629 = vmatprep.subr.bf16.mxu0 %v7126
        %7630 = vmatpush1.bf16.msra.mxu0 %v7125
        %7631 = vmatprep.subr.bf16.mxu0 %v7142
        %7632 = vmatpush1.bf16.msra.mxu0 %v7141
        %7633 = vmatprep.subr.bf16.mxu0 %v7158
        %7634 = vmatpush1.bf16.msra.mxu0 %v7157
        %7635 = vmatprep.subr.bf16.mxu0 %v7174
        %7636 = vmatpush1.bf16.msra.mxu0 %v7173
        %7637 = vmatprep.subr.bf16.mxu0 %v7190
        %7638 = vmatpush1.bf16.msra.mxu0 %v7189
        %7639 = vmatprep.subr.bf16.mxu0 %v7206
        %7640 = vmatpush1.bf16.msra.mxu0 %v7205
        %7641 = vmatprep.subr.bf16.mxu0 %v7222
        %7642 = vmatpush1.bf16.msra.mxu0 %v7221
        %7643 = vmatprep.subr.bf16.mxu0 %v7238
        %7644 = vmatpush1.bf16.msra.mxu0 %v7237
        %7645 = vmatprep.subr.bf16.mxu0 %v7254
        %7646 = vmatpush1.bf16.msra.mxu0 %v7253
        %7647 = vmatprep.subr.bf16.mxu0 0
        %7648 = vmatpush1.bf16.msra.mxu0 0
        %7649 = vmatprep.subr.bf16.mxu0 0
        %7650 = vmatpush1.bf16.msra.mxu0 0
        %7651 = vmatprep.mubr.bf16.mxu0 %v7488
        %7652 = vmatmul.mubr.bf16.gmra.mrb[0].mxu0 %v6052
        %v7653 = vpop.f32.mrb[0].mxu0
        %v7654 = vadd.f32 %v6314, %v7653
        %v7655 = vpop.f32.mrb[0].mxu0
        %v7656 = vadd.f32 %v6318, %v7655
        %v7657 = vpop.f32.mrb[0].mxu0
        %v7658 = vadd.f32 %v6314, %v7657
        %v7659 = vpop.f32.mrb[0].mxu0
        %v7660 = vadd.f32 %v6318, %v7659
        %7661 = vdwg.mxu0
        %7662 = vmatprep.subr.bf16.mxu0 %v7048
        %7663 = vmatpush1.bf16.msra.mxu0 %v7047
        %7664 = vmatprep.subr.bf16.mxu0 %v7064
        %7665 = vmatpush1.bf16.msra.mxu0 %v7063
        %7666 = vmatprep.subr.bf16.mxu0 %v7080
        %7667 = vmatpush1.bf16.msra.mxu0 %v7079
        %7668 = vmatprep.subr.bf16.mxu0 %v7096
        %7669 = vmatpush1.bf16.msra.mxu0 %v7095
        %7670 = vmatprep.subr.bf16.mxu0 %v7112
        %7671 = vmatpush1.bf16.msra.mxu0 %v7111
        %7672 = vmatprep.subr.bf16.mxu0 %v7128
        %7673 = vmatpush1.bf16.msra.mxu0 %v7127
        %7674 = vmatprep.subr.bf16.mxu0 %v7144
        %7675 = vmatpush1.bf16.msra.mxu0 %v7143
        %7676 = vmatprep.subr.bf16.mxu0 %v7160
        %7677 = vmatpush1.bf16.msra.mxu0 %v7159
        %7678 = vmatprep.subr.bf16.mxu0 %v7176
        %7679 = vmatpush1.bf16.msra.mxu0 %v7175
        %7680 = vmatprep.subr.bf16.mxu0 %v7192
        %7681 = vmatpush1.bf16.msra.mxu0 %v7191
        %7682 = vmatprep.subr.bf16.mxu0 %v7208
        %7683 = vmatpush1.bf16.msra.mxu0 %v7207
        %7684 = vmatprep.subr.bf16.mxu0 %v7224
        %7685 = vmatpush1.bf16.msra.mxu0 %v7223
        %7686 = vmatprep.subr.bf16.mxu0 %v7240
        %7687 = vmatpush1.bf16.msra.mxu0 %v7239
        %7688 = vmatprep.subr.bf16.mxu0 %v7256
        %7689 = vmatpush1.bf16.msra.mxu0 %v7255
        %7690 = vmatprep.subr.bf16.mxu0 0
        %7691 = vmatpush1.bf16.msra.mxu0 0
        %7692 = vmatprep.subr.bf16.mxu0 0
        %7693 = vmatpush1.bf16.msra.mxu0 0
        %7694 = vmatprep.mubr.bf16.mxu0 %v7488
        %7695 = vmatmul.mubr.bf16.gmra.mrb[0].mxu0 %v6052
        %v7696 = vpop.f32.mrb[0].mxu0
        %v7697 = vadd.f32 %v6322, %v7696
        %v7698 = vpop.f32.mrb[0].mxu0
        %v7699 = vadd.f32 %v6326, %v7698
        %v7700 = vpop.f32.mrb[0].mxu0
        %v7701 = vadd.f32 %v6322, %v7700
        %v7702 = vpop.f32.mrb[0].mxu0
        %v7703 = vadd.f32 %v6326, %v7702
        %7704 = vdwg.mxu0
        %7705 = vmatprep.subr.bf16.mxu0 %v7050
        %7706 = vmatpush1.bf16.msra.mxu0 %v7049
        %7707 = vmatprep.subr.bf16.mxu0 %v7066
        %7708 = vmatpush1.bf16.msra.mxu0 %v7065
        %7709 = vmatprep.subr.bf16.mxu0 %v7082
        %7710 = vmatpush1.bf16.msra.mxu0 %v7081
        %7711 = vmatprep.subr.bf16.mxu0 %v7098
        %7712 = vmatpush1.bf16.msra.mxu0 %v7097
        %7713 = vmatprep.subr.bf16.mxu0 %v7114
        %7714 = vmatpush1.bf16.msra.mxu0 %v7113
        %7715 = vmatprep.subr.bf16.mxu0 %v7130
        %7716 = vmatpush1.bf16.msra.mxu0 %v7129
        %7717 = vmatprep.subr.bf16.mxu0 %v7146
        %7718 = vmatpush1.bf16.msra.mxu0 %v7145
        %7719 = vmatprep.subr.bf16.mxu0 %v7162
        %7720 = vmatpush1.bf16.msra.mxu0 %v7161
        %7721 = vmatprep.subr.bf16.mxu0 %v7178
        %7722 = vmatpush1.bf16.msra.mxu0 %v7177
        %7723 = vmatprep.subr.bf16.mxu0 %v7194
        %7724 = vmatpush1.bf16.msra.mxu0 %v7193
        %7725 = vmatprep.subr.bf16.mxu0 %v7210
        %7726 = vmatpush1.bf16.msra.mxu0 %v7209
        %7727 = vmatprep.subr.bf16.mxu0 %v7226
        %7728 = vmatpush1.bf16.msra.mxu0 %v7225
        %7729 = vmatprep.subr.bf16.mxu0 %v7242
        %7730 = vmatpush1.bf16.msra.mxu0 %v7241
        %7731 = vmatprep.subr.bf16.mxu0 %v7258
        %7732 = vmatpush1.bf16.msra.mxu0 %v7257
        %7733 = vmatprep.subr.bf16.mxu0 0
        %7734 = vmatpush1.bf16.msra.mxu0 0
        %7735 = vmatprep.subr.bf16.mxu0 0
        %7736 = vmatpush1.bf16.msra.mxu0 0
        %7737 = vmatprep.mubr.bf16.mxu0 %v7488
        %7738 = vmatmul.mubr.bf16.gmra.mrb[0].mxu0 %v6052
        %v7739 = vpop.f32.mrb[0].mxu0
        %v7740 = vadd.f32 %v6330, %v7739
        %v7741 = vpop.f32.mrb[0].mxu0
        %v7742 = vadd.f32 %v6334, %v7741
        %v7743 = vpop.f32.mrb[0].mxu0
        %v7744 = vadd.f32 %v6330, %v7743
        %v7745 = vpop.f32.mrb[0].mxu0
        %v7746 = vadd.f32 %v6334, %v7745
        %7747 = vdwg.mxu0
        %7748 = vmatprep.subr.bf16.mxu0 %v7052
        %7749 = vmatpush1.bf16.msra.mxu0 %v7051
        %7750 = vmatprep.subr.bf16.mxu0 %v7068
        %7751 = vmatpush1.bf16.msra.mxu0 %v7067
        %7752 = vmatprep.subr.bf16.mxu0 %v7084
        %7753 = vmatpush1.bf16.msra.mxu0 %v7083
        %7754 = vmatprep.subr.bf16.mxu0 %v7100
        %7755 = vmatpush1.bf16.msra.mxu0 %v7099
        %7756 = vmatprep.subr.bf16.mxu0 %v7116
        %7757 = vmatpush1.bf16.msra.mxu0 %v7115
        %7758 = vmatprep.subr.bf16.mxu0 %v7132
        %7759 = vmatpush1.bf16.msra.mxu0 %v7131
        %7760 = vmatprep.subr.bf16.mxu0 %v7148
        %7761 = vmatpush1.bf16.msra.mxu0 %v7147
        %7762 = vmatprep.subr.bf16.mxu0 %v7164
        %7763 = vmatpush1.bf16.msra.mxu0 %v7163
        %7764 = vmatprep.subr.bf16.mxu0 %v7180
        %7765 = vmatpush1.bf16.msra.mxu0 %v7179
        %7766 = vmatprep.subr.bf16.mxu0 %v7196
        %7767 = vmatpush1.bf16.msra.mxu0 %v7195
        %7768 = vmatprep.subr.bf16.mxu0 %v7212
        %7769 = vmatpush1.bf16.msra.mxu0 %v7211
        %7770 = vmatprep.subr.bf16.mxu0 %v7228
        %7771 = vmatpush1.bf16.msra.mxu0 %v7227
        %7772 = vmatprep.subr.bf16.mxu0 %v7244
        %7773 = vmatpush1.bf16.msra.mxu0 %v7243
        %7774 = vmatprep.subr.bf16.mxu0 %v7260
        %7775 = vmatpush1.bf16.msra.mxu0 %v7259
        %7776 = vmatprep.subr.bf16.mxu0 0
        %7777 = vmatpush1.bf16.msra.mxu0 0
        %7778 = vmatprep.subr.bf16.mxu0 0
        %7779 = vmatpush1.bf16.msra.mxu0 0
        %7780 = vmatprep.mubr.bf16.mxu0 %v7488
        %7781 = vmatmul.mubr.bf16.gmra.mrb[0].mxu0 %v6052
        %v7782 = vpop.f32.mrb[0].mxu0
        %v7783 = vadd.f32 %v6338, %v7782
        %v7784 = vpop.f32.mrb[0].mxu0
        %v7785 = vadd.f32 %v6342, %v7784
        %v7786 = vpop.f32.mrb[0].mxu0
        %v7787 = vadd.f32 %v6338, %v7786
        %v7788 = vpop.f32.mrb[0].mxu0
        %v7789 = vadd.f32 %v6342, %v7788
        %7790 = vdwg.mxu0
        %7791 = vmatprep.subr.bf16.mxu0 %v7054
        %7792 = vmatpush1.bf16.msra.mxu0 %v7053
        %7793 = vmatprep.subr.bf16.mxu0 %v7070
        %7794 = vmatpush1.bf16.msra.mxu0 %v7069
        %7795 = vmatprep.subr.bf16.mxu0 %v7086
        %7796 = vmatpush1.bf16.msra.mxu0 %v7085
        %7797 = vmatprep.subr.bf16.mxu0 %v7102
        %7798 = vmatpush1.bf16.msra.mxu0 %v7101
        %7799 = vmatprep.subr.bf16.mxu0 %v7118
        %7800 = vmatpush1.bf16.msra.mxu0 %v7117
        %7801 = vmatprep.subr.bf16.mxu0 %v7134
        %7802 = vmatpush1.bf16.msra.mxu0 %v7133
        %7803 = vmatprep.subr.bf16.mxu0 %v7150
        %7804 = vmatpush1.bf16.msra.mxu0 %v7149
        %7805 = vmatprep.subr.bf16.mxu0 %v7166
        %7806 = vmatpush1.bf16.msra.mxu0 %v7165
        %7807 = vmatprep.subr.bf16.mxu0 %v7182
        %7808 = vmatpush1.bf16.msra.mxu0 %v7181
        %7809 = vmatprep.subr.bf16.mxu0 %v7198
        %7810 = vmatpush1.bf16.msra.mxu0 %v7197
        %7811 = vmatprep.subr.bf16.mxu0 %v7214
        %7812 = vmatpush1.bf16.msra.mxu0 %v7213
        %7813 = vmatprep.subr.bf16.mxu0 %v7230
        %7814 = vmatpush1.bf16.msra.mxu0 %v7229
        %7815 = vmatprep.subr.bf16.mxu0 %v7246
        %7816 = vmatpush1.bf16.msra.mxu0 %v7245
        %7817 = vmatprep.subr.bf16.mxu0 %v7262
        %7818 = vmatpush1.bf16.msra.mxu0 %v7261
        %7819 = vmatprep.subr.bf16.mxu0 0
        %7820 = vmatpush1.bf16.msra.mxu0 0
        %7821 = vmatprep.subr.bf16.mxu0 0
        %7822 = vmatpush1.bf16.msra.mxu0 0
        %7823 = vmatprep.mubr.bf16.mxu0 %v7488
        %7824 = vmatmul.mubr.bf16.gmra.mrb[0].mxu0 %v6052
        %v7825 = vpop.f32.mrb[0].mxu0
        %v7826 = vadd.f32 %v6346, %v7825
        %v7827 = vpop.f32.mrb[0].mxu0
        %v7828 = vadd.f32 %v6350, %v7827
        %v7829 = vpop.f32.mrb[0].mxu0
        %v7830 = vadd.f32 %v6346, %v7829
        %v7831 = vpop.f32.mrb[0].mxu0
        %v7832 = vadd.f32 %v6350, %v7831
        %7833 = vdwg.mxu0
        %v7834 = vpack.c.bf16 %v7529, %v7525
        %v7835 = vpack.c.bf16 %v7531, %v7527
        %v7836 = vpack.c.bf16 %v7572, %v7568
        %v7837 = vpack.c.bf16 %v7574, %v7570
        %v7838 = vpack.c.bf16 %v7615, %v7611
        %v7839 = vpack.c.bf16 %v7617, %v7613
        %v7840 = vpack.c.bf16 %v7658, %v7654
        %v7841 = vpack.c.bf16 %v7660, %v7656
        %v7842 = vpack.c.bf16 %v7701, %v7697
        %v7843 = vpack.c.bf16 %v7703, %v7699
        %v7844 = vpack.c.bf16 %v7744, %v7740
        %v7845 = vpack.c.bf16 %v7746, %v7742
        %v7846 = vpack.c.bf16 %v7787, %v7783
        %v7847 = vpack.c.bf16 %v7789, %v7785
        %v7848 = vpack.c.bf16 %v7830, %v7826
        %v7849 = vpack.c.bf16 %v7832, %v7828
        %v7850 = vmul.bf16 %v7834, %v7834
        %v7851 = vmul.bf16 %v7835, %v7835
        %v7852 = vmul.bf16 %v7836, %v7836
        %v7853 = vmul.bf16 %v7837, %v7837
        %v7854 = vmul.bf16 %v7838, %v7838
        %v7855 = vmul.bf16 %v7839, %v7839
        %v7856 = vmul.bf16 %v7840, %v7840
        %v7857 = vmul.bf16 %v7841, %v7841
        %v7858 = vmul.bf16 %v7842, %v7842
        %v7859 = vmul.bf16 %v7843, %v7843
        %v7860 = vmul.bf16 %v7844, %v7844
        %v7861 = vmul.bf16 %v7845, %v7845
        %v7862 = vmul.bf16 %v7846, %v7846
        %v7863 = vmul.bf16 %v7847, %v7847
        %v7864 = vmul.bf16 %v7848, %v7848
        %v7865 = vmul.bf16 %v7849, %v7849
        %v7866 = vmul.bf16 %v7834, %v7850
        %v7867 = vmul.bf16 %v7835, %v7851
        %v7868 = vmul.bf16 %v7836, %v7852
        %v7869 = vmul.bf16 %v7837, %v7853
        %v7870 = vmul.bf16 %v7838, %v7854
        %v7871 = vmul.bf16 %v7839, %v7855
        %v7872 = vmul.bf16 %v7840, %v7856
        %v7873 = vmul.bf16 %v7841, %v7857
        %v7874 = vmul.bf16 %v7842, %v7858
        %v7875 = vmul.bf16 %v7843, %v7859
        %v7876 = vmul.bf16 %v7844, %v7860
        %v7877 = vmul.bf16 %v7845, %v7861
        %v7878 = vmul.bf16 %v7846, %v7862
        %v7879 = vmul.bf16 %v7847, %v7863
        %v7880 = vmul.bf16 %v7848, %v7864
        %v7881 = vmul.bf16 %v7849, %v7865
        %v7882 = vmul.bf16 %v7866, 1027030327
        %v7883 = vmul.bf16 %v7867, 1027030327
        %v7884 = vmul.bf16 %v7868, 1027030327
        %v7885 = vmul.bf16 %v7869, 1027030327
        %v7886 = vmul.bf16 %v7870, 1027030327
        %v7887 = vmul.bf16 %v7871, 1027030327
        %v7888 = vmul.bf16 %v7872, 1027030327
        %v7889 = vmul.bf16 %v7873, 1027030327
        %v7890 = vmul.bf16 %v7874, 1027030327
        %v7891 = vmul.bf16 %v7875, 1027030327
        %v7892 = vmul.bf16 %v7876, 1027030327
        %v7893 = vmul.bf16 %v7877, 1027030327
        %v7894 = vmul.bf16 %v7878, 1027030327
        %v7895 = vmul.bf16 %v7879, 1027030327
        %v7896 = vmul.bf16 %v7880, 1027030327
        %v7897 = vmul.bf16 %v7881, 1027030327
        %v7898 = vadd.bf16 %v7834, %v7882
        %v7899 = vadd.bf16 %v7835, %v7883
        %v7900 = vadd.bf16 %v7836, %v7884
        %v7901 = vadd.bf16 %v7837, %v7885
        %v7902 = vadd.bf16 %v7838, %v7886
        %v7903 = vadd.bf16 %v7839, %v7887
        %v7904 = vadd.bf16 %v7840, %v7888
        %v7905 = vadd.bf16 %v7841, %v7889
        %v7906 = vadd.bf16 %v7842, %v7890
        %v7907 = vadd.bf16 %v7843, %v7891
        %v7908 = vadd.bf16 %v7844, %v7892
        %v7909 = vadd.bf16 %v7845, %v7893
        %v7910 = vadd.bf16 %v7846, %v7894
        %v7911 = vadd.bf16 %v7847, %v7895
        %v7912 = vadd.bf16 %v7848, %v7896
        %v7913 = vadd.bf16 %v7849, %v7897
        %v7914 = vmul.bf16 %v7898, 1061961548
        %v7915 = vmul.bf16 %v7899, 1061961548
        %v7916 = vmul.bf16 %v7900, 1061961548
        %v7917 = vmul.bf16 %v7901, 1061961548
        %v7918 = vmul.bf16 %v7902, 1061961548
        %v7919 = vmul.bf16 %v7903, 1061961548
        %v7920 = vmul.bf16 %v7904, 1061961548
        %v7921 = vmul.bf16 %v7905, 1061961548
        %v7922 = vmul.bf16 %v7906, 1061961548
        %v7923 = vmul.bf16 %v7907, 1061961548
        %v7924 = vmul.bf16 %v7908, 1061961548
        %v7925 = vmul.bf16 %v7909, 1061961548
        %v7926 = vmul.bf16 %v7910, 1061961548
        %v7927 = vmul.bf16 %v7911, 1061961548
        %v7928 = vmul.bf16 %v7912, 1061961548
        %v7929 = vmul.bf16 %v7913, 1061961548
        %v7930 = vtanh.bf16.pop %v7914
        %v7931 = vtanh.bf16.pop %v7915
        %v7932 = vtanh.bf16.pop %v7916
        %v7933 = vtanh.bf16.pop %v7917
        %v7934 = vtanh.bf16.pop %v7918
        %v7935 = vtanh.bf16.pop %v7919
        %v7936 = vtanh.bf16.pop %v7920
        %v7937 = vtanh.bf16.pop %v7921
        %v7938 = vtanh.bf16.pop %v7922
        %v7939 = vtanh.bf16.pop %v7923
        %v7940 = vtanh.bf16.pop %v7924
        %v7941 = vtanh.bf16.pop %v7925
        %v7942 = vtanh.bf16.pop %v7926
        %v7943 = vtanh.bf16.pop %v7927
        %v7944 = vtanh.bf16.pop %v7928
        %v7945 = vtanh.bf16.pop %v7929
        %v7946 = vadd.bf16 %v7930, 1065369472
        %v7947 = vadd.bf16 %v7931, 1065369472
        %v7948 = vadd.bf16 %v7932, 1065369472
        %v7949 = vadd.bf16 %v7933, 1065369472
        %v7950 = vadd.bf16 %v7934, 1065369472
        %v7951 = vadd.bf16 %v7935, 1065369472
        %v7952 = vadd.bf16 %v7936, 1065369472
        %v7953 = vadd.bf16 %v7937, 1065369472
        %v7954 = vadd.bf16 %v7938, 1065369472
        %v7955 = vadd.bf16 %v7939, 1065369472
        %v7956 = vadd.bf16 %v7940, 1065369472
        %v7957 = vadd.bf16 %v7941, 1065369472
        %v7958 = vadd.bf16 %v7942, 1065369472
        %v7959 = vadd.bf16 %v7943, 1065369472
        %v7960 = vadd.bf16 %v7944, 1065369472
        %v7961 = vadd.bf16 %v7945, 1065369472
        %v7962 = vmul.bf16 %v7946, 1056980736
        %v7963 = vmul.bf16 %v7947, 1056980736
        %v7964 = vmul.bf16 %v7948, 1056980736
        %v7965 = vmul.bf16 %v7949, 1056980736
        %v7966 = vmul.bf16 %v7950, 1056980736
        %v7967 = vmul.bf16 %v7951, 1056980736
        %v7968 = vmul.bf16 %v7952, 1056980736
        %v7969 = vmul.bf16 %v7953, 1056980736
        %v7970 = vmul.bf16 %v7954, 1056980736
        %v7971 = vmul.bf16 %v7955, 1056980736
        %v7972 = vmul.bf16 %v7956, 1056980736
        %v7973 = vmul.bf16 %v7957, 1056980736
        %v7974 = vmul.bf16 %v7958, 1056980736
        %v7975 = vmul.bf16 %v7959, 1056980736
        %v7976 = vmul.bf16 %v7960, 1056980736
        %v7977 = vmul.bf16 %v7961, 1056980736
        %v7978 = vmul.bf16 %v7834, %v7962
        %v7979 = vmul.bf16 %v7835, %v7963
        %v7980 = vmul.bf16 %v7836, %v7964
        %v7981 = vmul.bf16 %v7837, %v7965
        %v7982 = vmul.bf16 %v7838, %v7966
        %v7983 = vmul.bf16 %v7839, %v7967
        %v7984 = vmul.bf16 %v7840, %v7968
        %v7985 = vmul.bf16 %v7841, %v7969
        %v7986 = vmul.bf16 %v7842, %v7970
        %v7987 = vmul.bf16 %v7843, %v7971
        %v7988 = vmul.bf16 %v7844, %v7972
        %v7989 = vmul.bf16 %v7845, %v7973
        %v7990 = vmul.bf16 %v7846, %v7974
        %v7991 = vmul.bf16 %v7847, %v7975
        %v7992 = vmul.bf16 %v7848, %v7976
        %v7993 = vmul.bf16 %v7849, %v7977
        %s7994 = smul.u32 %s35, 512
        %s7995 = smul.addr %s7994, 4
        %s7996 = scalar_lea.vmem %s12, %s7995
        %v7997 = vld [vmem:[%s7996] sm:$0xff]
        %v7998 = vld [vmem:[%s7996 + $0x8] sm:$0xff]
        %v7999 = vld [vmem:[%s7996 + $0x10] sm:$0xff]
        %v8000 = vld [vmem:[%s7996 + $0x18] sm:$0xff]
        %v8001 = vld [vmem:[%s7996 + $0x20] sm:$0xff]
        %v8002 = vld [vmem:[%s7996 + $0x28] sm:$0xff]
        %v8003 = vld [vmem:[%s7996 + $0x30] sm:$0xff]
        %v8004 = vld [vmem:[%s7996 + $0x38] sm:$0xff]
        %v8005 = vld [vmem:[%s7996 + $0x40] sm:$0xff]
        %v8006 = vld [vmem:[%s7996 + $0x48] sm:$0xff]
        %v8007 = vld [vmem:[%s7996 + $0x50] sm:$0xff]
        %v8008 = vld [vmem:[%s7996 + $0x58] sm:$0xff]
        %v8009 = vld [vmem:[%s7996 + $0x60] sm:$0xff]
        %v8010 = vld [vmem:[%s7996 + $0x68] sm:$0xff]
        %v8011 = vld [vmem:[%s7996 + $0x70] sm:$0xff]
        %v8012 = vld [vmem:[%s7996 + $0x78] sm:$0xff]
        %v8013 = vld [vmem:[%s7996 + $0x80] sm:$0xff]
        %v8014 = vld [vmem:[%s7996 + $0x88] sm:$0xff]
        %v8015 = vld [vmem:[%s7996 + $0x90] sm:$0xff]
        %v8016 = vld [vmem:[%s7996 + $0x98] sm:$0xff]
        %v8017 = vld [vmem:[%s7996 + $0xa0] sm:$0xff]
        %v8018 = vld [vmem:[%s7996 + $0xa8] sm:$0xff]
        %v8019 = vld [vmem:[%s7996 + $0xb0] sm:$0xff]
        %v8020 = vld [vmem:[%s7996 + $0xb8] sm:$0xff]
        %v8021 = vld [vmem:[%s7996 + $0xc0] sm:$0xff]
        %v8022 = vld [vmem:[%s7996 + $0xc8] sm:$0xff]
        %v8023 = vld [vmem:[%s7996 + $0xd0] sm:$0xff]
        %v8024 = vld [vmem:[%s7996 + $0xd8] sm:$0xff]
        %v8025 = vld [vmem:[%s7996 + $0xe0] sm:$0xff]
        %v8026 = vld [vmem:[%s7996 + $0xe8] sm:$0xff]
        %v8027 = vld [vmem:[%s7996 + $0xf0] sm:$0xff]
        %v8028 = vld [vmem:[%s7996 + $0xf8] sm:$0xff]
        %v8029 = vld [vmem:[%s7996 + $0x100] sm:$0xff]
        %v8030 = vld [vmem:[%s7996 + $0x108] sm:$0xff]
        %v8031 = vld [vmem:[%s7996 + $0x110] sm:$0xff]
        %v8032 = vld [vmem:[%s7996 + $0x118] sm:$0xff]
        %v8033 = vld [vmem:[%s7996 + $0x120] sm:$0xff]
        %v8034 = vld [vmem:[%s7996 + $0x128] sm:$0xff]
        %v8035 = vld [vmem:[%s7996 + $0x130] sm:$0xff]
        %v8036 = vld [vmem:[%s7996 + $0x138] sm:$0xff]
        %v8037 = vld [vmem:[%s7996 + $0x140] sm:$0xff]
        %v8038 = vld [vmem:[%s7996 + $0x148] sm:$0xff]
        %v8039 = vld [vmem:[%s7996 + $0x150] sm:$0xff]
        %v8040 = vld [vmem:[%s7996 + $0x158] sm:$0xff]
        %v8041 = vld [vmem:[%s7996 + $0x160] sm:$0xff]
        %v8042 = vld [vmem:[%s7996 + $0x168] sm:$0xff]
        %v8043 = vld [vmem:[%s7996 + $0x170] sm:$0xff]
        %v8044 = vld [vmem:[%s7996 + $0x178] sm:$0xff]
        %v8045 = vld [vmem:[%s7996 + $0x180] sm:$0xff]
        %v8046 = vld [vmem:[%s7996 + $0x188] sm:$0xff]
        %v8047 = vld [vmem:[%s7996 + $0x190] sm:$0xff]
        %v8048 = vld [vmem:[%s7996 + $0x198] sm:$0xff]
        %v8049 = vld [vmem:[%s7996 + $0x1a0] sm:$0xff]
        %v8050 = vld [vmem:[%s7996 + $0x1a8] sm:$0xff]
        %v8051 = vld [vmem:[%s7996 + $0x1b0] sm:$0xff]
        %v8052 = vld [vmem:[%s7996 + $0x1b8] sm:$0xff]
        %v8053 = vld [vmem:[%s7996 + $0x1c0] sm:$0xff]
        %v8054 = vld [vmem:[%s7996 + $0x1c8] sm:$0xff]
        %v8055 = vld [vmem:[%s7996 + $0x1d0] sm:$0xff]
        %v8056 = vld [vmem:[%s7996 + $0x1d8] sm:$0xff]
        %v8057 = vld [vmem:[%s7996 + $0x1e0] sm:$0xff]
        %v8058 = vld [vmem:[%s7996 + $0x1e8] sm:$0xff]
        %v8059 = vld [vmem:[%s7996 + $0x1f0] sm:$0xff]
        %v8060 = vld [vmem:[%s7996 + $0x1f8] sm:$0xff]
        %v8061 = vld [vmem:[%s7996 + $0x200] sm:$0xff]
        %v8062 = vld [vmem:[%s7996 + $0x208] sm:$0xff]
        %v8063 = vld [vmem:[%s7996 + $0x210] sm:$0xff]
        %v8064 = vld [vmem:[%s7996 + $0x218] sm:$0xff]
        %v8065 = vld [vmem:[%s7996 + $0x220] sm:$0xff]
        %v8066 = vld [vmem:[%s7996 + $0x228] sm:$0xff]
        %v8067 = vld [vmem:[%s7996 + $0x230] sm:$0xff]
        %v8068 = vld [vmem:[%s7996 + $0x238] sm:$0xff]
        %v8069 = vld [vmem:[%s7996 + $0x240] sm:$0xff]
        %v8070 = vld [vmem:[%s7996 + $0x248] sm:$0xff]
        %v8071 = vld [vmem:[%s7996 + $0x250] sm:$0xff]
        %v8072 = vld [vmem:[%s7996 + $0x258] sm:$0xff]
        %v8073 = vld [vmem:[%s7996 + $0x260] sm:$0xff]
        %v8074 = vld [vmem:[%s7996 + $0x268] sm:$0xff]
        %v8075 = vld [vmem:[%s7996 + $0x270] sm:$0xff]
        %v8076 = vld [vmem:[%s7996 + $0x278] sm:$0xff]
        %v8077 = vld [vmem:[%s7996 + $0x280] sm:$0xff]
        %v8078 = vld [vmem:[%s7996 + $0x288] sm:$0xff]
        %v8079 = vld [vmem:[%s7996 + $0x290] sm:$0xff]
        %v8080 = vld [vmem:[%s7996 + $0x298] sm:$0xff]
        %v8081 = vld [vmem:[%s7996 + $0x2a0] sm:$0xff]
        %v8082 = vld [vmem:[%s7996 + $0x2a8] sm:$0xff]
        %v8083 = vld [vmem:[%s7996 + $0x2b0] sm:$0xff]
        %v8084 = vld [vmem:[%s7996 + $0x2b8] sm:$0xff]
        %v8085 = vld [vmem:[%s7996 + $0x2c0] sm:$0xff]
        %v8086 = vld [vmem:[%s7996 + $0x2c8] sm:$0xff]
        %v8087 = vld [vmem:[%s7996 + $0x2d0] sm:$0xff]
        %v8088 = vld [vmem:[%s7996 + $0x2d8] sm:$0xff]
        %v8089 = vld [vmem:[%s7996 + $0x2e0] sm:$0xff]
        %v8090 = vld [vmem:[%s7996 + $0x2e8] sm:$0xff]
        %v8091 = vld [vmem:[%s7996 + $0x2f0] sm:$0xff]
        %v8092 = vld [vmem:[%s7996 + $0x2f8] sm:$0xff]
        %v8093 = vld [vmem:[%s7996 + $0x300] sm:$0xff]
        %v8094 = vld [vmem:[%s7996 + $0x308] sm:$0xff]
        %v8095 = vld [vmem:[%s7996 + $0x310] sm:$0xff]
        %v8096 = vld [vmem:[%s7996 + $0x318] sm:$0xff]
        %v8097 = vld [vmem:[%s7996 + $0x320] sm:$0xff]
        %v8098 = vld [vmem:[%s7996 + $0x328] sm:$0xff]
        %v8099 = vld [vmem:[%s7996 + $0x330] sm:$0xff]
        %v8100 = vld [vmem:[%s7996 + $0x338] sm:$0xff]
        %v8101 = vld [vmem:[%s7996 + $0x340] sm:$0xff]
        %v8102 = vld [vmem:[%s7996 + $0x348] sm:$0xff]
        %v8103 = vld [vmem:[%s7996 + $0x350] sm:$0xff]
        %v8104 = vld [vmem:[%s7996 + $0x358] sm:$0xff]
        %v8105 = vld [vmem:[%s7996 + $0x360] sm:$0xff]
        %v8106 = vld [vmem:[%s7996 + $0x368] sm:$0xff]
        %v8107 = vld [vmem:[%s7996 + $0x370] sm:$0xff]
        %v8108 = vld [vmem:[%s7996 + $0x378] sm:$0xff]
        %v8109 = vld [vmem:[%s7996 + $0x380] sm:$0xff]
        %v8110 = vld [vmem:[%s7996 + $0x388] sm:$0xff]
        %v8111 = vld [vmem:[%s7996 + $0x390] sm:$0xff]
        %v8112 = vld [vmem:[%s7996 + $0x398] sm:$0xff]
        %v8113 = vld [vmem:[%s7996 + $0x3a0] sm:$0xff]
        %v8114 = vld [vmem:[%s7996 + $0x3a8] sm:$0xff]
        %v8115 = vld [vmem:[%s7996 + $0x3b0] sm:$0xff]
        %v8116 = vld [vmem:[%s7996 + $0x3b8] sm:$0xff]
        %v8117 = vld [vmem:[%s7996 + $0x3c0] sm:$0xff]
        %v8118 = vld [vmem:[%s7996 + $0x3c8] sm:$0xff]
        %v8119 = vld [vmem:[%s7996 + $0x3d0] sm:$0xff]
        %v8120 = vld [vmem:[%s7996 + $0x3d8] sm:$0xff]
        %v8121 = vld [vmem:[%s7996 + $0x3e0] sm:$0xff]
        %v8122 = vld [vmem:[%s7996 + $0x3e8] sm:$0xff]
        %v8123 = vld [vmem:[%s7996 + $0x3f0] sm:$0xff]
        %v8124 = vld [vmem:[%s7996 + $0x3f8] sm:$0xff]
        %v8125 = vld [vmem:[%s7996 + $0x400] sm:$0xff]
        %v8126 = vld [vmem:[%s7996 + $0x408] sm:$0xff]
        %v8127 = vld [vmem:[%s7996 + $0x410] sm:$0xff]
        %v8128 = vld [vmem:[%s7996 + $0x418] sm:$0xff]
        %v8129 = vld [vmem:[%s7996 + $0x420] sm:$0xff]
        %v8130 = vld [vmem:[%s7996 + $0x428] sm:$0xff]
        %v8131 = vld [vmem:[%s7996 + $0x430] sm:$0xff]
        %v8132 = vld [vmem:[%s7996 + $0x438] sm:$0xff]
        %v8133 = vld [vmem:[%s7996 + $0x440] sm:$0xff]
        %v8134 = vld [vmem:[%s7996 + $0x448] sm:$0xff]
        %v8135 = vld [vmem:[%s7996 + $0x450] sm:$0xff]
        %v8136 = vld [vmem:[%s7996 + $0x458] sm:$0xff]
        %v8137 = vld [vmem:[%s7996 + $0x460] sm:$0xff]
        %v8138 = vld [vmem:[%s7996 + $0x468] sm:$0xff]
        %v8139 = vld [vmem:[%s7996 + $0x470] sm:$0xff]
        %v8140 = vld [vmem:[%s7996 + $0x478] sm:$0xff]
        %v8141 = vld [vmem:[%s7996 + $0x480] sm:$0xff]
        %v8142 = vld [vmem:[%s7996 + $0x488] sm:$0xff]
        %v8143 = vld [vmem:[%s7996 + $0x490] sm:$0xff]
        %v8144 = vld [vmem:[%s7996 + $0x498] sm:$0xff]
        %v8145 = vld [vmem:[%s7996 + $0x4a0] sm:$0xff]
        %v8146 = vld [vmem:[%s7996 + $0x4a8] sm:$0xff]
        %v8147 = vld [vmem:[%s7996 + $0x4b0] sm:$0xff]
        %v8148 = vld [vmem:[%s7996 + $0x4b8] sm:$0xff]
        %v8149 = vld [vmem:[%s7996 + $0x4c0] sm:$0xff]
        %v8150 = vld [vmem:[%s7996 + $0x4c8] sm:$0xff]
        %v8151 = vld [vmem:[%s7996 + $0x4d0] sm:$0xff]
        %v8152 = vld [vmem:[%s7996 + $0x4d8] sm:$0xff]
        %v8153 = vld [vmem:[%s7996 + $0x4e0] sm:$0xff]
        %v8154 = vld [vmem:[%s7996 + $0x4e8] sm:$0xff]
        %v8155 = vld [vmem:[%s7996 + $0x4f0] sm:$0xff]
        %v8156 = vld [vmem:[%s7996 + $0x4f8] sm:$0xff]
        %v8157 = vld [vmem:[%s7996 + $0x500] sm:$0xff]
        %v8158 = vld [vmem:[%s7996 + $0x508] sm:$0xff]
        %v8159 = vld [vmem:[%s7996 + $0x510] sm:$0xff]
        %v8160 = vld [vmem:[%s7996 + $0x518] sm:$0xff]
        %v8161 = vld [vmem:[%s7996 + $0x520] sm:$0xff]
        %v8162 = vld [vmem:[%s7996 + $0x528] sm:$0xff]
        %v8163 = vld [vmem:[%s7996 + $0x530] sm:$0xff]
        %v8164 = vld [vmem:[%s7996 + $0x538] sm:$0xff]
        %v8165 = vld [vmem:[%s7996 + $0x540] sm:$0xff]
        %v8166 = vld [vmem:[%s7996 + $0x548] sm:$0xff]
        %v8167 = vld [vmem:[%s7996 + $0x550] sm:$0xff]
        %v8168 = vld [vmem:[%s7996 + $0x558] sm:$0xff]
        %v8169 = vld [vmem:[%s7996 + $0x560] sm:$0xff]
        %v8170 = vld [vmem:[%s7996 + $0x568] sm:$0xff]
        %v8171 = vld [vmem:[%s7996 + $0x570] sm:$0xff]
        %v8172 = vld [vmem:[%s7996 + $0x578] sm:$0xff]
        %v8173 = vld [vmem:[%s7996 + $0x580] sm:$0xff]
        %v8174 = vld [vmem:[%s7996 + $0x588] sm:$0xff]
        %v8175 = vld [vmem:[%s7996 + $0x590] sm:$0xff]
        %v8176 = vld [vmem:[%s7996 + $0x598] sm:$0xff]
        %v8177 = vld [vmem:[%s7996 + $0x5a0] sm:$0xff]
        %v8178 = vld [vmem:[%s7996 + $0x5a8] sm:$0xff]
        %v8179 = vld [vmem:[%s7996 + $0x5b0] sm:$0xff]
        %v8180 = vld [vmem:[%s7996 + $0x5b8] sm:$0xff]
        %v8181 = vld [vmem:[%s7996 + $0x5c0] sm:$0xff]
        %v8182 = vld [vmem:[%s7996 + $0x5c8] sm:$0xff]
        %v8183 = vld [vmem:[%s7996 + $0x5d0] sm:$0xff]
        %v8184 = vld [vmem:[%s7996 + $0x5d8] sm:$0xff]
        %v8185 = vld [vmem:[%s7996 + $0x5e0] sm:$0xff]
        %v8186 = vld [vmem:[%s7996 + $0x5e8] sm:$0xff]
        %v8187 = vld [vmem:[%s7996 + $0x5f0] sm:$0xff]
        %v8188 = vld [vmem:[%s7996 + $0x5f8] sm:$0xff]
        %v8189 = vld [vmem:[%s7996 + $0x600] sm:$0xff]
        %v8190 = vld [vmem:[%s7996 + $0x608] sm:$0xff]
        %v8191 = vld [vmem:[%s7996 + $0x610] sm:$0xff]
        %v8192 = vld [vmem:[%s7996 + $0x618] sm:$0xff]
        %v8193 = vld [vmem:[%s7996 + $0x620] sm:$0xff]
        %v8194 = vld [vmem:[%s7996 + $0x628] sm:$0xff]
        %v8195 = vld [vmem:[%s7996 + $0x630] sm:$0xff]
        %v8196 = vld [vmem:[%s7996 + $0x638] sm:$0xff]
        %v8197 = vld [vmem:[%s7996 + $0x640] sm:$0xff]
        %v8198 = vld [vmem:[%s7996 + $0x648] sm:$0xff]
        %v8199 = vld [vmem:[%s7996 + $0x650] sm:$0xff]
        %v8200 = vld [vmem:[%s7996 + $0x658] sm:$0xff]
        %v8201 = vld [vmem:[%s7996 + $0x660] sm:$0xff]
        %v8202 = vld [vmem:[%s7996 + $0x668] sm:$0xff]
        %v8203 = vld [vmem:[%s7996 + $0x670] sm:$0xff]
        %v8204 = vld [vmem:[%s7996 + $0x678] sm:$0xff]
        %v8205 = vld [vmem:[%s7996 + $0x680] sm:$0xff]
        %v8206 = vld [vmem:[%s7996 + $0x688] sm:$0xff]
        %v8207 = vld [vmem:[%s7996 + $0x690] sm:$0xff]
        %v8208 = vld [vmem:[%s7996 + $0x698] sm:$0xff]
        %v8209 = vld [vmem:[%s7996 + $0x6a0] sm:$0xff]
        %v8210 = vld [vmem:[%s7996 + $0x6a8] sm:$0xff]
        %v8211 = vld [vmem:[%s7996 + $0x6b0] sm:$0xff]
        %v8212 = vld [vmem:[%s7996 + $0x6b8] sm:$0xff]
        %v8213 = vld [vmem:[%s7996 + $0x6c0] sm:$0xff]
        %v8214 = vld [vmem:[%s7996 + $0x6c8] sm:$0xff]
        %v8215 = vld [vmem:[%s7996 + $0x6d0] sm:$0xff]
        %v8216 = vld [vmem:[%s7996 + $0x6d8] sm:$0xff]
        %v8217 = vld [vmem:[%s7996 + $0x6e0] sm:$0xff]
        %v8218 = vld [vmem:[%s7996 + $0x6e8] sm:$0xff]
        %v8219 = vld [vmem:[%s7996 + $0x6f0] sm:$0xff]
        %v8220 = vld [vmem:[%s7996 + $0x6f8] sm:$0xff]
        %v8221 = vld [vmem:[%s7996 + $0x700] sm:$0xff]
        %v8222 = vld [vmem:[%s7996 + $0x708] sm:$0xff]
        %v8223 = vld [vmem:[%s7996 + $0x710] sm:$0xff]
        %v8224 = vld [vmem:[%s7996 + $0x718] sm:$0xff]
        %v8225 = vld [vmem:[%s7996 + $0x720] sm:$0xff]
        %v8226 = vld [vmem:[%s7996 + $0x728] sm:$0xff]
        %v8227 = vld [vmem:[%s7996 + $0x730] sm:$0xff]
        %v8228 = vld [vmem:[%s7996 + $0x738] sm:$0xff]
        %v8229 = vld [vmem:[%s7996 + $0x740] sm:$0xff]
        %v8230 = vld [vmem:[%s7996 + $0x748] sm:$0xff]
        %v8231 = vld [vmem:[%s7996 + $0x750] sm:$0xff]
        %v8232 = vld [vmem:[%s7996 + $0x758] sm:$0xff]
        %v8233 = vld [vmem:[%s7996 + $0x760] sm:$0xff]
        %v8234 = vld [vmem:[%s7996 + $0x768] sm:$0xff]
        %v8235 = vld [vmem:[%s7996 + $0x770] sm:$0xff]
        %v8236 = vld [vmem:[%s7996 + $0x778] sm:$0xff]
        %v8237 = vld [vmem:[%s7996 + $0x780] sm:$0xff]
        %v8238 = vld [vmem:[%s7996 + $0x788] sm:$0xff]
        %v8239 = vld [vmem:[%s7996 + $0x790] sm:$0xff]
        %v8240 = vld [vmem:[%s7996 + $0x798] sm:$0xff]
        %v8241 = vld [vmem:[%s7996 + $0x7a0] sm:$0xff]
        %v8242 = vld [vmem:[%s7996 + $0x7a8] sm:$0xff]
        %v8243 = vld [vmem:[%s7996 + $0x7b0] sm:$0xff]
        %v8244 = vld [vmem:[%s7996 + $0x7b8] sm:$0xff]
        %v8245 = vld [vmem:[%s7996 + $0x7c0] sm:$0xff]
        %v8246 = vld [vmem:[%s7996 + $0x7c8] sm:$0xff]
        %v8247 = vld [vmem:[%s7996 + $0x7d0] sm:$0xff]
        %v8248 = vld [vmem:[%s7996 + $0x7d8] sm:$0xff]
        %v8249 = vld [vmem:[%s7996 + $0x7e0] sm:$0xff]
        %v8250 = vld [vmem:[%s7996 + $0x7e8] sm:$0xff]
        %v8251 = vld [vmem:[%s7996 + $0x7f0] sm:$0xff]
        %v8252 = vld [vmem:[%s7996 + $0x7f8] sm:$0xff]
        %s8253 = scalar_lea.vmem [#allocation15], %s642
        %v8254 = vld [vmem:[%s8253] sm:$0x3]
        %v8256 = vlaneseq
        %v8257 = vshrl.u32 %v8256, 7
        %v8258 = vsub.s32 0, %v8257
        %v8259 = vrot.slane %v8254, %v8258
        %v8260 = vlaneseq
        %v8261 = vshrl.u32 %v8260, 7
        %v8262 = vsub.s32 1, %v8261
        %v8263 = vrot.slane %v8254, %v8262
        %v8522 = vunpack.c.l.b16 %v7997
        %v8523 = vunpack.c.h.b16 %v7997
        %v8524 = vunpack.c.l.b16 %v7998
        %v8525 = vunpack.c.h.b16 %v7998
        %v8526 = vunpack.c.l.b16 %v7999
        %v8527 = vunpack.c.h.b16 %v7999
        %v8528 = vunpack.c.l.b16 %v8000
        %v8529 = vunpack.c.h.b16 %v8000
        %v8530 = vunpack.c.l.b16 %v8001
        %v8531 = vunpack.c.h.b16 %v8001
        %v8532 = vunpack.c.l.b16 %v8002
        %v8533 = vunpack.c.h.b16 %v8002
        %v8534 = vunpack.c.l.b16 %v8003
        %v8535 = vunpack.c.h.b16 %v8003
        %v8536 = vunpack.c.l.b16 %v8004
        %v8537 = vunpack.c.h.b16 %v8004
        %v8538 = vunpack.c.l.b16 %v8005
        %v8539 = vunpack.c.h.b16 %v8005
        %v8540 = vunpack.c.l.b16 %v8006
        %v8541 = vunpack.c.h.b16 %v8006
        %v8542 = vunpack.c.l.b16 %v8007
        %v8543 = vunpack.c.h.b16 %v8007
        %v8544 = vunpack.c.l.b16 %v8008
        %v8545 = vunpack.c.h.b16 %v8008
        %v8546 = vunpack.c.l.b16 %v8009
        %v8547 = vunpack.c.h.b16 %v8009
        %v8548 = vunpack.c.l.b16 %v8010
        %v8549 = vunpack.c.h.b16 %v8010
        %v8550 = vunpack.c.l.b16 %v8011
        %v8551 = vunpack.c.h.b16 %v8011
        %v8552 = vunpack.c.l.b16 %v8012
        %v8553 = vunpack.c.h.b16 %v8012
        %v8554 = vunpack.c.l.b16 %v8013
        %v8555 = vunpack.c.h.b16 %v8013
        %v8556 = vunpack.c.l.b16 %v8014
        %v8557 = vunpack.c.h.b16 %v8014
        %v8558 = vunpack.c.l.b16 %v8015
        %v8559 = vunpack.c.h.b16 %v8015
        %v8560 = vunpack.c.l.b16 %v8016
        %v8561 = vunpack.c.h.b16 %v8016
        %v8562 = vunpack.c.l.b16 %v8017
        %v8563 = vunpack.c.h.b16 %v8017
        %v8564 = vunpack.c.l.b16 %v8018
        %v8565 = vunpack.c.h.b16 %v8018
        %v8566 = vunpack.c.l.b16 %v8019
        %v8567 = vunpack.c.h.b16 %v8019
        %v8568 = vunpack.c.l.b16 %v8020
        %v8569 = vunpack.c.h.b16 %v8020
        %v8570 = vunpack.c.l.b16 %v8021
        %v8571 = vunpack.c.h.b16 %v8021
        %v8572 = vunpack.c.l.b16 %v8022
        %v8573 = vunpack.c.h.b16 %v8022
        %v8574 = vunpack.c.l.b16 %v8023
        %v8575 = vunpack.c.h.b16 %v8023
        %v8576 = vunpack.c.l.b16 %v8024
        %v8577 = vunpack.c.h.b16 %v8024
        %v8578 = vunpack.c.l.b16 %v8025
        %v8579 = vunpack.c.h.b16 %v8025
        %v8580 = vunpack.c.l.b16 %v8026
        %v8581 = vunpack.c.h.b16 %v8026
        %v8582 = vunpack.c.l.b16 %v8027
        %v8583 = vunpack.c.h.b16 %v8027
        %v8584 = vunpack.c.l.b16 %v8028
        %v8585 = vunpack.c.h.b16 %v8028
        %v8586 = vunpack.c.l.b16 %v8029
        %v8587 = vunpack.c.h.b16 %v8029
        %v8588 = vunpack.c.l.b16 %v8030
        %v8589 = vunpack.c.h.b16 %v8030
        %v8590 = vunpack.c.l.b16 %v8031
        %v8591 = vunpack.c.h.b16 %v8031
        %v8592 = vunpack.c.l.b16 %v8032
        %v8593 = vunpack.c.h.b16 %v8032
        %v8594 = vunpack.c.l.b16 %v8033
        %v8595 = vunpack.c.h.b16 %v8033
        %v8596 = vunpack.c.l.b16 %v8034
        %v8597 = vunpack.c.h.b16 %v8034
        %v8598 = vunpack.c.l.b16 %v8035
        %v8599 = vunpack.c.h.b16 %v8035
        %v8600 = vunpack.c.l.b16 %v8036
        %v8601 = vunpack.c.h.b16 %v8036
        %v8602 = vunpack.c.l.b16 %v8037
        %v8603 = vunpack.c.h.b16 %v8037
        %v8604 = vunpack.c.l.b16 %v8038
        %v8605 = vunpack.c.h.b16 %v8038
        %v8606 = vunpack.c.l.b16 %v8039
        %v8607 = vunpack.c.h.b16 %v8039
        %v8608 = vunpack.c.l.b16 %v8040
        %v8609 = vunpack.c.h.b16 %v8040
        %v8610 = vunpack.c.l.b16 %v8041
        %v8611 = vunpack.c.h.b16 %v8041
        %v8612 = vunpack.c.l.b16 %v8042
        %v8613 = vunpack.c.h.b16 %v8042
        %v8614 = vunpack.c.l.b16 %v8043
        %v8615 = vunpack.c.h.b16 %v8043
        %v8616 = vunpack.c.l.b16 %v8044
        %v8617 = vunpack.c.h.b16 %v8044
        %v8618 = vunpack.c.l.b16 %v8045
        %v8619 = vunpack.c.h.b16 %v8045
        %v8620 = vunpack.c.l.b16 %v8046
        %v8621 = vunpack.c.h.b16 %v8046
        %v8622 = vunpack.c.l.b16 %v8047
        %v8623 = vunpack.c.h.b16 %v8047
        %v8624 = vunpack.c.l.b16 %v8048
        %v8625 = vunpack.c.h.b16 %v8048
        %v8626 = vunpack.c.l.b16 %v8049
        %v8627 = vunpack.c.h.b16 %v8049
        %v8628 = vunpack.c.l.b16 %v8050
        %v8629 = vunpack.c.h.b16 %v8050
        %v8630 = vunpack.c.l.b16 %v8051
        %v8631 = vunpack.c.h.b16 %v8051
        %v8632 = vunpack.c.l.b16 %v8052
        %v8633 = vunpack.c.h.b16 %v8052
        %v8634 = vunpack.c.l.b16 %v8053
        %v8635 = vunpack.c.h.b16 %v8053
        %v8636 = vunpack.c.l.b16 %v8054
        %v8637 = vunpack.c.h.b16 %v8054
        %v8638 = vunpack.c.l.b16 %v8055
        %v8639 = vunpack.c.h.b16 %v8055
        %v8640 = vunpack.c.l.b16 %v8056
        %v8641 = vunpack.c.h.b16 %v8056
        %v8642 = vunpack.c.l.b16 %v8057
        %v8643 = vunpack.c.h.b16 %v8057
        %v8644 = vunpack.c.l.b16 %v8058
        %v8645 = vunpack.c.h.b16 %v8058
        %v8646 = vunpack.c.l.b16 %v8059
        %v8647 = vunpack.c.h.b16 %v8059
        %v8648 = vunpack.c.l.b16 %v8060
        %v8649 = vunpack.c.h.b16 %v8060
        %v8650 = vunpack.c.l.b16 %v8061
        %v8651 = vunpack.c.h.b16 %v8061
        %v8652 = vunpack.c.l.b16 %v8062
        %v8653 = vunpack.c.h.b16 %v8062
        %v8654 = vunpack.c.l.b16 %v8063
        %v8655 = vunpack.c.h.b16 %v8063
        %v8656 = vunpack.c.l.b16 %v8064
        %v8657 = vunpack.c.h.b16 %v8064
        %v8658 = vunpack.c.l.b16 %v8065
        %v8659 = vunpack.c.h.b16 %v8065
        %v8660 = vunpack.c.l.b16 %v8066
        %v8661 = vunpack.c.h.b16 %v8066
        %v8662 = vunpack.c.l.b16 %v8067
        %v8663 = vunpack.c.h.b16 %v8067
        %v8664 = vunpack.c.l.b16 %v8068
        %v8665 = vunpack.c.h.b16 %v8068
        %v8666 = vunpack.c.l.b16 %v8069
        %v8667 = vunpack.c.h.b16 %v8069
        %v8668 = vunpack.c.l.b16 %v8070
        %v8669 = vunpack.c.h.b16 %v8070
        %v8670 = vunpack.c.l.b16 %v8071
        %v8671 = vunpack.c.h.b16 %v8071
        %v8672 = vunpack.c.l.b16 %v8072
        %v8673 = vunpack.c.h.b16 %v8072
        %v8674 = vunpack.c.l.b16 %v8073
        %v8675 = vunpack.c.h.b16 %v8073
        %v8676 = vunpack.c.l.b16 %v8074
        %v8677 = vunpack.c.h.b16 %v8074
        %v8678 = vunpack.c.l.b16 %v8075
        %v8679 = vunpack.c.h.b16 %v8075
        %v8680 = vunpack.c.l.b16 %v8076
        %v8681 = vunpack.c.h.b16 %v8076
        %v8682 = vunpack.c.l.b16 %v8077
        %v8683 = vunpack.c.h.b16 %v8077
        %v8684 = vunpack.c.l.b16 %v8078
        %v8685 = vunpack.c.h.b16 %v8078
        %v8686 = vunpack.c.l.b16 %v8079
        %v8687 = vunpack.c.h.b16 %v8079
        %v8688 = vunpack.c.l.b16 %v8080
        %v8689 = vunpack.c.h.b16 %v8080
        %v8690 = vunpack.c.l.b16 %v8081
        %v8691 = vunpack.c.h.b16 %v8081
        %v8692 = vunpack.c.l.b16 %v8082
        %v8693 = vunpack.c.h.b16 %v8082
        %v8694 = vunpack.c.l.b16 %v8083
        %v8695 = vunpack.c.h.b16 %v8083
        %v8696 = vunpack.c.l.b16 %v8084
        %v8697 = vunpack.c.h.b16 %v8084
        %v8698 = vunpack.c.l.b16 %v8085
        %v8699 = vunpack.c.h.b16 %v8085
        %v8700 = vunpack.c.l.b16 %v8086
        %v8701 = vunpack.c.h.b16 %v8086
        %v8702 = vunpack.c.l.b16 %v8087
        %v8703 = vunpack.c.h.b16 %v8087
        %v8704 = vunpack.c.l.b16 %v8088
        %v8705 = vunpack.c.h.b16 %v8088
        %v8706 = vunpack.c.l.b16 %v8089
        %v8707 = vunpack.c.h.b16 %v8089
        %v8708 = vunpack.c.l.b16 %v8090
        %v8709 = vunpack.c.h.b16 %v8090
        %v8710 = vunpack.c.l.b16 %v8091
        %v8711 = vunpack.c.h.b16 %v8091
        %v8712 = vunpack.c.l.b16 %v8092
        %v8713 = vunpack.c.h.b16 %v8092
        %v8714 = vunpack.c.l.b16 %v8093
        %v8715 = vunpack.c.h.b16 %v8093
        %v8716 = vunpack.c.l.b16 %v8094
        %v8717 = vunpack.c.h.b16 %v8094
        %v8718 = vunpack.c.l.b16 %v8095
        %v8719 = vunpack.c.h.b16 %v8095
        %v8720 = vunpack.c.l.b16 %v8096
        %v8721 = vunpack.c.h.b16 %v8096
        %v8722 = vunpack.c.l.b16 %v8097
        %v8723 = vunpack.c.h.b16 %v8097
        %v8724 = vunpack.c.l.b16 %v8098
        %v8725 = vunpack.c.h.b16 %v8098
        %v8726 = vunpack.c.l.b16 %v8099
        %v8727 = vunpack.c.h.b16 %v8099
        %v8728 = vunpack.c.l.b16 %v8100
        %v8729 = vunpack.c.h.b16 %v8100
        %v8730 = vunpack.c.l.b16 %v8101
        %v8731 = vunpack.c.h.b16 %v8101
        %v8732 = vunpack.c.l.b16 %v8102
        %v8733 = vunpack.c.h.b16 %v8102
        %v8734 = vunpack.c.l.b16 %v8103
        %v8735 = vunpack.c.h.b16 %v8103
        %v8736 = vunpack.c.l.b16 %v8104
        %v8737 = vunpack.c.h.b16 %v8104
        %v8738 = vunpack.c.l.b16 %v8105
        %v8739 = vunpack.c.h.b16 %v8105
        %v8740 = vunpack.c.l.b16 %v8106
        %v8741 = vunpack.c.h.b16 %v8106
        %v8742 = vunpack.c.l.b16 %v8107
        %v8743 = vunpack.c.h.b16 %v8107
        %v8744 = vunpack.c.l.b16 %v8108
        %v8745 = vunpack.c.h.b16 %v8108
        %v8746 = vunpack.c.l.b16 %v8109
        %v8747 = vunpack.c.h.b16 %v8109
        %v8748 = vunpack.c.l.b16 %v8110
        %v8749 = vunpack.c.h.b16 %v8110
        %v8750 = vunpack.c.l.b16 %v8111
        %v8751 = vunpack.c.h.b16 %v8111
        %v8752 = vunpack.c.l.b16 %v8112
        %v8753 = vunpack.c.h.b16 %v8112
        %v8754 = vunpack.c.l.b16 %v8113
        %v8755 = vunpack.c.h.b16 %v8113
        %v8756 = vunpack.c.l.b16 %v8114
        %v8757 = vunpack.c.h.b16 %v8114
        %v8758 = vunpack.c.l.b16 %v8115
        %v8759 = vunpack.c.h.b16 %v8115
        %v8760 = vunpack.c.l.b16 %v8116
        %v8761 = vunpack.c.h.b16 %v8116
        %v8762 = vunpack.c.l.b16 %v8117
        %v8763 = vunpack.c.h.b16 %v8117
        %v8764 = vunpack.c.l.b16 %v8118
        %v8765 = vunpack.c.h.b16 %v8118
        %v8766 = vunpack.c.l.b16 %v8119
        %v8767 = vunpack.c.h.b16 %v8119
        %v8768 = vunpack.c.l.b16 %v8120
        %v8769 = vunpack.c.h.b16 %v8120
        %v8770 = vunpack.c.l.b16 %v8121
        %v8771 = vunpack.c.h.b16 %v8121
        %v8772 = vunpack.c.l.b16 %v8122
        %v8773 = vunpack.c.h.b16 %v8122
        %v8774 = vunpack.c.l.b16 %v8123
        %v8775 = vunpack.c.h.b16 %v8123
        %v8776 = vunpack.c.l.b16 %v8124
        %v8777 = vunpack.c.h.b16 %v8124
        %v8778 = vunpack.c.l.b16 %v8125
        %v8779 = vunpack.c.h.b16 %v8125
        %v8780 = vunpack.c.l.b16 %v8126
        %v8781 = vunpack.c.h.b16 %v8126
        %v8782 = vunpack.c.l.b16 %v8127
        %v8783 = vunpack.c.h.b16 %v8127
        %v8784 = vunpack.c.l.b16 %v8128
        %v8785 = vunpack.c.h.b16 %v8128
        %v8786 = vunpack.c.l.b16 %v8129
        %v8787 = vunpack.c.h.b16 %v8129
        %v8788 = vunpack.c.l.b16 %v8130
        %v8789 = vunpack.c.h.b16 %v8130
        %v8790 = vunpack.c.l.b16 %v8131
        %v8791 = vunpack.c.h.b16 %v8131
        %v8792 = vunpack.c.l.b16 %v8132
        %v8793 = vunpack.c.h.b16 %v8132
        %v8794 = vunpack.c.l.b16 %v8133
        %v8795 = vunpack.c.h.b16 %v8133
        %v8796 = vunpack.c.l.b16 %v8134
        %v8797 = vunpack.c.h.b16 %v8134
        %v8798 = vunpack.c.l.b16 %v8135
        %v8799 = vunpack.c.h.b16 %v8135
        %v8800 = vunpack.c.l.b16 %v8136
        %v8801 = vunpack.c.h.b16 %v8136
        %v8802 = vunpack.c.l.b16 %v8137
        %v8803 = vunpack.c.h.b16 %v8137
        %v8804 = vunpack.c.l.b16 %v8138
        %v8805 = vunpack.c.h.b16 %v8138
        %v8806 = vunpack.c.l.b16 %v8139
        %v8807 = vunpack.c.h.b16 %v8139
        %v8808 = vunpack.c.l.b16 %v8140
        %v8809 = vunpack.c.h.b16 %v8140
        %v8810 = vunpack.c.l.b16 %v8141
        %v8811 = vunpack.c.h.b16 %v8141
        %v8812 = vunpack.c.l.b16 %v8142
        %v8813 = vunpack.c.h.b16 %v8142
        %v8814 = vunpack.c.l.b16 %v8143
        %v8815 = vunpack.c.h.b16 %v8143
        %v8816 = vunpack.c.l.b16 %v8144
        %v8817 = vunpack.c.h.b16 %v8144
        %v8818 = vunpack.c.l.b16 %v8145
        %v8819 = vunpack.c.h.b16 %v8145
        %v8820 = vunpack.c.l.b16 %v8146
        %v8821 = vunpack.c.h.b16 %v8146
        %v8822 = vunpack.c.l.b16 %v8147
        %v8823 = vunpack.c.h.b16 %v8147
        %v8824 = vunpack.c.l.b16 %v8148
        %v8825 = vunpack.c.h.b16 %v8148
        %v8826 = vunpack.c.l.b16 %v8149
        %v8827 = vunpack.c.h.b16 %v8149
        %v8828 = vunpack.c.l.b16 %v8150
        %v8829 = vunpack.c.h.b16 %v8150
        %v8830 = vunpack.c.l.b16 %v8151
        %v8831 = vunpack.c.h.b16 %v8151
        %v8832 = vunpack.c.l.b16 %v8152
        %v8833 = vunpack.c.h.b16 %v8152
        %v8834 = vunpack.c.l.b16 %v8153
        %v8835 = vunpack.c.h.b16 %v8153
        %v8836 = vunpack.c.l.b16 %v8154
        %v8837 = vunpack.c.h.b16 %v8154
        %v8838 = vunpack.c.l.b16 %v8155
        %v8839 = vunpack.c.h.b16 %v8155
        %v8840 = vunpack.c.l.b16 %v8156
        %v8841 = vunpack.c.h.b16 %v8156
        %v8842 = vunpack.c.l.b16 %v8157
        %v8843 = vunpack.c.h.b16 %v8157
        %v8844 = vunpack.c.l.b16 %v8158
        %v8845 = vunpack.c.h.b16 %v8158
        %v8846 = vunpack.c.l.b16 %v8159
        %v8847 = vunpack.c.h.b16 %v8159
        %v8848 = vunpack.c.l.b16 %v8160
        %v8849 = vunpack.c.h.b16 %v8160
        %v8850 = vunpack.c.l.b16 %v8161
        %v8851 = vunpack.c.h.b16 %v8161
        %v8852 = vunpack.c.l.b16 %v8162
        %v8853 = vunpack.c.h.b16 %v8162
        %v8854 = vunpack.c.l.b16 %v8163
        %v8855 = vunpack.c.h.b16 %v8163
        %v8856 = vunpack.c.l.b16 %v8164
        %v8857 = vunpack.c.h.b16 %v8164
        %v8858 = vunpack.c.l.b16 %v8165
        %v8859 = vunpack.c.h.b16 %v8165
        %v8860 = vunpack.c.l.b16 %v8166
        %v8861 = vunpack.c.h.b16 %v8166
        %v8862 = vunpack.c.l.b16 %v8167
        %v8863 = vunpack.c.h.b16 %v8167
        %v8864 = vunpack.c.l.b16 %v8168
        %v8865 = vunpack.c.h.b16 %v8168
        %v8866 = vunpack.c.l.b16 %v8169
        %v8867 = vunpack.c.h.b16 %v8169
        %v8868 = vunpack.c.l.b16 %v8170
        %v8869 = vunpack.c.h.b16 %v8170
        %v8870 = vunpack.c.l.b16 %v8171
        %v8871 = vunpack.c.h.b16 %v8171
        %v8872 = vunpack.c.l.b16 %v8172
        %v8873 = vunpack.c.h.b16 %v8172
        %v8874 = vunpack.c.l.b16 %v8173
        %v8875 = vunpack.c.h.b16 %v8173
        %v8876 = vunpack.c.l.b16 %v8174
        %v8877 = vunpack.c.h.b16 %v8174
        %v8878 = vunpack.c.l.b16 %v8175
        %v8879 = vunpack.c.h.b16 %v8175
        %v8880 = vunpack.c.l.b16 %v8176
        %v8881 = vunpack.c.h.b16 %v8176
        %v8882 = vunpack.c.l.b16 %v8177
        %v8883 = vunpack.c.h.b16 %v8177
        %v8884 = vunpack.c.l.b16 %v8178
        %v8885 = vunpack.c.h.b16 %v8178
        %v8886 = vunpack.c.l.b16 %v8179
        %v8887 = vunpack.c.h.b16 %v8179
        %v8888 = vunpack.c.l.b16 %v8180
        %v8889 = vunpack.c.h.b16 %v8180
        %v8890 = vunpack.c.l.b16 %v8181
        %v8891 = vunpack.c.h.b16 %v8181
        %v8892 = vunpack.c.l.b16 %v8182
        %v8893 = vunpack.c.h.b16 %v8182
        %v8894 = vunpack.c.l.b16 %v8183
        %v8895 = vunpack.c.h.b16 %v8183
        %v8896 = vunpack.c.l.b16 %v8184
        %v8897 = vunpack.c.h.b16 %v8184
        %v8898 = vunpack.c.l.b16 %v8185
        %v8899 = vunpack.c.h.b16 %v8185
        %v8900 = vunpack.c.l.b16 %v8186
        %v8901 = vunpack.c.h.b16 %v8186
        %v8902 = vunpack.c.l.b16 %v8187
        %v8903 = vunpack.c.h.b16 %v8187
        %v8904 = vunpack.c.l.b16 %v8188
        %v8905 = vunpack.c.h.b16 %v8188
        %v8906 = vunpack.c.l.b16 %v8189
        %v8907 = vunpack.c.h.b16 %v8189
        %v8908 = vunpack.c.l.b16 %v8190
        %v8909 = vunpack.c.h.b16 %v8190
        %v8910 = vunpack.c.l.b16 %v8191
        %v8911 = vunpack.c.h.b16 %v8191
        %v8912 = vunpack.c.l.b16 %v8192
        %v8913 = vunpack.c.h.b16 %v8192
        %v8914 = vunpack.c.l.b16 %v8193
        %v8915 = vunpack.c.h.b16 %v8193
        %v8916 = vunpack.c.l.b16 %v8194
        %v8917 = vunpack.c.h.b16 %v8194
        %v8918 = vunpack.c.l.b16 %v8195
        %v8919 = vunpack.c.h.b16 %v8195
        %v8920 = vunpack.c.l.b16 %v8196
        %v8921 = vunpack.c.h.b16 %v8196
        %v8922 = vunpack.c.l.b16 %v8197
        %v8923 = vunpack.c.h.b16 %v8197
        %v8924 = vunpack.c.l.b16 %v8198
        %v8925 = vunpack.c.h.b16 %v8198
        %v8926 = vunpack.c.l.b16 %v8199
        %v8927 = vunpack.c.h.b16 %v8199
        %v8928 = vunpack.c.l.b16 %v8200
        %v8929 = vunpack.c.h.b16 %v8200
        %v8930 = vunpack.c.l.b16 %v8201
        %v8931 = vunpack.c.h.b16 %v8201
        %v8932 = vunpack.c.l.b16 %v8202
        %v8933 = vunpack.c.h.b16 %v8202
        %v8934 = vunpack.c.l.b16 %v8203
        %v8935 = vunpack.c.h.b16 %v8203
        %v8936 = vunpack.c.l.b16 %v8204
        %v8937 = vunpack.c.h.b16 %v8204
        %v8938 = vunpack.c.l.b16 %v8205
        %v8939 = vunpack.c.h.b16 %v8205
        %v8940 = vunpack.c.l.b16 %v8206
        %v8941 = vunpack.c.h.b16 %v8206
        %v8942 = vunpack.c.l.b16 %v8207
        %v8943 = vunpack.c.h.b16 %v8207
        %v8944 = vunpack.c.l.b16 %v8208
        %v8945 = vunpack.c.h.b16 %v8208
        %v8946 = vunpack.c.l.b16 %v8209
        %v8947 = vunpack.c.h.b16 %v8209
        %v8948 = vunpack.c.l.b16 %v8210
        %v8949 = vunpack.c.h.b16 %v8210
        %v8950 = vunpack.c.l.b16 %v8211
        %v8951 = vunpack.c.h.b16 %v8211
        %v8952 = vunpack.c.l.b16 %v8212
        %v8953 = vunpack.c.h.b16 %v8212
        %v8954 = vunpack.c.l.b16 %v8213
        %v8955 = vunpack.c.h.b16 %v8213
        %v8956 = vunpack.c.l.b16 %v8214
        %v8957 = vunpack.c.h.b16 %v8214
        %v8958 = vunpack.c.l.b16 %v8215
        %v8959 = vunpack.c.h.b16 %v8215
        %v8960 = vunpack.c.l.b16 %v8216
        %v8961 = vunpack.c.h.b16 %v8216
        %v8962 = vunpack.c.l.b16 %v8217
        %v8963 = vunpack.c.h.b16 %v8217
        %v8964 = vunpack.c.l.b16 %v8218
        %v8965 = vunpack.c.h.b16 %v8218
        %v8966 = vunpack.c.l.b16 %v8219
        %v8967 = vunpack.c.h.b16 %v8219
        %v8968 = vunpack.c.l.b16 %v8220
        %v8969 = vunpack.c.h.b16 %v8220
        %v8970 = vunpack.c.l.b16 %v8221
        %v8971 = vunpack.c.h.b16 %v8221
        %v8972 = vunpack.c.l.b16 %v8222
        %v8973 = vunpack.c.h.b16 %v8222
        %v8974 = vunpack.c.l.b16 %v8223
        %v8975 = vunpack.c.h.b16 %v8223
        %v8976 = vunpack.c.l.b16 %v8224
        %v8977 = vunpack.c.h.b16 %v8224
        %v8978 = vunpack.c.l.b16 %v8225
        %v8979 = vunpack.c.h.b16 %v8225
        %v8980 = vunpack.c.l.b16 %v8226
        %v8981 = vunpack.c.h.b16 %v8226
        %v8982 = vunpack.c.l.b16 %v8227
        %v8983 = vunpack.c.h.b16 %v8227
        %v8984 = vunpack.c.l.b16 %v8228
        %v8985 = vunpack.c.h.b16 %v8228
        %v8986 = vunpack.c.l.b16 %v8229
        %v8987 = vunpack.c.h.b16 %v8229
        %v8988 = vunpack.c.l.b16 %v8230
        %v8989 = vunpack.c.h.b16 %v8230
        %v8990 = vunpack.c.l.b16 %v8231
        %v8991 = vunpack.c.h.b16 %v8231
        %v8992 = vunpack.c.l.b16 %v8232
        %v8993 = vunpack.c.h.b16 %v8232
        %v8994 = vunpack.c.l.b16 %v8233
        %v8995 = vunpack.c.h.b16 %v8233
        %v8996 = vunpack.c.l.b16 %v8234
        %v8997 = vunpack.c.h.b16 %v8234
        %v8998 = vunpack.c.l.b16 %v8235
        %v8999 = vunpack.c.h.b16 %v8235
        %v9000 = vunpack.c.l.b16 %v8236
        %v9001 = vunpack.c.h.b16 %v8236
        %v9002 = vunpack.c.l.b16 %v8237
        %v9003 = vunpack.c.h.b16 %v8237
        %v9004 = vunpack.c.l.b16 %v8238
        %v9005 = vunpack.c.h.b16 %v8238
        %v9006 = vunpack.c.l.b16 %v8239
        %v9007 = vunpack.c.h.b16 %v8239
        %v9008 = vunpack.c.l.b16 %v8240
        %v9009 = vunpack.c.h.b16 %v8240
        %v9010 = vunpack.c.l.b16 %v8241
        %v9011 = vunpack.c.h.b16 %v8241
        %v9012 = vunpack.c.l.b16 %v8242
        %v9013 = vunpack.c.h.b16 %v8242
        %v9014 = vunpack.c.l.b16 %v8243
        %v9015 = vunpack.c.h.b16 %v8243
        %v9016 = vunpack.c.l.b16 %v8244
        %v9017 = vunpack.c.h.b16 %v8244
        %v9018 = vunpack.c.l.b16 %v8245
        %v9019 = vunpack.c.h.b16 %v8245
        %v9020 = vunpack.c.l.b16 %v8246
        %v9021 = vunpack.c.h.b16 %v8246
        %v9022 = vunpack.c.l.b16 %v8247
        %v9023 = vunpack.c.h.b16 %v8247
        %v9024 = vunpack.c.l.b16 %v8248
        %v9025 = vunpack.c.h.b16 %v8248
        %v9026 = vunpack.c.l.b16 %v8249
        %v9027 = vunpack.c.h.b16 %v8249
        %v9028 = vunpack.c.l.b16 %v8250
        %v9029 = vunpack.c.h.b16 %v8250
        %v9030 = vunpack.c.l.b16 %v8251
        %v9031 = vunpack.c.h.b16 %v8251
        %v9032 = vunpack.c.l.b16 %v8252
        %v9033 = vunpack.c.h.b16 %v8252
        %v9034 = vpack.c.b16 %v8524, %v8522
        %v9035 = vpack.c.b16 %v8525, %v8523
        %v9036 = vpack.c.b16 %v8528, %v8526
        %v9037 = vpack.c.b16 %v8529, %v8527
        %v9038 = vpack.c.b16 %v8532, %v8530
        %v9039 = vpack.c.b16 %v8533, %v8531
        %v9040 = vpack.c.b16 %v8536, %v8534
        %v9041 = vpack.c.b16 %v8537, %v8535
        %v9042 = vpack.c.b16 %v8540, %v8538
        %v9043 = vpack.c.b16 %v8541, %v8539
        %v9044 = vpack.c.b16 %v8544, %v8542
        %v9045 = vpack.c.b16 %v8545, %v8543
        %v9046 = vpack.c.b16 %v8548, %v8546
        %v9047 = vpack.c.b16 %v8549, %v8547
        %v9048 = vpack.c.b16 %v8552, %v8550
        %v9049 = vpack.c.b16 %v8553, %v8551
        %v9050 = vpack.c.b16 %v8556, %v8554
        %v9051 = vpack.c.b16 %v8557, %v8555
        %v9052 = vpack.c.b16 %v8560, %v8558
        %v9053 = vpack.c.b16 %v8561, %v8559
        %v9054 = vpack.c.b16 %v8564, %v8562
        %v9055 = vpack.c.b16 %v8565, %v8563
        %v9056 = vpack.c.b16 %v8568, %v8566
        %v9057 = vpack.c.b16 %v8569, %v8567
        %v9058 = vpack.c.b16 %v8572, %v8570
        %v9059 = vpack.c.b16 %v8573, %v8571
        %v9060 = vpack.c.b16 %v8576, %v8574
        %v9061 = vpack.c.b16 %v8577, %v8575
        %v9062 = vpack.c.b16 %v8580, %v8578
        %v9063 = vpack.c.b16 %v8581, %v8579
        %v9064 = vpack.c.b16 %v8584, %v8582
        %v9065 = vpack.c.b16 %v8585, %v8583
        %v9066 = vpack.c.b16 %v8588, %v8586
        %v9067 = vpack.c.b16 %v8589, %v8587
        %v9068 = vpack.c.b16 %v8592, %v8590
        %v9069 = vpack.c.b16 %v8593, %v8591
        %v9070 = vpack.c.b16 %v8596, %v8594
        %v9071 = vpack.c.b16 %v8597, %v8595
        %v9072 = vpack.c.b16 %v8600, %v8598
        %v9073 = vpack.c.b16 %v8601, %v8599
        %v9074 = vpack.c.b16 %v8604, %v8602
        %v9075 = vpack.c.b16 %v8605, %v8603
        %v9076 = vpack.c.b16 %v8608, %v8606
        %v9077 = vpack.c.b16 %v8609, %v8607
        %v9078 = vpack.c.b16 %v8612, %v8610
        %v9079 = vpack.c.b16 %v8613, %v8611
        %v9080 = vpack.c.b16 %v8616, %v8614
        %v9081 = vpack.c.b16 %v8617, %v8615
        %v9082 = vpack.c.b16 %v8620, %v8618
        %v9083 = vpack.c.b16 %v8621, %v8619
        %v9084 = vpack.c.b16 %v8624, %v8622
        %v9085 = vpack.c.b16 %v8625, %v8623
        %v9086 = vpack.c.b16 %v8628, %v8626
        %v9087 = vpack.c.b16 %v8629, %v8627
        %v9088 = vpack.c.b16 %v8632, %v8630
        %v9089 = vpack.c.b16 %v8633, %v8631
        %v9090 = vpack.c.b16 %v8636, %v8634
        %v9091 = vpack.c.b16 %v8637, %v8635
        %v9092 = vpack.c.b16 %v8640, %v8638
        %v9093 = vpack.c.b16 %v8641, %v8639
        %v9094 = vpack.c.b16 %v8644, %v8642
        %v9095 = vpack.c.b16 %v8645, %v8643
        %v9096 = vpack.c.b16 %v8648, %v8646
        %v9097 = vpack.c.b16 %v8649, %v8647
        %v9098 = vpack.c.b16 %v8652, %v8650
        %v9099 = vpack.c.b16 %v8653, %v8651
        %v9100 = vpack.c.b16 %v8656, %v8654
        %v9101 = vpack.c.b16 %v8657, %v8655
        %v9102 = vpack.c.b16 %v8660, %v8658
        %v9103 = vpack.c.b16 %v8661, %v8659
        %v9104 = vpack.c.b16 %v8664, %v8662
        %v9105 = vpack.c.b16 %v8665, %v8663
        %v9106 = vpack.c.b16 %v8668, %v8666
        %v9107 = vpack.c.b16 %v8669, %v8667
        %v9108 = vpack.c.b16 %v8672, %v8670
        %v9109 = vpack.c.b16 %v8673, %v8671
        %v9110 = vpack.c.b16 %v8676, %v8674
        %v9111 = vpack.c.b16 %v8677, %v8675
        %v9112 = vpack.c.b16 %v8680, %v8678
        %v9113 = vpack.c.b16 %v8681, %v8679
        %v9114 = vpack.c.b16 %v8684, %v8682
        %v9115 = vpack.c.b16 %v8685, %v8683
        %v9116 = vpack.c.b16 %v8688, %v8686
        %v9117 = vpack.c.b16 %v8689, %v8687
        %v9118 = vpack.c.b16 %v8692, %v8690
        %v9119 = vpack.c.b16 %v8693, %v8691
        %v9120 = vpack.c.b16 %v8696, %v8694
        %v9121 = vpack.c.b16 %v8697, %v8695
        %v9122 = vpack.c.b16 %v8700, %v8698
        %v9123 = vpack.c.b16 %v8701, %v8699
        %v9124 = vpack.c.b16 %v8704, %v8702
        %v9125 = vpack.c.b16 %v8705, %v8703
        %v9126 = vpack.c.b16 %v8708, %v8706
        %v9127 = vpack.c.b16 %v8709, %v8707
        %v9128 = vpack.c.b16 %v8712, %v8710
        %v9129 = vpack.c.b16 %v8713, %v8711
        %v9130 = vpack.c.b16 %v8716, %v8714
        %v9131 = vpack.c.b16 %v8717, %v8715
        %v9132 = vpack.c.b16 %v8720, %v8718
        %v9133 = vpack.c.b16 %v8721, %v8719
        %v9134 = vpack.c.b16 %v8724, %v8722
        %v9135 = vpack.c.b16 %v8725, %v8723
        %v9136 = vpack.c.b16 %v8728, %v8726
        %v9137 = vpack.c.b16 %v8729, %v8727
        %v9138 = vpack.c.b16 %v8732, %v8730
        %v9139 = vpack.c.b16 %v8733, %v8731
        %v9140 = vpack.c.b16 %v8736, %v8734
        %v9141 = vpack.c.b16 %v8737, %v8735
        %v9142 = vpack.c.b16 %v8740, %v8738
        %v9143 = vpack.c.b16 %v8741, %v8739
        %v9144 = vpack.c.b16 %v8744, %v8742
        %v9145 = vpack.c.b16 %v8745, %v8743
        %v9146 = vpack.c.b16 %v8748, %v8746
        %v9147 = vpack.c.b16 %v8749, %v8747
        %v9148 = vpack.c.b16 %v8752, %v8750
        %v9149 = vpack.c.b16 %v8753, %v8751
        %v9150 = vpack.c.b16 %v8756, %v8754
        %v9151 = vpack.c.b16 %v8757, %v8755
        %v9152 = vpack.c.b16 %v8760, %v8758
        %v9153 = vpack.c.b16 %v8761, %v8759
        %v9154 = vpack.c.b16 %v8764, %v8762
        %v9155 = vpack.c.b16 %v8765, %v8763
        %v9156 = vpack.c.b16 %v8768, %v8766
        %v9157 = vpack.c.b16 %v8769, %v8767
        %v9158 = vpack.c.b16 %v8772, %v8770
        %v9159 = vpack.c.b16 %v8773, %v8771
        %v9160 = vpack.c.b16 %v8776, %v8774
        %v9161 = vpack.c.b16 %v8777, %v8775
        %v9162 = vpack.c.b16 %v8780, %v8778
        %v9163 = vpack.c.b16 %v8781, %v8779
        %v9164 = vpack.c.b16 %v8784, %v8782
        %v9165 = vpack.c.b16 %v8785, %v8783
        %v9166 = vpack.c.b16 %v8788, %v8786
        %v9167 = vpack.c.b16 %v8789, %v8787
        %v9168 = vpack.c.b16 %v8792, %v8790
        %v9169 = vpack.c.b16 %v8793, %v8791
        %v9170 = vpack.c.b16 %v8796, %v8794
        %v9171 = vpack.c.b16 %v8797, %v8795
        %v9172 = vpack.c.b16 %v8800, %v8798
        %v9173 = vpack.c.b16 %v8801, %v8799
        %v9174 = vpack.c.b16 %v8804, %v8802
        %v9175 = vpack.c.b16 %v8805, %v8803
        %v9176 = vpack.c.b16 %v8808, %v8806
        %v9177 = vpack.c.b16 %v8809, %v8807
        %v9178 = vpack.c.b16 %v8812, %v8810
        %v9179 = vpack.c.b16 %v8813, %v8811
        %v9180 = vpack.c.b16 %v8816, %v8814
        %v9181 = vpack.c.b16 %v8817, %v8815
        %v9182 = vpack.c.b16 %v8820, %v8818
        %v9183 = vpack.c.b16 %v8821, %v8819
        %v9184 = vpack.c.b16 %v8824, %v8822
        %v9185 = vpack.c.b16 %v8825, %v8823
        %v9186 = vpack.c.b16 %v8828, %v8826
        %v9187 = vpack.c.b16 %v8829, %v8827
        %v9188 = vpack.c.b16 %v8832, %v8830
        %v9189 = vpack.c.b16 %v8833, %v8831
        %v9190 = vpack.c.b16 %v8836, %v8834
        %v9191 = vpack.c.b16 %v8837, %v8835
        %v9192 = vpack.c.b16 %v8840, %v8838
        %v9193 = vpack.c.b16 %v8841, %v8839
        %v9194 = vpack.c.b16 %v8844, %v8842
        %v9195 = vpack.c.b16 %v8845, %v8843
        %v9196 = vpack.c.b16 %v8848, %v8846
        %v9197 = vpack.c.b16 %v8849, %v8847
        %v9198 = vpack.c.b16 %v8852, %v8850
        %v9199 = vpack.c.b16 %v8853, %v8851
        %v9200 = vpack.c.b16 %v8856, %v8854
        %v9201 = vpack.c.b16 %v8857, %v8855
        %v9202 = vpack.c.b16 %v8860, %v8858
        %v9203 = vpack.c.b16 %v8861, %v8859
        %v9204 = vpack.c.b16 %v8864, %v8862
        %v9205 = vpack.c.b16 %v8865, %v8863
        %v9206 = vpack.c.b16 %v8868, %v8866
        %v9207 = vpack.c.b16 %v8869, %v8867
        %v9208 = vpack.c.b16 %v8872, %v8870
        %v9209 = vpack.c.b16 %v8873, %v8871
        %v9210 = vpack.c.b16 %v8876, %v8874
        %v9211 = vpack.c.b16 %v8877, %v8875
        %v9212 = vpack.c.b16 %v8880, %v8878
        %v9213 = vpack.c.b16 %v8881, %v8879
        %v9214 = vpack.c.b16 %v8884, %v8882
        %v9215 = vpack.c.b16 %v8885, %v8883
        %v9216 = vpack.c.b16 %v8888, %v8886
        %v9217 = vpack.c.b16 %v8889, %v8887
        %v9218 = vpack.c.b16 %v8892, %v8890
        %v9219 = vpack.c.b16 %v8893, %v8891
        %v9220 = vpack.c.b16 %v8896, %v8894
        %v9221 = vpack.c.b16 %v8897, %v8895
        %v9222 = vpack.c.b16 %v8900, %v8898
        %v9223 = vpack.c.b16 %v8901, %v8899
        %v9224 = vpack.c.b16 %v8904, %v8902
        %v9225 = vpack.c.b16 %v8905, %v8903
        %v9226 = vpack.c.b16 %v8908, %v8906
        %v9227 = vpack.c.b16 %v8909, %v8907
        %v9228 = vpack.c.b16 %v8912, %v8910
        %v9229 = vpack.c.b16 %v8913, %v8911
        %v9230 = vpack.c.b16 %v8916, %v8914
        %v9231 = vpack.c.b16 %v8917, %v8915
        %v9232 = vpack.c.b16 %v8920, %v8918
        %v9233 = vpack.c.b16 %v8921, %v8919
        %v9234 = vpack.c.b16 %v8924, %v8922
        %v9235 = vpack.c.b16 %v8925, %v8923
        %v9236 = vpack.c.b16 %v8928, %v8926
        %v9237 = vpack.c.b16 %v8929, %v8927
        %v9238 = vpack.c.b16 %v8932, %v8930
        %v9239 = vpack.c.b16 %v8933, %v8931
        %v9240 = vpack.c.b16 %v8936, %v8934
        %v9241 = vpack.c.b16 %v8937, %v8935
        %v9242 = vpack.c.b16 %v8940, %v8938
        %v9243 = vpack.c.b16 %v8941, %v8939
        %v9244 = vpack.c.b16 %v8944, %v8942
        %v9245 = vpack.c.b16 %v8945, %v8943
        %v9246 = vpack.c.b16 %v8948, %v8946
        %v9247 = vpack.c.b16 %v8949, %v8947
        %v9248 = vpack.c.b16 %v8952, %v8950
        %v9249 = vpack.c.b16 %v8953, %v8951
        %v9250 = vpack.c.b16 %v8956, %v8954
        %v9251 = vpack.c.b16 %v8957, %v8955
        %v9252 = vpack.c.b16 %v8960, %v8958
        %v9253 = vpack.c.b16 %v8961, %v8959
        %v9254 = vpack.c.b16 %v8964, %v8962
        %v9255 = vpack.c.b16 %v8965, %v8963
        %v9256 = vpack.c.b16 %v8968, %v8966
        %v9257 = vpack.c.b16 %v8969, %v8967
        %v9258 = vpack.c.b16 %v8972, %v8970
        %v9259 = vpack.c.b16 %v8973, %v8971
        %v9260 = vpack.c.b16 %v8976, %v8974
        %v9261 = vpack.c.b16 %v8977, %v8975
        %v9262 = vpack.c.b16 %v8980, %v8978
        %v9263 = vpack.c.b16 %v8981, %v8979
        %v9264 = vpack.c.b16 %v8984, %v8982
        %v9265 = vpack.c.b16 %v8985, %v8983
        %v9266 = vpack.c.b16 %v8988, %v8986
        %v9267 = vpack.c.b16 %v8989, %v8987
        %v9268 = vpack.c.b16 %v8992, %v8990
        %v9269 = vpack.c.b16 %v8993, %v8991
        %v9270 = vpack.c.b16 %v8996, %v8994
        %v9271 = vpack.c.b16 %v8997, %v8995
        %v9272 = vpack.c.b16 %v9000, %v8998
        %v9273 = vpack.c.b16 %v9001, %v8999
        %v9274 = vpack.c.b16 %v9004, %v9002
        %v9275 = vpack.c.b16 %v9005, %v9003
        %v9276 = vpack.c.b16 %v9008, %v9006
        %v9277 = vpack.c.b16 %v9009, %v9007
        %v9278 = vpack.c.b16 %v9012, %v9010
        %v9279 = vpack.c.b16 %v9013, %v9011
        %v9280 = vpack.c.b16 %v9016, %v9014
        %v9281 = vpack.c.b16 %v9017, %v9015
        %v9282 = vpack.c.b16 %v9020, %v9018
        %v9283 = vpack.c.b16 %v9021, %v9019
        %v9284 = vpack.c.b16 %v9024, %v9022
        %v9285 = vpack.c.b16 %v9025, %v9023
        %v9286 = vpack.c.b16 %v9028, %v9026
        %v9287 = vpack.c.b16 %v9029, %v9027
        %v9288 = vpack.c.b16 %v9032, %v9030
        %v9289 = vpack.c.b16 %v9033, %v9031
        %9546 = vmatprep.subr.bf16.mxu0 %v9035
        %9547 = vmatpush1.bf16.msra.mxu0 %v9034
        %9548 = vmatprep.subr.bf16.mxu0 %v9037
        %9549 = vmatpush1.bf16.msra.mxu0 %v9036
        %9550 = vmatprep.subr.bf16.mxu0 %v9039
        %9551 = vmatpush1.bf16.msra.mxu0 %v9038
        %9552 = vmatprep.subr.bf16.mxu0 %v9041
        %9553 = vmatpush1.bf16.msra.mxu0 %v9040
        %9554 = vmatprep.subr.bf16.mxu0 %v9043
        %9555 = vmatpush1.bf16.msra.mxu0 %v9042
        %9556 = vmatprep.subr.bf16.mxu0 %v9045
        %9557 = vmatpush1.bf16.msra.mxu0 %v9044
        %9558 = vmatprep.subr.bf16.mxu0 %v9047
        %9559 = vmatpush1.bf16.msra.mxu0 %v9046
        %9560 = vmatprep.subr.bf16.mxu0 %v9049
        %9561 = vmatpush1.bf16.msra.mxu0 %v9048
        %9562 = vmatprep.subr.bf16.mxu0 %v9051
        %9563 = vmatpush1.bf16.msra.mxu0 %v9050
        %9564 = vmatprep.subr.bf16.mxu0 %v9053
        %9565 = vmatpush1.bf16.msra.mxu0 %v9052
        %9566 = vmatprep.subr.bf16.mxu0 %v9055
        %9567 = vmatpush1.bf16.msra.mxu0 %v9054
        %9568 = vmatprep.subr.bf16.mxu0 %v9057
        %9569 = vmatpush1.bf16.msra.mxu0 %v9056
        %9570 = vmatprep.subr.bf16.mxu0 %v9059
        %9571 = vmatpush1.bf16.msra.mxu0 %v9058
        %9572 = vmatprep.subr.bf16.mxu0 %v9061
        %9573 = vmatpush1.bf16.msra.mxu0 %v9060
        %9574 = vmatprep.subr.bf16.mxu0 %v9063
        %9575 = vmatpush1.bf16.msra.mxu0 %v9062
        %9576 = vmatprep.subr.bf16.mxu0 %v9065
        %9577 = vmatpush1.bf16.msra.mxu0 %v9064
        %9578 = vmatprep.mubr.bf16.mxu0 %v7979
        %9579 = vmatmul.mubr.bf16.gmra.mrb[0].mxu0 %v7978
        %v9580 = vpop.f32.mrb[0].mxu0
        %v9581 = vadd.f32 %v8259, %v9580
        %v9582 = vpop.f32.mrb[0].mxu0
        %v9583 = vadd.f32 %v8263, %v9582
        %v9584 = vpop.f32.mrb[0].mxu0
        %v9585 = vadd.f32 %v8259, %v9584
        %v9586 = vpop.f32.mrb[0].mxu0
        %v9587 = vadd.f32 %v8263, %v9586
        %9588 = vdwg.mxu0
        %9589 = vmatprep.subr.bf16.mxu0 %v9067
        %9590 = vmatpush1.bf16.msra.mxu0 %v9066
        %9591 = vmatprep.subr.bf16.mxu0 %v9069
        %9592 = vmatpush1.bf16.msra.mxu0 %v9068
        %9593 = vmatprep.subr.bf16.mxu0 %v9071
        %9594 = vmatpush1.bf16.msra.mxu0 %v9070
        %9595 = vmatprep.subr.bf16.mxu0 %v9073
        %9596 = vmatpush1.bf16.msra.mxu0 %v9072
        %9597 = vmatprep.subr.bf16.mxu0 %v9075
        %9598 = vmatpush1.bf16.msra.mxu0 %v9074
        %9599 = vmatprep.subr.bf16.mxu0 %v9077
        %9600 = vmatpush1.bf16.msra.mxu0 %v9076
        %9601 = vmatprep.subr.bf16.mxu0 %v9079
        %9602 = vmatpush1.bf16.msra.mxu0 %v9078
        %9603 = vmatprep.subr.bf16.mxu0 %v9081
        %9604 = vmatpush1.bf16.msra.mxu0 %v9080
        %9605 = vmatprep.subr.bf16.mxu0 %v9083
        %9606 = vmatpush1.bf16.msra.mxu0 %v9082
        %9607 = vmatprep.subr.bf16.mxu0 %v9085
        %9608 = vmatpush1.bf16.msra.mxu0 %v9084
        %9609 = vmatprep.subr.bf16.mxu0 %v9087
        %9610 = vmatpush1.bf16.msra.mxu0 %v9086
        %9611 = vmatprep.subr.bf16.mxu0 %v9089
        %9612 = vmatpush1.bf16.msra.mxu0 %v9088
        %9613 = vmatprep.subr.bf16.mxu0 %v9091
        %9614 = vmatpush1.bf16.msra.mxu0 %v9090
        %9615 = vmatprep.subr.bf16.mxu0 %v9093
        %9616 = vmatpush1.bf16.msra.mxu0 %v9092
        %9617 = vmatprep.subr.bf16.mxu0 %v9095
        %9618 = vmatpush1.bf16.msra.mxu0 %v9094
        %9619 = vmatprep.subr.bf16.mxu0 %v9097
        %9620 = vmatpush1.bf16.msra.mxu0 %v9096
        %9621 = vmatprep.mubr.bf16.mxu0 %v7981
        %9622 = vmatmul.mubr.bf16.gmra.mrb[0].mxu0 %v7980
        %v9623 = vpop.f32.mrb[0].mxu0
        %v9624 = vadd.f32 %v9581, %v9623
        %v9625 = vpop.f32.mrb[0].mxu0
        %v9626 = vadd.f32 %v9583, %v9625
        %v9627 = vpop.f32.mrb[0].mxu0
        %v9628 = vadd.f32 %v9585, %v9627
        %v9629 = vpop.f32.mrb[0].mxu0
        %v9630 = vadd.f32 %v9587, %v9629
        %9631 = vdwg.mxu0
        %9632 = vmatprep.subr.bf16.mxu0 %v9099
        %9633 = vmatpush1.bf16.msra.mxu0 %v9098
        %9634 = vmatprep.subr.bf16.mxu0 %v9101
        %9635 = vmatpush1.bf16.msra.mxu0 %v9100
        %9636 = vmatprep.subr.bf16.mxu0 %v9103
        %9637 = vmatpush1.bf16.msra.mxu0 %v9102
        %9638 = vmatprep.subr.bf16.mxu0 %v9105
        %9639 = vmatpush1.bf16.msra.mxu0 %v9104
        %9640 = vmatprep.subr.bf16.mxu0 %v9107
        %9641 = vmatpush1.bf16.msra.mxu0 %v9106
        %9642 = vmatprep.subr.bf16.mxu0 %v9109
        %9643 = vmatpush1.bf16.msra.mxu0 %v9108
        %9644 = vmatprep.subr.bf16.mxu0 %v9111
        %9645 = vmatpush1.bf16.msra.mxu0 %v9110
        %9646 = vmatprep.subr.bf16.mxu0 %v9113
        %9647 = vmatpush1.bf16.msra.mxu0 %v9112
        %9648 = vmatprep.subr.bf16.mxu0 %v9115
        %9649 = vmatpush1.bf16.msra.mxu0 %v9114
        %9650 = vmatprep.subr.bf16.mxu0 %v9117
        %9651 = vmatpush1.bf16.msra.mxu0 %v9116
        %9652 = vmatprep.subr.bf16.mxu0 %v9119
        %9653 = vmatpush1.bf16.msra.mxu0 %v9118
        %9654 = vmatprep.subr.bf16.mxu0 %v9121
        %9655 = vmatpush1.bf16.msra.mxu0 %v9120
        %9656 = vmatprep.subr.bf16.mxu0 %v9123
        %9657 = vmatpush1.bf16.msra.mxu0 %v9122
        %9658 = vmatprep.subr.bf16.mxu0 %v9125
        %9659 = vmatpush1.bf16.msra.mxu0 %v9124
        %9660 = vmatprep.subr.bf16.mxu0 %v9127
        %9661 = vmatpush1.bf16.msra.mxu0 %v9126
        %9662 = vmatprep.subr.bf16.mxu0 %v9129
        %9663 = vmatpush1.bf16.msra.mxu0 %v9128
        %9664 = vmatprep.mubr.bf16.mxu0 %v7983
        %9665 = vmatmul.mubr.bf16.gmra.mrb[0].mxu0 %v7982
        %v9666 = vpop.f32.mrb[0].mxu0
        %v9667 = vadd.f32 %v9624, %v9666
        %v9668 = vpop.f32.mrb[0].mxu0
        %v9669 = vadd.f32 %v9626, %v9668
        %v9670 = vpop.f32.mrb[0].mxu0
        %v9671 = vadd.f32 %v9628, %v9670
        %v9672 = vpop.f32.mrb[0].mxu0
        %v9673 = vadd.f32 %v9630, %v9672
        %9674 = vdwg.mxu0
        %9675 = vmatprep.subr.bf16.mxu0 %v9131
        %9676 = vmatpush1.bf16.msra.mxu0 %v9130
        %9677 = vmatprep.subr.bf16.mxu0 %v9133
        %9678 = vmatpush1.bf16.msra.mxu0 %v9132
        %9679 = vmatprep.subr.bf16.mxu0 %v9135
        %9680 = vmatpush1.bf16.msra.mxu0 %v9134
        %9681 = vmatprep.subr.bf16.mxu0 %v9137
        %9682 = vmatpush1.bf16.msra.mxu0 %v9136
        %9683 = vmatprep.subr.bf16.mxu0 %v9139
        %9684 = vmatpush1.bf16.msra.mxu0 %v9138
        %9685 = vmatprep.subr.bf16.mxu0 %v9141
        %9686 = vmatpush1.bf16.msra.mxu0 %v9140
        %9687 = vmatprep.subr.bf16.mxu0 %v9143
        %9688 = vmatpush1.bf16.msra.mxu0 %v9142
        %9689 = vmatprep.subr.bf16.mxu0 %v9145
        %9690 = vmatpush1.bf16.msra.mxu0 %v9144
        %9691 = vmatprep.subr.bf16.mxu0 %v9147
        %9692 = vmatpush1.bf16.msra.mxu0 %v9146
        %9693 = vmatprep.subr.bf16.mxu0 %v9149
        %9694 = vmatpush1.bf16.msra.mxu0 %v9148
        %9695 = vmatprep.subr.bf16.mxu0 %v9151
        %9696 = vmatpush1.bf16.msra.mxu0 %v9150
        %9697 = vmatprep.subr.bf16.mxu0 %v9153
        %9698 = vmatpush1.bf16.msra.mxu0 %v9152
        %9699 = vmatprep.subr.bf16.mxu0 %v9155
        %9700 = vmatpush1.bf16.msra.mxu0 %v9154
        %9701 = vmatprep.subr.bf16.mxu0 %v9157
        %9702 = vmatpush1.bf16.msra.mxu0 %v9156
        %9703 = vmatprep.subr.bf16.mxu0 %v9159
        %9704 = vmatpush1.bf16.msra.mxu0 %v9158
        %9705 = vmatprep.subr.bf16.mxu0 %v9161
        %9706 = vmatpush1.bf16.msra.mxu0 %v9160
        %9707 = vmatprep.mubr.bf16.mxu0 %v7985
        %9708 = vmatmul.mubr.bf16.gmra.mrb[0].mxu0 %v7984
        %v9709 = vpop.f32.mrb[0].mxu0
        %v9710 = vadd.f32 %v9667, %v9709
        %v9711 = vpop.f32.mrb[0].mxu0
        %v9712 = vadd.f32 %v9669, %v9711
        %v9713 = vpop.f32.mrb[0].mxu0
        %v9714 = vadd.f32 %v9671, %v9713
        %v9715 = vpop.f32.mrb[0].mxu0
        %v9716 = vadd.f32 %v9673, %v9715
        %9717 = vdwg.mxu0
        %9718 = vmatprep.subr.bf16.mxu0 %v9163
        %9719 = vmatpush1.bf16.msra.mxu0 %v9162
        %9720 = vmatprep.subr.bf16.mxu0 %v9165
        %9721 = vmatpush1.bf16.msra.mxu0 %v9164
        %9722 = vmatprep.subr.bf16.mxu0 %v9167
        %9723 = vmatpush1.bf16.msra.mxu0 %v9166
        %9724 = vmatprep.subr.bf16.mxu0 %v9169
        %9725 = vmatpush1.bf16.msra.mxu0 %v9168
        %9726 = vmatprep.subr.bf16.mxu0 %v9171
        %9727 = vmatpush1.bf16.msra.mxu0 %v9170
        %9728 = vmatprep.subr.bf16.mxu0 %v9173
        %9729 = vmatpush1.bf16.msra.mxu0 %v9172
        %9730 = vmatprep.subr.bf16.mxu0 %v9175
        %9731 = vmatpush1.bf16.msra.mxu0 %v9174
        %9732 = vmatprep.subr.bf16.mxu0 %v9177
        %9733 = vmatpush1.bf16.msra.mxu0 %v9176
        %9734 = vmatprep.subr.bf16.mxu0 %v9179
        %9735 = vmatpush1.bf16.msra.mxu0 %v9178
        %9736 = vmatprep.subr.bf16.mxu0 %v9181
        %9737 = vmatpush1.bf16.msra.mxu0 %v9180
        %9738 = vmatprep.subr.bf16.mxu0 %v9183
        %9739 = vmatpush1.bf16.msra.mxu0 %v9182
        %9740 = vmatprep.subr.bf16.mxu0 %v9185
        %9741 = vmatpush1.bf16.msra.mxu0 %v9184
        %9742 = vmatprep.subr.bf16.mxu0 %v9187
        %9743 = vmatpush1.bf16.msra.mxu0 %v9186
        %9744 = vmatprep.subr.bf16.mxu0 %v9189
        %9745 = vmatpush1.bf16.msra.mxu0 %v9188
        %9746 = vmatprep.subr.bf16.mxu0 %v9191
        %9747 = vmatpush1.bf16.msra.mxu0 %v9190
        %9748 = vmatprep.subr.bf16.mxu0 %v9193
        %9749 = vmatpush1.bf16.msra.mxu0 %v9192
        %9750 = vmatprep.mubr.bf16.mxu0 %v7987
        %9751 = vmatmul.mubr.bf16.gmra.mrb[0].mxu0 %v7986
        %v9752 = vpop.f32.mrb[0].mxu0
        %v9753 = vadd.f32 %v9710, %v9752
        %v9754 = vpop.f32.mrb[0].mxu0
        %v9755 = vadd.f32 %v9712, %v9754
        %v9756 = vpop.f32.mrb[0].mxu0
        %v9757 = vadd.f32 %v9714, %v9756
        %v9758 = vpop.f32.mrb[0].mxu0
        %v9759 = vadd.f32 %v9716, %v9758
        %9760 = vdwg.mxu0
        %9761 = vmatprep.subr.bf16.mxu0 %v9195
        %9762 = vmatpush1.bf16.msra.mxu0 %v9194
        %9763 = vmatprep.subr.bf16.mxu0 %v9197
        %9764 = vmatpush1.bf16.msra.mxu0 %v9196
        %9765 = vmatprep.subr.bf16.mxu0 %v9199
        %9766 = vmatpush1.bf16.msra.mxu0 %v9198
        %9767 = vmatprep.subr.bf16.mxu0 %v9201
        %9768 = vmatpush1.bf16.msra.mxu0 %v9200
        %9769 = vmatprep.subr.bf16.mxu0 %v9203
        %9770 = vmatpush1.bf16.msra.mxu0 %v9202
        %9771 = vmatprep.subr.bf16.mxu0 %v9205
        %9772 = vmatpush1.bf16.msra.mxu0 %v9204
        %9773 = vmatprep.subr.bf16.mxu0 %v9207
        %9774 = vmatpush1.bf16.msra.mxu0 %v9206
        %9775 = vmatprep.subr.bf16.mxu0 %v9209
        %9776 = vmatpush1.bf16.msra.mxu0 %v9208
        %9777 = vmatprep.subr.bf16.mxu0 %v9211
        %9778 = vmatpush1.bf16.msra.mxu0 %v9210
        %9779 = vmatprep.subr.bf16.mxu0 %v9213
        %9780 = vmatpush1.bf16.msra.mxu0 %v9212
        %9781 = vmatprep.subr.bf16.mxu0 %v9215
        %9782 = vmatpush1.bf16.msra.mxu0 %v9214
        %9783 = vmatprep.subr.bf16.mxu0 %v9217
        %9784 = vmatpush1.bf16.msra.mxu0 %v9216
        %9785 = vmatprep.subr.bf16.mxu0 %v9219
        %9786 = vmatpush1.bf16.msra.mxu0 %v9218
        %9787 = vmatprep.subr.bf16.mxu0 %v9221
        %9788 = vmatpush1.bf16.msra.mxu0 %v9220
        %9789 = vmatprep.subr.bf16.mxu0 %v9223
        %9790 = vmatpush1.bf16.msra.mxu0 %v9222
        %9791 = vmatprep.subr.bf16.mxu0 %v9225
        %9792 = vmatpush1.bf16.msra.mxu0 %v9224
        %9793 = vmatprep.mubr.bf16.mxu0 %v7989
        %9794 = vmatmul.mubr.bf16.gmra.mrb[0].mxu0 %v7988
        %v9795 = vpop.f32.mrb[0].mxu0
        %v9796 = vadd.f32 %v9753, %v9795
        %v9797 = vpop.f32.mrb[0].mxu0
        %v9798 = vadd.f32 %v9755, %v9797
        %v9799 = vpop.f32.mrb[0].mxu0
        %v9800 = vadd.f32 %v9757, %v9799
        %v9801 = vpop.f32.mrb[0].mxu0
        %v9802 = vadd.f32 %v9759, %v9801
        %9803 = vdwg.mxu0
        %9804 = vmatprep.subr.bf16.mxu0 %v9227
        %9805 = vmatpush1.bf16.msra.mxu0 %v9226
        %9806 = vmatprep.subr.bf16.mxu0 %v9229
        %9807 = vmatpush1.bf16.msra.mxu0 %v9228
        %9808 = vmatprep.subr.bf16.mxu0 %v9231
        %9809 = vmatpush1.bf16.msra.mxu0 %v9230
        %9810 = vmatprep.subr.bf16.mxu0 %v9233
        %9811 = vmatpush1.bf16.msra.mxu0 %v9232
        %9812 = vmatprep.subr.bf16.mxu0 %v9235
        %9813 = vmatpush1.bf16.msra.mxu0 %v9234
        %9814 = vmatprep.subr.bf16.mxu0 %v9237
        %9815 = vmatpush1.bf16.msra.mxu0 %v9236
        %9816 = vmatprep.subr.bf16.mxu0 %v9239
        %9817 = vmatpush1.bf16.msra.mxu0 %v9238
        %9818 = vmatprep.subr.bf16.mxu0 %v9241
        %9819 = vmatpush1.bf16.msra.mxu0 %v9240
        %9820 = vmatprep.subr.bf16.mxu0 %v9243
        %9821 = vmatpush1.bf16.msra.mxu0 %v9242
        %9822 = vmatprep.subr.bf16.mxu0 %v9245
        %9823 = vmatpush1.bf16.msra.mxu0 %v9244
        %9824 = vmatprep.subr.bf16.mxu0 %v9247
        %9825 = vmatpush1.bf16.msra.mxu0 %v9246
        %9826 = vmatprep.subr.bf16.mxu0 %v9249
        %9827 = vmatpush1.bf16.msra.mxu0 %v9248
        %9828 = vmatprep.subr.bf16.mxu0 %v9251
        %9829 = vmatpush1.bf16.msra.mxu0 %v9250
        %9830 = vmatprep.subr.bf16.mxu0 %v9253
        %9831 = vmatpush1.bf16.msra.mxu0 %v9252
        %9832 = vmatprep.subr.bf16.mxu0 %v9255
        %9833 = vmatpush1.bf16.msra.mxu0 %v9254
        %9834 = vmatprep.subr.bf16.mxu0 %v9257
        %9835 = vmatpush1.bf16.msra.mxu0 %v9256
        %9836 = vmatprep.mubr.bf16.mxu0 %v7991
        %9837 = vmatmul.mubr.bf16.gmra.mrb[0].mxu0 %v7990
        %v9838 = vpop.f32.mrb[0].mxu0
        %v9839 = vadd.f32 %v9796, %v9838
        %v9840 = vpop.f32.mrb[0].mxu0
        %v9841 = vadd.f32 %v9798, %v9840
        %v9842 = vpop.f32.mrb[0].mxu0
        %v9843 = vadd.f32 %v9800, %v9842
        %v9844 = vpop.f32.mrb[0].mxu0
        %v9845 = vadd.f32 %v9802, %v9844
        %9846 = vdwg.mxu0
        %9847 = vmatprep.subr.bf16.mxu0 %v9259
        %9848 = vmatpush1.bf16.msra.mxu0 %v9258
        %9849 = vmatprep.subr.bf16.mxu0 %v9261
        %9850 = vmatpush1.bf16.msra.mxu0 %v9260
        %9851 = vmatprep.subr.bf16.mxu0 %v9263
        %9852 = vmatpush1.bf16.msra.mxu0 %v9262
        %9853 = vmatprep.subr.bf16.mxu0 %v9265
        %9854 = vmatpush1.bf16.msra.mxu0 %v9264
        %9855 = vmatprep.subr.bf16.mxu0 %v9267
        %9856 = vmatpush1.bf16.msra.mxu0 %v9266
        %9857 = vmatprep.subr.bf16.mxu0 %v9269
        %9858 = vmatpush1.bf16.msra.mxu0 %v9268
        %9859 = vmatprep.subr.bf16.mxu0 %v9271
        %9860 = vmatpush1.bf16.msra.mxu0 %v9270
        %9861 = vmatprep.subr.bf16.mxu0 %v9273
        %9862 = vmatpush1.bf16.msra.mxu0 %v9272
        %9863 = vmatprep.subr.bf16.mxu0 %v9275
        %9864 = vmatpush1.bf16.msra.mxu0 %v9274
        %9865 = vmatprep.subr.bf16.mxu0 %v9277
        %9866 = vmatpush1.bf16.msra.mxu0 %v9276
        %9867 = vmatprep.subr.bf16.mxu0 %v9279
        %9868 = vmatpush1.bf16.msra.mxu0 %v9278
        %9869 = vmatprep.subr.bf16.mxu0 %v9281
        %9870 = vmatpush1.bf16.msra.mxu0 %v9280
        %9871 = vmatprep.subr.bf16.mxu0 %v9283
        %9872 = vmatpush1.bf16.msra.mxu0 %v9282
        %9873 = vmatprep.subr.bf16.mxu0 %v9285
        %9874 = vmatpush1.bf16.msra.mxu0 %v9284
        %9875 = vmatprep.subr.bf16.mxu0 %v9287
        %9876 = vmatpush1.bf16.msra.mxu0 %v9286
        %9877 = vmatprep.subr.bf16.mxu0 %v9289
        %9878 = vmatpush1.bf16.msra.mxu0 %v9288
        %9879 = vmatprep.mubr.bf16.mxu0 %v7993
        %9880 = vmatmul.mubr.bf16.gmra.mrb[0].mxu0 %v7992
        %v9881 = vpop.f32.mrb[0].mxu0
        %v9882 = vadd.f32 %v9839, %v9881
        %v9883 = vpop.f32.mrb[0].mxu0
        %v9884 = vadd.f32 %v9841, %v9883
        %v9885 = vpop.f32.mrb[0].mxu0
        %v9886 = vadd.f32 %v9843, %v9885
        %v9887 = vpop.f32.mrb[0].mxu0
        %v9888 = vadd.f32 %v9845, %v9887
        %9889 = vdwg.mxu0
        %v9890 = vadd.f32 %v5976, %v9882
        %v9891 = vadd.f32 %v5977, %v9884
        %v9892 = vadd.f32 %v5978, %v9886
        %v9893 = vadd.f32 %v5979, %v9888
        %9894 = vst [vmem:[%s617] sm:$0xff] %v9890
        %9895 = vst.msk [vmem:[%s617 + $0x8] sm:$0xff] %vm647, %v9891
        %9896 = vst [vmem:[%s617 + $0x10] sm:$0x3] %v9892
        %9897 = vst.msk [vmem:[%s617 + $0x18] sm:$0x3] %vm654, %v9893
        %s9898 = smul.u32 2, %s34
        %p9899 = scmp.lt.s32.totalorder %s9898, 1
        %s9900 = scalar_select %p9899, %s9898, 1
        %s9901 = smul.addr %s9900, 2
        %s9902 = smul.addr %s9901, 8
        %s9903 = scalar_lea.vmem %s14, %s9902
        // Predicated region
        $region117: #{jem_forward.4} parent=75 // pred_check
          %p9904 = pneg %p359
        $region118: #{jem_forward.4} parent=75 // pred_check_branch
          %9906 = sbr.rel (%p9904) target = $region120
        $region119: #{jem_forward.4} parent=75 // pred_region
          %s9907 = smul.u32 2, %s34
        $region120: #{jem_forward.4} parent=75 // pred_fallthru
          _
        // Predicated region
        $region121: #{jem_forward.4} parent=75 // pred_check
          %p9908 = pneg %p359
        $region122: #{jem_forward.4} parent=75 // pred_check_branch
          %9910 = sbr.rel (%p9908) target = $region124
        $region123: #{jem_forward.4} parent=75 // pred_region
          %s9911 = smul.u32 2, %s34
          %p9912 = scmp.lt.s32.totalorder %s9911, 1
          %s9913 = scalar_select %p9912, %s9911, 1
          %s9914 = smul.addr %s9913, 2
          %s9915 = smul.addr %s9914, 8
          %s9916 = scalar_lea.vmem %s14, %s9915
        $region124: #{jem_forward.4} parent=75 // pred_fallthru
          _
      $region76: #{jem_forward.4} parent=5 // pred_fallthru
        _
      %p9917 = scmp.le.s32.totalorder 2, %s25
      // Predicated region
      $region125: #{jem_forward.4} parent=5 // pred_check
        %p9918 = pneg %p9917
      $region126: #{jem_forward.4} parent=5 // pred_check_branch
        %9920 = sbr.rel (%p9918) target = $region128
      $region127: #{jem_forward.4} parent=5 // pred_region
        %s9921 = ssub.s32 %s25, 2
      $region128: #{jem_forward.4} parent=5 // pred_fallthru
        _
    $region6: #{jem_forward.4} parent=1 // loop_footer
      %s29 = sadd.s32 1, %s25
    $region7: #{jem_forward.4} parent=1 // loop_footer_branch
      %24 = sbr.rel target = $region3
    $region8: #{jem_forward.4} parent=1 // loop_exit
      _
    %9922 = vsyncpa [#allocation3], 1
    %s9923 = scalar_lea.sflag [#allocation3], 1
    %9924 = vsyncpa %s9923, 1
    %9925 = vsyncpa [#allocation5], 1
    %9926 = vsyncpa [#allocation8], 1
    %9927 = vsyncpa [#allocation11], 1
    %9928 = vsyncpa [#allocation14], 1

</llo_original>
